<compile_context>
chip_gen: v7x
topology: tpu7x:2x2x1
jax: 0.10.0
libtpu: 0.0.40
codegen_flags: <defaults>
</compile_context>

<pallas_src>
import jax
import jax.numpy as jnp
from jax import lax
from jax.experimental import pallas as pl
from jax.experimental.pallas import tpu as pltpu

KH, KW = 8, 16          # ConvTranspose2d kernel size
PH, PW = 3, 7           # ConvTranspose2d padding
STRIDE = 2
EPS = 1e-5              # GroupNorm eps
CHANNELS = (16, 32, 16, 8, 1)


# ---------------------- parameter re-layout (plain JAX) ---------------------- #

def build_phase_weights(w_t, W, dtype=jnp.bfloat16):
    """Banded phase weights for one deconv stage.

    w_t: PyTorch ConvTranspose2d weight, shape (Cin, Cout, KH, KW).
    Returns (8, W*Cin, 2*W*Cout); index r*4+j selects output-row phase r and
    row tap j.  With P the row-padded input (rows = padded height, lanes =
    w*Cin+ci) the deconv output is
        out[2a+r, 2b+c, co] = sum_j  P[a+r+j, :] @ M[r*4+j]
    evaluated at lane (2b+c)*Cout+co, where
        M[r*4+j][w*Cin+ci, (2b+c)*Cout+co] = w_t[ci, co, 7-r-2j, kw],
        kw = 7 + c + 2b - 2w   (entry is 0 when kw is out of [0,16)).
    Column taps, column phase and Cin are thus folded into K / N of the matmul.
    """
    Cin, Cout, _, _ = w_t.shape
    OW = 2 * W
    w_pos = jnp.arange(W)[:, None, None]      # input column  w
    b_pos = jnp.arange(W)[None, :, None]      # output column block b
    c_pos = jnp.arange(2)[None, None, :]      # column phase  c
    kw = 7 + c_pos + 2 * b_pos - 2 * w_pos    # (W, W, 2)
    valid = (kw >= 0) & (kw < KW)
    kw_c = jnp.clip(kw, 0, KW - 1)
    mats = []
    for r in range(2):
        for j in range(4):
            kh = KH - 1 - r - 2 * j
            wk = w_t[:, :, kh, :]                              # (Cin, Cout, KW)
            g = jnp.take(wk, kw_c, axis=2)                     # (Cin, Cout, W, W, 2)
            g = jnp.where(valid[None, None], g, 0.0)
            g = jnp.transpose(g, (2, 0, 3, 4, 1))              # (w, Cin, b, c, Cout)
            mats.append(g.reshape(W * Cin, OW * Cout))
    return jnp.stack(mats, axis=0).astype(dtype)


def tile_lane_param(v, OW):
    """Per-channel (Cout,) vector -> lane vector (1, OW*Cout) for layout ow*Cout+co."""
    return jnp.tile(v.astype(jnp.float32), OW).reshape(1, -1)


# -------------------------------- fused kernel ------------------------------- #

def make_fused_kernel(layers):
    (H1, W1, C1, O1), (H2, W2, C2, O2), (H3, W3, C3, O3), (H4, W4, C4, O4) = layers

    def conv_phases(P, w_ref, H, W, Cout):
        """8 banded MXU matmuls -> two row-phase outputs, each (H, 2W*Cout) f32."""
        L = 2 * W * Cout
        ys = []
        for r in range(2):
            acc = jnp.zeros((H, L), jnp.float32)
            for j in range(4):
                rows = P[r + j:r + j + H, :].astype(jnp.bfloat16)
                acc = acc + jnp.dot(rows, w_ref[r * 4 + j],
                                    preferred_element_type=jnp.float32)
            ys.append(acc)
        return ys

    def relu_groupnorm(P, Pn, w_ref, b_ref, g_ref, be_ref, H, W, Cout):
        OH, L = 2 * H, 2 * W * Cout
        y0, y1 = conv_phases(P, w_ref, H, W, Cout)
        y0 = jnp.maximum(y0 + b_ref[...], 0.0)                 # bias + ReLU
        y1 = jnp.maximum(y1 + b_ref[...], 0.0)
        cnt = float(OH * L)                                    # = OH*OW*Cout
        mean = (jnp.sum(y0) + jnp.sum(y1)) / cnt               # GroupNorm(1, C)
        d0, d1 = y0 - mean, y1 - mean
        var = (jnp.sum(d0 * d0) + jnp.sum(d1 * d1)) / cnt
        inv = lax.rsqrt(var + EPS)
        n0 = d0 * inv * g_ref[...] + be_ref[...]
        n1 = d1 * inv * g_ref[...] + be_ref[...]
        # interleave the two row phases -> (OH, L); single dense block store.
        z = jnp.concatenate([n0[:, None, :], n1[:, None, :]], axis=1).reshape(OH, L)
        Pn[0:2, :] = jnp.zeros((2, L), jnp.float32)
        Pn[2 + OH:4 + OH, :] = jnp.zeros((2, L), jnp.float32)
        Pn[2:2 + OH, :] = z

    def kernel(x_ref,
               w1_ref, b1_ref, g1_ref, be1_ref,
               w2_ref, b2_ref, g2_ref, be2_ref,
               w3_ref, b3_ref, g3_ref, be3_ref,
               w4_ref, b4_ref,
               o_ref, p0, p1, p2, p3):
        # Stage 0: place this sample into the row-padded layer-1 input scratch.
        p0[0:2, :] = jnp.zeros((2, W1 * C1), jnp.float32)
        p0[2 + H1:4 + H1, :] = jnp.zeros((2, W1 * C1), jnp.float32)
        p0[2:2 + H1, :] = x_ref[0]

        relu_groupnorm(p0, p1, w1_ref, b1_ref, g1_ref, be1_ref, H1, W1, O1)
        relu_groupnorm(p1, p2, w2_ref, b2_ref, g2_ref, be2_ref, H2, W2, O2)
        relu_groupnorm(p2, p3, w3_ref, b3_ref, g3_ref, be3_ref, H3, W3, O3)

        # Final stage: conv + bias + sigmoid, stored as one lane-dense tile
        # (H4, 4*W4) = (32, 128): [output row 2p | output row 2p+1] per sublane.
        y0, y1 = conv_phases(p3, w4_ref, H4, W4, O4)
        s0 = jax.nn.sigmoid(y0 + b4_ref[...])
        s1 = jax.nn.sigmoid(y1 + b4_ref[...])
        o_ref[0] = jnp.concatenate([s0, s1], axis=1)

    return kernel


# --------------------------------- JAX wrapper ------------------------------- #

def texture_segmentation_forward(x_nchw, p):
    N, C, H, W = x_nchw.shape
    assert C == CHANNELS[0]
    layers = [(H * 2 ** i, W * 2 ** i, CHANNELS[i], CHANNELS[i + 1]) for i in range(4)]
    H1, W1, C1, _ = layers[0]
    H4, W4, _, _ = layers[3]

    # NCHW -> per-sample (H, W*Cin) slabs (channels fastest on lanes).
    x2d = jnp.transpose(x_nchw, (0, 2, 3, 1)).reshape(N, H1, W1 * C1)

    wkeys = (("w1", "b1", "g1", "be1"), ("w2", "b2", "g2", "be2"),
             ("w3", "b3", "g3", "be3"), ("w5", "b5", None, None))
    ins = [x2d]
    for (wk, bk, gk, bek), (_, Wl, _, _) in zip(wkeys, layers):
        OW = 2 * Wl
        ins.append(build_phase_weights(p[wk], Wl))
        ins.append(tile_lane_param(p[bk], OW))
        if gk is not None:
            ins.append(tile_lane_param(p[gk], OW))
            ins.append(tile_lane_param(p[bek], OW))

    def const_spec(a):
        nd = a.ndim
        return pl.BlockSpec(a.shape, lambda n, _nd=nd: (0,) * _nd)

    in_specs = [pl.BlockSpec((1, H1, W1 * C1), lambda n: (n, 0, 0))]
    in_specs += [const_spec(a) for a in ins[1:]]

    out = pl.pallas_call(
        make_fused_kernel(layers),
        out_shape=jax.ShapeDtypeStruct((N, H4, 4 * W4), jnp.float32),
        grid=(N,),
        in_specs=in_specs,
        out_specs=pl.BlockSpec((1, H4, 4 * W4), lambda n: (n, 0, 0)),
        scratch_shapes=[pltpu.VMEM((Hl + 4, Wl * Cl), jnp.float32)
                        for (Hl, Wl, Cl, _) in layers],
        compiler_params=pltpu.CompilerParams(
            dimension_semantics=("parallel",)),
    )(*ins)

    # (N, H4, 4*W4) row-major is exactly the (N, 1, 2*H4, 2*W4) output.
    return out.reshape(N, 1, 2 * H4, 2 * W4)


# ------------------------ deterministic parameter init ----------------------- #

def init_params(key):
    k1, k2, k3, k4 = jax.random.split(key, 4)

    def const_w(cin, cout, base, std, k):
        # Mirrors `weight.data[...] = base + torch.normal(0, std)` (scalar noise
        # broadcast to every element).
        noise = jax.random.normal(k, (), jnp.float32) * std
        return jnp.full((cin, cout, KH, KW), base, jnp.float32) + noise

    return {
        "w1": const_w(16, 32, 1.0 / (8 * 8 * 8), 1e-4, k1),
        "b1": jnp.zeros((32,), jnp.float32),
        "g1": jnp.ones((32,), jnp.float32), "be1": jnp.zeros((32,), jnp.float32),

        "w2": const_w(32, 16, 1.0 / (8 * 8 * 8), 1e-4, k2),
        "b2": jnp.zeros((16,), jnp.float32),
        "g2": jnp.ones((16,), jnp.float32), "be2": jnp.zeros((16,), jnp.float32),

        "w3": const_w(16, 8, 1.0 / (4 * 8 * 8), 1e-3, k3),
        "b3": jnp.zeros((8,), jnp.float32),
        "g3": jnp.ones((8,), jnp.float32), "be3": jnp.zeros((8,), jnp.float32),

        "w5": const_w(8, 1, 1.0 / (8 * 8 * 8 * 0.24), 1e-3, k4),
        "b5": jnp.full((1,), -(0.5 / 0.24), jnp.float32),
        "g5": jnp.ones((1,), jnp.float32), "be5": jnp.zeros((1,), jnp.float32),
    }


# -------------------------- pure-JAX reference (XLA) ------------------------- #

def _ref_convt(x_nchw, w_t, bias):
    rhs = jnp.transpose(w_t, (1, 0, 2, 3))[:, :, ::-1, ::-1]   # (Cout, Cin, KH, KW)
    out = lax.conv_general_dilated(
        x_nchw, rhs, window_strides=(1, 1),
        padding=[(KH - 1 - PH, KH - 1 - PH), (KW - 1 - PW, KW - 1 - PW)],
        lhs_dilation=(STRIDE, STRIDE),
        dimension_numbers=("NCHW", "OIHW", "NCHW"),
        precision=lax.Precision.HIGHEST)
    return out + bias[None, :, None, None]


def _ref_groupnorm(x, gamma, beta):
    mean = jnp.mean(x, axis=(1, 2, 3), keepdims=True)
    var = jnp.mean(jnp.square(x - mean), axis=(1, 2, 3), keepdims=True)
    xn = (x - mean) * lax.rsqrt(var + EPS)
    return xn * gamma[None, :, None, None] + beta[None, :, None, None]


def reference_forward(x, p):
    h = jax.nn.relu(_ref_convt(x, p["w1"], p["b1"]))
    h = _ref_groupnorm(h, p["g1"], p["be1"])
    h = jax.nn.relu(_ref_convt(h, p["w2"], p["b2"]))
    h = _ref_groupnorm(h, p["g2"], p["be2"])
    h = jax.nn.relu(_ref_convt(h, p["w3"], p["b3"]))
    h = _ref_groupnorm(h, p["g3"], p["be3"])
    return jax.nn.sigmoid(_ref_convt(h, p["w5"], p["b5"]))


# ------------------------------------ main ----------------------------------- #

if __name__ == "__main__":
    key = jax.random.PRNGKey(0)
    pkey, xkey = jax.random.split(key)
    params = init_params(pkey)

    # PyTorch-style NCHW input: batch=2, channels=16, spatial=4x4 -> (2,1,64,64).
    x = jax.random.normal(xkey, (2, 16, 4, 4), jnp.float32)

    out = jax.block_until_ready(jax.jit(texture_segmentation_forward)(x, params))
    assert out.shape == (2, 1, 64, 64), out.shape

    ref = jax.block_until_ready(reference_forward(x, params))
    err = float(jnp.max(jnp.abs(out - ref)))
    # bf16 MXU operands + f32 accumulation (per perf guidance) vs. f32 HIGHEST reference.
    assert err < 1e-2, err

    print("KERNEL_OK")
</pallas_src>

<mosaic_0001>
module attributes {stable_mosaic.version = 11 : i64} {
  func.func @kernel(%arg0: i32, %arg1: memref<1x4x64xf32, #tpu.memory_space<vmem>>, %arg2: memref<8x64x256xbf16, #tpu.memory_space<vmem>>, %arg3: memref<1x256xf32, #tpu.memory_space<vmem>>, %arg4: memref<1x256xf32, #tpu.memory_space<vmem>>, %arg5: memref<1x256xf32, #tpu.memory_space<vmem>>, %arg6: memref<8x256x256xbf16, #tpu.memory_space<vmem>>, %arg7: memref<1x256xf32, #tpu.memory_space<vmem>>, %arg8: memref<1x256xf32, #tpu.memory_space<vmem>>, %arg9: memref<1x256xf32, #tpu.memory_space<vmem>>, %arg10: memref<8x256x256xbf16, #tpu.memory_space<vmem>>, %arg11: memref<1x256xf32, #tpu.memory_space<vmem>>, %arg12: memref<1x256xf32, #tpu.memory_space<vmem>>, %arg13: memref<1x256xf32, #tpu.memory_space<vmem>>, %arg14: memref<8x256x64xbf16, #tpu.memory_space<vmem>>, %arg15: memref<1x64xf32, #tpu.memory_space<vmem>>, %arg16: memref<1x32x128xf32, #tpu.memory_space<vmem>>, %arg17: memref<8x64xf32, #tpu.memory_space<vmem>>, %arg18: memref<12x256xf32, #tpu.memory_space<vmem>>, %arg19: memref<20x256xf32, #tpu.memory_space<vmem>>, %arg20: memref<36x256xf32, #tpu.memory_space<vmem>>) attributes {dimension_semantics = [#tpu.dimension_semantics<parallel>], iteration_bounds = array<i64: 2>, scalar_prefetch = 0 : i64, scratch_operands = 4 : i64, tpu.core_type = #tpu.core_type<tc>, window_params = [{transform_indices = @transform_0, window_bounds = array<i64: 1, 4, 64>}, {pipeline_mode = #tpu.pipeline_mode<synchronous>, transform_indices = @transform_1, window_bounds = array<i64: 8, 64, 256>}, {pipeline_mode = #tpu.pipeline_mode<synchronous>, transform_indices = @transform_2, window_bounds = array<i64: 1, 256>}, {pipeline_mode = #tpu.pipeline_mode<synchronous>, transform_indices = @transform_3, window_bounds = array<i64: 1, 256>}, {pipeline_mode = #tpu.pipeline_mode<synchronous>, transform_indices = @transform_4, window_bounds = array<i64: 1, 256>}, {pipeline_mode = #tpu.pipeline_mode<synchronous>, transform_indices = @transform_5, window_bounds = array<i64: 8, 256, 256>}, {pipeline_mode = #tpu.pipeline_mode<synchronous>, transform_indices = @transform_6, window_bounds = array<i64: 1, 256>}, {pipeline_mode = #tpu.pipeline_mode<synchronous>, transform_indices = @transform_7, window_bounds = array<i64: 1, 256>}, {pipeline_mode = #tpu.pipeline_mode<synchronous>, transform_indices = @transform_8, window_bounds = array<i64: 1, 256>}, {pipeline_mode = #tpu.pipeline_mode<synchronous>, transform_indices = @transform_9, window_bounds = array<i64: 8, 256, 256>}, {pipeline_mode = #tpu.pipeline_mode<synchronous>, transform_indices = @transform_10, window_bounds = array<i64: 1, 256>}, {pipeline_mode = #tpu.pipeline_mode<synchronous>, transform_indices = @transform_11, window_bounds = array<i64: 1, 256>}, {pipeline_mode = #tpu.pipeline_mode<synchronous>, transform_indices = @transform_12, window_bounds = array<i64: 1, 256>}, {pipeline_mode = #tpu.pipeline_mode<synchronous>, transform_indices = @transform_13, window_bounds = array<i64: 8, 256, 64>}, {pipeline_mode = #tpu.pipeline_mode<synchronous>, transform_indices = @transform_14, window_bounds = array<i64: 1, 64>}, {transform_indices = @transform_15, window_bounds = array<i64: 1, 32, 128>}]} {
    %cst = arith.constant 0.000000e+00 : f32
    %0 = vector.broadcast %cst : f32 to vector<2x64xf32>
    %c0 = arith.constant 0 : index
    %c0_0 = arith.constant 0 : index
    %1 = vector.load %arg17[%c0, %c0_0] : memref<8x64xf32, #tpu.memory_space<vmem>>, vector<2x64xf32>
    tpu.vector_store %arg17[%c0, %c0_0], %0 {strides = array<i32>} : memref<8x64xf32, #tpu.memory_space<vmem>>, vector<2x64xf32>,
    %cst_1 = arith.constant 0.000000e+00 : f32
    %2 = vector.broadcast %cst_1 : f32 to vector<2x64xf32>
    %c6 = arith.constant 6 : index
    %c0_2 = arith.constant 0 : index
    %3 = vector.load %arg17[%c6, %c0_2] : memref<8x64xf32, #tpu.memory_space<vmem>>, vector<2x64xf32>
    tpu.vector_store %arg17[%c6, %c0_2], %2 {strides = array<i32>} : memref<8x64xf32, #tpu.memory_space<vmem>>, vector<2x64xf32>,
    %c0_3 = arith.constant 0 : index
    %c0_4 = arith.constant 0 : index
    %c0_5 = arith.constant 0 : index
    %4 = vector.load %arg1[%c0_3, %c0_4, %c0_5] : memref<1x4x64xf32, #tpu.memory_space<vmem>>, vector<1x4x64xf32>
    %5 = vector.shape_cast %4 : vector<1x4x64xf32> to vector<4x64xf32>
    %c2 = arith.constant 2 : index
    %c0_6 = arith.constant 0 : index
    %6 = vector.load %arg17[%c2, %c0_6] : memref<8x64xf32, #tpu.memory_space<vmem>>, vector<4x64xf32>
    tpu.vector_store %arg17[%c2, %c0_6], %5 {strides = array<i32>} : memref<8x64xf32, #tpu.memory_space<vmem>>, vector<4x64xf32>,
    %cst_7 = arith.constant 0.000000e+00 : f32
    %7 = vector.broadcast %cst_7 : f32 to vector<4x256xf32>
    %c0_8 = arith.constant 0 : index
    %c0_9 = arith.constant 0 : index
    %8 = vector.load %arg17[%c0_8, %c0_9] : memref<8x64xf32, #tpu.memory_space<vmem>>, vector<4x64xf32>
    %9 = arith.truncf %8 : vector<4x64xf32> to vector<4x64xbf16>
    %c0_10 = arith.constant 0 : index
    %c0_11 = arith.constant 0 : index
    %c0_12 = arith.constant 0 : index
    %10 = vector.load %arg2[%c0_10, %c0_11, %c0_12] : memref<8x64x256xbf16, #tpu.memory_space<vmem>>, vector<1x64x256xbf16>
    %11 = vector.shape_cast %10 : vector<1x64x256xbf16> to vector<64x256xbf16>
    %cst_13 = arith.constant dense<0.000000e+00> : vector<4x256xf32>
    %12 = tpu.matmul %9, %11, %cst_13 {dimension_numbers = #tpu.dot_dimension_numbers<[1], [0], [0], [1], [0, 0, 1, 1], [], []>} : vector<4x64xbf16>, vector<64x256xbf16>, vector<4x256xf32> -> vector<4x256xf32>
    %13 = arith.addf %7, %12 : vector<4x256xf32>
    %c1 = arith.constant 1 : index
    %c0_14 = arith.constant 0 : index
    %14 = vector.load %arg17[%c1, %c0_14] : memref<8x64xf32, #tpu.memory_space<vmem>>, vector<4x64xf32>
    %15 = arith.truncf %14 : vector<4x64xf32> to vector<4x64xbf16>
    %c1_15 = arith.constant 1 : index
    %c0_16 = arith.constant 0 : index
    %c0_17 = arith.constant 0 : index
    %16 = vector.load %arg2[%c1_15, %c0_16, %c0_17] : memref<8x64x256xbf16, #tpu.memory_space<vmem>>, vector<1x64x256xbf16>
    %17 = vector.shape_cast %16 : vector<1x64x256xbf16> to vector<64x256xbf16>
    %cst_18 = arith.constant dense<0.000000e+00> : vector<4x256xf32>
    %18 = tpu.matmul %15, %17, %cst_18 {dimension_numbers = #tpu.dot_dimension_numbers<[1], [0], [0], [1], [0, 0, 1, 1], [], []>} : vector<4x64xbf16>, vector<64x256xbf16>, vector<4x256xf32> -> vector<4x256xf32>
    %19 = arith.addf %13, %18 : vector<4x256xf32>
    %c2_19 = arith.constant 2 : index
    %c0_20 = arith.constant 0 : index
    %20 = vector.load %arg17[%c2_19, %c0_20] : memref<8x64xf32, #tpu.memory_space<vmem>>, vector<4x64xf32>
    %21 = arith.truncf %20 : vector<4x64xf32> to vector<4x64xbf16>
    %c2_21 = arith.constant 2 : index
    %c0_22 = arith.constant 0 : index
    %c0_23 = arith.constant 0 : index
    %22 = vector.load %arg2[%c2_21, %c0_22, %c0_23] : memref<8x64x256xbf16, #tpu.memory_space<vmem>>, vector<1x64x256xbf16>
    %23 = vector.shape_cast %22 : vector<1x64x256xbf16> to vector<64x256xbf16>
    %cst_24 = arith.constant dense<0.000000e+00> : vector<4x256xf32>
    %24 = tpu.matmul %21, %23, %cst_24 {dimension_numbers = #tpu.dot_dimension_numbers<[1], [0], [0], [1], [0, 0, 1, 1], [], []>} : vector<4x64xbf16>, vector<64x256xbf16>, vector<4x256xf32> -> vector<4x256xf32>
    %25 = arith.addf %19, %24 : vector<4x256xf32>
    %c3 = arith.constant 3 : index
    %c0_25 = arith.constant 0 : index
    %26 = vector.load %arg17[%c3, %c0_25] : memref<8x64xf32, #tpu.memory_space<vmem>>, vector<4x64xf32>
    %27 = arith.truncf %26 : vector<4x64xf32> to vector<4x64xbf16>
    %c3_26 = arith.constant 3 : index
    %c0_27 = arith.constant 0 : index
    %c0_28 = arith.constant 0 : index
    %28 = vector.load %arg2[%c3_26, %c0_27, %c0_28] : memref<8x64x256xbf16, #tpu.memory_space<vmem>>, vector<1x64x256xbf16>
    %29 = vector.shape_cast %28 : vector<1x64x256xbf16> to vector<64x256xbf16>
    %cst_29 = arith.constant dense<0.000000e+00> : vector<4x256xf32>
    %30 = tpu.matmul %27, %29, %cst_29 {dimension_numbers = #tpu.dot_dimension_numbers<[1], [0], [0], [1], [0, 0, 1, 1], [], []>} : vector<4x64xbf16>, vector<64x256xbf16>, vector<4x256xf32> -> vector<4x256xf32>
    %31 = arith.addf %25, %30 : vector<4x256xf32>
    %cst_30 = arith.constant 0.000000e+00 : f32
    %32 = vector.broadcast %cst_30 : f32 to vector<4x256xf32>
    %c1_31 = arith.constant 1 : index
    %c0_32 = arith.constant 0 : index
    %33 = vector.load %arg17[%c1_31, %c0_32] : memref<8x64xf32, #tpu.memory_space<vmem>>, vector<4x64xf32>
    %34 = arith.truncf %33 : vector<4x64xf32> to vector<4x64xbf16>
    %c4 = arith.constant 4 : index
    %c0_33 = arith.constant 0 : index
    %c0_34 = arith.constant 0 : index
    %35 = vector.load %arg2[%c4, %c0_33, %c0_34] : memref<8x64x256xbf16, #tpu.memory_space<vmem>>, vector<1x64x256xbf16>
    %36 = vector.shape_cast %35 : vector<1x64x256xbf16> to vector<64x256xbf16>
    %cst_35 = arith.constant dense<0.000000e+00> : vector<4x256xf32>
    %37 = tpu.matmul %34, %36, %cst_35 {dimension_numbers = #tpu.dot_dimension_numbers<[1], [0], [0], [1], [0, 0, 1, 1], [], []>} : vector<4x64xbf16>, vector<64x256xbf16>, vector<4x256xf32> -> vector<4x256xf32>
    %38 = arith.addf %32, %37 : vector<4x256xf32>
    %c2_36 = arith.constant 2 : index
    %c0_37 = arith.constant 0 : index
    %39 = vector.load %arg17[%c2_36, %c0_37] : memref<8x64xf32, #tpu.memory_space<vmem>>, vector<4x64xf32>
    %40 = arith.truncf %39 : vector<4x64xf32> to vector<4x64xbf16>
    %c5 = arith.constant 5 : index
    %c0_38 = arith.constant 0 : index
    %c0_39 = arith.constant 0 : index
    %41 = vector.load %arg2[%c5, %c0_38, %c0_39] : memref<8x64x256xbf16, #tpu.memory_space<vmem>>, vector<1x64x256xbf16>
    %42 = vector.shape_cast %41 : vector<1x64x256xbf16> to vector<64x256xbf16>
    %cst_40 = arith.constant dense<0.000000e+00> : vector<4x256xf32>
    %43 = tpu.matmul %40, %42, %cst_40 {dimension_numbers = #tpu.dot_dimension_numbers<[1], [0], [0], [1], [0, 0, 1, 1], [], []>} : vector<4x64xbf16>, vector<64x256xbf16>, vector<4x256xf32> -> vector<4x256xf32>
    %44 = arith.addf %38, %43 : vector<4x256xf32>
    %c3_41 = arith.constant 3 : index
    %c0_42 = arith.constant 0 : index
    %45 = vector.load %arg17[%c3_41, %c0_42] : memref<8x64xf32, #tpu.memory_space<vmem>>, vector<4x64xf32>
    %46 = arith.truncf %45 : vector<4x64xf32> to vector<4x64xbf16>
    %c6_43 = arith.constant 6 : index
    %c0_44 = arith.constant 0 : index
    %c0_45 = arith.constant 0 : index
    %47 = vector.load %arg2[%c6_43, %c0_44, %c0_45] : memref<8x64x256xbf16, #tpu.memory_space<vmem>>, vector<1x64x256xbf16>
    %48 = vector.shape_cast %47 : vector<1x64x256xbf16> to vector<64x256xbf16>
    %cst_46 = arith.constant dense<0.000000e+00> : vector<4x256xf32>
    %49 = tpu.matmul %46, %48, %cst_46 {dimension_numbers = #tpu.dot_dimension_numbers<[1], [0], [0], [1], [0, 0, 1, 1], [], []>} : vector<4x64xbf16>, vector<64x256xbf16>, vector<4x256xf32> -> vector<4x256xf32>
    %50 = arith.addf %44, %49 : vector<4x256xf32>
    %c4_47 = arith.constant 4 : index
    %c0_48 = arith.constant 0 : index
    %51 = vector.load %arg17[%c4_47, %c0_48] : memref<8x64xf32, #tpu.memory_space<vmem>>, vector<4x64xf32>
    %52 = arith.truncf %51 : vector<4x64xf32> to vector<4x64xbf16>
    %c7 = arith.constant 7 : index
    %c0_49 = arith.constant 0 : index
    %c0_50 = arith.constant 0 : index
    %53 = vector.load %arg2[%c7, %c0_49, %c0_50] : memref<8x64x256xbf16, #tpu.memory_space<vmem>>, vector<1x64x256xbf16>
    %54 = vector.shape_cast %53 : vector<1x64x256xbf16> to vector<64x256xbf16>
    %cst_51 = arith.constant dense<0.000000e+00> : vector<4x256xf32>
    %55 = tpu.matmul %52, %54, %cst_51 {dimension_numbers = #tpu.dot_dimension_numbers<[1], [0], [0], [1], [0, 0, 1, 1], [], []>} : vector<4x64xbf16>, vector<64x256xbf16>, vector<4x256xf32> -> vector<4x256xf32>
    %56 = arith.addf %50, %55 : vector<4x256xf32>
    %c0_52 = arith.constant 0 : index
    %c0_53 = arith.constant 0 : index
    %57 = vector.load %arg3[%c0_52, %c0_53] : memref<1x256xf32, #tpu.memory_space<vmem>>, vector<1x256xf32>
    %58 = vector.broadcast %57 : vector<1x256xf32> to vector<4x256xf32>
    %59 = arith.addf %31, %58 : vector<4x256xf32>
    %cst_54 = arith.constant 0.000000e+00 : f32
    %60 = vector.broadcast %cst_54 : f32 to vector<4x256xf32>
    %61 = arith.maximumf %59, %60 : vector<4x256xf32>
    %c0_55 = arith.constant 0 : index
    %c0_56 = arith.constant 0 : index
    %62 = vector.load %arg3[%c0_55, %c0_56] : memref<1x256xf32, #tpu.memory_space<vmem>>, vector<1x256xf32>
    %63 = vector.broadcast %62 : vector<1x256xf32> to vector<4x256xf32>
    %64 = arith.addf %56, %63 : vector<4x256xf32>
    %cst_57 = arith.constant 0.000000e+00 : f32
    %65 = vector.broadcast %cst_57 : f32 to vector<4x256xf32>
    %66 = arith.maximumf %64, %65 : vector<4x256xf32>
    %67 = vector.shape_cast %61 : vector<4x256xf32> to vector<1x4x256xf32>
    %cst_58 = arith.constant dense<0.000000e+00> : vector<1xf32>
    %68 = vector.multi_reduction <add>, %67, %cst_58 [1, 2] : vector<1x4x256xf32> to vector<1xf32>
    %69 = vector.shape_cast %68 : vector<1xf32> to vector<1x1x1xf32>
    %70 = vector.extract %69[0, 0, 0] : f32 from vector<1x1x1xf32>
    %71 = vector.shape_cast %66 : vector<4x256xf32> to vector<1x4x256xf32>
    %cst_59 = arith.constant dense<0.000000e+00> : vector<1xf32>
    %72 = vector.multi_reduction <add>, %71, %cst_59 [1, 2] : vector<1x4x256xf32> to vector<1xf32>
    %73 = vector.shape_cast %72 : vector<1xf32> to vector<1x1x1xf32>
    %74 = vector.extract %73[0, 0, 0] : f32 from vector<1x1x1xf32>
    %75 = arith.addf %70, %74 : f32
    %cst_60 = arith.constant 2.048000e+03 : f32
    %76 = arith.divf %75, %cst_60 : f32
    %77 = vector.broadcast %76 : f32 to vector<4x256xf32>
    %78 = arith.subf %61, %77 : vector<4x256xf32>
    %79 = vector.broadcast %76 : f32 to vector<4x256xf32>
    %80 = arith.subf %66, %79 : vector<4x256xf32>
    %81 = arith.mulf %78, %78 : vector<4x256xf32>
    %82 = vector.shape_cast %81 : vector<4x256xf32> to vector<1x4x256xf32>
    %cst_61 = arith.constant dense<0.000000e+00> : vector<1xf32>
    %83 = vector.multi_reduction <add>, %82, %cst_61 [1, 2] : vector<1x4x256xf32> to vector<1xf32>
    %84 = vector.shape_cast %83 : vector<1xf32> to vector<1x1x1xf32>
    %85 = vector.extract %84[0, 0, 0] : f32 from vector<1x1x1xf32>
    %86 = arith.mulf %80, %80 : vector<4x256xf32>
    %87 = vector.shape_cast %86 : vector<4x256xf32> to vector<1x4x256xf32>
    %cst_62 = arith.constant dense<0.000000e+00> : vector<1xf32>
    %88 = vector.multi_reduction <add>, %87, %cst_62 [1, 2] : vector<1x4x256xf32> to vector<1xf32>
    %89 = vector.shape_cast %88 : vector<1xf32> to vector<1x1x1xf32>
    %90 = vector.extract %89[0, 0, 0] : f32 from vector<1x1x1xf32>
    %91 = arith.addf %85, %90 : f32
    %cst_63 = arith.constant 2.048000e+03 : f32
    %92 = arith.divf %91, %cst_63 : f32
    %cst_64 = arith.constant 9.99999974E-6 : f32
    %93 = arith.addf %92, %cst_64 : f32
    %94 = math.rsqrt %93 : f32
    %95 = vector.broadcast %94 : f32 to vector<4x256xf32>
    %96 = arith.mulf %78, %95 : vector<4x256xf32>
    %c0_65 = arith.constant 0 : index
    %c0_66 = arith.constant 0 : index
    %97 = vector.load %arg4[%c0_65, %c0_66] : memref<1x256xf32, #tpu.memory_space<vmem>>, vector<1x256xf32>
    %98 = vector.broadcast %97 : vector<1x256xf32> to vector<4x256xf32>
    %99 = arith.mulf %96, %98 : vector<4x256xf32>
    %c0_67 = arith.constant 0 : index
    %c0_68 = arith.constant 0 : index
    %100 = vector.load %arg5[%c0_67, %c0_68] : memref<1x256xf32, #tpu.memory_space<vmem>>, vector<1x256xf32>
    %101 = vector.broadcast %100 : vector<1x256xf32> to vector<4x256xf32>
    %102 = arith.addf %99, %101 : vector<4x256xf32>
    %103 = vector.broadcast %94 : f32 to vector<4x256xf32>
    %104 = arith.mulf %80, %103 : vector<4x256xf32>
    %c0_69 = arith.constant 0 : index
    %c0_70 = arith.constant 0 : index
    %105 = vector.load %arg4[%c0_69, %c0_70] : memref<1x256xf32, #tpu.memory_space<vmem>>, vector<1x256xf32>
    %106 = vector.broadcast %105 : vector<1x256xf32> to vector<4x256xf32>
    %107 = arith.mulf %104, %106 : vector<4x256xf32>
    %c0_71 = arith.constant 0 : index
    %c0_72 = arith.constant 0 : index
    %108 = vector.load %arg5[%c0_71, %c0_72] : memref<1x256xf32, #tpu.memory_space<vmem>>, vector<1x256xf32>
    %109 = vector.broadcast %108 : vector<1x256xf32> to vector<4x256xf32>
    %110 = arith.addf %107, %109 : vector<4x256xf32>
    %111 = vector.shape_cast %102 : vector<4x256xf32> to vector<4x1x256xf32>
    %112 = vector.shape_cast %110 : vector<4x256xf32> to vector<4x1x256xf32>
    %113 = tpu.concatenate %111, %112 in 1 : vector<4x1x256xf32>, vector<4x1x256xf32> -> vector<4x2x256xf32>
    %114 = vector.shape_cast %113 : vector<4x2x256xf32> to vector<8x256xf32>
    %cst_73 = arith.constant 0.000000e+00 : f32
    %115 = vector.broadcast %cst_73 : f32 to vector<2x256xf32>
    %c0_74 = arith.constant 0 : index
    %c0_75 = arith.constant 0 : index
    %116 = vector.load %arg18[%c0_74, %c0_75] : memref<12x256xf32, #tpu.memory_space<vmem>>, vector<2x256xf32>
    tpu.vector_store %arg18[%c0_74, %c0_75], %115 {strides = array<i32>} : memref<12x256xf32, #tpu.memory_space<vmem>>, vector<2x256xf32>,
    %cst_76 = arith.constant 0.000000e+00 : f32
    %117 = vector.broadcast %cst_76 : f32 to vector<2x256xf32>
    %c10 = arith.constant 10 : index
    %c0_77 = arith.constant 0 : index
    %118 = vector.load %arg18[%c10, %c0_77] : memref<12x256xf32, #tpu.memory_space<vmem>>, vector<2x256xf32>
    tpu.vector_store %arg18[%c10, %c0_77], %117 {strides = array<i32>} : memref<12x256xf32, #tpu.memory_space<vmem>>, vector<2x256xf32>,
    %c2_78 = arith.constant 2 : index
    %c0_79 = arith.constant 0 : index
    %119 = vector.load %arg18[%c2_78, %c0_79] : memref<12x256xf32, #tpu.memory_space<vmem>>, vector<8x256xf32>
    tpu.vector_store %arg18[%c2_78, %c0_79], %114 {strides = array<i32>} : memref<12x256xf32, #tpu.memory_space<vmem>>, vector<8x256xf32>,
    %cst_80 = arith.constant 0.000000e+00 : f32
    %120 = vector.broadcast %cst_80 : f32 to vector<8x256xf32>
    %c0_81 = arith.constant 0 : index
    %c0_82 = arith.constant 0 : index
    %121 = vector.load %arg18[%c0_81, %c0_82] : memref<12x256xf32, #tpu.memory_space<vmem>>, vector<8x256xf32>
    %122 = arith.truncf %121 : vector<8x256xf32> to vector<8x256xbf16>
    %c0_83 = arith.constant 0 : index
    %c0_84 = arith.constant 0 : index
    %c0_85 = arith.constant 0 : index
    %123 = vector.load %arg6[%c0_83, %c0_84, %c0_85] : memref<8x256x256xbf16, #tpu.memory_space<vmem>>, vector<1x256x256xbf16>
    %124 = vector.shape_cast %123 : vector<1x256x256xbf16> to vector<256x256xbf16>
    %cst_86 = arith.constant dense<0.000000e+00> : vector<8x256xf32>
    %125 = tpu.matmul %122, %124, %cst_86 {dimension_numbers = #tpu.dot_dimension_numbers<[1], [0], [0], [1], [0, 0, 1, 1], [], []>} : vector<8x256xbf16>, vector<256x256xbf16>, vector<8x256xf32> -> vector<8x256xf32>
    %126 = arith.addf %120, %125 : vector<8x256xf32>
    %c1_87 = arith.constant 1 : index
    %c0_88 = arith.constant 0 : index
    %127 = vector.load %arg18[%c1_87, %c0_88] : memref<12x256xf32, #tpu.memory_space<vmem>>, vector<8x256xf32>
    %128 = arith.truncf %127 : vector<8x256xf32> to vector<8x256xbf16>
    %c1_89 = arith.constant 1 : index
    %c0_90 = arith.constant 0 : index
    %c0_91 = arith.constant 0 : index
    %129 = vector.load %arg6[%c1_89, %c0_90, %c0_91] : memref<8x256x256xbf16, #tpu.memory_space<vmem>>, vector<1x256x256xbf16>
    %130 = vector.shape_cast %129 : vector<1x256x256xbf16> to vector<256x256xbf16>
    %cst_92 = arith.constant dense<0.000000e+00> : vector<8x256xf32>
    %131 = tpu.matmul %128, %130, %cst_92 {dimension_numbers = #tpu.dot_dimension_numbers<[1], [0], [0], [1], [0, 0, 1, 1], [], []>} : vector<8x256xbf16>, vector<256x256xbf16>, vector<8x256xf32> -> vector<8x256xf32>
    %132 = arith.addf %126, %131 : vector<8x256xf32>
    %c2_93 = arith.constant 2 : index
    %c0_94 = arith.constant 0 : index
    %133 = vector.load %arg18[%c2_93, %c0_94] : memref<12x256xf32, #tpu.memory_space<vmem>>, vector<8x256xf32>
    %134 = arith.truncf %133 : vector<8x256xf32> to vector<8x256xbf16>
    %c2_95 = arith.constant 2 : index
    %c0_96 = arith.constant 0 : index
    %c0_97 = arith.constant 0 : index
    %135 = vector.load %arg6[%c2_95, %c0_96, %c0_97] : memref<8x256x256xbf16, #tpu.memory_space<vmem>>, vector<1x256x256xbf16>
    %136 = vector.shape_cast %135 : vector<1x256x256xbf16> to vector<256x256xbf16>
    %cst_98 = arith.constant dense<0.000000e+00> : vector<8x256xf32>
    %137 = tpu.matmul %134, %136, %cst_98 {dimension_numbers = #tpu.dot_dimension_numbers<[1], [0], [0], [1], [0, 0, 1, 1], [], []>} : vector<8x256xbf16>, vector<256x256xbf16>, vector<8x256xf32> -> vector<8x256xf32>
    %138 = arith.addf %132, %137 : vector<8x256xf32>
    %c3_99 = arith.constant 3 : index
    %c0_100 = arith.constant 0 : index
    %139 = vector.load %arg18[%c3_99, %c0_100] : memref<12x256xf32, #tpu.memory_space<vmem>>, vector<8x256xf32>
    %140 = arith.truncf %139 : vector<8x256xf32> to vector<8x256xbf16>
    %c3_101 = arith.constant 3 : index
    %c0_102 = arith.constant 0 : index
    %c0_103 = arith.constant 0 : index
    %141 = vector.load %arg6[%c3_101, %c0_102, %c0_103] : memref<8x256x256xbf16, #tpu.memory_space<vmem>>, vector<1x256x256xbf16>
    %142 = vector.shape_cast %141 : vector<1x256x256xbf16> to vector<256x256xbf16>
    %cst_104 = arith.constant dense<0.000000e+00> : vector<8x256xf32>
    %143 = tpu.matmul %140, %142, %cst_104 {dimension_numbers = #tpu.dot_dimension_numbers<[1], [0], [0], [1], [0, 0, 1, 1], [], []>} : vector<8x256xbf16>, vector<256x256xbf16>, vector<8x256xf32> -> vector<8x256xf32>
    %144 = arith.addf %138, %143 : vector<8x256xf32>
    %cst_105 = arith.constant 0.000000e+00 : f32
    %145 = vector.broadcast %cst_105 : f32 to vector<8x256xf32>
    %c1_106 = arith.constant 1 : index
    %c0_107 = arith.constant 0 : index
    %146 = vector.load %arg18[%c1_106, %c0_107] : memref<12x256xf32, #tpu.memory_space<vmem>>, vector<8x256xf32>
    %147 = arith.truncf %146 : vector<8x256xf32> to vector<8x256xbf16>
    %c4_108 = arith.constant 4 : index
    %c0_109 = arith.constant 0 : index
    %c0_110 = arith.constant 0 : index
    %148 = vector.load %arg6[%c4_108, %c0_109, %c0_110] : memref<8x256x256xbf16, #tpu.memory_space<vmem>>, vector<1x256x256xbf16>
    %149 = vector.shape_cast %148 : vector<1x256x256xbf16> to vector<256x256xbf16>
    %cst_111 = arith.constant dense<0.000000e+00> : vector<8x256xf32>
    %150 = tpu.matmul %147, %149, %cst_111 {dimension_numbers = #tpu.dot_dimension_numbers<[1], [0], [0], [1], [0, 0, 1, 1], [], []>} : vector<8x256xbf16>, vector<256x256xbf16>, vector<8x256xf32> -> vector<8x256xf32>
    %151 = arith.addf %145, %150 : vector<8x256xf32>
    %c2_112 = arith.constant 2 : index
    %c0_113 = arith.constant 0 : index
    %152 = vector.load %arg18[%c2_112, %c0_113] : memref<12x256xf32, #tpu.memory_space<vmem>>, vector<8x256xf32>
    %153 = arith.truncf %152 : vector<8x256xf32> to vector<8x256xbf16>
    %c5_114 = arith.constant 5 : index
    %c0_115 = arith.constant 0 : index
    %c0_116 = arith.constant 0 : index
    %154 = vector.load %arg6[%c5_114, %c0_115, %c0_116] : memref<8x256x256xbf16, #tpu.memory_space<vmem>>, vector<1x256x256xbf16>
    %155 = vector.shape_cast %154 : vector<1x256x256xbf16> to vector<256x256xbf16>
    %cst_117 = arith.constant dense<0.000000e+00> : vector<8x256xf32>
    %156 = tpu.matmul %153, %155, %cst_117 {dimension_numbers = #tpu.dot_dimension_numbers<[1], [0], [0], [1], [0, 0, 1, 1], [], []>} : vector<8x256xbf16>, vector<256x256xbf16>, vector<8x256xf32> -> vector<8x256xf32>
    %157 = arith.addf %151, %156 : vector<8x256xf32>
    %c3_118 = arith.constant 3 : index
    %c0_119 = arith.constant 0 : index
    %158 = vector.load %arg18[%c3_118, %c0_119] : memref<12x256xf32, #tpu.memory_space<vmem>>, vector<8x256xf32>
    %159 = arith.truncf %158 : vector<8x256xf32> to vector<8x256xbf16>
    %c6_120 = arith.constant 6 : index
    %c0_121 = arith.constant 0 : index
    %c0_122 = arith.constant 0 : index
    %160 = vector.load %arg6[%c6_120, %c0_121, %c0_122] : memref<8x256x256xbf16, #tpu.memory_space<vmem>>, vector<1x256x256xbf16>
    %161 = vector.shape_cast %160 : vector<1x256x256xbf16> to vector<256x256xbf16>
    %cst_123 = arith.constant dense<0.000000e+00> : vector<8x256xf32>
    %162 = tpu.matmul %159, %161, %cst_123 {dimension_numbers = #tpu.dot_dimension_numbers<[1], [0], [0], [1], [0, 0, 1, 1], [], []>} : vector<8x256xbf16>, vector<256x256xbf16>, vector<8x256xf32> -> vector<8x256xf32>
    %163 = arith.addf %157, %162 : vector<8x256xf32>
    %c4_124 = arith.constant 4 : index
    %c0_125 = arith.constant 0 : index
    %164 = vector.load %arg18[%c4_124, %c0_125] : memref<12x256xf32, #tpu.memory_space<vmem>>, vector<8x256xf32>
    %165 = arith.truncf %164 : vector<8x256xf32> to vector<8x256xbf16>
    %c7_126 = arith.constant 7 : index
    %c0_127 = arith.constant 0 : index
    %c0_128 = arith.constant 0 : index
    %166 = vector.load %arg6[%c7_126, %c0_127, %c0_128] : memref<8x256x256xbf16, #tpu.memory_space<vmem>>, vector<1x256x256xbf16>
    %167 = vector.shape_cast %166 : vector<1x256x256xbf16> to vector<256x256xbf16>
    %cst_129 = arith.constant dense<0.000000e+00> : vector<8x256xf32>
    %168 = tpu.matmul %165, %167, %cst_129 {dimension_numbers = #tpu.dot_dimension_numbers<[1], [0], [0], [1], [0, 0, 1, 1], [], []>} : vector<8x256xbf16>, vector<256x256xbf16>, vector<8x256xf32> -> vector<8x256xf32>
    %169 = arith.addf %163, %168 : vector<8x256xf32>
    %c0_130 = arith.constant 0 : index
    %c0_131 = arith.constant 0 : index
    %170 = vector.load %arg7[%c0_130, %c0_131] : memref<1x256xf32, #tpu.memory_space<vmem>>, vector<1x256xf32>
    %171 = vector.broadcast %170 : vector<1x256xf32> to vector<8x256xf32>
    %172 = arith.addf %144, %171 : vector<8x256xf32>
    %cst_132 = arith.constant 0.000000e+00 : f32
    %173 = vector.broadcast %cst_132 : f32 to vector<8x256xf32>
    %174 = arith.maximumf %172, %173 : vector<8x256xf32>
    %c0_133 = arith.constant 0 : index
    %c0_134 = arith.constant 0 : index
    %175 = vector.load %arg7[%c0_133, %c0_134] : memref<1x256xf32, #tpu.memory_space<vmem>>, vector<1x256xf32>
    %176 = vector.broadcast %175 : vector<1x256xf32> to vector<8x256xf32>
    %177 = arith.addf %169, %176 : vector<8x256xf32>
    %cst_135 = arith.constant 0.000000e+00 : f32
    %178 = vector.broadcast %cst_135 : f32 to vector<8x256xf32>
    %179 = arith.maximumf %177, %178 : vector<8x256xf32>
    %180 = vector.shape_cast %174 : vector<8x256xf32> to vector<1x8x256xf32>
    %cst_136 = arith.constant dense<0.000000e+00> : vector<1xf32>
    %181 = vector.multi_reduction <add>, %180, %cst_136 [1, 2] : vector<1x8x256xf32> to vector<1xf32>
    %182 = vector.shape_cast %181 : vector<1xf32> to vector<1x1x1xf32>
    %183 = vector.extract %182[0, 0, 0] : f32 from vector<1x1x1xf32>
    %184 = vector.shape_cast %179 : vector<8x256xf32> to vector<1x8x256xf32>
    %cst_137 = arith.constant dense<0.000000e+00> : vector<1xf32>
    %185 = vector.multi_reduction <add>, %184, %cst_137 [1, 2] : vector<1x8x256xf32> to vector<1xf32>
    %186 = vector.shape_cast %185 : vector<1xf32> to vector<1x1x1xf32>
    %187 = vector.extract %186[0, 0, 0] : f32 from vector<1x1x1xf32>
    %188 = arith.addf %183, %187 : f32
    %cst_138 = arith.constant 4.096000e+03 : f32
    %189 = arith.divf %188, %cst_138 : f32
    %190 = vector.broadcast %189 : f32 to vector<8x256xf32>
    %191 = arith.subf %174, %190 : vector<8x256xf32>
    %192 = vector.broadcast %189 : f32 to vector<8x256xf32>
    %193 = arith.subf %179, %192 : vector<8x256xf32>
    %194 = arith.mulf %191, %191 : vector<8x256xf32>
    %195 = vector.shape_cast %194 : vector<8x256xf32> to vector<1x8x256xf32>
    %cst_139 = arith.constant dense<0.000000e+00> : vector<1xf32>
    %196 = vector.multi_reduction <add>, %195, %cst_139 [1, 2] : vector<1x8x256xf32> to vector<1xf32>
    %197 = vector.shape_cast %196 : vector<1xf32> to vector<1x1x1xf32>
    %198 = vector.extract %197[0, 0, 0] : f32 from vector<1x1x1xf32>
    %199 = arith.mulf %193, %193 : vector<8x256xf32>
    %200 = vector.shape_cast %199 : vector<8x256xf32> to vector<1x8x256xf32>
    %cst_140 = arith.constant dense<0.000000e+00> : vector<1xf32>
    %201 = vector.multi_reduction <add>, %200, %cst_140 [1, 2] : vector<1x8x256xf32> to vector<1xf32>
    %202 = vector.shape_cast %201 : vector<1xf32> to vector<1x1x1xf32>
    %203 = vector.extract %202[0, 0, 0] : f32 from vector<1x1x1xf32>
    %204 = arith.addf %198, %203 : f32
    %cst_141 = arith.constant 4.096000e+03 : f32
    %205 = arith.divf %204, %cst_141 : f32
    %cst_142 = arith.constant 9.99999974E-6 : f32
    %206 = arith.addf %205, %cst_142 : f32
    %207 = math.rsqrt %206 : f32
    %208 = vector.broadcast %207 : f32 to vector<8x256xf32>
    %209 = arith.mulf %191, %208 : vector<8x256xf32>
    %c0_143 = arith.constant 0 : index
    %c0_144 = arith.constant 0 : index
    %210 = vector.load %arg8[%c0_143, %c0_144] : memref<1x256xf32, #tpu.memory_space<vmem>>, vector<1x256xf32>
    %211 = vector.broadcast %210 : vector<1x256xf32> to vector<8x256xf32>
    %212 = arith.mulf %209, %211 : vector<8x256xf32>
    %c0_145 = arith.constant 0 : index
    %c0_146 = arith.constant 0 : index
    %213 = vector.load %arg9[%c0_145, %c0_146] : memref<1x256xf32, #tpu.memory_space<vmem>>, vector<1x256xf32>
    %214 = vector.broadcast %213 : vector<1x256xf32> to vector<8x256xf32>
    %215 = arith.addf %212, %214 : vector<8x256xf32>
    %216 = vector.broadcast %207 : f32 to vector<8x256xf32>
    %217 = arith.mulf %193, %216 : vector<8x256xf32>
    %c0_147 = arith.constant 0 : index
    %c0_148 = arith.constant 0 : index
    %218 = vector.load %arg8[%c0_147, %c0_148] : memref<1x256xf32, #tpu.memory_space<vmem>>, vector<1x256xf32>
    %219 = vector.broadcast %218 : vector<1x256xf32> to vector<8x256xf32>
    %220 = arith.mulf %217, %219 : vector<8x256xf32>
    %c0_149 = arith.constant 0 : index
    %c0_150 = arith.constant 0 : index
    %221 = vector.load %arg9[%c0_149, %c0_150] : memref<1x256xf32, #tpu.memory_space<vmem>>, vector<1x256xf32>
    %222 = vector.broadcast %221 : vector<1x256xf32> to vector<8x256xf32>
    %223 = arith.addf %220, %222 : vector<8x256xf32>
    %224 = vector.shape_cast %215 : vector<8x256xf32> to vector<8x1x256xf32>
    %225 = vector.shape_cast %223 : vector<8x256xf32> to vector<8x1x256xf32>
    %226 = tpu.concatenate %224, %225 in 1 : vector<8x1x256xf32>, vector<8x1x256xf32> -> vector<8x2x256xf32>
    %227 = vector.shape_cast %226 : vector<8x2x256xf32> to vector<16x256xf32>
    %cst_151 = arith.constant 0.000000e+00 : f32
    %228 = vector.broadcast %cst_151 : f32 to vector<2x256xf32>
    %c0_152 = arith.constant 0 : index
    %c0_153 = arith.constant 0 : index
    %229 = vector.load %arg19[%c0_152, %c0_153] : memref<20x256xf32, #tpu.memory_space<vmem>>, vector<2x256xf32>
    tpu.vector_store %arg19[%c0_152, %c0_153], %228 {strides = array<i32>} : memref<20x256xf32, #tpu.memory_space<vmem>>, vector<2x256xf32>,
    %cst_154 = arith.constant 0.000000e+00 : f32
    %230 = vector.broadcast %cst_154 : f32 to vector<2x256xf32>
    %c18 = arith.constant 18 : index
    %c0_155 = arith.constant 0 : index
    %231 = vector.load %arg19[%c18, %c0_155] : memref<20x256xf32, #tpu.memory_space<vmem>>, vector<2x256xf32>
    tpu.vector_store %arg19[%c18, %c0_155], %230 {strides = array<i32>} : memref<20x256xf32, #tpu.memory_space<vmem>>, vector<2x256xf32>,
    %c2_156 = arith.constant 2 : index
    %c0_157 = arith.constant 0 : index
    %232 = vector.load %arg19[%c2_156, %c0_157] : memref<20x256xf32, #tpu.memory_space<vmem>>, vector<16x256xf32>
    tpu.vector_store %arg19[%c2_156, %c0_157], %227 {strides = array<i32>} : memref<20x256xf32, #tpu.memory_space<vmem>>, vector<16x256xf32>,
    %cst_158 = arith.constant 0.000000e+00 : f32
    %233 = vector.broadcast %cst_158 : f32 to vector<16x256xf32>
    %c0_159 = arith.constant 0 : index
    %c0_160 = arith.constant 0 : index
    %234 = vector.load %arg19[%c0_159, %c0_160] : memref<20x256xf32, #tpu.memory_space<vmem>>, vector<16x256xf32>
    %235 = arith.truncf %234 : vector<16x256xf32> to vector<16x256xbf16>
    %c0_161 = arith.constant 0 : index
    %c0_162 = arith.constant 0 : index
    %c0_163 = arith.constant 0 : index
    %236 = vector.load %arg10[%c0_161, %c0_162, %c0_163] : memref<8x256x256xbf16, #tpu.memory_space<vmem>>, vector<1x256x256xbf16>
    %237 = vector.shape_cast %236 : vector<1x256x256xbf16> to vector<256x256xbf16>
    %cst_164 = arith.constant dense<0.000000e+00> : vector<16x256xf32>
    %238 = tpu.matmul %235, %237, %cst_164 {dimension_numbers = #tpu.dot_dimension_numbers<[1], [0], [0], [1], [0, 0, 1, 1], [], []>} : vector<16x256xbf16>, vector<256x256xbf16>, vector<16x256xf32> -> vector<16x256xf32>
    %239 = arith.addf %233, %238 : vector<16x256xf32>
    %c1_165 = arith.constant 1 : index
    %c0_166 = arith.constant 0 : index
    %240 = vector.load %arg19[%c1_165, %c0_166] : memref<20x256xf32, #tpu.memory_space<vmem>>, vector<16x256xf32>
    %241 = arith.truncf %240 : vector<16x256xf32> to vector<16x256xbf16>
    %c1_167 = arith.constant 1 : index
    %c0_168 = arith.constant 0 : index
    %c0_169 = arith.constant 0 : index
    %242 = vector.load %arg10[%c1_167, %c0_168, %c0_169] : memref<8x256x256xbf16, #tpu.memory_space<vmem>>, vector<1x256x256xbf16>
    %243 = vector.shape_cast %242 : vector<1x256x256xbf16> to vector<256x256xbf16>
    %cst_170 = arith.constant dense<0.000000e+00> : vector<16x256xf32>
    %244 = tpu.matmul %241, %243, %cst_170 {dimension_numbers = #tpu.dot_dimension_numbers<[1], [0], [0], [1], [0, 0, 1, 1], [], []>} : vector<16x256xbf16>, vector<256x256xbf16>, vector<16x256xf32> -> vector<16x256xf32>
    %245 = arith.addf %239, %244 : vector<16x256xf32>
    %c2_171 = arith.constant 2 : index
    %c0_172 = arith.constant 0 : index
    %246 = vector.load %arg19[%c2_171, %c0_172] : memref<20x256xf32, #tpu.memory_space<vmem>>, vector<16x256xf32>
    %247 = arith.truncf %246 : vector<16x256xf32> to vector<16x256xbf16>
    %c2_173 = arith.constant 2 : index
    %c0_174 = arith.constant 0 : index
    %c0_175 = arith.constant 0 : index
    %248 = vector.load %arg10[%c2_173, %c0_174, %c0_175] : memref<8x256x256xbf16, #tpu.memory_space<vmem>>, vector<1x256x256xbf16>
    %249 = vector.shape_cast %248 : vector<1x256x256xbf16> to vector<256x256xbf16>
    %cst_176 = arith.constant dense<0.000000e+00> : vector<16x256xf32>
    %250 = tpu.matmul %247, %249, %cst_176 {dimension_numbers = #tpu.dot_dimension_numbers<[1], [0], [0], [1], [0, 0, 1, 1], [], []>} : vector<16x256xbf16>, vector<256x256xbf16>, vector<16x256xf32> -> vector<16x256xf32>
    %251 = arith.addf %245, %250 : vector<16x256xf32>
    %c3_177 = arith.constant 3 : index
    %c0_178 = arith.constant 0 : index
    %252 = vector.load %arg19[%c3_177, %c0_178] : memref<20x256xf32, #tpu.memory_space<vmem>>, vector<16x256xf32>
    %253 = arith.truncf %252 : vector<16x256xf32> to vector<16x256xbf16>
    %c3_179 = arith.constant 3 : index
    %c0_180 = arith.constant 0 : index
    %c0_181 = arith.constant 0 : index
    %254 = vector.load %arg10[%c3_179, %c0_180, %c0_181] : memref<8x256x256xbf16, #tpu.memory_space<vmem>>, vector<1x256x256xbf16>
    %255 = vector.shape_cast %254 : vector<1x256x256xbf16> to vector<256x256xbf16>
    %cst_182 = arith.constant dense<0.000000e+00> : vector<16x256xf32>
    %256 = tpu.matmul %253, %255, %cst_182 {dimension_numbers = #tpu.dot_dimension_numbers<[1], [0], [0], [1], [0, 0, 1, 1], [], []>} : vector<16x256xbf16>, vector<256x256xbf16>, vector<16x256xf32> -> vector<16x256xf32>
    %257 = arith.addf %251, %256 : vector<16x256xf32>
    %cst_183 = arith.constant 0.000000e+00 : f32
    %258 = vector.broadcast %cst_183 : f32 to vector<16x256xf32>
    %c1_184 = arith.constant 1 : index
    %c0_185 = arith.constant 0 : index
    %259 = vector.load %arg19[%c1_184, %c0_185] : memref<20x256xf32, #tpu.memory_space<vmem>>, vector<16x256xf32>
    %260 = arith.truncf %259 : vector<16x256xf32> to vector<16x256xbf16>
    %c4_186 = arith.constant 4 : index
    %c0_187 = arith.constant 0 : index
    %c0_188 = arith.constant 0 : index
    %261 = vector.load %arg10[%c4_186, %c0_187, %c0_188] : memref<8x256x256xbf16, #tpu.memory_space<vmem>>, vector<1x256x256xbf16>
    %262 = vector.shape_cast %261 : vector<1x256x256xbf16> to vector<256x256xbf16>
    %cst_189 = arith.constant dense<0.000000e+00> : vector<16x256xf32>
    %263 = tpu.matmul %260, %262, %cst_189 {dimension_numbers = #tpu.dot_dimension_numbers<[1], [0], [0], [1], [0, 0, 1, 1], [], []>} : vector<16x256xbf16>, vector<256x256xbf16>, vector<16x256xf32> -> vector<16x256xf32>
    %264 = arith.addf %258, %263 : vector<16x256xf32>
    %c2_190 = arith.constant 2 : index
    %c0_191 = arith.constant 0 : index
    %265 = vector.load %arg19[%c2_190, %c0_191] : memref<20x256xf32, #tpu.memory_space<vmem>>, vector<16x256xf32>
    %266 = arith.truncf %265 : vector<16x256xf32> to vector<16x256xbf16>
    %c5_192 = arith.constant 5 : index
    %c0_193 = arith.constant 0 : index
    %c0_194 = arith.constant 0 : index
    %267 = vector.load %arg10[%c5_192, %c0_193, %c0_194] : memref<8x256x256xbf16, #tpu.memory_space<vmem>>, vector<1x256x256xbf16>
    %268 = vector.shape_cast %267 : vector<1x256x256xbf16> to vector<256x256xbf16>
    %cst_195 = arith.constant dense<0.000000e+00> : vector<16x256xf32>
    %269 = tpu.matmul %266, %268, %cst_195 {dimension_numbers = #tpu.dot_dimension_numbers<[1], [0], [0], [1], [0, 0, 1, 1], [], []>} : vector<16x256xbf16>, vector<256x256xbf16>, vector<16x256xf32> -> vector<16x256xf32>
    %270 = arith.addf %264, %269 : vector<16x256xf32>
    %c3_196 = arith.constant 3 : index
    %c0_197 = arith.constant 0 : index
    %271 = vector.load %arg19[%c3_196, %c0_197] : memref<20x256xf32, #tpu.memory_space<vmem>>, vector<16x256xf32>
    %272 = arith.truncf %271 : vector<16x256xf32> to vector<16x256xbf16>
    %c6_198 = arith.constant 6 : index
    %c0_199 = arith.constant 0 : index
    %c0_200 = arith.constant 0 : index
    %273 = vector.load %arg10[%c6_198, %c0_199, %c0_200] : memref<8x256x256xbf16, #tpu.memory_space<vmem>>, vector<1x256x256xbf16>
    %274 = vector.shape_cast %273 : vector<1x256x256xbf16> to vector<256x256xbf16>
    %cst_201 = arith.constant dense<0.000000e+00> : vector<16x256xf32>
    %275 = tpu.matmul %272, %274, %cst_201 {dimension_numbers = #tpu.dot_dimension_numbers<[1], [0], [0], [1], [0, 0, 1, 1], [], []>} : vector<16x256xbf16>, vector<256x256xbf16>, vector<16x256xf32> -> vector<16x256xf32>
    %276 = arith.addf %270, %275 : vector<16x256xf32>
    %c4_202 = arith.constant 4 : index
    %c0_203 = arith.constant 0 : index
    %277 = vector.load %arg19[%c4_202, %c0_203] : memref<20x256xf32, #tpu.memory_space<vmem>>, vector<16x256xf32>
    %278 = arith.truncf %277 : vector<16x256xf32> to vector<16x256xbf16>
    %c7_204 = arith.constant 7 : index
    %c0_205 = arith.constant 0 : index
    %c0_206 = arith.constant 0 : index
    %279 = vector.load %arg10[%c7_204, %c0_205, %c0_206] : memref<8x256x256xbf16, #tpu.memory_space<vmem>>, vector<1x256x256xbf16>
    %280 = vector.shape_cast %279 : vector<1x256x256xbf16> to vector<256x256xbf16>
    %cst_207 = arith.constant dense<0.000000e+00> : vector<16x256xf32>
    %281 = tpu.matmul %278, %280, %cst_207 {dimension_numbers = #tpu.dot_dimension_numbers<[1], [0], [0], [1], [0, 0, 1, 1], [], []>} : vector<16x256xbf16>, vector<256x256xbf16>, vector<16x256xf32> -> vector<16x256xf32>
    %282 = arith.addf %276, %281 : vector<16x256xf32>
    %c0_208 = arith.constant 0 : index
    %c0_209 = arith.constant 0 : index
    %283 = vector.load %arg11[%c0_208, %c0_209] : memref<1x256xf32, #tpu.memory_space<vmem>>, vector<1x256xf32>
    %284 = vector.broadcast %283 : vector<1x256xf32> to vector<16x256xf32>
    %285 = arith.addf %257, %284 : vector<16x256xf32>
    %cst_210 = arith.constant 0.000000e+00 : f32
    %286 = vector.broadcast %cst_210 : f32 to vector<16x256xf32>
    %287 = arith.maximumf %285, %286 : vector<16x256xf32>
    %c0_211 = arith.constant 0 : index
    %c0_212 = arith.constant 0 : index
    %288 = vector.load %arg11[%c0_211, %c0_212] : memref<1x256xf32, #tpu.memory_space<vmem>>, vector<1x256xf32>
    %289 = vector.broadcast %288 : vector<1x256xf32> to vector<16x256xf32>
    %290 = arith.addf %282, %289 : vector<16x256xf32>
    %cst_213 = arith.constant 0.000000e+00 : f32
    %291 = vector.broadcast %cst_213 : f32 to vector<16x256xf32>
    %292 = arith.maximumf %290, %291 : vector<16x256xf32>
    %293 = vector.shape_cast %287 : vector<16x256xf32> to vector<1x16x256xf32>
    %cst_214 = arith.constant dense<0.000000e+00> : vector<1xf32>
    %294 = vector.multi_reduction <add>, %293, %cst_214 [1, 2] : vector<1x16x256xf32> to vector<1xf32>
    %295 = vector.shape_cast %294 : vector<1xf32> to vector<1x1x1xf32>
    %296 = vector.extract %295[0, 0, 0] : f32 from vector<1x1x1xf32>
    %297 = vector.shape_cast %292 : vector<16x256xf32> to vector<1x16x256xf32>
    %cst_215 = arith.constant dense<0.000000e+00> : vector<1xf32>
    %298 = vector.multi_reduction <add>, %297, %cst_215 [1, 2] : vector<1x16x256xf32> to vector<1xf32>
    %299 = vector.shape_cast %298 : vector<1xf32> to vector<1x1x1xf32>
    %300 = vector.extract %299[0, 0, 0] : f32 from vector<1x1x1xf32>
    %301 = arith.addf %296, %300 : f32
    %cst_216 = arith.constant 8.192000e+03 : f32
    %302 = arith.divf %301, %cst_216 : f32
    %303 = vector.broadcast %302 : f32 to vector<16x256xf32>
    %304 = arith.subf %287, %303 : vector<16x256xf32>
    %305 = vector.broadcast %302 : f32 to vector<16x256xf32>
    %306 = arith.subf %292, %305 : vector<16x256xf32>
    %307 = arith.mulf %304, %304 : vector<16x256xf32>
    %308 = vector.shape_cast %307 : vector<16x256xf32> to vector<1x16x256xf32>
    %cst_217 = arith.constant dense<0.000000e+00> : vector<1xf32>
    %309 = vector.multi_reduction <add>, %308, %cst_217 [1, 2] : vector<1x16x256xf32> to vector<1xf32>
    %310 = vector.shape_cast %309 : vector<1xf32> to vector<1x1x1xf32>
    %311 = vector.extract %310[0, 0, 0] : f32 from vector<1x1x1xf32>
    %312 = arith.mulf %306, %306 : vector<16x256xf32>
    %313 = vector.shape_cast %312 : vector<16x256xf32> to vector<1x16x256xf32>
    %cst_218 = arith.constant dense<0.000000e+00> : vector<1xf32>
    %314 = vector.multi_reduction <add>, %313, %cst_218 [1, 2] : vector<1x16x256xf32> to vector<1xf32>
    %315 = vector.shape_cast %314 : vector<1xf32> to vector<1x1x1xf32>
    %316 = vector.extract %315[0, 0, 0] : f32 from vector<1x1x1xf32>
    %317 = arith.addf %311, %316 : f32
    %cst_219 = arith.constant 8.192000e+03 : f32
    %318 = arith.divf %317, %cst_219 : f32
    %cst_220 = arith.constant 9.99999974E-6 : f32
    %319 = arith.addf %318, %cst_220 : f32
    %320 = math.rsqrt %319 : f32
    %321 = vector.broadcast %320 : f32 to vector<16x256xf32>
    %322 = arith.mulf %304, %321 : vector<16x256xf32>
    %c0_221 = arith.constant 0 : index
    %c0_222 = arith.constant 0 : index
    %323 = vector.load %arg12[%c0_221, %c0_222] : memref<1x256xf32, #tpu.memory_space<vmem>>, vector<1x256xf32>
    %324 = vector.broadcast %323 : vector<1x256xf32> to vector<16x256xf32>
    %325 = arith.mulf %322, %324 : vector<16x256xf32>
    %c0_223 = arith.constant 0 : index
    %c0_224 = arith.constant 0 : index
    %326 = vector.load %arg13[%c0_223, %c0_224] : memref<1x256xf32, #tpu.memory_space<vmem>>, vector<1x256xf32>
    %327 = vector.broadcast %326 : vector<1x256xf32> to vector<16x256xf32>
    %328 = arith.addf %325, %327 : vector<16x256xf32>
    %329 = vector.broadcast %320 : f32 to vector<16x256xf32>
    %330 = arith.mulf %306, %329 : vector<16x256xf32>
    %c0_225 = arith.constant 0 : index
    %c0_226 = arith.constant 0 : index
    %331 = vector.load %arg12[%c0_225, %c0_226] : memref<1x256xf32, #tpu.memory_space<vmem>>, vector<1x256xf32>
    %332 = vector.broadcast %331 : vector<1x256xf32> to vector<16x256xf32>
    %333 = arith.mulf %330, %332 : vector<16x256xf32>
    %c0_227 = arith.constant 0 : index
    %c0_228 = arith.constant 0 : index
    %334 = vector.load %arg13[%c0_227, %c0_228] : memref<1x256xf32, #tpu.memory_space<vmem>>, vector<1x256xf32>
    %335 = vector.broadcast %334 : vector<1x256xf32> to vector<16x256xf32>
    %336 = arith.addf %333, %335 : vector<16x256xf32>
    %337 = vector.shape_cast %328 : vector<16x256xf32> to vector<16x1x256xf32>
    %338 = vector.shape_cast %336 : vector<16x256xf32> to vector<16x1x256xf32>
    %339 = tpu.concatenate %337, %338 in 1 : vector<16x1x256xf32>, vector<16x1x256xf32> -> vector<16x2x256xf32>
    %340 = vector.shape_cast %339 : vector<16x2x256xf32> to vector<32x256xf32>
    %cst_229 = arith.constant 0.000000e+00 : f32
    %341 = vector.broadcast %cst_229 : f32 to vector<2x256xf32>
    %c0_230 = arith.constant 0 : index
    %c0_231 = arith.constant 0 : index
    %342 = vector.load %arg20[%c0_230, %c0_231] : memref<36x256xf32, #tpu.memory_space<vmem>>, vector<2x256xf32>
    tpu.vector_store %arg20[%c0_230, %c0_231], %341 {strides = array<i32>} : memref<36x256xf32, #tpu.memory_space<vmem>>, vector<2x256xf32>,
    %cst_232 = arith.constant 0.000000e+00 : f32
    %343 = vector.broadcast %cst_232 : f32 to vector<2x256xf32>
    %c34 = arith.constant 34 : index
    %c0_233 = arith.constant 0 : index
    %344 = vector.load %arg20[%c34, %c0_233] : memref<36x256xf32, #tpu.memory_space<vmem>>, vector<2x256xf32>
    tpu.vector_store %arg20[%c34, %c0_233], %343 {strides = array<i32>} : memref<36x256xf32, #tpu.memory_space<vmem>>, vector<2x256xf32>,
    %c2_234 = arith.constant 2 : index
    %c0_235 = arith.constant 0 : index
    %345 = vector.load %arg20[%c2_234, %c0_235] : memref<36x256xf32, #tpu.memory_space<vmem>>, vector<32x256xf32>
    tpu.vector_store %arg20[%c2_234, %c0_235], %340 {strides = array<i32>} : memref<36x256xf32, #tpu.memory_space<vmem>>, vector<32x256xf32>,
    %cst_236 = arith.constant 0.000000e+00 : f32
    %346 = vector.broadcast %cst_236 : f32 to vector<32x64xf32>
    %c0_237 = arith.constant 0 : index
    %c0_238 = arith.constant 0 : index
    %347 = vector.load %arg20[%c0_237, %c0_238] : memref<36x256xf32, #tpu.memory_space<vmem>>, vector<32x256xf32>
    %348 = arith.truncf %347 : vector<32x256xf32> to vector<32x256xbf16>
    %c0_239 = arith.constant 0 : index
    %c0_240 = arith.constant 0 : index
    %c0_241 = arith.constant 0 : index
    %349 = vector.load %arg14[%c0_239, %c0_240, %c0_241] : memref<8x256x64xbf16, #tpu.memory_space<vmem>>, vector<1x256x64xbf16>
    %350 = vector.shape_cast %349 : vector<1x256x64xbf16> to vector<256x64xbf16>
    %cst_242 = arith.constant dense<0.000000e+00> : vector<32x64xf32>
    %351 = tpu.matmul %348, %350, %cst_242 {dimension_numbers = #tpu.dot_dimension_numbers<[1], [0], [0], [1], [0, 0, 1, 1], [], []>} : vector<32x256xbf16>, vector<256x64xbf16>, vector<32x64xf32> -> vector<32x64xf32>
    %352 = arith.addf %346, %351 : vector<32x64xf32>
    %c1_243 = arith.constant 1 : index
    %c0_244 = arith.constant 0 : index
    %353 = vector.load %arg20[%c1_243, %c0_244] : memref<36x256xf32, #tpu.memory_space<vmem>>, vector<32x256xf32>
    %354 = arith.truncf %353 : vector<32x256xf32> to vector<32x256xbf16>
    %c1_245 = arith.constant 1 : index
    %c0_246 = arith.constant 0 : index
    %c0_247 = arith.constant 0 : index
    %355 = vector.load %arg14[%c1_245, %c0_246, %c0_247] : memref<8x256x64xbf16, #tpu.memory_space<vmem>>, vector<1x256x64xbf16>
    %356 = vector.shape_cast %355 : vector<1x256x64xbf16> to vector<256x64xbf16>
    %cst_248 = arith.constant dense<0.000000e+00> : vector<32x64xf32>
    %357 = tpu.matmul %354, %356, %cst_248 {dimension_numbers = #tpu.dot_dimension_numbers<[1], [0], [0], [1], [0, 0, 1, 1], [], []>} : vector<32x256xbf16>, vector<256x64xbf16>, vector<32x64xf32> -> vector<32x64xf32>
    %358 = arith.addf %352, %357 : vector<32x64xf32>
    %c2_249 = arith.constant 2 : index
    %c0_250 = arith.constant 0 : index
    %359 = vector.load %arg20[%c2_249, %c0_250] : memref<36x256xf32, #tpu.memory_space<vmem>>, vector<32x256xf32>
    %360 = arith.truncf %359 : vector<32x256xf32> to vector<32x256xbf16>
    %c2_251 = arith.constant 2 : index
    %c0_252 = arith.constant 0 : index
    %c0_253 = arith.constant 0 : index
    %361 = vector.load %arg14[%c2_251, %c0_252, %c0_253] : memref<8x256x64xbf16, #tpu.memory_space<vmem>>, vector<1x256x64xbf16>
    %362 = vector.shape_cast %361 : vector<1x256x64xbf16> to vector<256x64xbf16>
    %cst_254 = arith.constant dense<0.000000e+00> : vector<32x64xf32>
    %363 = tpu.matmul %360, %362, %cst_254 {dimension_numbers = #tpu.dot_dimension_numbers<[1], [0], [0], [1], [0, 0, 1, 1], [], []>} : vector<32x256xbf16>, vector<256x64xbf16>, vector<32x64xf32> -> vector<32x64xf32>
    %364 = arith.addf %358, %363 : vector<32x64xf32>
    %c3_255 = arith.constant 3 : index
    %c0_256 = arith.constant 0 : index
    %365 = vector.load %arg20[%c3_255, %c0_256] : memref<36x256xf32, #tpu.memory_space<vmem>>, vector<32x256xf32>
    %366 = arith.truncf %365 : vector<32x256xf32> to vector<32x256xbf16>
    %c3_257 = arith.constant 3 : index
    %c0_258 = arith.constant 0 : index
    %c0_259 = arith.constant 0 : index
    %367 = vector.load %arg14[%c3_257, %c0_258, %c0_259] : memref<8x256x64xbf16, #tpu.memory_space<vmem>>, vector<1x256x64xbf16>
    %368 = vector.shape_cast %367 : vector<1x256x64xbf16> to vector<256x64xbf16>
    %cst_260 = arith.constant dense<0.000000e+00> : vector<32x64xf32>
    %369 = tpu.matmul %366, %368, %cst_260 {dimension_numbers = #tpu.dot_dimension_numbers<[1], [0], [0], [1], [0, 0, 1, 1], [], []>} : vector<32x256xbf16>, vector<256x64xbf16>, vector<32x64xf32> -> vector<32x64xf32>
    %370 = arith.addf %364, %369 : vector<32x64xf32>
    %cst_261 = arith.constant 0.000000e+00 : f32
    %371 = vector.broadcast %cst_261 : f32 to vector<32x64xf32>
    %c1_262 = arith.constant 1 : index
    %c0_263 = arith.constant 0 : index
    %372 = vector.load %arg20[%c1_262, %c0_263] : memref<36x256xf32, #tpu.memory_space<vmem>>, vector<32x256xf32>
    %373 = arith.truncf %372 : vector<32x256xf32> to vector<32x256xbf16>
    %c4_264 = arith.constant 4 : index
    %c0_265 = arith.constant 0 : index
    %c0_266 = arith.constant 0 : index
    %374 = vector.load %arg14[%c4_264, %c0_265, %c0_266] : memref<8x256x64xbf16, #tpu.memory_space<vmem>>, vector<1x256x64xbf16>
    %375 = vector.shape_cast %374 : vector<1x256x64xbf16> to vector<256x64xbf16>
    %cst_267 = arith.constant dense<0.000000e+00> : vector<32x64xf32>
    %376 = tpu.matmul %373, %375, %cst_267 {dimension_numbers = #tpu.dot_dimension_numbers<[1], [0], [0], [1], [0, 0, 1, 1], [], []>} : vector<32x256xbf16>, vector<256x64xbf16>, vector<32x64xf32> -> vector<32x64xf32>
    %377 = arith.addf %371, %376 : vector<32x64xf32>
    %c2_268 = arith.constant 2 : index
    %c0_269 = arith.constant 0 : index
    %378 = vector.load %arg20[%c2_268, %c0_269] : memref<36x256xf32, #tpu.memory_space<vmem>>, vector<32x256xf32>
    %379 = arith.truncf %378 : vector<32x256xf32> to vector<32x256xbf16>
    %c5_270 = arith.constant 5 : index
    %c0_271 = arith.constant 0 : index
    %c0_272 = arith.constant 0 : index
    %380 = vector.load %arg14[%c5_270, %c0_271, %c0_272] : memref<8x256x64xbf16, #tpu.memory_space<vmem>>, vector<1x256x64xbf16>
    %381 = vector.shape_cast %380 : vector<1x256x64xbf16> to vector<256x64xbf16>
    %cst_273 = arith.constant dense<0.000000e+00> : vector<32x64xf32>
    %382 = tpu.matmul %379, %381, %cst_273 {dimension_numbers = #tpu.dot_dimension_numbers<[1], [0], [0], [1], [0, 0, 1, 1], [], []>} : vector<32x256xbf16>, vector<256x64xbf16>, vector<32x64xf32> -> vector<32x64xf32>
    %383 = arith.addf %377, %382 : vector<32x64xf32>
    %c3_274 = arith.constant 3 : index
    %c0_275 = arith.constant 0 : index
    %384 = vector.load %arg20[%c3_274, %c0_275] : memref<36x256xf32, #tpu.memory_space<vmem>>, vector<32x256xf32>
    %385 = arith.truncf %384 : vector<32x256xf32> to vector<32x256xbf16>
    %c6_276 = arith.constant 6 : index
    %c0_277 = arith.constant 0 : index
    %c0_278 = arith.constant 0 : index
    %386 = vector.load %arg14[%c6_276, %c0_277, %c0_278] : memref<8x256x64xbf16, #tpu.memory_space<vmem>>, vector<1x256x64xbf16>
    %387 = vector.shape_cast %386 : vector<1x256x64xbf16> to vector<256x64xbf16>
    %cst_279 = arith.constant dense<0.000000e+00> : vector<32x64xf32>
    %388 = tpu.matmul %385, %387, %cst_279 {dimension_numbers = #tpu.dot_dimension_numbers<[1], [0], [0], [1], [0, 0, 1, 1], [], []>} : vector<32x256xbf16>, vector<256x64xbf16>, vector<32x64xf32> -> vector<32x64xf32>
    %389 = arith.addf %383, %388 : vector<32x64xf32>
    %c4_280 = arith.constant 4 : index
    %c0_281 = arith.constant 0 : index
    %390 = vector.load %arg20[%c4_280, %c0_281] : memref<36x256xf32, #tpu.memory_space<vmem>>, vector<32x256xf32>
    %391 = arith.truncf %390 : vector<32x256xf32> to vector<32x256xbf16>
    %c7_282 = arith.constant 7 : index
    %c0_283 = arith.constant 0 : index
    %c0_284 = arith.constant 0 : index
    %392 = vector.load %arg14[%c7_282, %c0_283, %c0_284] : memref<8x256x64xbf16, #tpu.memory_space<vmem>>, vector<1x256x64xbf16>
    %393 = vector.shape_cast %392 : vector<1x256x64xbf16> to vector<256x64xbf16>
    %cst_285 = arith.constant dense<0.000000e+00> : vector<32x64xf32>
    %394 = tpu.matmul %391, %393, %cst_285 {dimension_numbers = #tpu.dot_dimension_numbers<[1], [0], [0], [1], [0, 0, 1, 1], [], []>} : vector<32x256xbf16>, vector<256x64xbf16>, vector<32x64xf32> -> vector<32x64xf32>
    %395 = arith.addf %389, %394 : vector<32x64xf32>
    %c0_286 = arith.constant 0 : index
    %c0_287 = arith.constant 0 : index
    %396 = vector.load %arg15[%c0_286, %c0_287] : memref<1x64xf32, #tpu.memory_space<vmem>>, vector<1x64xf32>
    %397 = vector.broadcast %396 : vector<1x64xf32> to vector<32x64xf32>
    %398 = arith.addf %370, %397 : vector<32x64xf32>
    %399 = arith.negf %398 : vector<32x64xf32>
    %400 = math.exp %399 : vector<32x64xf32>
    %cst_288 = arith.constant 1.000000e+00 : f32
    %401 = vector.broadcast %cst_288 : f32 to vector<32x64xf32>
    %402 = arith.addf %401, %400 : vector<32x64xf32>
    %403 = arith.divf %401, %402 : vector<32x64xf32>
    %c0_289 = arith.constant 0 : index
    %c0_290 = arith.constant 0 : index
    %404 = vector.load %arg15[%c0_289, %c0_290] : memref<1x64xf32, #tpu.memory_space<vmem>>, vector<1x64xf32>
    %405 = vector.broadcast %404 : vector<1x64xf32> to vector<32x64xf32>
    %406 = arith.addf %395, %405 : vector<32x64xf32>
    %407 = arith.negf %406 : vector<32x64xf32>
    %408 = math.exp %407 : vector<32x64xf32>
    %cst_291 = arith.constant 1.000000e+00 : f32
    %409 = vector.broadcast %cst_291 : f32 to vector<32x64xf32>
    %410 = arith.addf %409, %408 : vector<32x64xf32>
    %411 = arith.divf %409, %410 : vector<32x64xf32>
    %412 = tpu.concatenate %403, %411 in 1 : vector<32x64xf32>, vector<32x64xf32> -> vector<32x128xf32>
    %c0_292 = arith.constant 0 : index
    %c0_293 = arith.constant 0 : index
    %c0_294 = arith.constant 0 : index
    %413 = vector.load %arg16[%c0_292, %c0_293, %c0_294] : memref<1x32x128xf32, #tpu.memory_space<vmem>>, vector<1x32x128xf32>
    %414 = vector.shape_cast %413 : vector<1x32x128xf32> to vector<32x128xf32>
    %415 = vector.shape_cast %412 : vector<32x128xf32> to vector<1x32x128xf32>
    tpu.vector_store %arg16[%c0_292, %c0_293, %c0_294], %415 {strides = array<i32>} : memref<1x32x128xf32, #tpu.memory_space<vmem>>, vector<1x32x128xf32>,
    return
  }
  func.func @transform_0(%arg0: i32) -> (i32, i32, i32) {
    %c0_i32 = arith.constant 0 : i32
    %c0_i32_0 = arith.constant 0 : i32
    %c0_i32_1 = arith.constant 0 : i32
    return %arg0, %c0_i32, %c0_i32_0 : i32, i32, i32
  }
  func.func @transform_1(%arg0: i32) -> (i32, i32, i32) {
    %c0_i32 = arith.constant 0 : i32
    %c0_i32_0 = arith.constant 0 : i32
    %c0_i32_1 = arith.constant 0 : i32
    %c0_i32_2 = arith.constant 0 : i32
    return %c0_i32, %c0_i32_0, %c0_i32_1 : i32, i32, i32
  }
  func.func @transform_2(%arg0: i32) -> (i32, i32) {
    %c0_i32 = arith.constant 0 : i32
    %c0_i32_0 = arith.constant 0 : i32
    %c0_i32_1 = arith.constant 0 : i32
    return %c0_i32, %c0_i32_0 : i32, i32
  }
  func.func @transform_3(%arg0: i32) -> (i32, i32) {
    %c0_i32 = arith.constant 0 : i32
    %c0_i32_0 = arith.constant 0 : i32
    %c0_i32_1 = arith.constant 0 : i32
    return %c0_i32, %c0_i32_0 : i32, i32
  }
  func.func @transform_4(%arg0: i32) -> (i32, i32) {
    %c0_i32 = arith.constant 0 : i32
    %c0_i32_0 = arith.constant 0 : i32
    %c0_i32_1 = arith.constant 0 : i32
    return %c0_i32, %c0_i32_0 : i32, i32
  }
  func.func @transform_5(%arg0: i32) -> (i32, i32, i32) {
    %c0_i32 = arith.constant 0 : i32
    %c0_i32_0 = arith.constant 0 : i32
    %c0_i32_1 = arith.constant 0 : i32
    %c0_i32_2 = arith.constant 0 : i32
    return %c0_i32, %c0_i32_0, %c0_i32_1 : i32, i32, i32
  }
  func.func @transform_6(%arg0: i32) -> (i32, i32) {
    %c0_i32 = arith.constant 0 : i32
    %c0_i32_0 = arith.constant 0 : i32
    %c0_i32_1 = arith.constant 0 : i32
    return %c0_i32, %c0_i32_0 : i32, i32
  }
  func.func @transform_7(%arg0: i32) -> (i32, i32) {
    %c0_i32 = arith.constant 0 : i32
    %c0_i32_0 = arith.constant 0 : i32
    %c0_i32_1 = arith.constant 0 : i32
    return %c0_i32, %c0_i32_0 : i32, i32
  }
  func.func @transform_8(%arg0: i32) -> (i32, i32) {
    %c0_i32 = arith.constant 0 : i32
    %c0_i32_0 = arith.constant 0 : i32
    %c0_i32_1 = arith.constant 0 : i32
    return %c0_i32, %c0_i32_0 : i32, i32
  }
  func.func @transform_9(%arg0: i32) -> (i32, i32, i32) {
    %c0_i32 = arith.constant 0 : i32
    %c0_i32_0 = arith.constant 0 : i32
    %c0_i32_1 = arith.constant 0 : i32
    %c0_i32_2 = arith.constant 0 : i32
    return %c0_i32, %c0_i32_0, %c0_i32_1 : i32, i32, i32
  }
  func.func @transform_10(%arg0: i32) -> (i32, i32) {
    %c0_i32 = arith.constant 0 : i32
    %c0_i32_0 = arith.constant 0 : i32
    %c0_i32_1 = arith.constant 0 : i32
    return %c0_i32, %c0_i32_0 : i32, i32
  }
  func.func @transform_11(%arg0: i32) -> (i32, i32) {
    %c0_i32 = arith.constant 0 : i32
    %c0_i32_0 = arith.constant 0 : i32
    %c0_i32_1 = arith.constant 0 : i32
    return %c0_i32, %c0_i32_0 : i32, i32
  }
  func.func @transform_12(%arg0: i32) -> (i32, i32) {
    %c0_i32 = arith.constant 0 : i32
    %c0_i32_0 = arith.constant 0 : i32
    %c0_i32_1 = arith.constant 0 : i32
    return %c0_i32, %c0_i32_0 : i32, i32
  }
  func.func @transform_13(%arg0: i32) -> (i32, i32, i32) {
    %c0_i32 = arith.constant 0 : i32
    %c0_i32_0 = arith.constant 0 : i32
    %c0_i32_1 = arith.constant 0 : i32
    %c0_i32_2 = arith.constant 0 : i32
    return %c0_i32, %c0_i32_0, %c0_i32_1 : i32, i32, i32
  }
  func.func @transform_14(%arg0: i32) -> (i32, i32) {
    %c0_i32 = arith.constant 0 : i32
    %c0_i32_0 = arith.constant 0 : i32
    %c0_i32_1 = arith.constant 0 : i32
    return %c0_i32, %c0_i32_0 : i32, i32
  }
  func.func @transform_15(%arg0: i32) -> (i32, i32, i32) {
    %c0_i32 = arith.constant 0 : i32
    %c0_i32_0 = arith.constant 0 : i32
    %c0_i32_1 = arith.constant 0 : i32
    return %arg0, %c0_i32, %c0_i32_0 : i32, i32, i32
  }
}

</mosaic_0001>

<llo_original>
// kernel: tile.83
$region0: #{tile.83}
  #allocation0 [shape = 's32[1]{0}', space=sflag, size = 0x4, scoped, tag = 'scoped memory for tile.83']
  %s0 = inlined_call_operand.vmem [shape: f32[8], index: 0, kind: input, shape index: {}]
  %s1 = inlined_call_operand.vmem [shape: f32[32,8], index: 1, kind: output, shape index: {}]
  // Predicated region
  $region2: #{tile.83} parent=0 // pred_check
    _
  $region3: #{tile.83} parent=0 // pred_check_branch
    %3 = sbr.rel (0) target = $region5
  $region4: #{tile.83} parent=0 // pred_region
    _
  $region5: #{tile.83} parent=0 // pred_fallthru
    _
  %v4 = vld [vmem:[%s0] ss:$0 sm:$0xff]
  %5 = vst [vmem:[%s1] sm:$0xff] %v4
  %s6 = scalar_lea.vmem %s1, 8
  %7 = vst [vmem:[%s6] sm:$0xff] %v4
  %s8 = scalar_lea.vmem %s1, 16
  %9 = vst [vmem:[%s8] sm:$0xff] %v4
  %s10 = scalar_lea.vmem %s1, 24
  %11 = vst [vmem:[%s10] sm:$0xff] %v4

// kernel: tile.84
$region0: #{tile.84}
  %s0 = inlined_call_operand.vmem [shape: f32[32,8], index: 0, kind: input, shape index: {}]
  %s1 = inlined_call_operand.vmem [shape: f32[1,256], index: 1, kind: output, shape index: {}]
  $region1: #{tile.84} parent=0
    #allocation0 [shape = 'u8[8192]{0}', space=vmem, size = 0x2000, scoped, tag = 'scoped mem for output reshape']
    %s2 = smov 3
    %v3 = vld [vmem:[%s0] ss:$16 sm:%s2]
    %vm4 = vcmask 64512
    %5 = vst.msk [vmem:[#allocation0] ss:$8 sm:$0x3] %vm4, %v3
    %s6 = scalar_lea.vmem %s0, 15
    %s7 = smov 3
    %v8 = vld [vmem:[%s6] ss:$16 sm:%s7]
    %9 = vrot.lane.b32.xlu0 %v8, 120
    %v10 = vpop.permute.xlu0 %9
    %vm11 = vcmask 1048512
    %12 = vst.msk [vmem:[#allocation0] ss:$8 sm:$0x3] %vm11, %v10
    %s13 = scalar_lea.vmem %s0, 14
    %s14 = smov 3
    %v15 = vld [vmem:[%s13] ss:$16 sm:%s14]
    %16 = vrot.lane.b32.xlu0 %v15, 112
    %v17 = vpop.permute.xlu0 %16
    %vm18 = vcmask 982912
    %19 = vst.msk [vmem:[#allocation0] ss:$8 sm:$0x3] %vm18, %v17
    %s20 = scalar_lea.vmem %s0, 13
    %s21 = smov 3
    %v22 = vld [vmem:[%s20] ss:$16 sm:%s21]
    %23 = vrot.lane.b32.xlu0 %v22, 104
    %v24 = vpop.permute.xlu0 %23
    %vm25 = vcmask 917312
    %26 = vst.msk [vmem:[#allocation0] ss:$8 sm:$0x3] %vm25, %v24
    %s27 = scalar_lea.vmem %s0, 12
    %s28 = smov 3
    %v29 = vld [vmem:[%s27] ss:$16 sm:%s28]
    %30 = vrot.lane.b32.xlu0 %v29, 96
    %v31 = vpop.permute.xlu0 %30
    %vm32 = vcmask 851712
    %33 = vst.msk [vmem:[#allocation0] ss:$8 sm:$0x3] %vm32, %v31
    %s34 = scalar_lea.vmem %s0, 11
    %s35 = smov 3
    %v36 = vld [vmem:[%s34] ss:$16 sm:%s35]
    %37 = vrot.lane.b32.xlu0 %v36, 88
    %v38 = vpop.permute.xlu0 %37
    %vm39 = vcmask 786112
    %40 = vst.msk [vmem:[#allocation0] ss:$8 sm:$0x3] %vm39, %v38
    %s41 = scalar_lea.vmem %s0, 10
    %s42 = smov 3
    %v43 = vld [vmem:[%s41] ss:$16 sm:%s42]
    %44 = vrot.lane.b32.xlu0 %v43, 80
    %v45 = vpop.permute.xlu0 %44
    %vm46 = vcmask 720512
    %47 = vst.msk [vmem:[#allocation0] ss:$8 sm:$0x3] %vm46, %v45
    %s48 = scalar_lea.vmem %s0, 9
    %s49 = smov 3
    %v50 = vld [vmem:[%s48] ss:$16 sm:%s49]
    %51 = vrot.lane.b32.xlu0 %v50, 72
    %v52 = vpop.permute.xlu0 %51
    %vm53 = vcmask 654912
    %54 = vst.msk [vmem:[#allocation0] ss:$8 sm:$0x3] %vm53, %v52
    %s55 = scalar_lea.vmem %s0, 8
    %s56 = smov 3
    %v57 = vld [vmem:[%s55] ss:$16 sm:%s56]
    %58 = vrot.lane.b32.xlu0 %v57, 64
    %v59 = vpop.permute.xlu0 %58
    %vm60 = vcmask 589312
    %61 = vst.msk [vmem:[#allocation0] ss:$8 sm:$0x3] %vm60, %v59
    %s62 = scalar_lea.vmem %s0, 7
    %s63 = smov 3
    %v64 = vld [vmem:[%s62] ss:$16 sm:%s63]
    %65 = vrot.lane.b32.xlu0 %v64, 56
    %v66 = vpop.permute.xlu0 %65
    %vm67 = vcmask 523712
    %68 = vst.msk [vmem:[#allocation0] ss:$8 sm:$0x3] %vm67, %v66
    %s69 = scalar_lea.vmem %s0, 6
    %s70 = smov 3
    %v71 = vld [vmem:[%s69] ss:$16 sm:%s70]
    %72 = vrot.lane.b32.xlu0 %v71, 48
    %v73 = vpop.permute.xlu0 %72
    %vm74 = vcmask 458112
    %75 = vst.msk [vmem:[#allocation0] ss:$8 sm:$0x3] %vm74, %v73
    %s76 = scalar_lea.vmem %s0, 5
    %s77 = smov 3
    %v78 = vld [vmem:[%s76] ss:$16 sm:%s77]
    %79 = vrot.lane.b32.xlu0 %v78, 40
    %v80 = vpop.permute.xlu0 %79
    %vm81 = vcmask 392512
    %82 = vst.msk [vmem:[#allocation0] ss:$8 sm:$0x3] %vm81, %v80
    %s83 = scalar_lea.vmem %s0, 4
    %s84 = smov 3
    %v85 = vld [vmem:[%s83] ss:$16 sm:%s84]
    %86 = vrot.lane.b32.xlu0 %v85, 32
    %v87 = vpop.permute.xlu0 %86
    %vm88 = vcmask 326912
    %89 = vst.msk [vmem:[#allocation0] ss:$8 sm:$0x3] %vm88, %v87
    %s90 = scalar_lea.vmem %s0, 3
    %s91 = smov 3
    %v92 = vld [vmem:[%s90] ss:$16 sm:%s91]
    %93 = vrot.lane.b32.xlu0 %v92, 24
    %v94 = vpop.permute.xlu0 %93
    %vm95 = vcmask 261312
    %96 = vst.msk [vmem:[#allocation0] ss:$8 sm:$0x3] %vm95, %v94
    %s97 = scalar_lea.vmem %s0, 2
    %s98 = smov 3
    %v99 = vld [vmem:[%s97] ss:$16 sm:%s98]
    %100 = vrot.lane.b32.xlu0 %v99, 16
    %v101 = vpop.permute.xlu0 %100
    %vm102 = vcmask 195712
    %103 = vst.msk [vmem:[#allocation0] ss:$8 sm:$0x3] %vm102, %v101
    %s104 = scalar_lea.vmem %s0, 1
    %s105 = smov 3
    %v106 = vld [vmem:[%s104] ss:$16 sm:%s105]
    %107 = vrot.lane.b32.xlu0 %v106, 8
    %v108 = vpop.permute.xlu0 %107
    %vm109 = vcmask 130112
    %110 = vst.msk [vmem:[#allocation0] ss:$8 sm:$0x3] %vm109, %v108
    %s112 = sshllo.u32 0, 1
    %v114 = vld [vmem:[#allocation0] sm:%s112]
    %s115 = sshllo.u32 0, 1
    %116 = vst [vmem:[%s1] sm:%s115] %v114
    %s117 = scalar_lea.vmem [#allocation0], 8
    %v118 = vld [vmem:[%s117] sm:%s112]
    %s119 = sshllo.u32 0, 1
    %s120 = scalar_lea.vmem %s1, 1
    %121 = vst [vmem:[%s120] sm:%s119] %v118

// kernel: tile.68
$region0: #{tile.68}
  #allocation0 [shape = 's32[1]{0}', space=sflag, size = 0x4, scoped, tag = 'scoped memory for tile.68']
  %s0 = inlined_call_operand.vmem [shape: f32[16], index: 0, kind: input, shape index: {}]
  %s1 = inlined_call_operand.vmem [shape: f32[16,16], index: 1, kind: output, shape index: {}]
  // Predicated region
  $region2: #{tile.68} parent=0 // pred_check
    _
  $region3: #{tile.68} parent=0 // pred_check_branch
    %3 = sbr.rel (0) target = $region5
  $region4: #{tile.68} parent=0 // pred_region
    _
  $region5: #{tile.68} parent=0 // pred_fallthru
    _
  %v4 = vld [vmem:[%s0] ss:$0 sm:$0xff]
  %5 = vst [vmem:[%s1] sm:$0xff] %v4
  %s6 = scalar_lea.vmem %s1, 8
  %7 = vst [vmem:[%s6] sm:$0xff] %v4

// kernel: tile.69
$region0: #{tile.69}
  %s0 = inlined_call_operand.vmem [shape: f32[16,16], index: 0, kind: input, shape index: {}]
  %s1 = inlined_call_operand.vmem [shape: f32[1,256], index: 1, kind: output, shape index: {}]
  $region1: #{tile.69} parent=0
    #allocation0 [shape = 'u8[8192]{0}', space=vmem, size = 0x2000, scoped, tag = 'scoped mem for output reshape']
    %s2 = smov 3
    %v3 = vld [vmem:[%s0] ss:$8 sm:%s2]
    %vm4 = vcmask 130048
    %5 = vst.msk [vmem:[#allocation0] ss:$8 sm:$0x3] %vm4, %v3
    %s6 = scalar_lea.vmem %s0, 7
    %s7 = smov 3
    %v8 = vld [vmem:[%s6] ss:$8 sm:%s7]
    %9 = vrot.lane.b32.xlu0 %v8, 112
    %v10 = vpop.permute.xlu0 %9
    %vm11 = vcmask 1048448
    %12 = vst.msk [vmem:[#allocation0] ss:$8 sm:$0x3] %vm11, %v10
    %s13 = scalar_lea.vmem %s0, 6
    %s14 = smov 3
    %v15 = vld [vmem:[%s13] ss:$8 sm:%s14]
    %16 = vrot.lane.b32.xlu0 %v15, 96
    %v17 = vpop.permute.xlu0 %16
    %vm18 = vcmask 917248
    %19 = vst.msk [vmem:[#allocation0] ss:$8 sm:$0x3] %vm18, %v17
    %s20 = scalar_lea.vmem %s0, 5
    %s21 = smov 3
    %v22 = vld [vmem:[%s20] ss:$8 sm:%s21]
    %23 = vrot.lane.b32.xlu0 %v22, 80
    %v24 = vpop.permute.xlu0 %23
    %vm25 = vcmask 786048
    %26 = vst.msk [vmem:[#allocation0] ss:$8 sm:$0x3] %vm25, %v24
    %s27 = scalar_lea.vmem %s0, 4
    %s28 = smov 3
    %v29 = vld [vmem:[%s27] ss:$8 sm:%s28]
    %30 = vrot.lane.b32.xlu0 %v29, 64
    %v31 = vpop.permute.xlu0 %30
    %vm32 = vcmask 654848
    %33 = vst.msk [vmem:[#allocation0] ss:$8 sm:$0x3] %vm32, %v31
    %s34 = scalar_lea.vmem %s0, 3
    %s35 = smov 3
    %v36 = vld [vmem:[%s34] ss:$8 sm:%s35]
    %37 = vrot.lane.b32.xlu0 %v36, 48
    %v38 = vpop.permute.xlu0 %37
    %vm39 = vcmask 523648
    %40 = vst.msk [vmem:[#allocation0] ss:$8 sm:$0x3] %vm39, %v38
    %s41 = scalar_lea.vmem %s0, 2
    %s42 = smov 3
    %v43 = vld [vmem:[%s41] ss:$8 sm:%s42]
    %44 = vrot.lane.b32.xlu0 %v43, 32
    %v45 = vpop.permute.xlu0 %44
    %vm46 = vcmask 392448
    %47 = vst.msk [vmem:[#allocation0] ss:$8 sm:$0x3] %vm46, %v45
    %s48 = scalar_lea.vmem %s0, 1
    %s49 = smov 3
    %v50 = vld [vmem:[%s48] ss:$8 sm:%s49]
    %51 = vrot.lane.b32.xlu0 %v50, 16
    %v52 = vpop.permute.xlu0 %51
    %vm53 = vcmask 261248
    %54 = vst.msk [vmem:[#allocation0] ss:$8 sm:$0x3] %vm53, %v52
    %s56 = sshllo.u32 0, 1
    %v58 = vld [vmem:[#allocation0] sm:%s56]
    %s59 = sshllo.u32 0, 1
    %60 = vst [vmem:[%s1] sm:%s59] %v58
    %s61 = scalar_lea.vmem [#allocation0], 8
    %v62 = vld [vmem:[%s61] sm:%s56]
    %s63 = sshllo.u32 0, 1
    %s64 = scalar_lea.vmem %s1, 1
    %65 = vst [vmem:[%s64] sm:%s63] %v62

// kernel: tile.53
$region0: #{tile.53}
  #allocation0 [shape = 's32[1]{0}', space=sflag, size = 0x4, scoped, tag = 'scoped memory for tile.53']
  %s0 = inlined_call_operand.vmem [shape: f32[32], index: 0, kind: input, shape index: {}]
  %s1 = inlined_call_operand.vmem [shape: f32[8,32], index: 1, kind: output, shape index: {}]
  // Predicated region
  $region2: #{tile.53} parent=0 // pred_check
    _
  $region3: #{tile.53} parent=0 // pred_check_branch
    %3 = sbr.rel (0) target = $region5
  $region4: #{tile.53} parent=0 // pred_region
    _
  $region5: #{tile.53} parent=0 // pred_fallthru
    _
  %v4 = vld [vmem:[%s0] ss:$0 sm:$0xff]
  %5 = vst [vmem:[%s1] sm:$0xff] %v4

// kernel: tile.54
$region0: #{tile.54}
  %s0 = inlined_call_operand.vmem [shape: f32[8,32], index: 0, kind: input, shape index: {}]
  %s1 = inlined_call_operand.vmem [shape: f32[1,256], index: 1, kind: output, shape index: {}]
  $region1: #{tile.54} parent=0
    #allocation0 [shape = 'u8[8192]{0}', space=vmem, size = 0x2000, scoped, tag = 'scoped mem for output reshape']
    %s2 = smov 3
    %v3 = vld [vmem:[%s0] ss:$4 sm:%s2]
    %vm4 = vcmask 261120
    %5 = vst.msk [vmem:[#allocation0] ss:$8 sm:$0x3] %vm4, %v3
    %s6 = scalar_lea.vmem %s0, 3
    %s7 = smov 3
    %v8 = vld [vmem:[%s6] ss:$4 sm:%s7]
    %9 = vrot.lane.b32.xlu0 %v8, 96
    %v10 = vpop.permute.xlu0 %9
    %vm11 = vcmask 1048320
    %12 = vst.msk [vmem:[#allocation0] ss:$8 sm:$0x3] %vm11, %v10
    %s13 = scalar_lea.vmem %s0, 2
    %s14 = smov 3
    %v15 = vld [vmem:[%s13] ss:$4 sm:%s14]
    %16 = vrot.lane.b32.xlu0 %v15, 64
    %v17 = vpop.permute.xlu0 %16
    %vm18 = vcmask 785920
    %19 = vst.msk [vmem:[#allocation0] ss:$8 sm:$0x3] %vm18, %v17
    %s20 = scalar_lea.vmem %s0, 1
    %s21 = smov 3
    %v22 = vld [vmem:[%s20] ss:$4 sm:%s21]
    %23 = vrot.lane.b32.xlu0 %v22, 32
    %v24 = vpop.permute.xlu0 %23
    %vm25 = vcmask 523520
    %26 = vst.msk [vmem:[#allocation0] ss:$8 sm:$0x3] %vm25, %v24
    %s28 = sshllo.u32 0, 1
    %v30 = vld [vmem:[#allocation0] sm:%s28]
    %s31 = sshllo.u32 0, 1
    %32 = vst [vmem:[%s1] sm:%s31] %v30
    %s33 = scalar_lea.vmem [#allocation0], 8
    %v34 = vld [vmem:[%s33] sm:%s28]
    %s35 = sshllo.u32 0, 1
    %s36 = scalar_lea.vmem %s1, 1
    %37 = vst [vmem:[%s36] sm:%s35] %v34

// kernel: texture_segmentation_forward.1
$region0: #{texture_segmentation_forward.1}
  #allocation0 [shape = 'u32[]', space=smem, size = 0x4, offset = 0x4, fixed_abs, tag = 'smem constant byte address 0x4 - core index']
  #allocation1 [shape = 'u32[144,128]{1,0:T(1,128)}', space=vmem, size = 0x12000, scoped, tag = 'internal scratch']
  #allocation2 [shape = 'f32[8,64]{1,0:T(8,128)}', space=vmem, size = 0x1000, scoped, tag = 'scratch operand']
  #allocation3 [shape = 'f32[12,256]{1,0:T(8,128)}', space=vmem, size = 0x4000, scoped, tag = 'scratch operand']
  #allocation4 [shape = 'f32[20,256]{1,0:T(8,128)}', space=vmem, size = 0x6000, scoped, tag = 'scratch operand']
  #allocation5 [shape = 'f32[36,256]{1,0:T(8,128)}', space=vmem, size = 0xa000, scoped, tag = 'scratch operand']
  %s0 = inlined_call_operand.vmem [shape: f32[2,4,64], index: 0, kind: input, shape index: {}]
  %s1 = inlined_call_operand.vmem [shape: bf16[8,64,256], index: 1, kind: input, shape index: {}]
  %s2 = inlined_call_operand.vmem [shape: f32[1,256], index: 2, kind: input, shape index: {}]
  %s3 = inlined_call_operand.vmem [shape: f32[1,256], index: 3, kind: input, shape index: {}]
  %s4 = inlined_call_operand.vmem [shape: f32[1,256], index: 4, kind: input, shape index: {}]
  %s5 = inlined_call_operand.vmem [shape: bf16[8,256,256], index: 5, kind: input, shape index: {}]
  %s6 = inlined_call_operand.vmem [shape: f32[1,256], index: 6, kind: input, shape index: {}]
  %s7 = inlined_call_operand.vmem [shape: f32[1,256], index: 7, kind: input, shape index: {}]
  %s8 = inlined_call_operand.vmem [shape: f32[1,256], index: 8, kind: input, shape index: {}]
  %s9 = inlined_call_operand.vmem [shape: bf16[8,256,256], index: 9, kind: input, shape index: {}]
  %s10 = inlined_call_operand.vmem [shape: f32[1,256], index: 10, kind: input, shape index: {}]
  %s11 = inlined_call_operand.vmem [shape: f32[1,256], index: 11, kind: input, shape index: {}]
  %s12 = inlined_call_operand.vmem [shape: f32[1,256], index: 12, kind: input, shape index: {}]
  %s13 = inlined_call_operand.vmem [shape: bf16[8,256,64], index: 13, kind: input, shape index: {}]
  %s14 = inlined_call_operand.vmem [shape: f32[1,64], index: 14, kind: input, shape index: {}]
  %s15 = inlined_call_operand.vmem [shape: f32[2,32,128], index: 15, kind: output, shape index: {}]
  %s16 = sld [smem:[#allocation0]]
  $region93: #{texture_segmentation_forward.1} parent=0
    _
  %s18 = ssub.s32 1, %s16
  %s19 = scalar_select 0, %s18, %s16
  loop: start=0, step=1, limit=4
  $region2: #{texture_segmentation_forward.1} parent=0 // loop_pre_header
    _
  $region3: #{texture_segmentation_forward.1} parent=0 // loop_header
    %s21 = sphi 0, %s25
    %p22 = scmp.ge.s32.totalorder %s21, 4
    %s31 = sphi 0, %s33
    %s34 = sphi 0, %s31
    %s35 = sphi 0, %s34
    %s51 = sphi 0, %s35
    %s55 = sphi 0, %s55
    %s57 = sphi 0, %s55
    %s58 = sphi 0, %s57
    %s72 = sphi 0, %s58
    %s76 = sphi 0, %s76
    %s78 = sphi 0, %s76
    %s79 = sphi 0, %s78
    %s93 = sphi 0, %s79
    %s97 = sphi 0, %s97
    %s99 = sphi 0, %s97
    %s100 = sphi 0, %s99
    %s114 = sphi 0, %s100
    %s118 = sphi 0, %s118
    %s120 = sphi 0, %s118
    %s121 = sphi 0, %s120
    %s135 = sphi 0, %s121
    %s139 = sphi 0, %s139
    %s141 = sphi 0, %s139
    %s142 = sphi 0, %s141
    %s156 = sphi 0, %s142
    %s160 = sphi 0, %s160
    %s162 = sphi 0, %s160
    %s163 = sphi 0, %s162
    %s177 = sphi 0, %s163
    %s181 = sphi 0, %s181
    %s183 = sphi 0, %s181
    %s184 = sphi 0, %s183
    %s198 = sphi 0, %s184
    %s202 = sphi 0, %s202
    %s204 = sphi 0, %s202
    %s205 = sphi 0, %s204
    %s219 = sphi 0, %s205
    %s223 = sphi 0, %s223
    %s225 = sphi 0, %s223
    %s226 = sphi 0, %s225
    %s240 = sphi 0, %s226
    %s244 = sphi 0, %s244
    %s246 = sphi 0, %s244
    %s247 = sphi 0, %s246
    %s261 = sphi 0, %s247
    %s265 = sphi 0, %s265
    %s267 = sphi 0, %s265
    %s268 = sphi 0, %s267
    %s282 = sphi 0, %s268
    %s286 = sphi 0, %s286
    %s288 = sphi 0, %s286
    %s289 = sphi 0, %s288
    %s303 = sphi 0, %s289
    %s307 = sphi 0, %s307
    %s309 = sphi 0, %s307
    %s310 = sphi 0, %s309
    %s324 = sphi 0, %s310
    %s328 = sphi 0, %s328
    %s330 = sphi 0, %s328
    %s331 = sphi 0, %s330
    %s345 = sphi 0, %s331
    %s351 = sphi 0, %s353
    %s354 = sphi 0, %s351
    %s355 = sphi 0, %s354
    %s371 = sphi 0, %s355
  $region4: #{texture_segmentation_forward.1} parent=0 // loop_header_branch
    %24 = sbr.rel (%p22) target = $region8
  $region5: #{texture_segmentation_forward.1} parent=0 // loop_body
    %s26 = ssub.s32 %s21, 1
    %s27 = ssub.s32 %s21, 2
    %s28 = sadd.s32 %s21, 1
    %s29 = ssub.s32 %s21, %s28
    %p30 = scmp.eq.s32.totalorder %s29, 0
    %s32 = sadd.s32 %s31, 1
    %s33 = scalar_select %p30, %s31, %s32
    %p36 = pneg %p30
    %p37 = scmp.eq.s32.totalorder %s21, 1
    %p38 = por %p36, %p37
    %p39 = scmp.ne.s32.totalorder %s31, %s34
    %p40 = scmp.eq.s32.totalorder %s21, 0
    %p41 = por %p39, %p40
    %p42 = scmp.ne.s32.totalorder %s31, %s34
    %p43 = scmp.eq.s32.totalorder %s26, 1
    %p44 = por %p42, %p43
    %p45 = scmp.ne.s32.totalorder %s34, %s35
    %p46 = scmp.eq.s32.totalorder %s26, 0
    %p47 = por %p45, %p46
    %p48 = scmp.ne.s32.totalorder %s34, %s35
    %p49 = scmp.eq.s32.totalorder %s27, 1
    %p50 = por %p48, %p49
    %p52 = scmp.ne.s32.totalorder %s35, %s51
    %p53 = scmp.eq.s32.totalorder %s27, 0
    %p54 = por %p52, %p53
    %s56 = sadd.s32 %s55, 1
    %p59 = scmp.eq.s32.totalorder %s21, 1
    %p60 = scmp.ne.s32.totalorder %s55, %s57
    %p61 = scmp.eq.s32.totalorder %s21, 0
    %p62 = por %p60, %p61
    %p63 = scmp.ne.s32.totalorder %s55, %s57
    %p64 = scmp.eq.s32.totalorder %s26, 1
    %p65 = por %p63, %p64
    %p66 = scmp.ne.s32.totalorder %s57, %s58
    %p67 = scmp.eq.s32.totalorder %s26, 0
    %p68 = por %p66, %p67
    %p69 = scmp.ne.s32.totalorder %s57, %s58
    %p70 = scmp.eq.s32.totalorder %s27, 1
    %p71 = por %p69, %p70
    %p73 = scmp.ne.s32.totalorder %s58, %s72
    %p74 = scmp.eq.s32.totalorder %s27, 0
    %p75 = por %p73, %p74
    %s77 = sadd.s32 %s76, 1
    %p80 = scmp.eq.s32.totalorder %s21, 1
    %p81 = scmp.ne.s32.totalorder %s76, %s78
    %p82 = scmp.eq.s32.totalorder %s21, 0
    %p83 = por %p81, %p82
    %p84 = scmp.ne.s32.totalorder %s76, %s78
    %p85 = scmp.eq.s32.totalorder %s26, 1
    %p86 = por %p84, %p85
    %p87 = scmp.ne.s32.totalorder %s78, %s79
    %p88 = scmp.eq.s32.totalorder %s26, 0
    %p89 = por %p87, %p88
    %p90 = scmp.ne.s32.totalorder %s78, %s79
    %p91 = scmp.eq.s32.totalorder %s27, 1
    %p92 = por %p90, %p91
    %p94 = scmp.ne.s32.totalorder %s79, %s93
    %p95 = scmp.eq.s32.totalorder %s27, 0
    %p96 = por %p94, %p95
    %s98 = sadd.s32 %s97, 1
    %p101 = scmp.eq.s32.totalorder %s21, 1
    %p102 = scmp.ne.s32.totalorder %s97, %s99
    %p103 = scmp.eq.s32.totalorder %s21, 0
    %p104 = por %p102, %p103
    %p105 = scmp.ne.s32.totalorder %s97, %s99
    %p106 = scmp.eq.s32.totalorder %s26, 1
    %p107 = por %p105, %p106
    %p108 = scmp.ne.s32.totalorder %s99, %s100
    %p109 = scmp.eq.s32.totalorder %s26, 0
    %p110 = por %p108, %p109
    %p111 = scmp.ne.s32.totalorder %s99, %s100
    %p112 = scmp.eq.s32.totalorder %s27, 1
    %p113 = por %p111, %p112
    %p115 = scmp.ne.s32.totalorder %s100, %s114
    %p116 = scmp.eq.s32.totalorder %s27, 0
    %p117 = por %p115, %p116
    %s119 = sadd.s32 %s118, 1
    %p122 = scmp.eq.s32.totalorder %s21, 1
    %p123 = scmp.ne.s32.totalorder %s118, %s120
    %p124 = scmp.eq.s32.totalorder %s21, 0
    %p125 = por %p123, %p124
    %p126 = scmp.ne.s32.totalorder %s118, %s120
    %p127 = scmp.eq.s32.totalorder %s26, 1
    %p128 = por %p126, %p127
    %p129 = scmp.ne.s32.totalorder %s120, %s121
    %p130 = scmp.eq.s32.totalorder %s26, 0
    %p131 = por %p129, %p130
    %p132 = scmp.ne.s32.totalorder %s120, %s121
    %p133 = scmp.eq.s32.totalorder %s27, 1
    %p134 = por %p132, %p133
    %p136 = scmp.ne.s32.totalorder %s121, %s135
    %p137 = scmp.eq.s32.totalorder %s27, 0
    %p138 = por %p136, %p137
    %s140 = sadd.s32 %s139, 1
    %p143 = scmp.eq.s32.totalorder %s21, 1
    %p144 = scmp.ne.s32.totalorder %s139, %s141
    %p145 = scmp.eq.s32.totalorder %s21, 0
    %p146 = por %p144, %p145
    %p147 = scmp.ne.s32.totalorder %s139, %s141
    %p148 = scmp.eq.s32.totalorder %s26, 1
    %p149 = por %p147, %p148
    %p150 = scmp.ne.s32.totalorder %s141, %s142
    %p151 = scmp.eq.s32.totalorder %s26, 0
    %p152 = por %p150, %p151
    %p153 = scmp.ne.s32.totalorder %s141, %s142
    %p154 = scmp.eq.s32.totalorder %s27, 1
    %p155 = por %p153, %p154
    %p157 = scmp.ne.s32.totalorder %s142, %s156
    %p158 = scmp.eq.s32.totalorder %s27, 0
    %p159 = por %p157, %p158
    %s161 = sadd.s32 %s160, 1
    %p164 = scmp.eq.s32.totalorder %s21, 1
    %p165 = scmp.ne.s32.totalorder %s160, %s162
    %p166 = scmp.eq.s32.totalorder %s21, 0
    %p167 = por %p165, %p166
    %p168 = scmp.ne.s32.totalorder %s160, %s162
    %p169 = scmp.eq.s32.totalorder %s26, 1
    %p170 = por %p168, %p169
    %p171 = scmp.ne.s32.totalorder %s162, %s163
    %p172 = scmp.eq.s32.totalorder %s26, 0
    %p173 = por %p171, %p172
    %p174 = scmp.ne.s32.totalorder %s162, %s163
    %p175 = scmp.eq.s32.totalorder %s27, 1
    %p176 = por %p174, %p175
    %p178 = scmp.ne.s32.totalorder %s163, %s177
    %p179 = scmp.eq.s32.totalorder %s27, 0
    %p180 = por %p178, %p179
    %s182 = sadd.s32 %s181, 1
    %p185 = scmp.eq.s32.totalorder %s21, 1
    %p186 = scmp.ne.s32.totalorder %s181, %s183
    %p187 = scmp.eq.s32.totalorder %s21, 0
    %p188 = por %p186, %p187
    %p189 = scmp.ne.s32.totalorder %s181, %s183
    %p190 = scmp.eq.s32.totalorder %s26, 1
    %p191 = por %p189, %p190
    %p192 = scmp.ne.s32.totalorder %s183, %s184
    %p193 = scmp.eq.s32.totalorder %s26, 0
    %p194 = por %p192, %p193
    %p195 = scmp.ne.s32.totalorder %s183, %s184
    %p196 = scmp.eq.s32.totalorder %s27, 1
    %p197 = por %p195, %p196
    %p199 = scmp.ne.s32.totalorder %s184, %s198
    %p200 = scmp.eq.s32.totalorder %s27, 0
    %p201 = por %p199, %p200
    %s203 = sadd.s32 %s202, 1
    %p206 = scmp.eq.s32.totalorder %s21, 1
    %p207 = scmp.ne.s32.totalorder %s202, %s204
    %p208 = scmp.eq.s32.totalorder %s21, 0
    %p209 = por %p207, %p208
    %p210 = scmp.ne.s32.totalorder %s202, %s204
    %p211 = scmp.eq.s32.totalorder %s26, 1
    %p212 = por %p210, %p211
    %p213 = scmp.ne.s32.totalorder %s204, %s205
    %p214 = scmp.eq.s32.totalorder %s26, 0
    %p215 = por %p213, %p214
    %p216 = scmp.ne.s32.totalorder %s204, %s205
    %p217 = scmp.eq.s32.totalorder %s27, 1
    %p218 = por %p216, %p217
    %p220 = scmp.ne.s32.totalorder %s205, %s219
    %p221 = scmp.eq.s32.totalorder %s27, 0
    %p222 = por %p220, %p221
    %s224 = sadd.s32 %s223, 1
    %p227 = scmp.eq.s32.totalorder %s21, 1
    %p228 = scmp.ne.s32.totalorder %s223, %s225
    %p229 = scmp.eq.s32.totalorder %s21, 0
    %p230 = por %p228, %p229
    %p231 = scmp.ne.s32.totalorder %s223, %s225
    %p232 = scmp.eq.s32.totalorder %s26, 1
    %p233 = por %p231, %p232
    %p234 = scmp.ne.s32.totalorder %s225, %s226
    %p235 = scmp.eq.s32.totalorder %s26, 0
    %p236 = por %p234, %p235
    %p237 = scmp.ne.s32.totalorder %s225, %s226
    %p238 = scmp.eq.s32.totalorder %s27, 1
    %p239 = por %p237, %p238
    %p241 = scmp.ne.s32.totalorder %s226, %s240
    %p242 = scmp.eq.s32.totalorder %s27, 0
    %p243 = por %p241, %p242
    %s245 = sadd.s32 %s244, 1
    %p248 = scmp.eq.s32.totalorder %s21, 1
    %p249 = scmp.ne.s32.totalorder %s244, %s246
    %p250 = scmp.eq.s32.totalorder %s21, 0
    %p251 = por %p249, %p250
    %p252 = scmp.ne.s32.totalorder %s244, %s246
    %p253 = scmp.eq.s32.totalorder %s26, 1
    %p254 = por %p252, %p253
    %p255 = scmp.ne.s32.totalorder %s246, %s247
    %p256 = scmp.eq.s32.totalorder %s26, 0
    %p257 = por %p255, %p256
    %p258 = scmp.ne.s32.totalorder %s246, %s247
    %p259 = scmp.eq.s32.totalorder %s27, 1
    %p260 = por %p258, %p259
    %p262 = scmp.ne.s32.totalorder %s247, %s261
    %p263 = scmp.eq.s32.totalorder %s27, 0
    %p264 = por %p262, %p263
    %s266 = sadd.s32 %s265, 1
    %p269 = scmp.eq.s32.totalorder %s21, 1
    %p270 = scmp.ne.s32.totalorder %s265, %s267
    %p271 = scmp.eq.s32.totalorder %s21, 0
    %p272 = por %p270, %p271
    %p273 = scmp.ne.s32.totalorder %s265, %s267
    %p274 = scmp.eq.s32.totalorder %s26, 1
    %p275 = por %p273, %p274
    %p276 = scmp.ne.s32.totalorder %s267, %s268
    %p277 = scmp.eq.s32.totalorder %s26, 0
    %p278 = por %p276, %p277
    %p279 = scmp.ne.s32.totalorder %s267, %s268
    %p280 = scmp.eq.s32.totalorder %s27, 1
    %p281 = por %p279, %p280
    %p283 = scmp.ne.s32.totalorder %s268, %s282
    %p284 = scmp.eq.s32.totalorder %s27, 0
    %p285 = por %p283, %p284
    %s287 = sadd.s32 %s286, 1
    %p290 = scmp.eq.s32.totalorder %s21, 1
    %p291 = scmp.ne.s32.totalorder %s286, %s288
    %p292 = scmp.eq.s32.totalorder %s21, 0
    %p293 = por %p291, %p292
    %p294 = scmp.ne.s32.totalorder %s286, %s288
    %p295 = scmp.eq.s32.totalorder %s26, 1
    %p296 = por %p294, %p295
    %p297 = scmp.ne.s32.totalorder %s288, %s289
    %p298 = scmp.eq.s32.totalorder %s26, 0
    %p299 = por %p297, %p298
    %p300 = scmp.ne.s32.totalorder %s288, %s289
    %p301 = scmp.eq.s32.totalorder %s27, 1
    %p302 = por %p300, %p301
    %p304 = scmp.ne.s32.totalorder %s289, %s303
    %p305 = scmp.eq.s32.totalorder %s27, 0
    %p306 = por %p304, %p305
    %s308 = sadd.s32 %s307, 1
    %p311 = scmp.eq.s32.totalorder %s21, 1
    %p312 = scmp.ne.s32.totalorder %s307, %s309
    %p313 = scmp.eq.s32.totalorder %s21, 0
    %p314 = por %p312, %p313
    %p315 = scmp.ne.s32.totalorder %s307, %s309
    %p316 = scmp.eq.s32.totalorder %s26, 1
    %p317 = por %p315, %p316
    %p318 = scmp.ne.s32.totalorder %s309, %s310
    %p319 = scmp.eq.s32.totalorder %s26, 0
    %p320 = por %p318, %p319
    %p321 = scmp.ne.s32.totalorder %s309, %s310
    %p322 = scmp.eq.s32.totalorder %s27, 1
    %p323 = por %p321, %p322
    %p325 = scmp.ne.s32.totalorder %s310, %s324
    %p326 = scmp.eq.s32.totalorder %s27, 0
    %p327 = por %p325, %p326
    %s329 = sadd.s32 %s328, 1
    %p332 = scmp.eq.s32.totalorder %s21, 1
    %p333 = scmp.ne.s32.totalorder %s328, %s330
    %p334 = scmp.eq.s32.totalorder %s21, 0
    %p335 = por %p333, %p334
    %p336 = scmp.ne.s32.totalorder %s328, %s330
    %p337 = scmp.eq.s32.totalorder %s26, 1
    %p338 = por %p336, %p337
    %p339 = scmp.ne.s32.totalorder %s330, %s331
    %p340 = scmp.eq.s32.totalorder %s26, 0
    %p341 = por %p339, %p340
    %p342 = scmp.ne.s32.totalorder %s330, %s331
    %p343 = scmp.eq.s32.totalorder %s27, 1
    %p344 = por %p342, %p343
    %p346 = scmp.ne.s32.totalorder %s331, %s345
    %p347 = scmp.eq.s32.totalorder %s27, 0
    %p348 = por %p346, %p347
    %s349 = ssub.s32 %s21, %s28
    %p350 = scmp.eq.s32.totalorder %s349, 0
    %s352 = sadd.s32 %s351, 1
    %s353 = scalar_select %p350, %s351, %s352
    %p356 = pneg %p350
    %p357 = scmp.eq.s32.totalorder %s21, 1
    %p358 = por %p356, %p357
    %p359 = scmp.ne.s32.totalorder %s351, %s354
    %p360 = scmp.eq.s32.totalorder %s21, 0
    %p361 = por %p359, %p360
    %p362 = scmp.ne.s32.totalorder %s351, %s354
    %p363 = scmp.eq.s32.totalorder %s26, 1
    %p364 = por %p362, %p363
    %p365 = scmp.ne.s32.totalorder %s354, %s355
    %p366 = scmp.eq.s32.totalorder %s26, 0
    %p367 = por %p365, %p366
    %p368 = scmp.ne.s32.totalorder %s354, %s355
    %p369 = scmp.eq.s32.totalorder %s27, 1
    %p370 = por %p368, %p369
    %p372 = scmp.ne.s32.totalorder %s355, %s371
    %p373 = scmp.eq.s32.totalorder %s27, 0
    %p374 = por %p372, %p373
    %p375 = scmp.le.s32.totalorder 1, %s21
    %p376 = scmp.lt.s32.totalorder %s21, 3
    %p377 = pnand %p375, %p376
    %p378 = pneg %p377
    // Predicated region
    $region9: #{texture_segmentation_forward.1} parent=5 // pred_check
      _
    $region10: #{texture_segmentation_forward.1} parent=5 // pred_check_branch
      %380 = sbr.rel (%p377) target = $region12
    $region11: #{texture_segmentation_forward.1} parent=5 // pred_region
      %s381 = ssub.s32 %s21, 1
      // Predicated region
      $region13: #{texture_segmentation_forward.1} parent=11 // pred_check
        %p382 = pneg %p68
      $region14: #{texture_segmentation_forward.1} parent=11 // pred_check_branch
        %384 = sbr.rel (%p382) target = $region16
      $region15: #{texture_segmentation_forward.1} parent=11 // pred_region
        _
      $region16: #{texture_segmentation_forward.1} parent=11 // pred_fallthru
        _
      // Predicated region
      $region17: #{texture_segmentation_forward.1} parent=11 // pred_check
        %p385 = pneg %p89
      $region18: #{texture_segmentation_forward.1} parent=11 // pred_check_branch
        %387 = sbr.rel (%p385) target = $region20
      $region19: #{texture_segmentation_forward.1} parent=11 // pred_region
        _
      $region20: #{texture_segmentation_forward.1} parent=11 // pred_fallthru
        _
      // Predicated region
      $region21: #{texture_segmentation_forward.1} parent=11 // pred_check
        %p388 = pneg %p110
      $region22: #{texture_segmentation_forward.1} parent=11 // pred_check_branch
        %390 = sbr.rel (%p388) target = $region24
      $region23: #{texture_segmentation_forward.1} parent=11 // pred_region
        _
      $region24: #{texture_segmentation_forward.1} parent=11 // pred_fallthru
        _
      // Predicated region
      $region25: #{texture_segmentation_forward.1} parent=11 // pred_check
        %p391 = pneg %p131
      $region26: #{texture_segmentation_forward.1} parent=11 // pred_check_branch
        %393 = sbr.rel (%p391) target = $region28
      $region27: #{texture_segmentation_forward.1} parent=11 // pred_region
        _
      $region28: #{texture_segmentation_forward.1} parent=11 // pred_fallthru
        _
      // Predicated region
      $region29: #{texture_segmentation_forward.1} parent=11 // pred_check
        %p394 = pneg %p152
      $region30: #{texture_segmentation_forward.1} parent=11 // pred_check_branch
        %396 = sbr.rel (%p394) target = $region32
      $region31: #{texture_segmentation_forward.1} parent=11 // pred_region
        _
      $region32: #{texture_segmentation_forward.1} parent=11 // pred_fallthru
        _
      // Predicated region
      $region33: #{texture_segmentation_forward.1} parent=11 // pred_check
        %p397 = pneg %p173
      $region34: #{texture_segmentation_forward.1} parent=11 // pred_check_branch
        %399 = sbr.rel (%p397) target = $region36
      $region35: #{texture_segmentation_forward.1} parent=11 // pred_region
        _
      $region36: #{texture_segmentation_forward.1} parent=11 // pred_fallthru
        _
      // Predicated region
      $region37: #{texture_segmentation_forward.1} parent=11 // pred_check
        %p400 = pneg %p194
      $region38: #{texture_segmentation_forward.1} parent=11 // pred_check_branch
        %402 = sbr.rel (%p400) target = $region40
      $region39: #{texture_segmentation_forward.1} parent=11 // pred_region
        _
      $region40: #{texture_segmentation_forward.1} parent=11 // pred_fallthru
        _
      // Predicated region
      $region41: #{texture_segmentation_forward.1} parent=11 // pred_check
        %p403 = pneg %p215
      $region42: #{texture_segmentation_forward.1} parent=11 // pred_check_branch
        %405 = sbr.rel (%p403) target = $region44
      $region43: #{texture_segmentation_forward.1} parent=11 // pred_region
        _
      $region44: #{texture_segmentation_forward.1} parent=11 // pred_fallthru
        _
      // Predicated region
      $region45: #{texture_segmentation_forward.1} parent=11 // pred_check
        %p406 = pneg %p236
      $region46: #{texture_segmentation_forward.1} parent=11 // pred_check_branch
        %408 = sbr.rel (%p406) target = $region48
      $region47: #{texture_segmentation_forward.1} parent=11 // pred_region
        _
      $region48: #{texture_segmentation_forward.1} parent=11 // pred_fallthru
        _
      // Predicated region
      $region49: #{texture_segmentation_forward.1} parent=11 // pred_check
        %p409 = pneg %p257
      $region50: #{texture_segmentation_forward.1} parent=11 // pred_check_branch
        %411 = sbr.rel (%p409) target = $region52
      $region51: #{texture_segmentation_forward.1} parent=11 // pred_region
        _
      $region52: #{texture_segmentation_forward.1} parent=11 // pred_fallthru
        _
      // Predicated region
      $region53: #{texture_segmentation_forward.1} parent=11 // pred_check
        %p412 = pneg %p278
      $region54: #{texture_segmentation_forward.1} parent=11 // pred_check_branch
        %414 = sbr.rel (%p412) target = $region56
      $region55: #{texture_segmentation_forward.1} parent=11 // pred_region
        _
      $region56: #{texture_segmentation_forward.1} parent=11 // pred_fallthru
        _
      // Predicated region
      $region57: #{texture_segmentation_forward.1} parent=11 // pred_check
        %p415 = pneg %p299
      $region58: #{texture_segmentation_forward.1} parent=11 // pred_check_branch
        %417 = sbr.rel (%p415) target = $region60
      $region59: #{texture_segmentation_forward.1} parent=11 // pred_region
        _
      $region60: #{texture_segmentation_forward.1} parent=11 // pred_fallthru
        _
      // Predicated region
      $region61: #{texture_segmentation_forward.1} parent=11 // pred_check
        %p418 = pneg %p320
      $region62: #{texture_segmentation_forward.1} parent=11 // pred_check_branch
        %420 = sbr.rel (%p418) target = $region64
      $region63: #{texture_segmentation_forward.1} parent=11 // pred_region
        _
      $region64: #{texture_segmentation_forward.1} parent=11 // pred_fallthru
        _
      // Predicated region
      $region65: #{texture_segmentation_forward.1} parent=11 // pred_check
        %p421 = pneg %p341
      $region66: #{texture_segmentation_forward.1} parent=11 // pred_check_branch
        %423 = sbr.rel (%p421) target = $region68
      $region67: #{texture_segmentation_forward.1} parent=11 // pred_region
        _
      $region68: #{texture_segmentation_forward.1} parent=11 // pred_fallthru
        _
    $region12: #{texture_segmentation_forward.1} parent=5 // pred_fallthru
      _
    %p424 = scmp.lt.s32.totalorder %s21, 2
    // Predicated region
    $region69: #{texture_segmentation_forward.1} parent=5 // pred_check
      %p425 = pneg %p424
    $region70: #{texture_segmentation_forward.1} parent=5 // pred_check_branch
      %427 = sbr.rel (%p425) target = $region72
    $region71: #{texture_segmentation_forward.1} parent=5 // pred_region
      // Predicated region
      $region73: #{texture_segmentation_forward.1} parent=71 // pred_check
        %p428 = pneg %p41
      $region74: #{texture_segmentation_forward.1} parent=71 // pred_check_branch
        %430 = sbr.rel (%p428) target = $region76
      $region75: #{texture_segmentation_forward.1} parent=71 // pred_region
        %p431 = scmp.lt.s32.totalorder %s21, 1
        %s432 = scalar_select %p431, %s21, 1
        %s433 = smul.addr %s432, 4
        %s434 = scalar_lea.vmem %s0, %s433
      $region76: #{texture_segmentation_forward.1} parent=71 // pred_fallthru
        _
    $region72: #{texture_segmentation_forward.1} parent=5 // pred_fallthru
      _
    %p435 = scmp.le.s32.totalorder 1, %s21
    %p436 = scmp.lt.s32.totalorder %s21, 3
    %p437 = pnand %p435, %p436
    %p438 = pneg %p437
    // Predicated region
    $region77: #{texture_segmentation_forward.1} parent=5 // pred_check
      _
    $region78: #{texture_segmentation_forward.1} parent=5 // pred_check_branch
      %440 = sbr.rel (%p437) target = $region80
    $region79: #{texture_segmentation_forward.1} parent=5 // pred_region
      %s441 = ssub.s32 %s21, 1
      %p442 = scmp.lt.s32.totalorder %s26, 1
      %s443 = scalar_select %p442, %s26, 1
      %s444 = smul.addr %s443, 4
      %s445 = scalar_lea.vmem %s0, %s444
      %p446 = pneg %p47
      %p447 = pneg %p44
      %p448 = pneg %p68
      %p449 = pneg %p65
      %p450 = pneg %p89
      %p451 = pneg %p86
      %p452 = pneg %p110
      %p453 = pneg %p107
      %p454 = pneg %p131
      %p455 = pneg %p128
      %p456 = pneg %p152
      %p457 = pneg %p149
      %p458 = pneg %p173
      %p459 = pneg %p170
      %p460 = pneg %p194
      %p461 = pneg %p191
      %p462 = pneg %p215
      %p463 = pneg %p212
      %p464 = pneg %p236
      %p465 = pneg %p233
      %p466 = pneg %p257
      %p467 = pneg %p254
      %p468 = pneg %p278
      %p469 = pneg %p275
      %p470 = pneg %p299
      %p471 = pneg %p296
      %p472 = pneg %p320
      %p473 = pneg %p317
      %p474 = pneg %p341
      %p475 = pneg %p338
      %p476 = pneg %p367
      %p477 = pneg %p364
      %p478 = scmp.lt.s32.totalorder %s26, 1
      %s479 = scalar_select %p478, %s26, 1
      %s480 = smul.addr %s479, 4
      %s481 = smul.addr %s480, 8
      %s482 = scalar_lea.vmem %s15, %s481
      %p483 = scmp.lt.s32.totalorder %s26, 1
      %s484 = scalar_select %p483, %s26, 1
      %s485 = smul.addr %s484, 4
      %s486 = scalar_lea.vmem %s0, %s485
      %p487 = scmp.lt.s32.totalorder %s26, 1
      %s488 = scalar_select %p487, %s26, 1
      %s489 = smul.addr %s488, 4
      %s490 = smul.addr %s489, 8
      %s491 = scalar_lea.vmem %s15, %s490
      %vm493 = vcmask 517120
      %494 = vst.msk [vmem:[#allocation2] sm:$0x3] %vm493, 0.0
      %495 = vst.msk [vmem:[#allocation2 + $0x6] sm:$0x3] %vm493, 0.0
      %v496 = vld [vmem:[%s486] sm:$0xf]
      %vm497 = vcmask 519168
      %498 = vst.msk [vmem:[#allocation2 + $0x2] sm:$0xf] %vm497, %v496
      %v499 = vld [vmem:[#allocation2] sm:$0xf]
      %v500 = vpack.c.bf16 %v499, %v499
      %v501 = vld [vmem:[%s1] sm:$0xff]
      %v502 = vld [vmem:[%s1 + $0x8] sm:$0xff]
      %v503 = vld [vmem:[%s1 + $0x10] sm:$0xff]
      %v504 = vld [vmem:[%s1 + $0x18] sm:$0xff]
      %v505 = vld [vmem:[%s1 + $0x20] sm:$0xff]
      %v506 = vld [vmem:[%s1 + $0x28] sm:$0xff]
      %v507 = vld [vmem:[%s1 + $0x30] sm:$0xff]
      %v508 = vld [vmem:[%s1 + $0x38] sm:$0xff]
      %v509 = vld [vmem:[#allocation2 + $0x1] sm:$0xf]
      %v510 = vpack.c.bf16 %v509, %v509
      %s511 = scalar_lea.vmem %s1, 64
      %v512 = vld [vmem:[%s511] sm:$0xff]
      %v513 = vld [vmem:[%s511 + $0x8] sm:$0xff]
      %v514 = vld [vmem:[%s511 + $0x10] sm:$0xff]
      %v515 = vld [vmem:[%s511 + $0x18] sm:$0xff]
      %v516 = vld [vmem:[%s511 + $0x20] sm:$0xff]
      %v517 = vld [vmem:[%s511 + $0x28] sm:$0xff]
      %v518 = vld [vmem:[%s511 + $0x30] sm:$0xff]
      %v519 = vld [vmem:[%s511 + $0x38] sm:$0xff]
      %v528 = vunpack.c.l.b16 %v512
      %v529 = vunpack.c.h.b16 %v512
      %v530 = vunpack.c.l.b16 %v513
      %v531 = vunpack.c.h.b16 %v513
      %v532 = vunpack.c.l.b16 %v514
      %v533 = vunpack.c.h.b16 %v514
      %v534 = vunpack.c.l.b16 %v515
      %v535 = vunpack.c.h.b16 %v515
      %v536 = vunpack.c.l.b16 %v516
      %v537 = vunpack.c.h.b16 %v516
      %v538 = vunpack.c.l.b16 %v517
      %v539 = vunpack.c.h.b16 %v517
      %v540 = vunpack.c.l.b16 %v518
      %v541 = vunpack.c.h.b16 %v518
      %v542 = vunpack.c.l.b16 %v519
      %v543 = vunpack.c.h.b16 %v519
      %v544 = vpack.c.b16 %v530, %v528
      %v545 = vpack.c.b16 %v531, %v529
      %v546 = vpack.c.b16 %v534, %v532
      %v547 = vpack.c.b16 %v535, %v533
      %v548 = vpack.c.b16 %v538, %v536
      %v549 = vpack.c.b16 %v539, %v537
      %v550 = vpack.c.b16 %v542, %v540
      %v551 = vpack.c.b16 %v543, %v541
      %vm560 = vcmask 523264
      %v562 = vsel %vm560, %v510, 0
      %564 = vmatprep.subr.bf16.mxu0 %v545
      %565 = vmatpush1.bf16.msra.mxu0 %v544
      %566 = vmatprep.subr.bf16.mxu0 %v547
      %567 = vmatpush1.bf16.msra.mxu0 %v546
      %568 = vmatprep.subr.bf16.mxu0 %v549
      %569 = vmatpush1.bf16.msra.mxu0 %v548
      %570 = vmatprep.subr.bf16.mxu0 %v551
      %571 = vmatpush1.bf16.msra.mxu0 %v550
      %572 = vmatprep.subr.bf16.mxu0 0
      %573 = vmatpush1.bf16.msra.mxu0 0
      %574 = vmatprep.subr.bf16.mxu0 0
      %575 = vmatpush1.bf16.msra.mxu0 0
      %576 = vmatprep.subr.bf16.mxu0 0
      %577 = vmatpush1.bf16.msra.mxu0 0
      %578 = vmatprep.subr.bf16.mxu0 0
      %579 = vmatpush1.bf16.msra.mxu0 0
      %580 = vmatprep.subr.bf16.mxu0 0
      %581 = vmatpush1.bf16.msra.mxu0 0
      %582 = vmatprep.subr.bf16.mxu0 0
      %583 = vmatpush1.bf16.msra.mxu0 0
      %584 = vmatprep.subr.bf16.mxu0 0
      %585 = vmatpush1.bf16.msra.mxu0 0
      %586 = vmatprep.subr.bf16.mxu0 0
      %587 = vmatpush1.bf16.msra.mxu0 0
      %588 = vmatprep.subr.bf16.mxu0 0
      %589 = vmatpush1.bf16.msra.mxu0 0
      %590 = vmatprep.subr.bf16.mxu0 0
      %591 = vmatpush1.bf16.msra.mxu0 0
      %592 = vmatprep.subr.bf16.mxu0 0
      %593 = vmatpush1.bf16.msra.mxu0 0
      %594 = vmatprep.subr.bf16.mxu0 0
      %595 = vmatpush1.bf16.msra.mxu0 0
      %596 = vmatprep.mubr.bf16.mxu0 0
      %597 = vmatmul.mubr.bf16.gmra.mrb[0].mxu0 %v562
      %v598 = vpop.f32.mrb[0].mxu0
      %v599 = vadd.f32 0.0, %v598
      %v600 = vpop.f32.mrb[0].mxu0
      %v601 = vadd.f32 0.0, %v600
      %v602 = vpop.f32.mrb[0].mxu0
      %v603 = vpop.f32.mrb[0].mxu0
      %604 = vdwg.mxu0
      %v613 = vunpack.c.l.b16 %v501
      %v614 = vunpack.c.h.b16 %v501
      %v615 = vunpack.c.l.b16 %v502
      %v616 = vunpack.c.h.b16 %v502
      %v617 = vunpack.c.l.b16 %v503
      %v618 = vunpack.c.h.b16 %v503
      %v619 = vunpack.c.l.b16 %v504
      %v620 = vunpack.c.h.b16 %v504
      %v621 = vunpack.c.l.b16 %v505
      %v622 = vunpack.c.h.b16 %v505
      %v623 = vunpack.c.l.b16 %v506
      %v624 = vunpack.c.h.b16 %v506
      %v625 = vunpack.c.l.b16 %v507
      %v626 = vunpack.c.h.b16 %v507
      %v627 = vunpack.c.l.b16 %v508
      %v628 = vunpack.c.h.b16 %v508
      %v629 = vpack.c.b16 %v615, %v613
      %v630 = vpack.c.b16 %v616, %v614
      %v631 = vpack.c.b16 %v619, %v617
      %v632 = vpack.c.b16 %v620, %v618
      %v633 = vpack.c.b16 %v623, %v621
      %v634 = vpack.c.b16 %v624, %v622
      %v635 = vpack.c.b16 %v627, %v625
      %v636 = vpack.c.b16 %v628, %v626
      %v646 = vsel %vm560, %v500, 0
      %648 = vmatprep.subr.bf16.mxu0 %v630
      %649 = vmatpush1.bf16.msra.mxu0 %v629
      %650 = vmatprep.subr.bf16.mxu0 %v632
      %651 = vmatpush1.bf16.msra.mxu0 %v631
      %652 = vmatprep.subr.bf16.mxu0 %v634
      %653 = vmatpush1.bf16.msra.mxu0 %v633
      %654 = vmatprep.subr.bf16.mxu0 %v636
      %655 = vmatpush1.bf16.msra.mxu0 %v635
      %656 = vmatprep.subr.bf16.mxu0 0
      %657 = vmatpush1.bf16.msra.mxu0 0
      %658 = vmatprep.subr.bf16.mxu0 0
      %659 = vmatpush1.bf16.msra.mxu0 0
      %660 = vmatprep.subr.bf16.mxu0 0
      %661 = vmatpush1.bf16.msra.mxu0 0
      %662 = vmatprep.subr.bf16.mxu0 0
      %663 = vmatpush1.bf16.msra.mxu0 0
      %664 = vmatprep.subr.bf16.mxu0 0
      %665 = vmatpush1.bf16.msra.mxu0 0
      %666 = vmatprep.subr.bf16.mxu0 0
      %667 = vmatpush1.bf16.msra.mxu0 0
      %668 = vmatprep.subr.bf16.mxu0 0
      %669 = vmatpush1.bf16.msra.mxu0 0
      %670 = vmatprep.subr.bf16.mxu0 0
      %671 = vmatpush1.bf16.msra.mxu0 0
      %672 = vmatprep.subr.bf16.mxu0 0
      %673 = vmatpush1.bf16.msra.mxu0 0
      %674 = vmatprep.subr.bf16.mxu0 0
      %675 = vmatpush1.bf16.msra.mxu0 0
      %676 = vmatprep.subr.bf16.mxu0 0
      %677 = vmatpush1.bf16.msra.mxu0 0
      %678 = vmatprep.subr.bf16.mxu0 0
      %679 = vmatpush1.bf16.msra.mxu0 0
      %680 = vmatprep.mubr.bf16.mxu0 0
      %681 = vmatmul.mubr.bf16.gmra.mrb[0].mxu0 %v646
      %v682 = vpop.f32.mrb[0].mxu0
      %v683 = vadd.f32 %v599, %v682
      %v684 = vpop.f32.mrb[0].mxu0
      %v685 = vadd.f32 %v601, %v684
      %v686 = vpop.f32.mrb[0].mxu0
      %v687 = vpop.f32.mrb[0].mxu0
      %688 = vdwg.mxu0
      %v689 = vld [vmem:[#allocation2 + $0x2] sm:$0xf]
      %v690 = vpack.c.bf16 %v689, %v689
      %s691 = scalar_lea.vmem %s1, 128
      %v692 = vld [vmem:[%s691] sm:$0xff]
      %v693 = vld [vmem:[%s691 + $0x8] sm:$0xff]
      %v694 = vld [vmem:[%s691 + $0x10] sm:$0xff]
      %v695 = vld [vmem:[%s691 + $0x18] sm:$0xff]
      %v696 = vld [vmem:[%s691 + $0x20] sm:$0xff]
      %v697 = vld [vmem:[%s691 + $0x28] sm:$0xff]
      %v698 = vld [vmem:[%s691 + $0x30] sm:$0xff]
      %v699 = vld [vmem:[%s691 + $0x38] sm:$0xff]
      %v708 = vunpack.c.l.b16 %v692
      %v709 = vunpack.c.h.b16 %v692
      %v710 = vunpack.c.l.b16 %v693
      %v711 = vunpack.c.h.b16 %v693
      %v712 = vunpack.c.l.b16 %v694
      %v713 = vunpack.c.h.b16 %v694
      %v714 = vunpack.c.l.b16 %v695
      %v715 = vunpack.c.h.b16 %v695
      %v716 = vunpack.c.l.b16 %v696
      %v717 = vunpack.c.h.b16 %v696
      %v718 = vunpack.c.l.b16 %v697
      %v719 = vunpack.c.h.b16 %v697
      %v720 = vunpack.c.l.b16 %v698
      %v721 = vunpack.c.h.b16 %v698
      %v722 = vunpack.c.l.b16 %v699
      %v723 = vunpack.c.h.b16 %v699
      %v724 = vpack.c.b16 %v710, %v708
      %v725 = vpack.c.b16 %v711, %v709
      %v726 = vpack.c.b16 %v714, %v712
      %v727 = vpack.c.b16 %v715, %v713
      %v728 = vpack.c.b16 %v718, %v716
      %v729 = vpack.c.b16 %v719, %v717
      %v730 = vpack.c.b16 %v722, %v720
      %v731 = vpack.c.b16 %v723, %v721
      %v741 = vsel %vm560, %v690, 0
      %743 = vmatprep.subr.bf16.mxu0 %v725
      %744 = vmatpush1.bf16.msra.mxu0 %v724
      %745 = vmatprep.subr.bf16.mxu0 %v727
      %746 = vmatpush1.bf16.msra.mxu0 %v726
      %747 = vmatprep.subr.bf16.mxu0 %v729
      %748 = vmatpush1.bf16.msra.mxu0 %v728
      %749 = vmatprep.subr.bf16.mxu0 %v731
      %750 = vmatpush1.bf16.msra.mxu0 %v730
      %751 = vmatprep.subr.bf16.mxu0 0
      %752 = vmatpush1.bf16.msra.mxu0 0
      %753 = vmatprep.subr.bf16.mxu0 0
      %754 = vmatpush1.bf16.msra.mxu0 0
      %755 = vmatprep.subr.bf16.mxu0 0
      %756 = vmatpush1.bf16.msra.mxu0 0
      %757 = vmatprep.subr.bf16.mxu0 0
      %758 = vmatpush1.bf16.msra.mxu0 0
      %759 = vmatprep.subr.bf16.mxu0 0
      %760 = vmatpush1.bf16.msra.mxu0 0
      %761 = vmatprep.subr.bf16.mxu0 0
      %762 = vmatpush1.bf16.msra.mxu0 0
      %763 = vmatprep.subr.bf16.mxu0 0
      %764 = vmatpush1.bf16.msra.mxu0 0
      %765 = vmatprep.subr.bf16.mxu0 0
      %766 = vmatpush1.bf16.msra.mxu0 0
      %767 = vmatprep.subr.bf16.mxu0 0
      %768 = vmatpush1.bf16.msra.mxu0 0
      %769 = vmatprep.subr.bf16.mxu0 0
      %770 = vmatpush1.bf16.msra.mxu0 0
      %771 = vmatprep.subr.bf16.mxu0 0
      %772 = vmatpush1.bf16.msra.mxu0 0
      %773 = vmatprep.subr.bf16.mxu0 0
      %774 = vmatpush1.bf16.msra.mxu0 0
      %775 = vmatprep.mubr.bf16.mxu0 0
      %776 = vmatmul.mubr.bf16.gmra.mrb[0].mxu0 %v741
      %v777 = vpop.f32.mrb[0].mxu0
      %v778 = vadd.f32 0.0, %v777
      %v779 = vpop.f32.mrb[0].mxu0
      %v780 = vadd.f32 0.0, %v779
      %v781 = vpop.f32.mrb[0].mxu0
      %v782 = vpop.f32.mrb[0].mxu0
      %783 = vdwg.mxu0
      %v784 = vadd.f32 %v683, %v778
      %v785 = vadd.f32 %v685, %v780
      %v786 = vld [vmem:[#allocation2 + $0x3] sm:$0xf]
      %v787 = vpack.c.bf16 %v786, %v786
      %s788 = scalar_lea.vmem %s1, 192
      %v789 = vld [vmem:[%s788] sm:$0xff]
      %v790 = vld [vmem:[%s788 + $0x8] sm:$0xff]
      %v791 = vld [vmem:[%s788 + $0x10] sm:$0xff]
      %v792 = vld [vmem:[%s788 + $0x18] sm:$0xff]
      %v793 = vld [vmem:[%s788 + $0x20] sm:$0xff]
      %v794 = vld [vmem:[%s788 + $0x28] sm:$0xff]
      %v795 = vld [vmem:[%s788 + $0x30] sm:$0xff]
      %v796 = vld [vmem:[%s788 + $0x38] sm:$0xff]
      %v805 = vunpack.c.l.b16 %v789
      %v806 = vunpack.c.h.b16 %v789
      %v807 = vunpack.c.l.b16 %v790
      %v808 = vunpack.c.h.b16 %v790
      %v809 = vunpack.c.l.b16 %v791
      %v810 = vunpack.c.h.b16 %v791
      %v811 = vunpack.c.l.b16 %v792
      %v812 = vunpack.c.h.b16 %v792
      %v813 = vunpack.c.l.b16 %v793
      %v814 = vunpack.c.h.b16 %v793
      %v815 = vunpack.c.l.b16 %v794
      %v816 = vunpack.c.h.b16 %v794
      %v817 = vunpack.c.l.b16 %v795
      %v818 = vunpack.c.h.b16 %v795
      %v819 = vunpack.c.l.b16 %v796
      %v820 = vunpack.c.h.b16 %v796
      %v821 = vpack.c.b16 %v807, %v805
      %v822 = vpack.c.b16 %v808, %v806
      %v823 = vpack.c.b16 %v811, %v809
      %v824 = vpack.c.b16 %v812, %v810
      %v825 = vpack.c.b16 %v815, %v813
      %v826 = vpack.c.b16 %v816, %v814
      %v827 = vpack.c.b16 %v819, %v817
      %v828 = vpack.c.b16 %v820, %v818
      %v838 = vsel %vm560, %v787, 0
      %840 = vmatprep.subr.bf16.mxu0 %v822
      %841 = vmatpush1.bf16.msra.mxu0 %v821
      %842 = vmatprep.subr.bf16.mxu0 %v824
      %843 = vmatpush1.bf16.msra.mxu0 %v823
      %844 = vmatprep.subr.bf16.mxu0 %v826
      %845 = vmatpush1.bf16.msra.mxu0 %v825
      %846 = vmatprep.subr.bf16.mxu0 %v828
      %847 = vmatpush1.bf16.msra.mxu0 %v827
      %848 = vmatprep.subr.bf16.mxu0 0
      %849 = vmatpush1.bf16.msra.mxu0 0
      %850 = vmatprep.subr.bf16.mxu0 0
      %851 = vmatpush1.bf16.msra.mxu0 0
      %852 = vmatprep.subr.bf16.mxu0 0
      %853 = vmatpush1.bf16.msra.mxu0 0
      %854 = vmatprep.subr.bf16.mxu0 0
      %855 = vmatpush1.bf16.msra.mxu0 0
      %856 = vmatprep.subr.bf16.mxu0 0
      %857 = vmatpush1.bf16.msra.mxu0 0
      %858 = vmatprep.subr.bf16.mxu0 0
      %859 = vmatpush1.bf16.msra.mxu0 0
      %860 = vmatprep.subr.bf16.mxu0 0
      %861 = vmatpush1.bf16.msra.mxu0 0
      %862 = vmatprep.subr.bf16.mxu0 0
      %863 = vmatpush1.bf16.msra.mxu0 0
      %864 = vmatprep.subr.bf16.mxu0 0
      %865 = vmatpush1.bf16.msra.mxu0 0
      %866 = vmatprep.subr.bf16.mxu0 0
      %867 = vmatpush1.bf16.msra.mxu0 0
      %868 = vmatprep.subr.bf16.mxu0 0
      %869 = vmatpush1.bf16.msra.mxu0 0
      %870 = vmatprep.subr.bf16.mxu0 0
      %871 = vmatpush1.bf16.msra.mxu0 0
      %872 = vmatprep.mubr.bf16.mxu0 0
      %873 = vmatmul.mubr.bf16.gmra.mrb[0].mxu0 %v838
      %v874 = vpop.f32.mrb[0].mxu0
      %v875 = vadd.f32 0.0, %v874
      %v876 = vpop.f32.mrb[0].mxu0
      %v877 = vadd.f32 0.0, %v876
      %v878 = vpop.f32.mrb[0].mxu0
      %v879 = vpop.f32.mrb[0].mxu0
      %880 = vdwg.mxu0
      %v881 = vadd.f32 %v784, %v875
      %v882 = vadd.f32 %v785, %v877
      %s883 = scalar_lea.vmem %s1, 256
      %v884 = vld [vmem:[%s883] sm:$0xff]
      %v885 = vld [vmem:[%s883 + $0x8] sm:$0xff]
      %v886 = vld [vmem:[%s883 + $0x10] sm:$0xff]
      %v887 = vld [vmem:[%s883 + $0x18] sm:$0xff]
      %v888 = vld [vmem:[%s883 + $0x20] sm:$0xff]
      %v889 = vld [vmem:[%s883 + $0x28] sm:$0xff]
      %v890 = vld [vmem:[%s883 + $0x30] sm:$0xff]
      %v891 = vld [vmem:[%s883 + $0x38] sm:$0xff]
      %s892 = scalar_lea.vmem %s1, 320
      %v893 = vld [vmem:[%s892] sm:$0xff]
      %v894 = vld [vmem:[%s892 + $0x8] sm:$0xff]
      %v895 = vld [vmem:[%s892 + $0x10] sm:$0xff]
      %v896 = vld [vmem:[%s892 + $0x18] sm:$0xff]
      %v897 = vld [vmem:[%s892 + $0x20] sm:$0xff]
      %v898 = vld [vmem:[%s892 + $0x28] sm:$0xff]
      %v899 = vld [vmem:[%s892 + $0x30] sm:$0xff]
      %v900 = vld [vmem:[%s892 + $0x38] sm:$0xff]
      %v909 = vunpack.c.l.b16 %v893
      %v910 = vunpack.c.h.b16 %v893
      %v911 = vunpack.c.l.b16 %v894
      %v912 = vunpack.c.h.b16 %v894
      %v913 = vunpack.c.l.b16 %v895
      %v914 = vunpack.c.h.b16 %v895
      %v915 = vunpack.c.l.b16 %v896
      %v916 = vunpack.c.h.b16 %v896
      %v917 = vunpack.c.l.b16 %v897
      %v918 = vunpack.c.h.b16 %v897
      %v919 = vunpack.c.l.b16 %v898
      %v920 = vunpack.c.h.b16 %v898
      %v921 = vunpack.c.l.b16 %v899
      %v922 = vunpack.c.h.b16 %v899
      %v923 = vunpack.c.l.b16 %v900
      %v924 = vunpack.c.h.b16 %v900
      %v925 = vpack.c.b16 %v911, %v909
      %v926 = vpack.c.b16 %v912, %v910
      %v927 = vpack.c.b16 %v915, %v913
      %v928 = vpack.c.b16 %v916, %v914
      %v929 = vpack.c.b16 %v919, %v917
      %v930 = vpack.c.b16 %v920, %v918
      %v931 = vpack.c.b16 %v923, %v921
      %v932 = vpack.c.b16 %v924, %v922
      %941 = vmatprep.subr.bf16.mxu0 %v926
      %942 = vmatpush1.bf16.msra.mxu0 %v925
      %943 = vmatprep.subr.bf16.mxu0 %v928
      %944 = vmatpush1.bf16.msra.mxu0 %v927
      %945 = vmatprep.subr.bf16.mxu0 %v930
      %946 = vmatpush1.bf16.msra.mxu0 %v929
      %947 = vmatprep.subr.bf16.mxu0 %v932
      %948 = vmatpush1.bf16.msra.mxu0 %v931
      %949 = vmatprep.subr.bf16.mxu0 0
      %950 = vmatpush1.bf16.msra.mxu0 0
      %951 = vmatprep.subr.bf16.mxu0 0
      %952 = vmatpush1.bf16.msra.mxu0 0
      %953 = vmatprep.subr.bf16.mxu0 0
      %954 = vmatpush1.bf16.msra.mxu0 0
      %955 = vmatprep.subr.bf16.mxu0 0
      %956 = vmatpush1.bf16.msra.mxu0 0
      %957 = vmatprep.subr.bf16.mxu0 0
      %958 = vmatpush1.bf16.msra.mxu0 0
      %959 = vmatprep.subr.bf16.mxu0 0
      %960 = vmatpush1.bf16.msra.mxu0 0
      %961 = vmatprep.subr.bf16.mxu0 0
      %962 = vmatpush1.bf16.msra.mxu0 0
      %963 = vmatprep.subr.bf16.mxu0 0
      %964 = vmatpush1.bf16.msra.mxu0 0
      %965 = vmatprep.subr.bf16.mxu0 0
      %966 = vmatpush1.bf16.msra.mxu0 0
      %967 = vmatprep.subr.bf16.mxu0 0
      %968 = vmatpush1.bf16.msra.mxu0 0
      %969 = vmatprep.subr.bf16.mxu0 0
      %970 = vmatpush1.bf16.msra.mxu0 0
      %971 = vmatprep.subr.bf16.mxu0 0
      %972 = vmatpush1.bf16.msra.mxu0 0
      %973 = vmatprep.mubr.bf16.mxu0 0
      %974 = vmatmul.mubr.bf16.gmra.mrb[0].mxu0 %v741
      %v975 = vpop.f32.mrb[0].mxu0
      %v976 = vadd.f32 0.0, %v975
      %v977 = vpop.f32.mrb[0].mxu0
      %v978 = vadd.f32 0.0, %v977
      %v979 = vpop.f32.mrb[0].mxu0
      %v980 = vpop.f32.mrb[0].mxu0
      %981 = vdwg.mxu0
      %v990 = vunpack.c.l.b16 %v884
      %v991 = vunpack.c.h.b16 %v884
      %v992 = vunpack.c.l.b16 %v885
      %v993 = vunpack.c.h.b16 %v885
      %v994 = vunpack.c.l.b16 %v886
      %v995 = vunpack.c.h.b16 %v886
      %v996 = vunpack.c.l.b16 %v887
      %v997 = vunpack.c.h.b16 %v887
      %v998 = vunpack.c.l.b16 %v888
      %v999 = vunpack.c.h.b16 %v888
      %v1000 = vunpack.c.l.b16 %v889
      %v1001 = vunpack.c.h.b16 %v889
      %v1002 = vunpack.c.l.b16 %v890
      %v1003 = vunpack.c.h.b16 %v890
      %v1004 = vunpack.c.l.b16 %v891
      %v1005 = vunpack.c.h.b16 %v891
      %v1006 = vpack.c.b16 %v992, %v990
      %v1007 = vpack.c.b16 %v993, %v991
      %v1008 = vpack.c.b16 %v996, %v994
      %v1009 = vpack.c.b16 %v997, %v995
      %v1010 = vpack.c.b16 %v1000, %v998
      %v1011 = vpack.c.b16 %v1001, %v999
      %v1012 = vpack.c.b16 %v1004, %v1002
      %v1013 = vpack.c.b16 %v1005, %v1003
      %1022 = vmatprep.subr.bf16.mxu0 %v1007
      %1023 = vmatpush1.bf16.msra.mxu0 %v1006
      %1024 = vmatprep.subr.bf16.mxu0 %v1009
      %1025 = vmatpush1.bf16.msra.mxu0 %v1008
      %1026 = vmatprep.subr.bf16.mxu0 %v1011
      %1027 = vmatpush1.bf16.msra.mxu0 %v1010
      %1028 = vmatprep.subr.bf16.mxu0 %v1013
      %1029 = vmatpush1.bf16.msra.mxu0 %v1012
      %1030 = vmatprep.subr.bf16.mxu0 0
      %1031 = vmatpush1.bf16.msra.mxu0 0
      %1032 = vmatprep.subr.bf16.mxu0 0
      %1033 = vmatpush1.bf16.msra.mxu0 0
      %1034 = vmatprep.subr.bf16.mxu0 0
      %1035 = vmatpush1.bf16.msra.mxu0 0
      %1036 = vmatprep.subr.bf16.mxu0 0
      %1037 = vmatpush1.bf16.msra.mxu0 0
      %1038 = vmatprep.subr.bf16.mxu0 0
      %1039 = vmatpush1.bf16.msra.mxu0 0
      %1040 = vmatprep.subr.bf16.mxu0 0
      %1041 = vmatpush1.bf16.msra.mxu0 0
      %1042 = vmatprep.subr.bf16.mxu0 0
      %1043 = vmatpush1.bf16.msra.mxu0 0
      %1044 = vmatprep.subr.bf16.mxu0 0
      %1045 = vmatpush1.bf16.msra.mxu0 0
      %1046 = vmatprep.subr.bf16.mxu0 0
      %1047 = vmatpush1.bf16.msra.mxu0 0
      %1048 = vmatprep.subr.bf16.mxu0 0
      %1049 = vmatpush1.bf16.msra.mxu0 0
      %1050 = vmatprep.subr.bf16.mxu0 0
      %1051 = vmatpush1.bf16.msra.mxu0 0
      %1052 = vmatprep.subr.bf16.mxu0 0
      %1053 = vmatpush1.bf16.msra.mxu0 0
      %1054 = vmatprep.mubr.bf16.mxu0 0
      %1055 = vmatmul.mubr.bf16.gmra.mrb[0].mxu0 %v562
      %v1056 = vpop.f32.mrb[0].mxu0
      %v1057 = vadd.f32 %v976, %v1056
      %v1058 = vpop.f32.mrb[0].mxu0
      %v1059 = vadd.f32 %v978, %v1058
      %v1060 = vpop.f32.mrb[0].mxu0
      %v1061 = vpop.f32.mrb[0].mxu0
      %1062 = vdwg.mxu0
      %s1063 = scalar_lea.vmem %s1, 384
      %v1064 = vld [vmem:[%s1063] sm:$0xff]
      %v1065 = vld [vmem:[%s1063 + $0x8] sm:$0xff]
      %v1066 = vld [vmem:[%s1063 + $0x10] sm:$0xff]
      %v1067 = vld [vmem:[%s1063 + $0x18] sm:$0xff]
      %v1068 = vld [vmem:[%s1063 + $0x20] sm:$0xff]
      %v1069 = vld [vmem:[%s1063 + $0x28] sm:$0xff]
      %v1070 = vld [vmem:[%s1063 + $0x30] sm:$0xff]
      %v1071 = vld [vmem:[%s1063 + $0x38] sm:$0xff]
      %v1080 = vunpack.c.l.b16 %v1064
      %v1081 = vunpack.c.h.b16 %v1064
      %v1082 = vunpack.c.l.b16 %v1065
      %v1083 = vunpack.c.h.b16 %v1065
      %v1084 = vunpack.c.l.b16 %v1066
      %v1085 = vunpack.c.h.b16 %v1066
      %v1086 = vunpack.c.l.b16 %v1067
      %v1087 = vunpack.c.h.b16 %v1067
      %v1088 = vunpack.c.l.b16 %v1068
      %v1089 = vunpack.c.h.b16 %v1068
      %v1090 = vunpack.c.l.b16 %v1069
      %v1091 = vunpack.c.h.b16 %v1069
      %v1092 = vunpack.c.l.b16 %v1070
      %v1093 = vunpack.c.h.b16 %v1070
      %v1094 = vunpack.c.l.b16 %v1071
      %v1095 = vunpack.c.h.b16 %v1071
      %v1096 = vpack.c.b16 %v1082, %v1080
      %v1097 = vpack.c.b16 %v1083, %v1081
      %v1098 = vpack.c.b16 %v1086, %v1084
      %v1099 = vpack.c.b16 %v1087, %v1085
      %v1100 = vpack.c.b16 %v1090, %v1088
      %v1101 = vpack.c.b16 %v1091, %v1089
      %v1102 = vpack.c.b16 %v1094, %v1092
      %v1103 = vpack.c.b16 %v1095, %v1093
      %1112 = vmatprep.subr.bf16.mxu0 %v1097
      %1113 = vmatpush1.bf16.msra.mxu0 %v1096
      %1114 = vmatprep.subr.bf16.mxu0 %v1099
      %1115 = vmatpush1.bf16.msra.mxu0 %v1098
      %1116 = vmatprep.subr.bf16.mxu0 %v1101
      %1117 = vmatpush1.bf16.msra.mxu0 %v1100
      %1118 = vmatprep.subr.bf16.mxu0 %v1103
      %1119 = vmatpush1.bf16.msra.mxu0 %v1102
      %1120 = vmatprep.subr.bf16.mxu0 0
      %1121 = vmatpush1.bf16.msra.mxu0 0
      %1122 = vmatprep.subr.bf16.mxu0 0
      %1123 = vmatpush1.bf16.msra.mxu0 0
      %1124 = vmatprep.subr.bf16.mxu0 0
      %1125 = vmatpush1.bf16.msra.mxu0 0
      %1126 = vmatprep.subr.bf16.mxu0 0
      %1127 = vmatpush1.bf16.msra.mxu0 0
      %1128 = vmatprep.subr.bf16.mxu0 0
      %1129 = vmatpush1.bf16.msra.mxu0 0
      %1130 = vmatprep.subr.bf16.mxu0 0
      %1131 = vmatpush1.bf16.msra.mxu0 0
      %1132 = vmatprep.subr.bf16.mxu0 0
      %1133 = vmatpush1.bf16.msra.mxu0 0
      %1134 = vmatprep.subr.bf16.mxu0 0
      %1135 = vmatpush1.bf16.msra.mxu0 0
      %1136 = vmatprep.subr.bf16.mxu0 0
      %1137 = vmatpush1.bf16.msra.mxu0 0
      %1138 = vmatprep.subr.bf16.mxu0 0
      %1139 = vmatpush1.bf16.msra.mxu0 0
      %1140 = vmatprep.subr.bf16.mxu0 0
      %1141 = vmatpush1.bf16.msra.mxu0 0
      %1142 = vmatprep.subr.bf16.mxu0 0
      %1143 = vmatpush1.bf16.msra.mxu0 0
      %1144 = vmatprep.mubr.bf16.mxu0 0
      %1145 = vmatmul.mubr.bf16.gmra.mrb[0].mxu0 %v838
      %v1146 = vpop.f32.mrb[0].mxu0
      %v1147 = vadd.f32 0.0, %v1146
      %v1148 = vpop.f32.mrb[0].mxu0
      %v1149 = vadd.f32 0.0, %v1148
      %v1150 = vpop.f32.mrb[0].mxu0
      %v1151 = vpop.f32.mrb[0].mxu0
      %1152 = vdwg.mxu0
      %v1153 = vadd.f32 %v1057, %v1147
      %v1154 = vadd.f32 %v1059, %v1149
      %v1155 = vld [vmem:[#allocation2 + $0x4] sm:$0xf]
      %v1156 = vpack.c.bf16 %v1155, %v1155
      %s1157 = scalar_lea.vmem %s1, 448
      %v1158 = vld [vmem:[%s1157] sm:$0xff]
      %v1159 = vld [vmem:[%s1157 + $0x8] sm:$0xff]
      %v1160 = vld [vmem:[%s1157 + $0x10] sm:$0xff]
      %v1161 = vld [vmem:[%s1157 + $0x18] sm:$0xff]
      %v1162 = vld [vmem:[%s1157 + $0x20] sm:$0xff]
      %v1163 = vld [vmem:[%s1157 + $0x28] sm:$0xff]
      %v1164 = vld [vmem:[%s1157 + $0x30] sm:$0xff]
      %v1165 = vld [vmem:[%s1157 + $0x38] sm:$0xff]
      %v1174 = vunpack.c.l.b16 %v1158
      %v1175 = vunpack.c.h.b16 %v1158
      %v1176 = vunpack.c.l.b16 %v1159
      %v1177 = vunpack.c.h.b16 %v1159
      %v1178 = vunpack.c.l.b16 %v1160
      %v1179 = vunpack.c.h.b16 %v1160
      %v1180 = vunpack.c.l.b16 %v1161
      %v1181 = vunpack.c.h.b16 %v1161
      %v1182 = vunpack.c.l.b16 %v1162
      %v1183 = vunpack.c.h.b16 %v1162
      %v1184 = vunpack.c.l.b16 %v1163
      %v1185 = vunpack.c.h.b16 %v1163
      %v1186 = vunpack.c.l.b16 %v1164
      %v1187 = vunpack.c.h.b16 %v1164
      %v1188 = vunpack.c.l.b16 %v1165
      %v1189 = vunpack.c.h.b16 %v1165
      %v1190 = vpack.c.b16 %v1176, %v1174
      %v1191 = vpack.c.b16 %v1177, %v1175
      %v1192 = vpack.c.b16 %v1180, %v1178
      %v1193 = vpack.c.b16 %v1181, %v1179
      %v1194 = vpack.c.b16 %v1184, %v1182
      %v1195 = vpack.c.b16 %v1185, %v1183
      %v1196 = vpack.c.b16 %v1188, %v1186
      %v1197 = vpack.c.b16 %v1189, %v1187
      %v1207 = vsel %vm560, %v1156, 0
      %1209 = vmatprep.subr.bf16.mxu0 %v1191
      %1210 = vmatpush1.bf16.msra.mxu0 %v1190
      %1211 = vmatprep.subr.bf16.mxu0 %v1193
      %1212 = vmatpush1.bf16.msra.mxu0 %v1192
      %1213 = vmatprep.subr.bf16.mxu0 %v1195
      %1214 = vmatpush1.bf16.msra.mxu0 %v1194
      %1215 = vmatprep.subr.bf16.mxu0 %v1197
      %1216 = vmatpush1.bf16.msra.mxu0 %v1196
      %1217 = vmatprep.subr.bf16.mxu0 0
      %1218 = vmatpush1.bf16.msra.mxu0 0
      %1219 = vmatprep.subr.bf16.mxu0 0
      %1220 = vmatpush1.bf16.msra.mxu0 0
      %1221 = vmatprep.subr.bf16.mxu0 0
      %1222 = vmatpush1.bf16.msra.mxu0 0
      %1223 = vmatprep.subr.bf16.mxu0 0
      %1224 = vmatpush1.bf16.msra.mxu0 0
      %1225 = vmatprep.subr.bf16.mxu0 0
      %1226 = vmatpush1.bf16.msra.mxu0 0
      %1227 = vmatprep.subr.bf16.mxu0 0
      %1228 = vmatpush1.bf16.msra.mxu0 0
      %1229 = vmatprep.subr.bf16.mxu0 0
      %1230 = vmatpush1.bf16.msra.mxu0 0
      %1231 = vmatprep.subr.bf16.mxu0 0
      %1232 = vmatpush1.bf16.msra.mxu0 0
      %1233 = vmatprep.subr.bf16.mxu0 0
      %1234 = vmatpush1.bf16.msra.mxu0 0
      %1235 = vmatprep.subr.bf16.mxu0 0
      %1236 = vmatpush1.bf16.msra.mxu0 0
      %1237 = vmatprep.subr.bf16.mxu0 0
      %1238 = vmatpush1.bf16.msra.mxu0 0
      %1239 = vmatprep.subr.bf16.mxu0 0
      %1240 = vmatpush1.bf16.msra.mxu0 0
      %1241 = vmatprep.mubr.bf16.mxu0 0
      %1242 = vmatmul.mubr.bf16.gmra.mrb[0].mxu0 %v1207
      %v1243 = vpop.f32.mrb[0].mxu0
      %v1244 = vadd.f32 0.0, %v1243
      %v1245 = vpop.f32.mrb[0].mxu0
      %v1246 = vadd.f32 0.0, %v1245
      %v1247 = vpop.f32.mrb[0].mxu0
      %v1248 = vpop.f32.mrb[0].mxu0
      %1249 = vdwg.mxu0
      %v1250 = vadd.f32 %v1153, %v1244
      %v1251 = vadd.f32 %v1154, %v1246
      %v1252 = vld [vmem:[%s2] sm:$0x3]
      %v1254 = vlaneseq
      %v1255 = vshrl.u32 %v1254, 7
      %v1256 = vsub.s32 0, %v1255
      %v1257 = vrot.slane %v1252, %v1256
      %v1258 = vlaneseq
      %v1259 = vshrl.u32 %v1258, 7
      %v1260 = vsub.s32 1, %v1259
      %v1261 = vrot.slane %v1252, %v1260
      %v1264 = vadd.f32 %v881, %v1257
      %v1265 = vadd.f32 %v882, %v1261
      %v1266 = vmax.f32 %v1264, 0.0
      %v1267 = vmax.f32 %v1265, 0.0
      %v1268 = vadd.f32 %v1250, %v1257
      %v1269 = vadd.f32 %v1251, %v1261
      %v1270 = vmax.f32 %v1268, 0.0
      %v1271 = vmax.f32 %v1269, 0.0
      %vm1272 = vcmask 1043456
      %v1273 = vsel %vm1272, %v1266, 0.0
      %v1274 = vsel %vm1272, %v1267, 0.0
      %v1275 = vadd.f32 %v1273, %v1274
      %1276 = vadd.xlane.f32.xlu0 %v1275
      %v1277 = vpop.xlane.xlu0 %1276
      %v1278 = vrot.slane %v1277, 4
      %v1279 = vadd.f32 %v1277, %v1278
      %v1280 = vrot.slane %v1279, 2
      %v1281 = vadd.f32 %v1279, %v1280
      %v1282 = vrot.slane %v1281, 1
      %v1283 = vadd.f32 %v1281, %v1282
      %s1284 = vtos %v1283
      %v1285 = vsel %vm1272, %v1270, 0.0
      %v1286 = vsel %vm1272, %v1271, 0.0
      %v1287 = vadd.f32 %v1285, %v1286
      %1288 = vadd.xlane.f32.xlu0 %v1287
      %v1289 = vpop.xlane.xlu0 %1288
      %v1290 = vrot.slane %v1289, 4
      %v1291 = vadd.f32 %v1289, %v1290
      %v1292 = vrot.slane %v1291, 2
      %v1293 = vadd.f32 %v1291, %v1292
      %v1294 = vrot.slane %v1293, 1
      %v1295 = vadd.f32 %v1293, %v1294
      %s1296 = vtos %v1295
      %s1297 = sadd.f32 %s1284, %s1296
      %v1298 = vrcp.pop 2048.0
      %s1299 = vtos %v1298
      %s1300 = smul.f32 %s1297, %s1299
      %v1301 = vstv %s1300
      %v1302 = vsub.f32 %v1266, %v1301
      %v1303 = vsub.f32 %v1267, %v1301
      %v1304 = vsub.f32 %v1270, %v1301
      %v1305 = vsub.f32 %v1271, %v1301
      %v1306 = vmul.f32 %v1302, %v1302
      %v1307 = vmul.f32 %v1303, %v1303
      %v1308 = vsel %vm1272, %v1306, 0.0
      %v1309 = vsel %vm1272, %v1307, 0.0
      %v1310 = vadd.f32 %v1308, %v1309
      %1311 = vadd.xlane.f32.xlu0 %v1310
      %v1312 = vpop.xlane.xlu0 %1311
      %v1313 = vrot.slane %v1312, 4
      %v1314 = vadd.f32 %v1312, %v1313
      %v1315 = vrot.slane %v1314, 2
      %v1316 = vadd.f32 %v1314, %v1315
      %v1317 = vrot.slane %v1316, 1
      %v1318 = vadd.f32 %v1316, %v1317
      %s1319 = vtos %v1318
      %v1320 = vmul.f32 %v1304, %v1304
      %v1321 = vmul.f32 %v1305, %v1305
      %v1322 = vsel %vm1272, %v1320, 0.0
      %v1323 = vsel %vm1272, %v1321, 0.0
      %v1324 = vadd.f32 %v1322, %v1323
      %1325 = vadd.xlane.f32.xlu0 %v1324
      %v1326 = vpop.xlane.xlu0 %1325
      %v1327 = vrot.slane %v1326, 4
      %v1328 = vadd.f32 %v1326, %v1327
      %v1329 = vrot.slane %v1328, 2
      %v1330 = vadd.f32 %v1328, %v1329
      %v1331 = vrot.slane %v1330, 1
      %v1332 = vadd.f32 %v1330, %v1331
      %s1333 = vtos %v1332
      %s1334 = sadd.f32 %s1319, %s1333
      %v1335 = vrcp.pop 2048.0
      %s1336 = vtos %v1335
      %s1337 = smul.f32 %s1334, %s1336
      %s1338 = sadd.f32 %s1337, 1e-05
      %v1339 = vstv %s1338
      %v1340 = vrsqrt.pop %v1339
      %s1341 = vtos %v1340
      %v1342 = vstv %s1341
      %v1343 = vmul.f32 %v1302, %v1342
      %v1344 = vmul.f32 %v1303, %v1342
      %v1345 = vld [vmem:[%s3] sm:$0x3]
      %v1347 = vlaneseq
      %v1348 = vshrl.u32 %v1347, 7
      %v1349 = vsub.s32 0, %v1348
      %v1350 = vrot.slane %v1345, %v1349
      %v1351 = vlaneseq
      %v1352 = vshrl.u32 %v1351, 7
      %v1353 = vsub.s32 1, %v1352
      %v1354 = vrot.slane %v1345, %v1353
      %v1357 = vmul.f32 %v1343, %v1350
      %v1358 = vmul.f32 %v1344, %v1354
      %v1359 = vld [vmem:[%s4] sm:$0x3]
      %v1361 = vlaneseq
      %v1362 = vshrl.u32 %v1361, 7
      %v1363 = vsub.s32 0, %v1362
      %v1364 = vrot.slane %v1359, %v1363
      %v1365 = vlaneseq
      %v1366 = vshrl.u32 %v1365, 7
      %v1367 = vsub.s32 1, %v1366
      %v1368 = vrot.slane %v1359, %v1367
      %v1371 = vadd.f32 %v1357, %v1364
      %v1372 = vadd.f32 %v1358, %v1368
      %v1373 = vmul.f32 %v1304, %v1342
      %v1374 = vmul.f32 %v1305, %v1342
      %v1375 = vmul.f32 %v1373, %v1350
      %v1376 = vmul.f32 %v1374, %v1354
      %v1377 = vadd.f32 %v1375, %v1364
      %v1378 = vadd.f32 %v1376, %v1368
      %v1381 = vcombine.low %v1371, %v1372
      %v1383 = vunpack.c.l.s4 1966171168
      %v1384 = vunpack.c.0.s8 %v1383
      %v1385 = vlaneseq
      %v1386 = vshrl.u32 %v1385, 7
      %v1387 = vsub.s32 %v1384, %v1386
      %v1388 = vrot.slane %v1381, %v1387
      %v1389 = vcombine.high %v1388, %v1388
      %v1391 = vunpack.c.l.s4 1966171168
      %v1392 = vunpack.c.0.s8 %v1391
      %v1393 = vlaneseq
      %v1394 = vshrl.u32 %v1393, 7
      %v1395 = vsub.s32 %v1392, %v1394
      %v1396 = vrot.slane %v1388, %v1395
      %v1398 = vunpack.c.l.s4 1966171168
      %v1399 = vunpack.c.0.s8 %v1398
      %v1400 = vlaneseq
      %v1401 = vshrl.u32 %v1400, 7
      %v1402 = vsub.s32 %v1399, %v1401
      %v1403 = vrot.slane %v1389, %v1402
      %v1404 = vcombine.high %v1396, %v1396
      %v1405 = vcombine.high %v1403, %v1403
      %v1408 = vcombine.low %v1377, %v1378
      %v1410 = vunpack.c.l.s4 1966171168
      %v1411 = vunpack.c.0.s8 %v1410
      %v1412 = vlaneseq
      %v1413 = vshrl.u32 %v1412, 7
      %v1414 = vsub.s32 %v1411, %v1413
      %v1415 = vrot.slane %v1408, %v1414
      %v1416 = vcombine.high %v1415, %v1415
      %v1418 = vunpack.c.l.s4 1966171168
      %v1419 = vunpack.c.0.s8 %v1418
      %v1420 = vlaneseq
      %v1421 = vshrl.u32 %v1420, 7
      %v1422 = vsub.s32 %v1419, %v1421
      %v1423 = vrot.slane %v1415, %v1422
      %v1425 = vunpack.c.l.s4 1966171168
      %v1426 = vunpack.c.0.s8 %v1425
      %v1427 = vlaneseq
      %v1428 = vshrl.u32 %v1427, 7
      %v1429 = vsub.s32 %v1426, %v1428
      %v1430 = vrot.slane %v1416, %v1429
      %v1431 = vcombine.high %v1423, %v1423
      %v1432 = vcombine.high %v1430, %v1430
      %v1433 = vlaneseq
      %v1434 = vshrl.u32 %v1433, 7
      %v1435 = vsub.s32 0, %v1434
      %v1436 = vrot.slane %v1396, %v1435
      %v1437 = vlaneseq
      %v1438 = vshrl.u32 %v1437, 7
      %v1439 = vsub.s32 1, %v1438
      %v1440 = vrot.slane %v1396, %v1439
      %v1441 = vlaneseq
      %v1442 = vshrl.u32 %v1441, 7
      %v1443 = vsub.s32 0, %v1442
      %v1444 = vrot.slane %v1403, %v1443
      %v1445 = vlaneseq
      %v1446 = vshrl.u32 %v1445, 7
      %v1447 = vsub.s32 1, %v1446
      %v1448 = vrot.slane %v1403, %v1447
      %v1449 = vlaneseq
      %v1450 = vshrl.u32 %v1449, 7
      %v1451 = vsub.s32 0, %v1450
      %v1452 = vrot.slane %v1404, %v1451
      %v1453 = vlaneseq
      %v1454 = vshrl.u32 %v1453, 7
      %v1455 = vsub.s32 1, %v1454
      %v1456 = vrot.slane %v1404, %v1455
      %v1457 = vlaneseq
      %v1458 = vshrl.u32 %v1457, 7
      %v1459 = vsub.s32 0, %v1458
      %v1460 = vrot.slane %v1405, %v1459
      %v1461 = vlaneseq
      %v1462 = vshrl.u32 %v1461, 7
      %v1463 = vsub.s32 1, %v1462
      %v1464 = vrot.slane %v1405, %v1463
      %v1473 = vlaneseq
      %v1474 = vshrl.u32 %v1473, 7
      %v1475 = vsub.s32 0, %v1474
      %v1476 = vrot.slane %v1423, %v1475
      %v1477 = vlaneseq
      %v1478 = vshrl.u32 %v1477, 7
      %v1479 = vsub.s32 1, %v1478
      %v1480 = vrot.slane %v1423, %v1479
      %v1481 = vlaneseq
      %v1482 = vshrl.u32 %v1481, 7
      %v1483 = vsub.s32 0, %v1482
      %v1484 = vrot.slane %v1430, %v1483
      %v1485 = vlaneseq
      %v1486 = vshrl.u32 %v1485, 7
      %v1487 = vsub.s32 1, %v1486
      %v1488 = vrot.slane %v1430, %v1487
      %v1489 = vlaneseq
      %v1490 = vshrl.u32 %v1489, 7
      %v1491 = vsub.s32 0, %v1490
      %v1492 = vrot.slane %v1431, %v1491
      %v1493 = vlaneseq
      %v1494 = vshrl.u32 %v1493, 7
      %v1495 = vsub.s32 1, %v1494
      %v1496 = vrot.slane %v1431, %v1495
      %v1497 = vlaneseq
      %v1498 = vshrl.u32 %v1497, 7
      %v1499 = vsub.s32 0, %v1498
      %v1500 = vrot.slane %v1432, %v1499
      %v1501 = vlaneseq
      %v1502 = vshrl.u32 %v1501, 7
      %v1503 = vsub.s32 1, %v1502
      %v1504 = vrot.slane %v1432, %v1503
      %vm1513 = vcmask 1040384
      %v1514 = vsel %vm1513, %v1436, %v1476
      %v1515 = vsel %vm1513, %v1440, %v1480
      %v1516 = vsel %vm1513, %v1444, %v1484
      %v1517 = vsel %vm1513, %v1448, %v1488
      %v1518 = vsel %vm1513, %v1452, %v1492
      %v1519 = vsel %vm1513, %v1456, %v1496
      %v1520 = vsel %vm1513, %v1460, %v1500
      %v1521 = vsel %vm1513, %v1464, %v1504
      %v1530 = vcombine.low %v1514, %v1515
      %v1532 = vunpack.c.l.s4 1983009808
      %v1533 = vunpack.c.0.s8 %v1532
      %v1534 = vlaneseq
      %v1535 = vshrl.u32 %v1534, 7
      %v1536 = vsub.s32 %v1533, %v1535
      %v1537 = vrot.slane %v1530, %v1536
      %v1538 = vcombine.low %v1516, %v1517
      %v1540 = vunpack.c.l.s4 1983009808
      %v1541 = vunpack.c.0.s8 %v1540
      %v1542 = vlaneseq
      %v1543 = vshrl.u32 %v1542, 7
      %v1544 = vsub.s32 %v1541, %v1543
      %v1545 = vrot.slane %v1538, %v1544
      %v1546 = vcombine.low %v1518, %v1519
      %v1548 = vunpack.c.l.s4 1983009808
      %v1549 = vunpack.c.0.s8 %v1548
      %v1550 = vlaneseq
      %v1551 = vshrl.u32 %v1550, 7
      %v1552 = vsub.s32 %v1549, %v1551
      %v1553 = vrot.slane %v1546, %v1552
      %v1554 = vcombine.low %v1520, %v1521
      %v1556 = vunpack.c.l.s4 1983009808
      %v1557 = vunpack.c.0.s8 %v1556
      %v1558 = vlaneseq
      %v1559 = vshrl.u32 %v1558, 7
      %v1560 = vsub.s32 %v1557, %v1559
      %v1561 = vrot.slane %v1554, %v1560
      %1562 = vst [vmem:[#allocation3] sm:$0x3] 0.0
      %1563 = vst [vmem:[#allocation3 + $0x8] sm:$0x3] 0.0
      %1564 = vst [vmem:[#allocation3 + $0x10] sm:$0xc] 0.0
      %1565 = vst [vmem:[#allocation3 + $0x18] sm:$0xc] 0.0
      %v1566 = vcombine.low %v1537, %v1537
      %v1567 = vcombine.low %v1545, %v1553
      %v1569 = vunpack.c.l.s4 1983009808
      %v1570 = vunpack.c.0.s8 %v1569
      %v1571 = vlaneseq
      %v1572 = vshrl.u32 %v1571, 7
      %v1573 = vsub.s32 %v1570, %v1572
      %v1574 = vrot.slane %v1566, %v1573
      %v1576 = vunpack.c.l.s4 1983009808
      %v1577 = vunpack.c.0.s8 %v1576
      %v1578 = vlaneseq
      %v1579 = vshrl.u32 %v1578, 7
      %v1580 = vsub.s32 %v1577, %v1579
      %v1581 = vrot.slane %v1567, %v1580
      %v1582 = vcombine.low %v1574, %v1581
      %v1583 = vcombine.high %v1574, %v1581
      %v1585 = vunpack.c.l.s4 1983009808
      %v1586 = vunpack.c.0.s8 %v1585
      %v1587 = vlaneseq
      %v1588 = vshrl.u32 %v1587, 7
      %v1589 = vsub.s32 %v1586, %v1588
      %v1590 = vrot.slane %v1561, %v1589
      %v1591 = vcombine.high %v1590, %v1590
      %1596 = vst [vmem:[#allocation3] sm:$0xfc] %v1582
      %1597 = vst [vmem:[#allocation3 + $0x8] sm:$0xfc] %v1583
      %1598 = vst [vmem:[#allocation3 + $0x10] sm:$0x3] %v1590
      %1599 = vst [vmem:[#allocation3 + $0x18] sm:$0x3] %v1591
      %v1600 = vld [vmem:[#allocation3] sm:$0xff]
      %v1601 = vld [vmem:[#allocation3 + $0x8] sm:$0xff]
      %v1602 = vpack.c.bf16 %v1600, %v1600
      %v1603 = vpack.c.bf16 %v1601, %v1601
      %v1604 = vld [vmem:[%s5] sm:$0xff]
      %v1605 = vld [vmem:[%s5 + $0x8] sm:$0xff]
      %v1606 = vld [vmem:[%s5 + $0x10] sm:$0xff]
      %v1607 = vld [vmem:[%s5 + $0x18] sm:$0xff]
      %v1608 = vld [vmem:[%s5 + $0x20] sm:$0xff]
      %v1609 = vld [vmem:[%s5 + $0x28] sm:$0xff]
      %v1610 = vld [vmem:[%s5 + $0x30] sm:$0xff]
      %v1611 = vld [vmem:[%s5 + $0x38] sm:$0xff]
      %v1612 = vld [vmem:[%s5 + $0x40] sm:$0xff]
      %v1613 = vld [vmem:[%s5 + $0x48] sm:$0xff]
      %v1614 = vld [vmem:[%s5 + $0x50] sm:$0xff]
      %v1615 = vld [vmem:[%s5 + $0x58] sm:$0xff]
      %v1616 = vld [vmem:[%s5 + $0x60] sm:$0xff]
      %v1617 = vld [vmem:[%s5 + $0x68] sm:$0xff]
      %v1618 = vld [vmem:[%s5 + $0x70] sm:$0xff]
      %v1619 = vld [vmem:[%s5 + $0x78] sm:$0xff]
      %v1620 = vld [vmem:[%s5 + $0x80] sm:$0xff]
      %v1621 = vld [vmem:[%s5 + $0x88] sm:$0xff]
      %v1622 = vld [vmem:[%s5 + $0x90] sm:$0xff]
      %v1623 = vld [vmem:[%s5 + $0x98] sm:$0xff]
      %v1624 = vld [vmem:[%s5 + $0xa0] sm:$0xff]
      %v1625 = vld [vmem:[%s5 + $0xa8] sm:$0xff]
      %v1626 = vld [vmem:[%s5 + $0xb0] sm:$0xff]
      %v1627 = vld [vmem:[%s5 + $0xb8] sm:$0xff]
      %v1628 = vld [vmem:[%s5 + $0xc0] sm:$0xff]
      %v1629 = vld [vmem:[%s5 + $0xc8] sm:$0xff]
      %v1630 = vld [vmem:[%s5 + $0xd0] sm:$0xff]
      %v1631 = vld [vmem:[%s5 + $0xd8] sm:$0xff]
      %v1632 = vld [vmem:[%s5 + $0xe0] sm:$0xff]
      %v1633 = vld [vmem:[%s5 + $0xe8] sm:$0xff]
      %v1634 = vld [vmem:[%s5 + $0xf0] sm:$0xff]
      %v1635 = vld [vmem:[%s5 + $0xf8] sm:$0xff]
      %v1636 = vld [vmem:[#allocation3] sm:$0xfe]
      %v1637 = vld [vmem:[#allocation3 + $0x8] sm:$0xfe]
      %v1638 = vld [vmem:[#allocation3 + $0x10] sm:$0x1]
      %v1639 = vld [vmem:[#allocation3 + $0x18] sm:$0x1]
      %v1640 = vpack.c.bf16 %v1638, %v1636
      %v1641 = vpack.c.bf16 %v1639, %v1637
      %s1642 = scalar_lea.vmem %s5, 256
      %v1643 = vld [vmem:[%s1642] sm:$0xff]
      %v1644 = vld [vmem:[%s1642 + $0x8] sm:$0xff]
      %v1645 = vld [vmem:[%s1642 + $0x10] sm:$0xff]
      %v1646 = vld [vmem:[%s1642 + $0x18] sm:$0xff]
      %v1647 = vld [vmem:[%s1642 + $0x20] sm:$0xff]
      %v1648 = vld [vmem:[%s1642 + $0x28] sm:$0xff]
      %v1649 = vld [vmem:[%s1642 + $0x30] sm:$0xff]
      %v1650 = vld [vmem:[%s1642 + $0x38] sm:$0xff]
      %v1651 = vld [vmem:[%s1642 + $0x40] sm:$0xff]
      %v1652 = vld [vmem:[%s1642 + $0x48] sm:$0xff]
      %v1653 = vld [vmem:[%s1642 + $0x50] sm:$0xff]
      %v1654 = vld [vmem:[%s1642 + $0x58] sm:$0xff]
      %v1655 = vld [vmem:[%s1642 + $0x60] sm:$0xff]
      %v1656 = vld [vmem:[%s1642 + $0x68] sm:$0xff]
      %v1657 = vld [vmem:[%s1642 + $0x70] sm:$0xff]
      %v1658 = vld [vmem:[%s1642 + $0x78] sm:$0xff]
      %v1659 = vld [vmem:[%s1642 + $0x80] sm:$0xff]
      %v1660 = vld [vmem:[%s1642 + $0x88] sm:$0xff]
      %v1661 = vld [vmem:[%s1642 + $0x90] sm:$0xff]
      %v1662 = vld [vmem:[%s1642 + $0x98] sm:$0xff]
      %v1663 = vld [vmem:[%s1642 + $0xa0] sm:$0xff]
      %v1664 = vld [vmem:[%s1642 + $0xa8] sm:$0xff]
      %v1665 = vld [vmem:[%s1642 + $0xb0] sm:$0xff]
      %v1666 = vld [vmem:[%s1642 + $0xb8] sm:$0xff]
      %v1667 = vld [vmem:[%s1642 + $0xc0] sm:$0xff]
      %v1668 = vld [vmem:[%s1642 + $0xc8] sm:$0xff]
      %v1669 = vld [vmem:[%s1642 + $0xd0] sm:$0xff]
      %v1670 = vld [vmem:[%s1642 + $0xd8] sm:$0xff]
      %v1671 = vld [vmem:[%s1642 + $0xe0] sm:$0xff]
      %v1672 = vld [vmem:[%s1642 + $0xe8] sm:$0xff]
      %v1673 = vld [vmem:[%s1642 + $0xf0] sm:$0xff]
      %v1674 = vld [vmem:[%s1642 + $0xf8] sm:$0xff]
      %v1676 = vshrl.u32 %v1640, 16
      %v1678 = vshll.u32 %v1640, 16
      %v1680 = vrot.slane %v1678, 1
      %v1681 = vor.u32 %v1676, %v1680
      %v1683 = vshrl.u32 %v1641, 16
      %v1685 = vshll.u32 %v1641, 16
      %v1687 = vrot.slane %v1685, 1
      %v1688 = vor.u32 %v1683, %v1687
      %v1723 = vunpack.c.l.b16 %v1643
      %v1724 = vunpack.c.h.b16 %v1643
      %v1725 = vunpack.c.l.b16 %v1644
      %v1726 = vunpack.c.h.b16 %v1644
      %v1727 = vunpack.c.l.b16 %v1645
      %v1728 = vunpack.c.h.b16 %v1645
      %v1729 = vunpack.c.l.b16 %v1646
      %v1730 = vunpack.c.h.b16 %v1646
      %v1731 = vunpack.c.l.b16 %v1647
      %v1732 = vunpack.c.h.b16 %v1647
      %v1733 = vunpack.c.l.b16 %v1648
      %v1734 = vunpack.c.h.b16 %v1648
      %v1735 = vunpack.c.l.b16 %v1649
      %v1736 = vunpack.c.h.b16 %v1649
      %v1737 = vunpack.c.l.b16 %v1650
      %v1738 = vunpack.c.h.b16 %v1650
      %v1739 = vunpack.c.l.b16 %v1651
      %v1740 = vunpack.c.h.b16 %v1651
      %v1741 = vunpack.c.l.b16 %v1652
      %v1742 = vunpack.c.h.b16 %v1652
      %v1743 = vunpack.c.l.b16 %v1653
      %v1744 = vunpack.c.h.b16 %v1653
      %v1745 = vunpack.c.l.b16 %v1654
      %v1746 = vunpack.c.h.b16 %v1654
      %v1747 = vunpack.c.l.b16 %v1655
      %v1748 = vunpack.c.h.b16 %v1655
      %v1749 = vunpack.c.l.b16 %v1656
      %v1750 = vunpack.c.h.b16 %v1656
      %v1751 = vunpack.c.l.b16 %v1657
      %v1752 = vunpack.c.h.b16 %v1657
      %v1753 = vunpack.c.l.b16 %v1658
      %v1754 = vunpack.c.h.b16 %v1658
      %v1755 = vunpack.c.l.b16 %v1659
      %v1756 = vunpack.c.h.b16 %v1659
      %v1757 = vunpack.c.l.b16 %v1660
      %v1758 = vunpack.c.h.b16 %v1660
      %v1759 = vunpack.c.l.b16 %v1661
      %v1760 = vunpack.c.h.b16 %v1661
      %v1761 = vunpack.c.l.b16 %v1662
      %v1762 = vunpack.c.h.b16 %v1662
      %v1763 = vunpack.c.l.b16 %v1663
      %v1764 = vunpack.c.h.b16 %v1663
      %v1765 = vunpack.c.l.b16 %v1664
      %v1766 = vunpack.c.h.b16 %v1664
      %v1767 = vunpack.c.l.b16 %v1665
      %v1768 = vunpack.c.h.b16 %v1665
      %v1769 = vunpack.c.l.b16 %v1666
      %v1770 = vunpack.c.h.b16 %v1666
      %v1771 = vunpack.c.l.b16 %v1667
      %v1772 = vunpack.c.h.b16 %v1667
      %v1773 = vunpack.c.l.b16 %v1668
      %v1774 = vunpack.c.h.b16 %v1668
      %v1775 = vunpack.c.l.b16 %v1669
      %v1776 = vunpack.c.h.b16 %v1669
      %v1777 = vunpack.c.l.b16 %v1670
      %v1778 = vunpack.c.h.b16 %v1670
      %v1779 = vunpack.c.l.b16 %v1671
      %v1780 = vunpack.c.h.b16 %v1671
      %v1781 = vunpack.c.l.b16 %v1672
      %v1782 = vunpack.c.h.b16 %v1672
      %v1783 = vunpack.c.l.b16 %v1673
      %v1784 = vunpack.c.h.b16 %v1673
      %v1785 = vunpack.c.l.b16 %v1674
      %v1786 = vunpack.c.h.b16 %v1674
      %v1787 = vpack.c.b16 %v1725, %v1723
      %v1788 = vpack.c.b16 %v1726, %v1724
      %v1789 = vpack.c.b16 %v1729, %v1727
      %v1790 = vpack.c.b16 %v1730, %v1728
      %v1791 = vpack.c.b16 %v1733, %v1731
      %v1792 = vpack.c.b16 %v1734, %v1732
      %v1793 = vpack.c.b16 %v1737, %v1735
      %v1794 = vpack.c.b16 %v1738, %v1736
      %v1795 = vpack.c.b16 %v1741, %v1739
      %v1796 = vpack.c.b16 %v1742, %v1740
      %v1797 = vpack.c.b16 %v1745, %v1743
      %v1798 = vpack.c.b16 %v1746, %v1744
      %v1799 = vpack.c.b16 %v1749, %v1747
      %v1800 = vpack.c.b16 %v1750, %v1748
      %v1801 = vpack.c.b16 %v1753, %v1751
      %v1802 = vpack.c.b16 %v1754, %v1752
      %v1803 = vpack.c.b16 %v1757, %v1755
      %v1804 = vpack.c.b16 %v1758, %v1756
      %v1805 = vpack.c.b16 %v1761, %v1759
      %v1806 = vpack.c.b16 %v1762, %v1760
      %v1807 = vpack.c.b16 %v1765, %v1763
      %v1808 = vpack.c.b16 %v1766, %v1764
      %v1809 = vpack.c.b16 %v1769, %v1767
      %v1810 = vpack.c.b16 %v1770, %v1768
      %v1811 = vpack.c.b16 %v1773, %v1771
      %v1812 = vpack.c.b16 %v1774, %v1772
      %v1813 = vpack.c.b16 %v1777, %v1775
      %v1814 = vpack.c.b16 %v1778, %v1776
      %v1815 = vpack.c.b16 %v1781, %v1779
      %v1816 = vpack.c.b16 %v1782, %v1780
      %v1817 = vpack.c.b16 %v1785, %v1783
      %v1818 = vpack.c.b16 %v1786, %v1784
      %1851 = vmatprep.subr.bf16.mxu0 %v1788
      %1852 = vmatpush1.bf16.msra.mxu0 %v1787
      %1853 = vmatprep.subr.bf16.mxu0 %v1790
      %1854 = vmatpush1.bf16.msra.mxu0 %v1789
      %1855 = vmatprep.subr.bf16.mxu0 %v1792
      %1856 = vmatpush1.bf16.msra.mxu0 %v1791
      %1857 = vmatprep.subr.bf16.mxu0 %v1794
      %1858 = vmatpush1.bf16.msra.mxu0 %v1793
      %1859 = vmatprep.subr.bf16.mxu0 %v1796
      %1860 = vmatpush1.bf16.msra.mxu0 %v1795
      %1861 = vmatprep.subr.bf16.mxu0 %v1798
      %1862 = vmatpush1.bf16.msra.mxu0 %v1797
      %1863 = vmatprep.subr.bf16.mxu0 %v1800
      %1864 = vmatpush1.bf16.msra.mxu0 %v1799
      %1865 = vmatprep.subr.bf16.mxu0 %v1802
      %1866 = vmatpush1.bf16.msra.mxu0 %v1801
      %1867 = vmatprep.subr.bf16.mxu0 %v1804
      %1868 = vmatpush1.bf16.msra.mxu0 %v1803
      %1869 = vmatprep.subr.bf16.mxu0 %v1806
      %1870 = vmatpush1.bf16.msra.mxu0 %v1805
      %1871 = vmatprep.subr.bf16.mxu0 %v1808
      %1872 = vmatpush1.bf16.msra.mxu0 %v1807
      %1873 = vmatprep.subr.bf16.mxu0 %v1810
      %1874 = vmatpush1.bf16.msra.mxu0 %v1809
      %1875 = vmatprep.subr.bf16.mxu0 %v1812
      %1876 = vmatpush1.bf16.msra.mxu0 %v1811
      %1877 = vmatprep.subr.bf16.mxu0 %v1814
      %1878 = vmatpush1.bf16.msra.mxu0 %v1813
      %1879 = vmatprep.subr.bf16.mxu0 %v1816
      %1880 = vmatpush1.bf16.msra.mxu0 %v1815
      %1881 = vmatprep.subr.bf16.mxu0 %v1818
      %1882 = vmatpush1.bf16.msra.mxu0 %v1817
      %1883 = vmatprep.mubr.bf16.mxu0 %v1688
      %1884 = vmatmul.mubr.bf16.gmra.mrb[0].mxu0 %v1681
      %v1885 = vpop.f32.mrb[0].mxu0
      %v1886 = vadd.f32 0.0, %v1885
      %v1887 = vpop.f32.mrb[0].mxu0
      %v1888 = vadd.f32 0.0, %v1887
      %v1889 = vpop.f32.mrb[0].mxu0
      %v1890 = vpop.f32.mrb[0].mxu0
      %1891 = vdwg.mxu0
      %v1924 = vunpack.c.l.b16 %v1604
      %v1925 = vunpack.c.h.b16 %v1604
      %v1926 = vunpack.c.l.b16 %v1605
      %v1927 = vunpack.c.h.b16 %v1605
      %v1928 = vunpack.c.l.b16 %v1606
      %v1929 = vunpack.c.h.b16 %v1606
      %v1930 = vunpack.c.l.b16 %v1607
      %v1931 = vunpack.c.h.b16 %v1607
      %v1932 = vunpack.c.l.b16 %v1608
      %v1933 = vunpack.c.h.b16 %v1608
      %v1934 = vunpack.c.l.b16 %v1609
      %v1935 = vunpack.c.h.b16 %v1609
      %v1936 = vunpack.c.l.b16 %v1610
      %v1937 = vunpack.c.h.b16 %v1610
      %v1938 = vunpack.c.l.b16 %v1611
      %v1939 = vunpack.c.h.b16 %v1611
      %v1940 = vunpack.c.l.b16 %v1612
      %v1941 = vunpack.c.h.b16 %v1612
      %v1942 = vunpack.c.l.b16 %v1613
      %v1943 = vunpack.c.h.b16 %v1613
      %v1944 = vunpack.c.l.b16 %v1614
      %v1945 = vunpack.c.h.b16 %v1614
      %v1946 = vunpack.c.l.b16 %v1615
      %v1947 = vunpack.c.h.b16 %v1615
      %v1948 = vunpack.c.l.b16 %v1616
      %v1949 = vunpack.c.h.b16 %v1616
      %v1950 = vunpack.c.l.b16 %v1617
      %v1951 = vunpack.c.h.b16 %v1617
      %v1952 = vunpack.c.l.b16 %v1618
      %v1953 = vunpack.c.h.b16 %v1618
      %v1954 = vunpack.c.l.b16 %v1619
      %v1955 = vunpack.c.h.b16 %v1619
      %v1956 = vunpack.c.l.b16 %v1620
      %v1957 = vunpack.c.h.b16 %v1620
      %v1958 = vunpack.c.l.b16 %v1621
      %v1959 = vunpack.c.h.b16 %v1621
      %v1960 = vunpack.c.l.b16 %v1622
      %v1961 = vunpack.c.h.b16 %v1622
      %v1962 = vunpack.c.l.b16 %v1623
      %v1963 = vunpack.c.h.b16 %v1623
      %v1964 = vunpack.c.l.b16 %v1624
      %v1965 = vunpack.c.h.b16 %v1624
      %v1966 = vunpack.c.l.b16 %v1625
      %v1967 = vunpack.c.h.b16 %v1625
      %v1968 = vunpack.c.l.b16 %v1626
      %v1969 = vunpack.c.h.b16 %v1626
      %v1970 = vunpack.c.l.b16 %v1627
      %v1971 = vunpack.c.h.b16 %v1627
      %v1972 = vunpack.c.l.b16 %v1628
      %v1973 = vunpack.c.h.b16 %v1628
      %v1974 = vunpack.c.l.b16 %v1629
      %v1975 = vunpack.c.h.b16 %v1629
      %v1976 = vunpack.c.l.b16 %v1630
      %v1977 = vunpack.c.h.b16 %v1630
      %v1978 = vunpack.c.l.b16 %v1631
      %v1979 = vunpack.c.h.b16 %v1631
      %v1980 = vunpack.c.l.b16 %v1632
      %v1981 = vunpack.c.h.b16 %v1632
      %v1982 = vunpack.c.l.b16 %v1633
      %v1983 = vunpack.c.h.b16 %v1633
      %v1984 = vunpack.c.l.b16 %v1634
      %v1985 = vunpack.c.h.b16 %v1634
      %v1986 = vunpack.c.l.b16 %v1635
      %v1987 = vunpack.c.h.b16 %v1635
      %v1988 = vpack.c.b16 %v1926, %v1924
      %v1989 = vpack.c.b16 %v1927, %v1925
      %v1990 = vpack.c.b16 %v1930, %v1928
      %v1991 = vpack.c.b16 %v1931, %v1929
      %v1992 = vpack.c.b16 %v1934, %v1932
      %v1993 = vpack.c.b16 %v1935, %v1933
      %v1994 = vpack.c.b16 %v1938, %v1936
      %v1995 = vpack.c.b16 %v1939, %v1937
      %v1996 = vpack.c.b16 %v1942, %v1940
      %v1997 = vpack.c.b16 %v1943, %v1941
      %v1998 = vpack.c.b16 %v1946, %v1944
      %v1999 = vpack.c.b16 %v1947, %v1945
      %v2000 = vpack.c.b16 %v1950, %v1948
      %v2001 = vpack.c.b16 %v1951, %v1949
      %v2002 = vpack.c.b16 %v1954, %v1952
      %v2003 = vpack.c.b16 %v1955, %v1953
      %v2004 = vpack.c.b16 %v1958, %v1956
      %v2005 = vpack.c.b16 %v1959, %v1957
      %v2006 = vpack.c.b16 %v1962, %v1960
      %v2007 = vpack.c.b16 %v1963, %v1961
      %v2008 = vpack.c.b16 %v1966, %v1964
      %v2009 = vpack.c.b16 %v1967, %v1965
      %v2010 = vpack.c.b16 %v1970, %v1968
      %v2011 = vpack.c.b16 %v1971, %v1969
      %v2012 = vpack.c.b16 %v1974, %v1972
      %v2013 = vpack.c.b16 %v1975, %v1973
      %v2014 = vpack.c.b16 %v1978, %v1976
      %v2015 = vpack.c.b16 %v1979, %v1977
      %v2016 = vpack.c.b16 %v1982, %v1980
      %v2017 = vpack.c.b16 %v1983, %v1981
      %v2018 = vpack.c.b16 %v1986, %v1984
      %v2019 = vpack.c.b16 %v1987, %v1985
      %2052 = vmatprep.subr.bf16.mxu0 %v1989
      %2053 = vmatpush1.bf16.msra.mxu0 %v1988
      %2054 = vmatprep.subr.bf16.mxu0 %v1991
      %2055 = vmatpush1.bf16.msra.mxu0 %v1990
      %2056 = vmatprep.subr.bf16.mxu0 %v1993
      %2057 = vmatpush1.bf16.msra.mxu0 %v1992
      %2058 = vmatprep.subr.bf16.mxu0 %v1995
      %2059 = vmatpush1.bf16.msra.mxu0 %v1994
      %2060 = vmatprep.subr.bf16.mxu0 %v1997
      %2061 = vmatpush1.bf16.msra.mxu0 %v1996
      %2062 = vmatprep.subr.bf16.mxu0 %v1999
      %2063 = vmatpush1.bf16.msra.mxu0 %v1998
      %2064 = vmatprep.subr.bf16.mxu0 %v2001
      %2065 = vmatpush1.bf16.msra.mxu0 %v2000
      %2066 = vmatprep.subr.bf16.mxu0 %v2003
      %2067 = vmatpush1.bf16.msra.mxu0 %v2002
      %2068 = vmatprep.subr.bf16.mxu0 %v2005
      %2069 = vmatpush1.bf16.msra.mxu0 %v2004
      %2070 = vmatprep.subr.bf16.mxu0 %v2007
      %2071 = vmatpush1.bf16.msra.mxu0 %v2006
      %2072 = vmatprep.subr.bf16.mxu0 %v2009
      %2073 = vmatpush1.bf16.msra.mxu0 %v2008
      %2074 = vmatprep.subr.bf16.mxu0 %v2011
      %2075 = vmatpush1.bf16.msra.mxu0 %v2010
      %2076 = vmatprep.subr.bf16.mxu0 %v2013
      %2077 = vmatpush1.bf16.msra.mxu0 %v2012
      %2078 = vmatprep.subr.bf16.mxu0 %v2015
      %2079 = vmatpush1.bf16.msra.mxu0 %v2014
      %2080 = vmatprep.subr.bf16.mxu0 %v2017
      %2081 = vmatpush1.bf16.msra.mxu0 %v2016
      %2082 = vmatprep.subr.bf16.mxu0 %v2019
      %2083 = vmatpush1.bf16.msra.mxu0 %v2018
      %2084 = vmatprep.mubr.bf16.mxu0 %v1603
      %2085 = vmatmul.mubr.bf16.gmra.mrb[0].mxu0 %v1602
      %v2086 = vpop.f32.mrb[0].mxu0
      %v2087 = vadd.f32 %v1886, %v2086
      %v2088 = vpop.f32.mrb[0].mxu0
      %v2089 = vadd.f32 %v1888, %v2088
      %v2090 = vpop.f32.mrb[0].mxu0
      %v2091 = vpop.f32.mrb[0].mxu0
      %2092 = vdwg.mxu0
      %v2093 = vld [vmem:[#allocation3] sm:$0xfc]
      %v2094 = vld [vmem:[#allocation3 + $0x8] sm:$0xfc]
      %v2095 = vld [vmem:[#allocation3 + $0x10] sm:$0x3]
      %v2096 = vld [vmem:[#allocation3 + $0x18] sm:$0x3]
      %v2097 = vpack.c.bf16 %v2095, %v2093
      %v2098 = vpack.c.bf16 %v2096, %v2094
      %s2099 = scalar_lea.vmem %s5, 512
      %v2100 = vld [vmem:[%s2099] sm:$0xff]
      %v2101 = vld [vmem:[%s2099 + $0x8] sm:$0xff]
      %v2102 = vld [vmem:[%s2099 + $0x10] sm:$0xff]
      %v2103 = vld [vmem:[%s2099 + $0x18] sm:$0xff]
      %v2104 = vld [vmem:[%s2099 + $0x20] sm:$0xff]
      %v2105 = vld [vmem:[%s2099 + $0x28] sm:$0xff]
      %v2106 = vld [vmem:[%s2099 + $0x30] sm:$0xff]
      %v2107 = vld [vmem:[%s2099 + $0x38] sm:$0xff]
      %v2108 = vld [vmem:[%s2099 + $0x40] sm:$0xff]
      %v2109 = vld [vmem:[%s2099 + $0x48] sm:$0xff]
      %v2110 = vld [vmem:[%s2099 + $0x50] sm:$0xff]
      %v2111 = vld [vmem:[%s2099 + $0x58] sm:$0xff]
      %v2112 = vld [vmem:[%s2099 + $0x60] sm:$0xff]
      %v2113 = vld [vmem:[%s2099 + $0x68] sm:$0xff]
      %v2114 = vld [vmem:[%s2099 + $0x70] sm:$0xff]
      %v2115 = vld [vmem:[%s2099 + $0x78] sm:$0xff]
      %v2116 = vld [vmem:[%s2099 + $0x80] sm:$0xff]
      %v2117 = vld [vmem:[%s2099 + $0x88] sm:$0xff]
      %v2118 = vld [vmem:[%s2099 + $0x90] sm:$0xff]
      %v2119 = vld [vmem:[%s2099 + $0x98] sm:$0xff]
      %v2120 = vld [vmem:[%s2099 + $0xa0] sm:$0xff]
      %v2121 = vld [vmem:[%s2099 + $0xa8] sm:$0xff]
      %v2122 = vld [vmem:[%s2099 + $0xb0] sm:$0xff]
      %v2123 = vld [vmem:[%s2099 + $0xb8] sm:$0xff]
      %v2124 = vld [vmem:[%s2099 + $0xc0] sm:$0xff]
      %v2125 = vld [vmem:[%s2099 + $0xc8] sm:$0xff]
      %v2126 = vld [vmem:[%s2099 + $0xd0] sm:$0xff]
      %v2127 = vld [vmem:[%s2099 + $0xd8] sm:$0xff]
      %v2128 = vld [vmem:[%s2099 + $0xe0] sm:$0xff]
      %v2129 = vld [vmem:[%s2099 + $0xe8] sm:$0xff]
      %v2130 = vld [vmem:[%s2099 + $0xf0] sm:$0xff]
      %v2131 = vld [vmem:[%s2099 + $0xf8] sm:$0xff]
      %v2134 = vrot.slane %v2097, 1
      %v2135 = vrot.slane %v2098, 1
      %v2170 = vunpack.c.l.b16 %v2100
      %v2171 = vunpack.c.h.b16 %v2100
      %v2172 = vunpack.c.l.b16 %v2101
      %v2173 = vunpack.c.h.b16 %v2101
      %v2174 = vunpack.c.l.b16 %v2102
      %v2175 = vunpack.c.h.b16 %v2102
      %v2176 = vunpack.c.l.b16 %v2103
      %v2177 = vunpack.c.h.b16 %v2103
      %v2178 = vunpack.c.l.b16 %v2104
      %v2179 = vunpack.c.h.b16 %v2104
      %v2180 = vunpack.c.l.b16 %v2105
      %v2181 = vunpack.c.h.b16 %v2105
      %v2182 = vunpack.c.l.b16 %v2106
      %v2183 = vunpack.c.h.b16 %v2106
      %v2184 = vunpack.c.l.b16 %v2107
      %v2185 = vunpack.c.h.b16 %v2107
      %v2186 = vunpack.c.l.b16 %v2108
      %v2187 = vunpack.c.h.b16 %v2108
      %v2188 = vunpack.c.l.b16 %v2109
      %v2189 = vunpack.c.h.b16 %v2109
      %v2190 = vunpack.c.l.b16 %v2110
      %v2191 = vunpack.c.h.b16 %v2110
      %v2192 = vunpack.c.l.b16 %v2111
      %v2193 = vunpack.c.h.b16 %v2111
      %v2194 = vunpack.c.l.b16 %v2112
      %v2195 = vunpack.c.h.b16 %v2112
      %v2196 = vunpack.c.l.b16 %v2113
      %v2197 = vunpack.c.h.b16 %v2113
      %v2198 = vunpack.c.l.b16 %v2114
      %v2199 = vunpack.c.h.b16 %v2114
      %v2200 = vunpack.c.l.b16 %v2115
      %v2201 = vunpack.c.h.b16 %v2115
      %v2202 = vunpack.c.l.b16 %v2116
      %v2203 = vunpack.c.h.b16 %v2116
      %v2204 = vunpack.c.l.b16 %v2117
      %v2205 = vunpack.c.h.b16 %v2117
      %v2206 = vunpack.c.l.b16 %v2118
      %v2207 = vunpack.c.h.b16 %v2118
      %v2208 = vunpack.c.l.b16 %v2119
      %v2209 = vunpack.c.h.b16 %v2119
      %v2210 = vunpack.c.l.b16 %v2120
      %v2211 = vunpack.c.h.b16 %v2120
      %v2212 = vunpack.c.l.b16 %v2121
      %v2213 = vunpack.c.h.b16 %v2121
      %v2214 = vunpack.c.l.b16 %v2122
      %v2215 = vunpack.c.h.b16 %v2122
      %v2216 = vunpack.c.l.b16 %v2123
      %v2217 = vunpack.c.h.b16 %v2123
      %v2218 = vunpack.c.l.b16 %v2124
      %v2219 = vunpack.c.h.b16 %v2124
      %v2220 = vunpack.c.l.b16 %v2125
      %v2221 = vunpack.c.h.b16 %v2125
      %v2222 = vunpack.c.l.b16 %v2126
      %v2223 = vunpack.c.h.b16 %v2126
      %v2224 = vunpack.c.l.b16 %v2127
      %v2225 = vunpack.c.h.b16 %v2127
      %v2226 = vunpack.c.l.b16 %v2128
      %v2227 = vunpack.c.h.b16 %v2128
      %v2228 = vunpack.c.l.b16 %v2129
      %v2229 = vunpack.c.h.b16 %v2129
      %v2230 = vunpack.c.l.b16 %v2130
      %v2231 = vunpack.c.h.b16 %v2130
      %v2232 = vunpack.c.l.b16 %v2131
      %v2233 = vunpack.c.h.b16 %v2131
      %v2234 = vpack.c.b16 %v2172, %v2170
      %v2235 = vpack.c.b16 %v2173, %v2171
      %v2236 = vpack.c.b16 %v2176, %v2174
      %v2237 = vpack.c.b16 %v2177, %v2175
      %v2238 = vpack.c.b16 %v2180, %v2178
      %v2239 = vpack.c.b16 %v2181, %v2179
      %v2240 = vpack.c.b16 %v2184, %v2182
      %v2241 = vpack.c.b16 %v2185, %v2183
      %v2242 = vpack.c.b16 %v2188, %v2186
      %v2243 = vpack.c.b16 %v2189, %v2187
      %v2244 = vpack.c.b16 %v2192, %v2190
      %v2245 = vpack.c.b16 %v2193, %v2191
      %v2246 = vpack.c.b16 %v2196, %v2194
      %v2247 = vpack.c.b16 %v2197, %v2195
      %v2248 = vpack.c.b16 %v2200, %v2198
      %v2249 = vpack.c.b16 %v2201, %v2199
      %v2250 = vpack.c.b16 %v2204, %v2202
      %v2251 = vpack.c.b16 %v2205, %v2203
      %v2252 = vpack.c.b16 %v2208, %v2206
      %v2253 = vpack.c.b16 %v2209, %v2207
      %v2254 = vpack.c.b16 %v2212, %v2210
      %v2255 = vpack.c.b16 %v2213, %v2211
      %v2256 = vpack.c.b16 %v2216, %v2214
      %v2257 = vpack.c.b16 %v2217, %v2215
      %v2258 = vpack.c.b16 %v2220, %v2218
      %v2259 = vpack.c.b16 %v2221, %v2219
      %v2260 = vpack.c.b16 %v2224, %v2222
      %v2261 = vpack.c.b16 %v2225, %v2223
      %v2262 = vpack.c.b16 %v2228, %v2226
      %v2263 = vpack.c.b16 %v2229, %v2227
      %v2264 = vpack.c.b16 %v2232, %v2230
      %v2265 = vpack.c.b16 %v2233, %v2231
      %2298 = vmatprep.subr.bf16.mxu0 %v2235
      %2299 = vmatpush1.bf16.msra.mxu0 %v2234
      %2300 = vmatprep.subr.bf16.mxu0 %v2237
      %2301 = vmatpush1.bf16.msra.mxu0 %v2236
      %2302 = vmatprep.subr.bf16.mxu0 %v2239
      %2303 = vmatpush1.bf16.msra.mxu0 %v2238
      %2304 = vmatprep.subr.bf16.mxu0 %v2241
      %2305 = vmatpush1.bf16.msra.mxu0 %v2240
      %2306 = vmatprep.subr.bf16.mxu0 %v2243
      %2307 = vmatpush1.bf16.msra.mxu0 %v2242
      %2308 = vmatprep.subr.bf16.mxu0 %v2245
      %2309 = vmatpush1.bf16.msra.mxu0 %v2244
      %2310 = vmatprep.subr.bf16.mxu0 %v2247
      %2311 = vmatpush1.bf16.msra.mxu0 %v2246
      %2312 = vmatprep.subr.bf16.mxu0 %v2249
      %2313 = vmatpush1.bf16.msra.mxu0 %v2248
      %2314 = vmatprep.subr.bf16.mxu0 %v2251
      %2315 = vmatpush1.bf16.msra.mxu0 %v2250
      %2316 = vmatprep.subr.bf16.mxu0 %v2253
      %2317 = vmatpush1.bf16.msra.mxu0 %v2252
      %2318 = vmatprep.subr.bf16.mxu0 %v2255
      %2319 = vmatpush1.bf16.msra.mxu0 %v2254
      %2320 = vmatprep.subr.bf16.mxu0 %v2257
      %2321 = vmatpush1.bf16.msra.mxu0 %v2256
      %2322 = vmatprep.subr.bf16.mxu0 %v2259
      %2323 = vmatpush1.bf16.msra.mxu0 %v2258
      %2324 = vmatprep.subr.bf16.mxu0 %v2261
      %2325 = vmatpush1.bf16.msra.mxu0 %v2260
      %2326 = vmatprep.subr.bf16.mxu0 %v2263
      %2327 = vmatpush1.bf16.msra.mxu0 %v2262
      %2328 = vmatprep.subr.bf16.mxu0 %v2265
      %2329 = vmatpush1.bf16.msra.mxu0 %v2264
      %2330 = vmatprep.mubr.bf16.mxu0 %v2135
      %2331 = vmatmul.mubr.bf16.gmra.mrb[0].mxu0 %v2134
      %v2332 = vpop.f32.mrb[0].mxu0
      %v2333 = vadd.f32 0.0, %v2332
      %v2334 = vpop.f32.mrb[0].mxu0
      %v2335 = vadd.f32 0.0, %v2334
      %v2336 = vpop.f32.mrb[0].mxu0
      %v2337 = vpop.f32.mrb[0].mxu0
      %2338 = vdwg.mxu0
      %v2339 = vadd.f32 %v2087, %v2333
      %v2340 = vadd.f32 %v2089, %v2335
      %v2341 = vld [vmem:[#allocation3] sm:$0xf8]
      %v2342 = vld [vmem:[#allocation3 + $0x8] sm:$0xf8]
      %v2343 = vld [vmem:[#allocation3 + $0x10] sm:$0x7]
      %v2344 = vld [vmem:[#allocation3 + $0x18] sm:$0x7]
      %v2345 = vpack.c.bf16 %v2343, %v2341
      %v2346 = vpack.c.bf16 %v2344, %v2342
      %s2347 = scalar_lea.vmem %s5, 768
      %v2348 = vld [vmem:[%s2347] sm:$0xff]
      %v2349 = vld [vmem:[%s2347 + $0x8] sm:$0xff]
      %v2350 = vld [vmem:[%s2347 + $0x10] sm:$0xff]
      %v2351 = vld [vmem:[%s2347 + $0x18] sm:$0xff]
      %v2352 = vld [vmem:[%s2347 + $0x20] sm:$0xff]
      %v2353 = vld [vmem:[%s2347 + $0x28] sm:$0xff]
      %v2354 = vld [vmem:[%s2347 + $0x30] sm:$0xff]
      %v2355 = vld [vmem:[%s2347 + $0x38] sm:$0xff]
      %v2356 = vld [vmem:[%s2347 + $0x40] sm:$0xff]
      %v2357 = vld [vmem:[%s2347 + $0x48] sm:$0xff]
      %v2358 = vld [vmem:[%s2347 + $0x50] sm:$0xff]
      %v2359 = vld [vmem:[%s2347 + $0x58] sm:$0xff]
      %v2360 = vld [vmem:[%s2347 + $0x60] sm:$0xff]
      %v2361 = vld [vmem:[%s2347 + $0x68] sm:$0xff]
      %v2362 = vld [vmem:[%s2347 + $0x70] sm:$0xff]
      %v2363 = vld [vmem:[%s2347 + $0x78] sm:$0xff]
      %v2364 = vld [vmem:[%s2347 + $0x80] sm:$0xff]
      %v2365 = vld [vmem:[%s2347 + $0x88] sm:$0xff]
      %v2366 = vld [vmem:[%s2347 + $0x90] sm:$0xff]
      %v2367 = vld [vmem:[%s2347 + $0x98] sm:$0xff]
      %v2368 = vld [vmem:[%s2347 + $0xa0] sm:$0xff]
      %v2369 = vld [vmem:[%s2347 + $0xa8] sm:$0xff]
      %v2370 = vld [vmem:[%s2347 + $0xb0] sm:$0xff]
      %v2371 = vld [vmem:[%s2347 + $0xb8] sm:$0xff]
      %v2372 = vld [vmem:[%s2347 + $0xc0] sm:$0xff]
      %v2373 = vld [vmem:[%s2347 + $0xc8] sm:$0xff]
      %v2374 = vld [vmem:[%s2347 + $0xd0] sm:$0xff]
      %v2375 = vld [vmem:[%s2347 + $0xd8] sm:$0xff]
      %v2376 = vld [vmem:[%s2347 + $0xe0] sm:$0xff]
      %v2377 = vld [vmem:[%s2347 + $0xe8] sm:$0xff]
      %v2378 = vld [vmem:[%s2347 + $0xf0] sm:$0xff]
      %v2379 = vld [vmem:[%s2347 + $0xf8] sm:$0xff]
      %v2381 = vshrl.u32 %v2345, 16
      %v2383 = vrot.slane %v2381, 1
      %v2384 = vshll.u32 %v2345, 16
      %v2386 = vrot.slane %v2384, 2
      %v2387 = vor.u32 %v2383, %v2386
      %v2389 = vshrl.u32 %v2346, 16
      %v2391 = vrot.slane %v2389, 1
      %v2392 = vshll.u32 %v2346, 16
      %v2394 = vrot.slane %v2392, 2
      %v2395 = vor.u32 %v2391, %v2394
      %v2430 = vunpack.c.l.b16 %v2348
      %v2431 = vunpack.c.h.b16 %v2348
      %v2432 = vunpack.c.l.b16 %v2349
      %v2433 = vunpack.c.h.b16 %v2349
      %v2434 = vunpack.c.l.b16 %v2350
      %v2435 = vunpack.c.h.b16 %v2350
      %v2436 = vunpack.c.l.b16 %v2351
      %v2437 = vunpack.c.h.b16 %v2351
      %v2438 = vunpack.c.l.b16 %v2352
      %v2439 = vunpack.c.h.b16 %v2352
      %v2440 = vunpack.c.l.b16 %v2353
      %v2441 = vunpack.c.h.b16 %v2353
      %v2442 = vunpack.c.l.b16 %v2354
      %v2443 = vunpack.c.h.b16 %v2354
      %v2444 = vunpack.c.l.b16 %v2355
      %v2445 = vunpack.c.h.b16 %v2355
      %v2446 = vunpack.c.l.b16 %v2356
      %v2447 = vunpack.c.h.b16 %v2356
      %v2448 = vunpack.c.l.b16 %v2357
      %v2449 = vunpack.c.h.b16 %v2357
      %v2450 = vunpack.c.l.b16 %v2358
      %v2451 = vunpack.c.h.b16 %v2358
      %v2452 = vunpack.c.l.b16 %v2359
      %v2453 = vunpack.c.h.b16 %v2359
      %v2454 = vunpack.c.l.b16 %v2360
      %v2455 = vunpack.c.h.b16 %v2360
      %v2456 = vunpack.c.l.b16 %v2361
      %v2457 = vunpack.c.h.b16 %v2361
      %v2458 = vunpack.c.l.b16 %v2362
      %v2459 = vunpack.c.h.b16 %v2362
      %v2460 = vunpack.c.l.b16 %v2363
      %v2461 = vunpack.c.h.b16 %v2363
      %v2462 = vunpack.c.l.b16 %v2364
      %v2463 = vunpack.c.h.b16 %v2364
      %v2464 = vunpack.c.l.b16 %v2365
      %v2465 = vunpack.c.h.b16 %v2365
      %v2466 = vunpack.c.l.b16 %v2366
      %v2467 = vunpack.c.h.b16 %v2366
      %v2468 = vunpack.c.l.b16 %v2367
      %v2469 = vunpack.c.h.b16 %v2367
      %v2470 = vunpack.c.l.b16 %v2368
      %v2471 = vunpack.c.h.b16 %v2368
      %v2472 = vunpack.c.l.b16 %v2369
      %v2473 = vunpack.c.h.b16 %v2369
      %v2474 = vunpack.c.l.b16 %v2370
      %v2475 = vunpack.c.h.b16 %v2370
      %v2476 = vunpack.c.l.b16 %v2371
      %v2477 = vunpack.c.h.b16 %v2371
      %v2478 = vunpack.c.l.b16 %v2372
      %v2479 = vunpack.c.h.b16 %v2372
      %v2480 = vunpack.c.l.b16 %v2373
      %v2481 = vunpack.c.h.b16 %v2373
      %v2482 = vunpack.c.l.b16 %v2374
      %v2483 = vunpack.c.h.b16 %v2374
      %v2484 = vunpack.c.l.b16 %v2375
      %v2485 = vunpack.c.h.b16 %v2375
      %v2486 = vunpack.c.l.b16 %v2376
      %v2487 = vunpack.c.h.b16 %v2376
      %v2488 = vunpack.c.l.b16 %v2377
      %v2489 = vunpack.c.h.b16 %v2377
      %v2490 = vunpack.c.l.b16 %v2378
      %v2491 = vunpack.c.h.b16 %v2378
      %v2492 = vunpack.c.l.b16 %v2379
      %v2493 = vunpack.c.h.b16 %v2379
      %v2494 = vpack.c.b16 %v2432, %v2430
      %v2495 = vpack.c.b16 %v2433, %v2431
      %v2496 = vpack.c.b16 %v2436, %v2434
      %v2497 = vpack.c.b16 %v2437, %v2435
      %v2498 = vpack.c.b16 %v2440, %v2438
      %v2499 = vpack.c.b16 %v2441, %v2439
      %v2500 = vpack.c.b16 %v2444, %v2442
      %v2501 = vpack.c.b16 %v2445, %v2443
      %v2502 = vpack.c.b16 %v2448, %v2446
      %v2503 = vpack.c.b16 %v2449, %v2447
      %v2504 = vpack.c.b16 %v2452, %v2450
      %v2505 = vpack.c.b16 %v2453, %v2451
      %v2506 = vpack.c.b16 %v2456, %v2454
      %v2507 = vpack.c.b16 %v2457, %v2455
      %v2508 = vpack.c.b16 %v2460, %v2458
      %v2509 = vpack.c.b16 %v2461, %v2459
      %v2510 = vpack.c.b16 %v2464, %v2462
      %v2511 = vpack.c.b16 %v2465, %v2463
      %v2512 = vpack.c.b16 %v2468, %v2466
      %v2513 = vpack.c.b16 %v2469, %v2467
      %v2514 = vpack.c.b16 %v2472, %v2470
      %v2515 = vpack.c.b16 %v2473, %v2471
      %v2516 = vpack.c.b16 %v2476, %v2474
      %v2517 = vpack.c.b16 %v2477, %v2475
      %v2518 = vpack.c.b16 %v2480, %v2478
      %v2519 = vpack.c.b16 %v2481, %v2479
      %v2520 = vpack.c.b16 %v2484, %v2482
      %v2521 = vpack.c.b16 %v2485, %v2483
      %v2522 = vpack.c.b16 %v2488, %v2486
      %v2523 = vpack.c.b16 %v2489, %v2487
      %v2524 = vpack.c.b16 %v2492, %v2490
      %v2525 = vpack.c.b16 %v2493, %v2491
      %2558 = vmatprep.subr.bf16.mxu0 %v2495
      %2559 = vmatpush1.bf16.msra.mxu0 %v2494
      %2560 = vmatprep.subr.bf16.mxu0 %v2497
      %2561 = vmatpush1.bf16.msra.mxu0 %v2496
      %2562 = vmatprep.subr.bf16.mxu0 %v2499
      %2563 = vmatpush1.bf16.msra.mxu0 %v2498
      %2564 = vmatprep.subr.bf16.mxu0 %v2501
      %2565 = vmatpush1.bf16.msra.mxu0 %v2500
      %2566 = vmatprep.subr.bf16.mxu0 %v2503
      %2567 = vmatpush1.bf16.msra.mxu0 %v2502
      %2568 = vmatprep.subr.bf16.mxu0 %v2505
      %2569 = vmatpush1.bf16.msra.mxu0 %v2504
      %2570 = vmatprep.subr.bf16.mxu0 %v2507
      %2571 = vmatpush1.bf16.msra.mxu0 %v2506
      %2572 = vmatprep.subr.bf16.mxu0 %v2509
      %2573 = vmatpush1.bf16.msra.mxu0 %v2508
      %2574 = vmatprep.subr.bf16.mxu0 %v2511
      %2575 = vmatpush1.bf16.msra.mxu0 %v2510
      %2576 = vmatprep.subr.bf16.mxu0 %v2513
      %2577 = vmatpush1.bf16.msra.mxu0 %v2512
      %2578 = vmatprep.subr.bf16.mxu0 %v2515
      %2579 = vmatpush1.bf16.msra.mxu0 %v2514
      %2580 = vmatprep.subr.bf16.mxu0 %v2517
      %2581 = vmatpush1.bf16.msra.mxu0 %v2516
      %2582 = vmatprep.subr.bf16.mxu0 %v2519
      %2583 = vmatpush1.bf16.msra.mxu0 %v2518
      %2584 = vmatprep.subr.bf16.mxu0 %v2521
      %2585 = vmatpush1.bf16.msra.mxu0 %v2520
      %2586 = vmatprep.subr.bf16.mxu0 %v2523
      %2587 = vmatpush1.bf16.msra.mxu0 %v2522
      %2588 = vmatprep.subr.bf16.mxu0 %v2525
      %2589 = vmatpush1.bf16.msra.mxu0 %v2524
      %2590 = vmatprep.mubr.bf16.mxu0 %v2395
      %2591 = vmatmul.mubr.bf16.gmra.mrb[0].mxu0 %v2387
      %v2592 = vpop.f32.mrb[0].mxu0
      %v2593 = vadd.f32 0.0, %v2592
      %v2594 = vpop.f32.mrb[0].mxu0
      %v2595 = vadd.f32 0.0, %v2594
      %v2596 = vpop.f32.mrb[0].mxu0
      %v2597 = vpop.f32.mrb[0].mxu0
      %2598 = vdwg.mxu0
      %v2599 = vadd.f32 %v2339, %v2593
      %v2600 = vadd.f32 %v2340, %v2595
      %s2601 = scalar_lea.vmem %s5, 1024
      %v2602 = vld [vmem:[%s2601] sm:$0xff]
      %v2603 = vld [vmem:[%s2601 + $0x8] sm:$0xff]
      %v2604 = vld [vmem:[%s2601 + $0x10] sm:$0xff]
      %v2605 = vld [vmem:[%s2601 + $0x18] sm:$0xff]
      %v2606 = vld [vmem:[%s2601 + $0x20] sm:$0xff]
      %v2607 = vld [vmem:[%s2601 + $0x28] sm:$0xff]
      %v2608 = vld [vmem:[%s2601 + $0x30] sm:$0xff]
      %v2609 = vld [vmem:[%s2601 + $0x38] sm:$0xff]
      %v2610 = vld [vmem:[%s2601 + $0x40] sm:$0xff]
      %v2611 = vld [vmem:[%s2601 + $0x48] sm:$0xff]
      %v2612 = vld [vmem:[%s2601 + $0x50] sm:$0xff]
      %v2613 = vld [vmem:[%s2601 + $0x58] sm:$0xff]
      %v2614 = vld [vmem:[%s2601 + $0x60] sm:$0xff]
      %v2615 = vld [vmem:[%s2601 + $0x68] sm:$0xff]
      %v2616 = vld [vmem:[%s2601 + $0x70] sm:$0xff]
      %v2617 = vld [vmem:[%s2601 + $0x78] sm:$0xff]
      %v2618 = vld [vmem:[%s2601 + $0x80] sm:$0xff]
      %v2619 = vld [vmem:[%s2601 + $0x88] sm:$0xff]
      %v2620 = vld [vmem:[%s2601 + $0x90] sm:$0xff]
      %v2621 = vld [vmem:[%s2601 + $0x98] sm:$0xff]
      %v2622 = vld [vmem:[%s2601 + $0xa0] sm:$0xff]
      %v2623 = vld [vmem:[%s2601 + $0xa8] sm:$0xff]
      %v2624 = vld [vmem:[%s2601 + $0xb0] sm:$0xff]
      %v2625 = vld [vmem:[%s2601 + $0xb8] sm:$0xff]
      %v2626 = vld [vmem:[%s2601 + $0xc0] sm:$0xff]
      %v2627 = vld [vmem:[%s2601 + $0xc8] sm:$0xff]
      %v2628 = vld [vmem:[%s2601 + $0xd0] sm:$0xff]
      %v2629 = vld [vmem:[%s2601 + $0xd8] sm:$0xff]
      %v2630 = vld [vmem:[%s2601 + $0xe0] sm:$0xff]
      %v2631 = vld [vmem:[%s2601 + $0xe8] sm:$0xff]
      %v2632 = vld [vmem:[%s2601 + $0xf0] sm:$0xff]
      %v2633 = vld [vmem:[%s2601 + $0xf8] sm:$0xff]
      %s2634 = scalar_lea.vmem %s5, 1280
      %v2635 = vld [vmem:[%s2634] sm:$0xff]
      %v2636 = vld [vmem:[%s2634 + $0x8] sm:$0xff]
      %v2637 = vld [vmem:[%s2634 + $0x10] sm:$0xff]
      %v2638 = vld [vmem:[%s2634 + $0x18] sm:$0xff]
      %v2639 = vld [vmem:[%s2634 + $0x20] sm:$0xff]
      %v2640 = vld [vmem:[%s2634 + $0x28] sm:$0xff]
      %v2641 = vld [vmem:[%s2634 + $0x30] sm:$0xff]
      %v2642 = vld [vmem:[%s2634 + $0x38] sm:$0xff]
      %v2643 = vld [vmem:[%s2634 + $0x40] sm:$0xff]
      %v2644 = vld [vmem:[%s2634 + $0x48] sm:$0xff]
      %v2645 = vld [vmem:[%s2634 + $0x50] sm:$0xff]
      %v2646 = vld [vmem:[%s2634 + $0x58] sm:$0xff]
      %v2647 = vld [vmem:[%s2634 + $0x60] sm:$0xff]
      %v2648 = vld [vmem:[%s2634 + $0x68] sm:$0xff]
      %v2649 = vld [vmem:[%s2634 + $0x70] sm:$0xff]
      %v2650 = vld [vmem:[%s2634 + $0x78] sm:$0xff]
      %v2651 = vld [vmem:[%s2634 + $0x80] sm:$0xff]
      %v2652 = vld [vmem:[%s2634 + $0x88] sm:$0xff]
      %v2653 = vld [vmem:[%s2634 + $0x90] sm:$0xff]
      %v2654 = vld [vmem:[%s2634 + $0x98] sm:$0xff]
      %v2655 = vld [vmem:[%s2634 + $0xa0] sm:$0xff]
      %v2656 = vld [vmem:[%s2634 + $0xa8] sm:$0xff]
      %v2657 = vld [vmem:[%s2634 + $0xb0] sm:$0xff]
      %v2658 = vld [vmem:[%s2634 + $0xb8] sm:$0xff]
      %v2659 = vld [vmem:[%s2634 + $0xc0] sm:$0xff]
      %v2660 = vld [vmem:[%s2634 + $0xc8] sm:$0xff]
      %v2661 = vld [vmem:[%s2634 + $0xd0] sm:$0xff]
      %v2662 = vld [vmem:[%s2634 + $0xd8] sm:$0xff]
      %v2663 = vld [vmem:[%s2634 + $0xe0] sm:$0xff]
      %v2664 = vld [vmem:[%s2634 + $0xe8] sm:$0xff]
      %v2665 = vld [vmem:[%s2634 + $0xf0] sm:$0xff]
      %v2666 = vld [vmem:[%s2634 + $0xf8] sm:$0xff]
      %v2699 = vunpack.c.l.b16 %v2635
      %v2700 = vunpack.c.h.b16 %v2635
      %v2701 = vunpack.c.l.b16 %v2636
      %v2702 = vunpack.c.h.b16 %v2636
      %v2703 = vunpack.c.l.b16 %v2637
      %v2704 = vunpack.c.h.b16 %v2637
      %v2705 = vunpack.c.l.b16 %v2638
      %v2706 = vunpack.c.h.b16 %v2638
      %v2707 = vunpack.c.l.b16 %v2639
      %v2708 = vunpack.c.h.b16 %v2639
      %v2709 = vunpack.c.l.b16 %v2640
      %v2710 = vunpack.c.h.b16 %v2640
      %v2711 = vunpack.c.l.b16 %v2641
      %v2712 = vunpack.c.h.b16 %v2641
      %v2713 = vunpack.c.l.b16 %v2642
      %v2714 = vunpack.c.h.b16 %v2642
      %v2715 = vunpack.c.l.b16 %v2643
      %v2716 = vunpack.c.h.b16 %v2643
      %v2717 = vunpack.c.l.b16 %v2644
      %v2718 = vunpack.c.h.b16 %v2644
      %v2719 = vunpack.c.l.b16 %v2645
      %v2720 = vunpack.c.h.b16 %v2645
      %v2721 = vunpack.c.l.b16 %v2646
      %v2722 = vunpack.c.h.b16 %v2646
      %v2723 = vunpack.c.l.b16 %v2647
      %v2724 = vunpack.c.h.b16 %v2647
      %v2725 = vunpack.c.l.b16 %v2648
      %v2726 = vunpack.c.h.b16 %v2648
      %v2727 = vunpack.c.l.b16 %v2649
      %v2728 = vunpack.c.h.b16 %v2649
      %v2729 = vunpack.c.l.b16 %v2650
      %v2730 = vunpack.c.h.b16 %v2650
      %v2731 = vunpack.c.l.b16 %v2651
      %v2732 = vunpack.c.h.b16 %v2651
      %v2733 = vunpack.c.l.b16 %v2652
      %v2734 = vunpack.c.h.b16 %v2652
      %v2735 = vunpack.c.l.b16 %v2653
      %v2736 = vunpack.c.h.b16 %v2653
      %v2737 = vunpack.c.l.b16 %v2654
      %v2738 = vunpack.c.h.b16 %v2654
      %v2739 = vunpack.c.l.b16 %v2655
      %v2740 = vunpack.c.h.b16 %v2655
      %v2741 = vunpack.c.l.b16 %v2656
      %v2742 = vunpack.c.h.b16 %v2656
      %v2743 = vunpack.c.l.b16 %v2657
      %v2744 = vunpack.c.h.b16 %v2657
      %v2745 = vunpack.c.l.b16 %v2658
      %v2746 = vunpack.c.h.b16 %v2658
      %v2747 = vunpack.c.l.b16 %v2659
      %v2748 = vunpack.c.h.b16 %v2659
      %v2749 = vunpack.c.l.b16 %v2660
      %v2750 = vunpack.c.h.b16 %v2660
      %v2751 = vunpack.c.l.b16 %v2661
      %v2752 = vunpack.c.h.b16 %v2661
      %v2753 = vunpack.c.l.b16 %v2662
      %v2754 = vunpack.c.h.b16 %v2662
      %v2755 = vunpack.c.l.b16 %v2663
      %v2756 = vunpack.c.h.b16 %v2663
      %v2757 = vunpack.c.l.b16 %v2664
      %v2758 = vunpack.c.h.b16 %v2664
      %v2759 = vunpack.c.l.b16 %v2665
      %v2760 = vunpack.c.h.b16 %v2665
      %v2761 = vunpack.c.l.b16 %v2666
      %v2762 = vunpack.c.h.b16 %v2666
      %v2763 = vpack.c.b16 %v2701, %v2699
      %v2764 = vpack.c.b16 %v2702, %v2700
      %v2765 = vpack.c.b16 %v2705, %v2703
      %v2766 = vpack.c.b16 %v2706, %v2704
      %v2767 = vpack.c.b16 %v2709, %v2707
      %v2768 = vpack.c.b16 %v2710, %v2708
      %v2769 = vpack.c.b16 %v2713, %v2711
      %v2770 = vpack.c.b16 %v2714, %v2712
      %v2771 = vpack.c.b16 %v2717, %v2715
      %v2772 = vpack.c.b16 %v2718, %v2716
      %v2773 = vpack.c.b16 %v2721, %v2719
      %v2774 = vpack.c.b16 %v2722, %v2720
      %v2775 = vpack.c.b16 %v2725, %v2723
      %v2776 = vpack.c.b16 %v2726, %v2724
      %v2777 = vpack.c.b16 %v2729, %v2727
      %v2778 = vpack.c.b16 %v2730, %v2728
      %v2779 = vpack.c.b16 %v2733, %v2731
      %v2780 = vpack.c.b16 %v2734, %v2732
      %v2781 = vpack.c.b16 %v2737, %v2735
      %v2782 = vpack.c.b16 %v2738, %v2736
      %v2783 = vpack.c.b16 %v2741, %v2739
      %v2784 = vpack.c.b16 %v2742, %v2740
      %v2785 = vpack.c.b16 %v2745, %v2743
      %v2786 = vpack.c.b16 %v2746, %v2744
      %v2787 = vpack.c.b16 %v2749, %v2747
      %v2788 = vpack.c.b16 %v2750, %v2748
      %v2789 = vpack.c.b16 %v2753, %v2751
      %v2790 = vpack.c.b16 %v2754, %v2752
      %v2791 = vpack.c.b16 %v2757, %v2755
      %v2792 = vpack.c.b16 %v2758, %v2756
      %v2793 = vpack.c.b16 %v2761, %v2759
      %v2794 = vpack.c.b16 %v2762, %v2760
      %2827 = vmatprep.subr.bf16.mxu0 %v2764
      %2828 = vmatpush1.bf16.msra.mxu0 %v2763
      %2829 = vmatprep.subr.bf16.mxu0 %v2766
      %2830 = vmatpush1.bf16.msra.mxu0 %v2765
      %2831 = vmatprep.subr.bf16.mxu0 %v2768
      %2832 = vmatpush1.bf16.msra.mxu0 %v2767
      %2833 = vmatprep.subr.bf16.mxu0 %v2770
      %2834 = vmatpush1.bf16.msra.mxu0 %v2769
      %2835 = vmatprep.subr.bf16.mxu0 %v2772
      %2836 = vmatpush1.bf16.msra.mxu0 %v2771
      %2837 = vmatprep.subr.bf16.mxu0 %v2774
      %2838 = vmatpush1.bf16.msra.mxu0 %v2773
      %2839 = vmatprep.subr.bf16.mxu0 %v2776
      %2840 = vmatpush1.bf16.msra.mxu0 %v2775
      %2841 = vmatprep.subr.bf16.mxu0 %v2778
      %2842 = vmatpush1.bf16.msra.mxu0 %v2777
      %2843 = vmatprep.subr.bf16.mxu0 %v2780
      %2844 = vmatpush1.bf16.msra.mxu0 %v2779
      %2845 = vmatprep.subr.bf16.mxu0 %v2782
      %2846 = vmatpush1.bf16.msra.mxu0 %v2781
      %2847 = vmatprep.subr.bf16.mxu0 %v2784
      %2848 = vmatpush1.bf16.msra.mxu0 %v2783
      %2849 = vmatprep.subr.bf16.mxu0 %v2786
      %2850 = vmatpush1.bf16.msra.mxu0 %v2785
      %2851 = vmatprep.subr.bf16.mxu0 %v2788
      %2852 = vmatpush1.bf16.msra.mxu0 %v2787
      %2853 = vmatprep.subr.bf16.mxu0 %v2790
      %2854 = vmatpush1.bf16.msra.mxu0 %v2789
      %2855 = vmatprep.subr.bf16.mxu0 %v2792
      %2856 = vmatpush1.bf16.msra.mxu0 %v2791
      %2857 = vmatprep.subr.bf16.mxu0 %v2794
      %2858 = vmatpush1.bf16.msra.mxu0 %v2793
      %2859 = vmatprep.mubr.bf16.mxu0 %v2135
      %2860 = vmatmul.mubr.bf16.gmra.mrb[0].mxu0 %v2134
      %v2861 = vpop.f32.mrb[0].mxu0
      %v2862 = vadd.f32 0.0, %v2861
      %v2863 = vpop.f32.mrb[0].mxu0
      %v2864 = vadd.f32 0.0, %v2863
      %v2865 = vpop.f32.mrb[0].mxu0
      %v2866 = vpop.f32.mrb[0].mxu0
      %2867 = vdwg.mxu0
      %v2900 = vunpack.c.l.b16 %v2602
      %v2901 = vunpack.c.h.b16 %v2602
      %v2902 = vunpack.c.l.b16 %v2603
      %v2903 = vunpack.c.h.b16 %v2603
      %v2904 = vunpack.c.l.b16 %v2604
      %v2905 = vunpack.c.h.b16 %v2604
      %v2906 = vunpack.c.l.b16 %v2605
      %v2907 = vunpack.c.h.b16 %v2605
      %v2908 = vunpack.c.l.b16 %v2606
      %v2909 = vunpack.c.h.b16 %v2606
      %v2910 = vunpack.c.l.b16 %v2607
      %v2911 = vunpack.c.h.b16 %v2607
      %v2912 = vunpack.c.l.b16 %v2608
      %v2913 = vunpack.c.h.b16 %v2608
      %v2914 = vunpack.c.l.b16 %v2609
      %v2915 = vunpack.c.h.b16 %v2609
      %v2916 = vunpack.c.l.b16 %v2610
      %v2917 = vunpack.c.h.b16 %v2610
      %v2918 = vunpack.c.l.b16 %v2611
      %v2919 = vunpack.c.h.b16 %v2611
      %v2920 = vunpack.c.l.b16 %v2612
      %v2921 = vunpack.c.h.b16 %v2612
      %v2922 = vunpack.c.l.b16 %v2613
      %v2923 = vunpack.c.h.b16 %v2613
      %v2924 = vunpack.c.l.b16 %v2614
      %v2925 = vunpack.c.h.b16 %v2614
      %v2926 = vunpack.c.l.b16 %v2615
      %v2927 = vunpack.c.h.b16 %v2615
      %v2928 = vunpack.c.l.b16 %v2616
      %v2929 = vunpack.c.h.b16 %v2616
      %v2930 = vunpack.c.l.b16 %v2617
      %v2931 = vunpack.c.h.b16 %v2617
      %v2932 = vunpack.c.l.b16 %v2618
      %v2933 = vunpack.c.h.b16 %v2618
      %v2934 = vunpack.c.l.b16 %v2619
      %v2935 = vunpack.c.h.b16 %v2619
      %v2936 = vunpack.c.l.b16 %v2620
      %v2937 = vunpack.c.h.b16 %v2620
      %v2938 = vunpack.c.l.b16 %v2621
      %v2939 = vunpack.c.h.b16 %v2621
      %v2940 = vunpack.c.l.b16 %v2622
      %v2941 = vunpack.c.h.b16 %v2622
      %v2942 = vunpack.c.l.b16 %v2623
      %v2943 = vunpack.c.h.b16 %v2623
      %v2944 = vunpack.c.l.b16 %v2624
      %v2945 = vunpack.c.h.b16 %v2624
      %v2946 = vunpack.c.l.b16 %v2625
      %v2947 = vunpack.c.h.b16 %v2625
      %v2948 = vunpack.c.l.b16 %v2626
      %v2949 = vunpack.c.h.b16 %v2626
      %v2950 = vunpack.c.l.b16 %v2627
      %v2951 = vunpack.c.h.b16 %v2627
      %v2952 = vunpack.c.l.b16 %v2628
      %v2953 = vunpack.c.h.b16 %v2628
      %v2954 = vunpack.c.l.b16 %v2629
      %v2955 = vunpack.c.h.b16 %v2629
      %v2956 = vunpack.c.l.b16 %v2630
      %v2957 = vunpack.c.h.b16 %v2630
      %v2958 = vunpack.c.l.b16 %v2631
      %v2959 = vunpack.c.h.b16 %v2631
      %v2960 = vunpack.c.l.b16 %v2632
      %v2961 = vunpack.c.h.b16 %v2632
      %v2962 = vunpack.c.l.b16 %v2633
      %v2963 = vunpack.c.h.b16 %v2633
      %v2964 = vpack.c.b16 %v2902, %v2900
      %v2965 = vpack.c.b16 %v2903, %v2901
      %v2966 = vpack.c.b16 %v2906, %v2904
      %v2967 = vpack.c.b16 %v2907, %v2905
      %v2968 = vpack.c.b16 %v2910, %v2908
      %v2969 = vpack.c.b16 %v2911, %v2909
      %v2970 = vpack.c.b16 %v2914, %v2912
      %v2971 = vpack.c.b16 %v2915, %v2913
      %v2972 = vpack.c.b16 %v2918, %v2916
      %v2973 = vpack.c.b16 %v2919, %v2917
      %v2974 = vpack.c.b16 %v2922, %v2920
      %v2975 = vpack.c.b16 %v2923, %v2921
      %v2976 = vpack.c.b16 %v2926, %v2924
      %v2977 = vpack.c.b16 %v2927, %v2925
      %v2978 = vpack.c.b16 %v2930, %v2928
      %v2979 = vpack.c.b16 %v2931, %v2929
      %v2980 = vpack.c.b16 %v2934, %v2932
      %v2981 = vpack.c.b16 %v2935, %v2933
      %v2982 = vpack.c.b16 %v2938, %v2936
      %v2983 = vpack.c.b16 %v2939, %v2937
      %v2984 = vpack.c.b16 %v2942, %v2940
      %v2985 = vpack.c.b16 %v2943, %v2941
      %v2986 = vpack.c.b16 %v2946, %v2944
      %v2987 = vpack.c.b16 %v2947, %v2945
      %v2988 = vpack.c.b16 %v2950, %v2948
      %v2989 = vpack.c.b16 %v2951, %v2949
      %v2990 = vpack.c.b16 %v2954, %v2952
      %v2991 = vpack.c.b16 %v2955, %v2953
      %v2992 = vpack.c.b16 %v2958, %v2956
      %v2993 = vpack.c.b16 %v2959, %v2957
      %v2994 = vpack.c.b16 %v2962, %v2960
      %v2995 = vpack.c.b16 %v2963, %v2961
      %3028 = vmatprep.subr.bf16.mxu0 %v2965
      %3029 = vmatpush1.bf16.msra.mxu0 %v2964
      %3030 = vmatprep.subr.bf16.mxu0 %v2967
      %3031 = vmatpush1.bf16.msra.mxu0 %v2966
      %3032 = vmatprep.subr.bf16.mxu0 %v2969
      %3033 = vmatpush1.bf16.msra.mxu0 %v2968
      %3034 = vmatprep.subr.bf16.mxu0 %v2971
      %3035 = vmatpush1.bf16.msra.mxu0 %v2970
      %3036 = vmatprep.subr.bf16.mxu0 %v2973
      %3037 = vmatpush1.bf16.msra.mxu0 %v2972
      %3038 = vmatprep.subr.bf16.mxu0 %v2975
      %3039 = vmatpush1.bf16.msra.mxu0 %v2974
      %3040 = vmatprep.subr.bf16.mxu0 %v2977
      %3041 = vmatpush1.bf16.msra.mxu0 %v2976
      %3042 = vmatprep.subr.bf16.mxu0 %v2979
      %3043 = vmatpush1.bf16.msra.mxu0 %v2978
      %3044 = vmatprep.subr.bf16.mxu0 %v2981
      %3045 = vmatpush1.bf16.msra.mxu0 %v2980
      %3046 = vmatprep.subr.bf16.mxu0 %v2983
      %3047 = vmatpush1.bf16.msra.mxu0 %v2982
      %3048 = vmatprep.subr.bf16.mxu0 %v2985
      %3049 = vmatpush1.bf16.msra.mxu0 %v2984
      %3050 = vmatprep.subr.bf16.mxu0 %v2987
      %3051 = vmatpush1.bf16.msra.mxu0 %v2986
      %3052 = vmatprep.subr.bf16.mxu0 %v2989
      %3053 = vmatpush1.bf16.msra.mxu0 %v2988
      %3054 = vmatprep.subr.bf16.mxu0 %v2991
      %3055 = vmatpush1.bf16.msra.mxu0 %v2990
      %3056 = vmatprep.subr.bf16.mxu0 %v2993
      %3057 = vmatpush1.bf16.msra.mxu0 %v2992
      %3058 = vmatprep.subr.bf16.mxu0 %v2995
      %3059 = vmatpush1.bf16.msra.mxu0 %v2994
      %3060 = vmatprep.mubr.bf16.mxu0 %v1688
      %3061 = vmatmul.mubr.bf16.gmra.mrb[0].mxu0 %v1681
      %v3062 = vpop.f32.mrb[0].mxu0
      %v3063 = vadd.f32 %v2862, %v3062
      %v3064 = vpop.f32.mrb[0].mxu0
      %v3065 = vadd.f32 %v2864, %v3064
      %v3066 = vpop.f32.mrb[0].mxu0
      %v3067 = vpop.f32.mrb[0].mxu0
      %3068 = vdwg.mxu0
      %s3069 = scalar_lea.vmem %s5, 1536
      %v3070 = vld [vmem:[%s3069] sm:$0xff]
      %v3071 = vld [vmem:[%s3069 + $0x8] sm:$0xff]
      %v3072 = vld [vmem:[%s3069 + $0x10] sm:$0xff]
      %v3073 = vld [vmem:[%s3069 + $0x18] sm:$0xff]
      %v3074 = vld [vmem:[%s3069 + $0x20] sm:$0xff]
      %v3075 = vld [vmem:[%s3069 + $0x28] sm:$0xff]
      %v3076 = vld [vmem:[%s3069 + $0x30] sm:$0xff]
      %v3077 = vld [vmem:[%s3069 + $0x38] sm:$0xff]
      %v3078 = vld [vmem:[%s3069 + $0x40] sm:$0xff]
      %v3079 = vld [vmem:[%s3069 + $0x48] sm:$0xff]
      %v3080 = vld [vmem:[%s3069 + $0x50] sm:$0xff]
      %v3081 = vld [vmem:[%s3069 + $0x58] sm:$0xff]
      %v3082 = vld [vmem:[%s3069 + $0x60] sm:$0xff]
      %v3083 = vld [vmem:[%s3069 + $0x68] sm:$0xff]
      %v3084 = vld [vmem:[%s3069 + $0x70] sm:$0xff]
      %v3085 = vld [vmem:[%s3069 + $0x78] sm:$0xff]
      %v3086 = vld [vmem:[%s3069 + $0x80] sm:$0xff]
      %v3087 = vld [vmem:[%s3069 + $0x88] sm:$0xff]
      %v3088 = vld [vmem:[%s3069 + $0x90] sm:$0xff]
      %v3089 = vld [vmem:[%s3069 + $0x98] sm:$0xff]
      %v3090 = vld [vmem:[%s3069 + $0xa0] sm:$0xff]
      %v3091 = vld [vmem:[%s3069 + $0xa8] sm:$0xff]
      %v3092 = vld [vmem:[%s3069 + $0xb0] sm:$0xff]
      %v3093 = vld [vmem:[%s3069 + $0xb8] sm:$0xff]
      %v3094 = vld [vmem:[%s3069 + $0xc0] sm:$0xff]
      %v3095 = vld [vmem:[%s3069 + $0xc8] sm:$0xff]
      %v3096 = vld [vmem:[%s3069 + $0xd0] sm:$0xff]
      %v3097 = vld [vmem:[%s3069 + $0xd8] sm:$0xff]
      %v3098 = vld [vmem:[%s3069 + $0xe0] sm:$0xff]
      %v3099 = vld [vmem:[%s3069 + $0xe8] sm:$0xff]
      %v3100 = vld [vmem:[%s3069 + $0xf0] sm:$0xff]
      %v3101 = vld [vmem:[%s3069 + $0xf8] sm:$0xff]
      %v3134 = vunpack.c.l.b16 %v3070
      %v3135 = vunpack.c.h.b16 %v3070
      %v3136 = vunpack.c.l.b16 %v3071
      %v3137 = vunpack.c.h.b16 %v3071
      %v3138 = vunpack.c.l.b16 %v3072
      %v3139 = vunpack.c.h.b16 %v3072
      %v3140 = vunpack.c.l.b16 %v3073
      %v3141 = vunpack.c.h.b16 %v3073
      %v3142 = vunpack.c.l.b16 %v3074
      %v3143 = vunpack.c.h.b16 %v3074
      %v3144 = vunpack.c.l.b16 %v3075
      %v3145 = vunpack.c.h.b16 %v3075
      %v3146 = vunpack.c.l.b16 %v3076
      %v3147 = vunpack.c.h.b16 %v3076
      %v3148 = vunpack.c.l.b16 %v3077
      %v3149 = vunpack.c.h.b16 %v3077
      %v3150 = vunpack.c.l.b16 %v3078
      %v3151 = vunpack.c.h.b16 %v3078
      %v3152 = vunpack.c.l.b16 %v3079
      %v3153 = vunpack.c.h.b16 %v3079
      %v3154 = vunpack.c.l.b16 %v3080
      %v3155 = vunpack.c.h.b16 %v3080
      %v3156 = vunpack.c.l.b16 %v3081
      %v3157 = vunpack.c.h.b16 %v3081
      %v3158 = vunpack.c.l.b16 %v3082
      %v3159 = vunpack.c.h.b16 %v3082
      %v3160 = vunpack.c.l.b16 %v3083
      %v3161 = vunpack.c.h.b16 %v3083
      %v3162 = vunpack.c.l.b16 %v3084
      %v3163 = vunpack.c.h.b16 %v3084
      %v3164 = vunpack.c.l.b16 %v3085
      %v3165 = vunpack.c.h.b16 %v3085
      %v3166 = vunpack.c.l.b16 %v3086
      %v3167 = vunpack.c.h.b16 %v3086
      %v3168 = vunpack.c.l.b16 %v3087
      %v3169 = vunpack.c.h.b16 %v3087
      %v3170 = vunpack.c.l.b16 %v3088
      %v3171 = vunpack.c.h.b16 %v3088
      %v3172 = vunpack.c.l.b16 %v3089
      %v3173 = vunpack.c.h.b16 %v3089
      %v3174 = vunpack.c.l.b16 %v3090
      %v3175 = vunpack.c.h.b16 %v3090
      %v3176 = vunpack.c.l.b16 %v3091
      %v3177 = vunpack.c.h.b16 %v3091
      %v3178 = vunpack.c.l.b16 %v3092
      %v3179 = vunpack.c.h.b16 %v3092
      %v3180 = vunpack.c.l.b16 %v3093
      %v3181 = vunpack.c.h.b16 %v3093
      %v3182 = vunpack.c.l.b16 %v3094
      %v3183 = vunpack.c.h.b16 %v3094
      %v3184 = vunpack.c.l.b16 %v3095
      %v3185 = vunpack.c.h.b16 %v3095
      %v3186 = vunpack.c.l.b16 %v3096
      %v3187 = vunpack.c.h.b16 %v3096
      %v3188 = vunpack.c.l.b16 %v3097
      %v3189 = vunpack.c.h.b16 %v3097
      %v3190 = vunpack.c.l.b16 %v3098
      %v3191 = vunpack.c.h.b16 %v3098
      %v3192 = vunpack.c.l.b16 %v3099
      %v3193 = vunpack.c.h.b16 %v3099
      %v3194 = vunpack.c.l.b16 %v3100
      %v3195 = vunpack.c.h.b16 %v3100
      %v3196 = vunpack.c.l.b16 %v3101
      %v3197 = vunpack.c.h.b16 %v3101
      %v3198 = vpack.c.b16 %v3136, %v3134
      %v3199 = vpack.c.b16 %v3137, %v3135
      %v3200 = vpack.c.b16 %v3140, %v3138
      %v3201 = vpack.c.b16 %v3141, %v3139
      %v3202 = vpack.c.b16 %v3144, %v3142
      %v3203 = vpack.c.b16 %v3145, %v3143
      %v3204 = vpack.c.b16 %v3148, %v3146
      %v3205 = vpack.c.b16 %v3149, %v3147
      %v3206 = vpack.c.b16 %v3152, %v3150
      %v3207 = vpack.c.b16 %v3153, %v3151
      %v3208 = vpack.c.b16 %v3156, %v3154
      %v3209 = vpack.c.b16 %v3157, %v3155
      %v3210 = vpack.c.b16 %v3160, %v3158
      %v3211 = vpack.c.b16 %v3161, %v3159
      %v3212 = vpack.c.b16 %v3164, %v3162
      %v3213 = vpack.c.b16 %v3165, %v3163
      %v3214 = vpack.c.b16 %v3168, %v3166
      %v3215 = vpack.c.b16 %v3169, %v3167
      %v3216 = vpack.c.b16 %v3172, %v3170
      %v3217 = vpack.c.b16 %v3173, %v3171
      %v3218 = vpack.c.b16 %v3176, %v3174
      %v3219 = vpack.c.b16 %v3177, %v3175
      %v3220 = vpack.c.b16 %v3180, %v3178
      %v3221 = vpack.c.b16 %v3181, %v3179
      %v3222 = vpack.c.b16 %v3184, %v3182
      %v3223 = vpack.c.b16 %v3185, %v3183
      %v3224 = vpack.c.b16 %v3188, %v3186
      %v3225 = vpack.c.b16 %v3189, %v3187
      %v3226 = vpack.c.b16 %v3192, %v3190
      %v3227 = vpack.c.b16 %v3193, %v3191
      %v3228 = vpack.c.b16 %v3196, %v3194
      %v3229 = vpack.c.b16 %v3197, %v3195
      %3262 = vmatprep.subr.bf16.mxu0 %v3199
      %3263 = vmatpush1.bf16.msra.mxu0 %v3198
      %3264 = vmatprep.subr.bf16.mxu0 %v3201
      %3265 = vmatpush1.bf16.msra.mxu0 %v3200
      %3266 = vmatprep.subr.bf16.mxu0 %v3203
      %3267 = vmatpush1.bf16.msra.mxu0 %v3202
      %3268 = vmatprep.subr.bf16.mxu0 %v3205
      %3269 = vmatpush1.bf16.msra.mxu0 %v3204
      %3270 = vmatprep.subr.bf16.mxu0 %v3207
      %3271 = vmatpush1.bf16.msra.mxu0 %v3206
      %3272 = vmatprep.subr.bf16.mxu0 %v3209
      %3273 = vmatpush1.bf16.msra.mxu0 %v3208
      %3274 = vmatprep.subr.bf16.mxu0 %v3211
      %3275 = vmatpush1.bf16.msra.mxu0 %v3210
      %3276 = vmatprep.subr.bf16.mxu0 %v3213
      %3277 = vmatpush1.bf16.msra.mxu0 %v3212
      %3278 = vmatprep.subr.bf16.mxu0 %v3215
      %3279 = vmatpush1.bf16.msra.mxu0 %v3214
      %3280 = vmatprep.subr.bf16.mxu0 %v3217
      %3281 = vmatpush1.bf16.msra.mxu0 %v3216
      %3282 = vmatprep.subr.bf16.mxu0 %v3219
      %3283 = vmatpush1.bf16.msra.mxu0 %v3218
      %3284 = vmatprep.subr.bf16.mxu0 %v3221
      %3285 = vmatpush1.bf16.msra.mxu0 %v3220
      %3286 = vmatprep.subr.bf16.mxu0 %v3223
      %3287 = vmatpush1.bf16.msra.mxu0 %v3222
      %3288 = vmatprep.subr.bf16.mxu0 %v3225
      %3289 = vmatpush1.bf16.msra.mxu0 %v3224
      %3290 = vmatprep.subr.bf16.mxu0 %v3227
      %3291 = vmatpush1.bf16.msra.mxu0 %v3226
      %3292 = vmatprep.subr.bf16.mxu0 %v3229
      %3293 = vmatpush1.bf16.msra.mxu0 %v3228
      %3294 = vmatprep.mubr.bf16.mxu0 %v2395
      %3295 = vmatmul.mubr.bf16.gmra.mrb[0].mxu0 %v2387
      %v3296 = vpop.f32.mrb[0].mxu0
      %v3297 = vadd.f32 0.0, %v3296
      %v3298 = vpop.f32.mrb[0].mxu0
      %v3299 = vadd.f32 0.0, %v3298
      %v3300 = vpop.f32.mrb[0].mxu0
      %v3301 = vpop.f32.mrb[0].mxu0
      %3302 = vdwg.mxu0
      %v3303 = vadd.f32 %v3063, %v3297
      %v3304 = vadd.f32 %v3065, %v3299
      %v3305 = vld [vmem:[#allocation3] sm:$0xf0]
      %v3306 = vld [vmem:[#allocation3 + $0x8] sm:$0xf0]
      %v3307 = vld [vmem:[#allocation3 + $0x10] sm:$0xf]
      %v3308 = vld [vmem:[#allocation3 + $0x18] sm:$0xf]
      %v3309 = vpack.c.bf16 %v3307, %v3305
      %v3310 = vpack.c.bf16 %v3308, %v3306
      %s3311 = scalar_lea.vmem %s5, 1792
      %v3312 = vld [vmem:[%s3311] sm:$0xff]
      %v3313 = vld [vmem:[%s3311 + $0x8] sm:$0xff]
      %v3314 = vld [vmem:[%s3311 + $0x10] sm:$0xff]
      %v3315 = vld [vmem:[%s3311 + $0x18] sm:$0xff]
      %v3316 = vld [vmem:[%s3311 + $0x20] sm:$0xff]
      %v3317 = vld [vmem:[%s3311 + $0x28] sm:$0xff]
      %v3318 = vld [vmem:[%s3311 + $0x30] sm:$0xff]
      %v3319 = vld [vmem:[%s3311 + $0x38] sm:$0xff]
      %v3320 = vld [vmem:[%s3311 + $0x40] sm:$0xff]
      %v3321 = vld [vmem:[%s3311 + $0x48] sm:$0xff]
      %v3322 = vld [vmem:[%s3311 + $0x50] sm:$0xff]
      %v3323 = vld [vmem:[%s3311 + $0x58] sm:$0xff]
      %v3324 = vld [vmem:[%s3311 + $0x60] sm:$0xff]
      %v3325 = vld [vmem:[%s3311 + $0x68] sm:$0xff]
      %v3326 = vld [vmem:[%s3311 + $0x70] sm:$0xff]
      %v3327 = vld [vmem:[%s3311 + $0x78] sm:$0xff]
      %v3328 = vld [vmem:[%s3311 + $0x80] sm:$0xff]
      %v3329 = vld [vmem:[%s3311 + $0x88] sm:$0xff]
      %v3330 = vld [vmem:[%s3311 + $0x90] sm:$0xff]
      %v3331 = vld [vmem:[%s3311 + $0x98] sm:$0xff]
      %v3332 = vld [vmem:[%s3311 + $0xa0] sm:$0xff]
      %v3333 = vld [vmem:[%s3311 + $0xa8] sm:$0xff]
      %v3334 = vld [vmem:[%s3311 + $0xb0] sm:$0xff]
      %v3335 = vld [vmem:[%s3311 + $0xb8] sm:$0xff]
      %v3336 = vld [vmem:[%s3311 + $0xc0] sm:$0xff]
      %v3337 = vld [vmem:[%s3311 + $0xc8] sm:$0xff]
      %v3338 = vld [vmem:[%s3311 + $0xd0] sm:$0xff]
      %v3339 = vld [vmem:[%s3311 + $0xd8] sm:$0xff]
      %v3340 = vld [vmem:[%s3311 + $0xe0] sm:$0xff]
      %v3341 = vld [vmem:[%s3311 + $0xe8] sm:$0xff]
      %v3342 = vld [vmem:[%s3311 + $0xf0] sm:$0xff]
      %v3343 = vld [vmem:[%s3311 + $0xf8] sm:$0xff]
      %v3346 = vrot.slane %v3309, 2
      %v3347 = vrot.slane %v3310, 2
      %v3382 = vunpack.c.l.b16 %v3312
      %v3383 = vunpack.c.h.b16 %v3312
      %v3384 = vunpack.c.l.b16 %v3313
      %v3385 = vunpack.c.h.b16 %v3313
      %v3386 = vunpack.c.l.b16 %v3314
      %v3387 = vunpack.c.h.b16 %v3314
      %v3388 = vunpack.c.l.b16 %v3315
      %v3389 = vunpack.c.h.b16 %v3315
      %v3390 = vunpack.c.l.b16 %v3316
      %v3391 = vunpack.c.h.b16 %v3316
      %v3392 = vunpack.c.l.b16 %v3317
      %v3393 = vunpack.c.h.b16 %v3317
      %v3394 = vunpack.c.l.b16 %v3318
      %v3395 = vunpack.c.h.b16 %v3318
      %v3396 = vunpack.c.l.b16 %v3319
      %v3397 = vunpack.c.h.b16 %v3319
      %v3398 = vunpack.c.l.b16 %v3320
      %v3399 = vunpack.c.h.b16 %v3320
      %v3400 = vunpack.c.l.b16 %v3321
      %v3401 = vunpack.c.h.b16 %v3321
      %v3402 = vunpack.c.l.b16 %v3322
      %v3403 = vunpack.c.h.b16 %v3322
      %v3404 = vunpack.c.l.b16 %v3323
      %v3405 = vunpack.c.h.b16 %v3323
      %v3406 = vunpack.c.l.b16 %v3324
      %v3407 = vunpack.c.h.b16 %v3324
      %v3408 = vunpack.c.l.b16 %v3325
      %v3409 = vunpack.c.h.b16 %v3325
      %v3410 = vunpack.c.l.b16 %v3326
      %v3411 = vunpack.c.h.b16 %v3326
      %v3412 = vunpack.c.l.b16 %v3327
      %v3413 = vunpack.c.h.b16 %v3327
      %v3414 = vunpack.c.l.b16 %v3328
      %v3415 = vunpack.c.h.b16 %v3328
      %v3416 = vunpack.c.l.b16 %v3329
      %v3417 = vunpack.c.h.b16 %v3329
      %v3418 = vunpack.c.l.b16 %v3330
      %v3419 = vunpack.c.h.b16 %v3330
      %v3420 = vunpack.c.l.b16 %v3331
      %v3421 = vunpack.c.h.b16 %v3331
      %v3422 = vunpack.c.l.b16 %v3332
      %v3423 = vunpack.c.h.b16 %v3332
      %v3424 = vunpack.c.l.b16 %v3333
      %v3425 = vunpack.c.h.b16 %v3333
      %v3426 = vunpack.c.l.b16 %v3334
      %v3427 = vunpack.c.h.b16 %v3334
      %v3428 = vunpack.c.l.b16 %v3335
      %v3429 = vunpack.c.h.b16 %v3335
      %v3430 = vunpack.c.l.b16 %v3336
      %v3431 = vunpack.c.h.b16 %v3336
      %v3432 = vunpack.c.l.b16 %v3337
      %v3433 = vunpack.c.h.b16 %v3337
      %v3434 = vunpack.c.l.b16 %v3338
      %v3435 = vunpack.c.h.b16 %v3338
      %v3436 = vunpack.c.l.b16 %v3339
      %v3437 = vunpack.c.h.b16 %v3339
      %v3438 = vunpack.c.l.b16 %v3340
      %v3439 = vunpack.c.h.b16 %v3340
      %v3440 = vunpack.c.l.b16 %v3341
      %v3441 = vunpack.c.h.b16 %v3341
      %v3442 = vunpack.c.l.b16 %v3342
      %v3443 = vunpack.c.h.b16 %v3342
      %v3444 = vunpack.c.l.b16 %v3343
      %v3445 = vunpack.c.h.b16 %v3343
      %v3446 = vpack.c.b16 %v3384, %v3382
      %v3447 = vpack.c.b16 %v3385, %v3383
      %v3448 = vpack.c.b16 %v3388, %v3386
      %v3449 = vpack.c.b16 %v3389, %v3387
      %v3450 = vpack.c.b16 %v3392, %v3390
      %v3451 = vpack.c.b16 %v3393, %v3391
      %v3452 = vpack.c.b16 %v3396, %v3394
      %v3453 = vpack.c.b16 %v3397, %v3395
      %v3454 = vpack.c.b16 %v3400, %v3398
      %v3455 = vpack.c.b16 %v3401, %v3399
      %v3456 = vpack.c.b16 %v3404, %v3402
      %v3457 = vpack.c.b16 %v3405, %v3403
      %v3458 = vpack.c.b16 %v3408, %v3406
      %v3459 = vpack.c.b16 %v3409, %v3407
      %v3460 = vpack.c.b16 %v3412, %v3410
      %v3461 = vpack.c.b16 %v3413, %v3411
      %v3462 = vpack.c.b16 %v3416, %v3414
      %v3463 = vpack.c.b16 %v3417, %v3415
      %v3464 = vpack.c.b16 %v3420, %v3418
      %v3465 = vpack.c.b16 %v3421, %v3419
      %v3466 = vpack.c.b16 %v3424, %v3422
      %v3467 = vpack.c.b16 %v3425, %v3423
      %v3468 = vpack.c.b16 %v3428, %v3426
      %v3469 = vpack.c.b16 %v3429, %v3427
      %v3470 = vpack.c.b16 %v3432, %v3430
      %v3471 = vpack.c.b16 %v3433, %v3431
      %v3472 = vpack.c.b16 %v3436, %v3434
      %v3473 = vpack.c.b16 %v3437, %v3435
      %v3474 = vpack.c.b16 %v3440, %v3438
      %v3475 = vpack.c.b16 %v3441, %v3439
      %v3476 = vpack.c.b16 %v3444, %v3442
      %v3477 = vpack.c.b16 %v3445, %v3443
      %3510 = vmatprep.subr.bf16.mxu0 %v3447
      %3511 = vmatpush1.bf16.msra.mxu0 %v3446
      %3512 = vmatprep.subr.bf16.mxu0 %v3449
      %3513 = vmatpush1.bf16.msra.mxu0 %v3448
      %3514 = vmatprep.subr.bf16.mxu0 %v3451
      %3515 = vmatpush1.bf16.msra.mxu0 %v3450
      %3516 = vmatprep.subr.bf16.mxu0 %v3453
      %3517 = vmatpush1.bf16.msra.mxu0 %v3452
      %3518 = vmatprep.subr.bf16.mxu0 %v3455
      %3519 = vmatpush1.bf16.msra.mxu0 %v3454
      %3520 = vmatprep.subr.bf16.mxu0 %v3457
      %3521 = vmatpush1.bf16.msra.mxu0 %v3456
      %3522 = vmatprep.subr.bf16.mxu0 %v3459
      %3523 = vmatpush1.bf16.msra.mxu0 %v3458
      %3524 = vmatprep.subr.bf16.mxu0 %v3461
      %3525 = vmatpush1.bf16.msra.mxu0 %v3460
      %3526 = vmatprep.subr.bf16.mxu0 %v3463
      %3527 = vmatpush1.bf16.msra.mxu0 %v3462
      %3528 = vmatprep.subr.bf16.mxu0 %v3465
      %3529 = vmatpush1.bf16.msra.mxu0 %v3464
      %3530 = vmatprep.subr.bf16.mxu0 %v3467
      %3531 = vmatpush1.bf16.msra.mxu0 %v3466
      %3532 = vmatprep.subr.bf16.mxu0 %v3469
      %3533 = vmatpush1.bf16.msra.mxu0 %v3468
      %3534 = vmatprep.subr.bf16.mxu0 %v3471
      %3535 = vmatpush1.bf16.msra.mxu0 %v3470
      %3536 = vmatprep.subr.bf16.mxu0 %v3473
      %3537 = vmatpush1.bf16.msra.mxu0 %v3472
      %3538 = vmatprep.subr.bf16.mxu0 %v3475
      %3539 = vmatpush1.bf16.msra.mxu0 %v3474
      %3540 = vmatprep.subr.bf16.mxu0 %v3477
      %3541 = vmatpush1.bf16.msra.mxu0 %v3476
      %3542 = vmatprep.mubr.bf16.mxu0 %v3347
      %3543 = vmatmul.mubr.bf16.gmra.mrb[0].mxu0 %v3346
      %v3544 = vpop.f32.mrb[0].mxu0
      %v3545 = vadd.f32 0.0, %v3544
      %v3546 = vpop.f32.mrb[0].mxu0
      %v3547 = vadd.f32 0.0, %v3546
      %v3548 = vpop.f32.mrb[0].mxu0
      %v3549 = vpop.f32.mrb[0].mxu0
      %3550 = vdwg.mxu0
      %v3551 = vadd.f32 %v3303, %v3545
      %v3552 = vadd.f32 %v3304, %v3547
      %v3553 = vld [vmem:[%s6] sm:$0x3]
      %v3555 = vlaneseq
      %v3556 = vshrl.u32 %v3555, 7
      %v3557 = vsub.s32 0, %v3556
      %v3558 = vrot.slane %v3553, %v3557
      %v3559 = vlaneseq
      %v3560 = vshrl.u32 %v3559, 7
      %v3561 = vsub.s32 1, %v3560
      %v3562 = vrot.slane %v3553, %v3561
      %v3565 = vadd.f32 %v2599, %v3558
      %v3566 = vadd.f32 %v2600, %v3562
      %v3567 = vmax.f32 %v3565, 0.0
      %v3568 = vmax.f32 %v3566, 0.0
      %v3569 = vadd.f32 %v3551, %v3558
      %v3570 = vadd.f32 %v3552, %v3562
      %v3571 = vmax.f32 %v3569, 0.0
      %v3572 = vmax.f32 %v3570, 0.0
      %v3573 = vadd.f32 %v3567, %v3568
      %3574 = vadd.xlane.f32.xlu0 %v3573
      %v3575 = vpop.xlane.xlu0 %3574
      %v3576 = vrot.slane %v3575, 4
      %v3577 = vadd.f32 %v3575, %v3576
      %v3578 = vrot.slane %v3577, 2
      %v3579 = vadd.f32 %v3577, %v3578
      %v3580 = vrot.slane %v3579, 1
      %v3581 = vadd.f32 %v3579, %v3580
      %s3582 = vtos %v3581
      %v3583 = vadd.f32 %v3571, %v3572
      %3584 = vadd.xlane.f32.xlu0 %v3583
      %v3585 = vpop.xlane.xlu0 %3584
      %v3586 = vrot.slane %v3585, 4
      %v3587 = vadd.f32 %v3585, %v3586
      %v3588 = vrot.slane %v3587, 2
      %v3589 = vadd.f32 %v3587, %v3588
      %v3590 = vrot.slane %v3589, 1
      %v3591 = vadd.f32 %v3589, %v3590
      %s3592 = vtos %v3591
      %s3593 = sadd.f32 %s3582, %s3592
      %v3594 = vrcp.pop 4096.0
      %s3595 = vtos %v3594
      %s3596 = smul.f32 %s3593, %s3595
      %v3597 = vstv %s3596
      %v3598 = vsub.f32 %v3567, %v3597
      %v3599 = vsub.f32 %v3568, %v3597
      %v3600 = vsub.f32 %v3571, %v3597
      %v3601 = vsub.f32 %v3572, %v3597
      %v3602 = vmul.f32 %v3598, %v3598
      %v3603 = vmul.f32 %v3599, %v3599
      %v3604 = vadd.f32 %v3602, %v3603
      %3605 = vadd.xlane.f32.xlu0 %v3604
      %v3606 = vpop.xlane.xlu0 %3605
      %v3607 = vrot.slane %v3606, 4
      %v3608 = vadd.f32 %v3606, %v3607
      %v3609 = vrot.slane %v3608, 2
      %v3610 = vadd.f32 %v3608, %v3609
      %v3611 = vrot.slane %v3610, 1
      %v3612 = vadd.f32 %v3610, %v3611
      %s3613 = vtos %v3612
      %v3614 = vmul.f32 %v3600, %v3600
      %v3615 = vmul.f32 %v3601, %v3601
      %v3616 = vadd.f32 %v3614, %v3615
      %3617 = vadd.xlane.f32.xlu0 %v3616
      %v3618 = vpop.xlane.xlu0 %3617
      %v3619 = vrot.slane %v3618, 4
      %v3620 = vadd.f32 %v3618, %v3619
      %v3621 = vrot.slane %v3620, 2
      %v3622 = vadd.f32 %v3620, %v3621
      %v3623 = vrot.slane %v3622, 1
      %v3624 = vadd.f32 %v3622, %v3623
      %s3625 = vtos %v3624
      %s3626 = sadd.f32 %s3613, %s3625
      %v3627 = vrcp.pop 4096.0
      %s3628 = vtos %v3627
      %s3629 = smul.f32 %s3626, %s3628
      %s3630 = sadd.f32 %s3629, 1e-05
      %v3631 = vstv %s3630
      %v3632 = vrsqrt.pop %v3631
      %s3633 = vtos %v3632
      %v3634 = vstv %s3633
      %v3635 = vmul.f32 %v3598, %v3634
      %v3636 = vmul.f32 %v3599, %v3634
      %v3637 = vld [vmem:[%s7] sm:$0x3]
      %v3639 = vlaneseq
      %v3640 = vshrl.u32 %v3639, 7
      %v3641 = vsub.s32 0, %v3640
      %v3642 = vrot.slane %v3637, %v3641
      %v3643 = vlaneseq
      %v3644 = vshrl.u32 %v3643, 7
      %v3645 = vsub.s32 1, %v3644
      %v3646 = vrot.slane %v3637, %v3645
      %v3649 = vmul.f32 %v3635, %v3642
      %v3650 = vmul.f32 %v3636, %v3646
      %v3651 = vld [vmem:[%s8] sm:$0x3]
      %v3653 = vlaneseq
      %v3654 = vshrl.u32 %v3653, 7
      %v3655 = vsub.s32 0, %v3654
      %v3656 = vrot.slane %v3651, %v3655
      %v3657 = vlaneseq
      %v3658 = vshrl.u32 %v3657, 7
      %v3659 = vsub.s32 1, %v3658
      %v3660 = vrot.slane %v3651, %v3659
      %v3663 = vadd.f32 %v3649, %v3656
      %v3664 = vadd.f32 %v3650, %v3660
      %v3665 = vmul.f32 %v3600, %v3634
      %v3666 = vmul.f32 %v3601, %v3634
      %v3667 = vmul.f32 %v3665, %v3642
      %v3668 = vmul.f32 %v3666, %v3646
      %v3669 = vadd.f32 %v3667, %v3656
      %v3670 = vadd.f32 %v3668, %v3660
      %v3673 = vcombine.low %v3663, %v3664
      %v3674 = vcombine.high %v3663, %v3664
      %v3676 = vunpack.c.l.s4 1966171168
      %v3677 = vunpack.c.0.s8 %v3676
      %v3678 = vlaneseq
      %v3679 = vshrl.u32 %v3678, 7
      %v3680 = vsub.s32 %v3677, %v3679
      %v3681 = vrot.slane %v3673, %v3680
      %v3683 = vunpack.c.l.s4 1966171168
      %v3684 = vunpack.c.0.s8 %v3683
      %v3685 = vlaneseq
      %v3686 = vshrl.u32 %v3685, 7
      %v3687 = vsub.s32 %v3684, %v3686
      %v3688 = vrot.slane %v3674, %v3687
      %v3689 = vcombine.high %v3681, %v3681
      %v3690 = vcombine.high %v3688, %v3688
      %v3692 = vunpack.c.l.s4 1966171168
      %v3693 = vunpack.c.0.s8 %v3692
      %v3694 = vlaneseq
      %v3695 = vshrl.u32 %v3694, 7
      %v3696 = vsub.s32 %v3693, %v3695
      %v3697 = vrot.slane %v3681, %v3696
      %v3699 = vunpack.c.l.s4 1966171168
      %v3700 = vunpack.c.0.s8 %v3699
      %v3701 = vlaneseq
      %v3702 = vshrl.u32 %v3701, 7
      %v3703 = vsub.s32 %v3700, %v3702
      %v3704 = vrot.slane %v3688, %v3703
      %v3706 = vunpack.c.l.s4 1966171168
      %v3707 = vunpack.c.0.s8 %v3706
      %v3708 = vlaneseq
      %v3709 = vshrl.u32 %v3708, 7
      %v3710 = vsub.s32 %v3707, %v3709
      %v3711 = vrot.slane %v3689, %v3710
      %v3713 = vunpack.c.l.s4 1966171168
      %v3714 = vunpack.c.0.s8 %v3713
      %v3715 = vlaneseq
      %v3716 = vshrl.u32 %v3715, 7
      %v3717 = vsub.s32 %v3714, %v3716
      %v3718 = vrot.slane %v3690, %v3717
      %v3719 = vcombine.high %v3697, %v3697
      %v3720 = vcombine.high %v3704, %v3704
      %v3721 = vcombine.high %v3711, %v3711
      %v3722 = vcombine.high %v3718, %v3718
      %v3725 = vcombine.low %v3669, %v3670
      %v3726 = vcombine.high %v3669, %v3670
      %v3728 = vunpack.c.l.s4 1966171168
      %v3729 = vunpack.c.0.s8 %v3728
      %v3730 = vlaneseq
      %v3731 = vshrl.u32 %v3730, 7
      %v3732 = vsub.s32 %v3729, %v3731
      %v3733 = vrot.slane %v3725, %v3732
      %v3735 = vunpack.c.l.s4 1966171168
      %v3736 = vunpack.c.0.s8 %v3735
      %v3737 = vlaneseq
      %v3738 = vshrl.u32 %v3737, 7
      %v3739 = vsub.s32 %v3736, %v3738
      %v3740 = vrot.slane %v3726, %v3739
      %v3741 = vcombine.high %v3733, %v3733
      %v3742 = vcombine.high %v3740, %v3740
      %v3744 = vunpack.c.l.s4 1966171168
      %v3745 = vunpack.c.0.s8 %v3744
      %v3746 = vlaneseq
      %v3747 = vshrl.u32 %v3746, 7
      %v3748 = vsub.s32 %v3745, %v3747
      %v3749 = vrot.slane %v3733, %v3748
      %v3751 = vunpack.c.l.s4 1966171168
      %v3752 = vunpack.c.0.s8 %v3751
      %v3753 = vlaneseq
      %v3754 = vshrl.u32 %v3753, 7
      %v3755 = vsub.s32 %v3752, %v3754
      %v3756 = vrot.slane %v3740, %v3755
      %v3758 = vunpack.c.l.s4 1966171168
      %v3759 = vunpack.c.0.s8 %v3758
      %v3760 = vlaneseq
      %v3761 = vshrl.u32 %v3760, 7
      %v3762 = vsub.s32 %v3759, %v3761
      %v3763 = vrot.slane %v3741, %v3762
      %v3765 = vunpack.c.l.s4 1966171168
      %v3766 = vunpack.c.0.s8 %v3765
      %v3767 = vlaneseq
      %v3768 = vshrl.u32 %v3767, 7
      %v3769 = vsub.s32 %v3766, %v3768
      %v3770 = vrot.slane %v3742, %v3769
      %v3771 = vcombine.high %v3749, %v3749
      %v3772 = vcombine.high %v3756, %v3756
      %v3773 = vcombine.high %v3763, %v3763
      %v3774 = vcombine.high %v3770, %v3770
      %v3775 = vlaneseq
      %v3776 = vshrl.u32 %v3775, 7
      %v3777 = vsub.s32 0, %v3776
      %v3778 = vrot.slane %v3697, %v3777
      %v3779 = vlaneseq
      %v3780 = vshrl.u32 %v3779, 7
      %v3781 = vsub.s32 1, %v3780
      %v3782 = vrot.slane %v3697, %v3781
      %v3783 = vlaneseq
      %v3784 = vshrl.u32 %v3783, 7
      %v3785 = vsub.s32 0, %v3784
      %v3786 = vrot.slane %v3711, %v3785
      %v3787 = vlaneseq
      %v3788 = vshrl.u32 %v3787, 7
      %v3789 = vsub.s32 1, %v3788
      %v3790 = vrot.slane %v3711, %v3789
      %v3791 = vlaneseq
      %v3792 = vshrl.u32 %v3791, 7
      %v3793 = vsub.s32 0, %v3792
      %v3794 = vrot.slane %v3719, %v3793
      %v3795 = vlaneseq
      %v3796 = vshrl.u32 %v3795, 7
      %v3797 = vsub.s32 1, %v3796
      %v3798 = vrot.slane %v3719, %v3797
      %v3799 = vlaneseq
      %v3800 = vshrl.u32 %v3799, 7
      %v3801 = vsub.s32 0, %v3800
      %v3802 = vrot.slane %v3721, %v3801
      %v3803 = vlaneseq
      %v3804 = vshrl.u32 %v3803, 7
      %v3805 = vsub.s32 1, %v3804
      %v3806 = vrot.slane %v3721, %v3805
      %v3807 = vlaneseq
      %v3808 = vshrl.u32 %v3807, 7
      %v3809 = vsub.s32 0, %v3808
      %v3810 = vrot.slane %v3704, %v3809
      %v3811 = vlaneseq
      %v3812 = vshrl.u32 %v3811, 7
      %v3813 = vsub.s32 1, %v3812
      %v3814 = vrot.slane %v3704, %v3813
      %v3815 = vlaneseq
      %v3816 = vshrl.u32 %v3815, 7
      %v3817 = vsub.s32 0, %v3816
      %v3818 = vrot.slane %v3718, %v3817
      %v3819 = vlaneseq
      %v3820 = vshrl.u32 %v3819, 7
      %v3821 = vsub.s32 1, %v3820
      %v3822 = vrot.slane %v3718, %v3821
      %v3823 = vlaneseq
      %v3824 = vshrl.u32 %v3823, 7
      %v3825 = vsub.s32 0, %v3824
      %v3826 = vrot.slane %v3720, %v3825
      %v3827 = vlaneseq
      %v3828 = vshrl.u32 %v3827, 7
      %v3829 = vsub.s32 1, %v3828
      %v3830 = vrot.slane %v3720, %v3829
      %v3831 = vlaneseq
      %v3832 = vshrl.u32 %v3831, 7
      %v3833 = vsub.s32 0, %v3832
      %v3834 = vrot.slane %v3722, %v3833
      %v3835 = vlaneseq
      %v3836 = vshrl.u32 %v3835, 7
      %v3837 = vsub.s32 1, %v3836
      %v3838 = vrot.slane %v3722, %v3837
      %v3855 = vlaneseq
      %v3856 = vshrl.u32 %v3855, 7
      %v3857 = vsub.s32 0, %v3856
      %v3858 = vrot.slane %v3749, %v3857
      %v3859 = vlaneseq
      %v3860 = vshrl.u32 %v3859, 7
      %v3861 = vsub.s32 1, %v3860
      %v3862 = vrot.slane %v3749, %v3861
      %v3863 = vlaneseq
      %v3864 = vshrl.u32 %v3863, 7
      %v3865 = vsub.s32 0, %v3864
      %v3866 = vrot.slane %v3763, %v3865
      %v3867 = vlaneseq
      %v3868 = vshrl.u32 %v3867, 7
      %v3869 = vsub.s32 1, %v3868
      %v3870 = vrot.slane %v3763, %v3869
      %v3871 = vlaneseq
      %v3872 = vshrl.u32 %v3871, 7
      %v3873 = vsub.s32 0, %v3872
      %v3874 = vrot.slane %v3771, %v3873
      %v3875 = vlaneseq
      %v3876 = vshrl.u32 %v3875, 7
      %v3877 = vsub.s32 1, %v3876
      %v3878 = vrot.slane %v3771, %v3877
      %v3879 = vlaneseq
      %v3880 = vshrl.u32 %v3879, 7
      %v3881 = vsub.s32 0, %v3880
      %v3882 = vrot.slane %v3773, %v3881
      %v3883 = vlaneseq
      %v3884 = vshrl.u32 %v3883, 7
      %v3885 = vsub.s32 1, %v3884
      %v3886 = vrot.slane %v3773, %v3885
      %v3887 = vlaneseq
      %v3888 = vshrl.u32 %v3887, 7
      %v3889 = vsub.s32 0, %v3888
      %v3890 = vrot.slane %v3756, %v3889
      %v3891 = vlaneseq
      %v3892 = vshrl.u32 %v3891, 7
      %v3893 = vsub.s32 1, %v3892
      %v3894 = vrot.slane %v3756, %v3893
      %v3895 = vlaneseq
      %v3896 = vshrl.u32 %v3895, 7
      %v3897 = vsub.s32 0, %v3896
      %v3898 = vrot.slane %v3770, %v3897
      %v3899 = vlaneseq
      %v3900 = vshrl.u32 %v3899, 7
      %v3901 = vsub.s32 1, %v3900
      %v3902 = vrot.slane %v3770, %v3901
      %v3903 = vlaneseq
      %v3904 = vshrl.u32 %v3903, 7
      %v3905 = vsub.s32 0, %v3904
      %v3906 = vrot.slane %v3772, %v3905
      %v3907 = vlaneseq
      %v3908 = vshrl.u32 %v3907, 7
      %v3909 = vsub.s32 1, %v3908
      %v3910 = vrot.slane %v3772, %v3909
      %v3911 = vlaneseq
      %v3912 = vshrl.u32 %v3911, 7
      %v3913 = vsub.s32 0, %v3912
      %v3914 = vrot.slane %v3774, %v3913
      %v3915 = vlaneseq
      %v3916 = vshrl.u32 %v3915, 7
      %v3917 = vsub.s32 1, %v3916
      %v3918 = vrot.slane %v3774, %v3917
      %v3935 = vsel %vm1513, %v3778, %v3858
      %v3936 = vsel %vm1513, %v3782, %v3862
      %v3937 = vsel %vm1513, %v3786, %v3866
      %v3938 = vsel %vm1513, %v3790, %v3870
      %v3939 = vsel %vm1513, %v3794, %v3874
      %v3940 = vsel %vm1513, %v3798, %v3878
      %v3941 = vsel %vm1513, %v3802, %v3882
      %v3942 = vsel %vm1513, %v3806, %v3886
      %v3943 = vsel %vm1513, %v3810, %v3890
      %v3944 = vsel %vm1513, %v3814, %v3894
      %v3945 = vsel %vm1513, %v3818, %v3898
      %v3946 = vsel %vm1513, %v3822, %v3902
      %v3947 = vsel %vm1513, %v3826, %v3906
      %v3948 = vsel %vm1513, %v3830, %v3910
      %v3949 = vsel %vm1513, %v3834, %v3914
      %v3950 = vsel %vm1513, %v3838, %v3918
      %v3967 = vcombine.low %v3935, %v3936
      %v3969 = vunpack.c.l.s4 1983009808
      %v3970 = vunpack.c.0.s8 %v3969
      %v3971 = vlaneseq
      %v3972 = vshrl.u32 %v3971, 7
      %v3973 = vsub.s32 %v3970, %v3972
      %v3974 = vrot.slane %v3967, %v3973
      %v3975 = vcombine.low %v3937, %v3938
      %v3977 = vunpack.c.l.s4 1983009808
      %v3978 = vunpack.c.0.s8 %v3977
      %v3979 = vlaneseq
      %v3980 = vshrl.u32 %v3979, 7
      %v3981 = vsub.s32 %v3978, %v3980
      %v3982 = vrot.slane %v3975, %v3981
      %v3983 = vcombine.low %v3939, %v3940
      %v3985 = vunpack.c.l.s4 1983009808
      %v3986 = vunpack.c.0.s8 %v3985
      %v3987 = vlaneseq
      %v3988 = vshrl.u32 %v3987, 7
      %v3989 = vsub.s32 %v3986, %v3988
      %v3990 = vrot.slane %v3983, %v3989
      %v3991 = vcombine.low %v3941, %v3942
      %v3993 = vunpack.c.l.s4 1983009808
      %v3994 = vunpack.c.0.s8 %v3993
      %v3995 = vlaneseq
      %v3996 = vshrl.u32 %v3995, 7
      %v3997 = vsub.s32 %v3994, %v3996
      %v3998 = vrot.slane %v3991, %v3997
      %v3999 = vcombine.low %v3943, %v3944
      %v4001 = vunpack.c.l.s4 1983009808
      %v4002 = vunpack.c.0.s8 %v4001
      %v4003 = vlaneseq
      %v4004 = vshrl.u32 %v4003, 7
      %v4005 = vsub.s32 %v4002, %v4004
      %v4006 = vrot.slane %v3999, %v4005
      %v4007 = vcombine.low %v3945, %v3946
      %v4009 = vunpack.c.l.s4 1983009808
      %v4010 = vunpack.c.0.s8 %v4009
      %v4011 = vlaneseq
      %v4012 = vshrl.u32 %v4011, 7
      %v4013 = vsub.s32 %v4010, %v4012
      %v4014 = vrot.slane %v4007, %v4013
      %v4015 = vcombine.low %v3947, %v3948
      %v4017 = vunpack.c.l.s4 1983009808
      %v4018 = vunpack.c.0.s8 %v4017
      %v4019 = vlaneseq
      %v4020 = vshrl.u32 %v4019, 7
      %v4021 = vsub.s32 %v4018, %v4020
      %v4022 = vrot.slane %v4015, %v4021
      %v4023 = vcombine.low %v3949, %v3950
      %v4025 = vunpack.c.l.s4 1983009808
      %v4026 = vunpack.c.0.s8 %v4025
      %v4027 = vlaneseq
      %v4028 = vshrl.u32 %v4027, 7
      %v4029 = vsub.s32 %v4026, %v4028
      %v4030 = vrot.slane %v4023, %v4029
      %4031 = vst [vmem:[#allocation4] sm:$0x3] 0.0
      %4032 = vst [vmem:[#allocation4 + $0x8] sm:$0x3] 0.0
      %4033 = vst [vmem:[#allocation4 + $0x20] sm:$0xc] 0.0
      %4034 = vst [vmem:[#allocation4 + $0x28] sm:$0xc] 0.0
      %v4035 = vcombine.low %v3974, %v3974
      %v4036 = vcombine.low %v3982, %v3990
      %v4038 = vunpack.c.l.s4 1983009808
      %v4039 = vunpack.c.0.s8 %v4038
      %v4040 = vlaneseq
      %v4041 = vshrl.u32 %v4040, 7
      %v4042 = vsub.s32 %v4039, %v4041
      %v4043 = vrot.slane %v4035, %v4042
      %v4045 = vunpack.c.l.s4 1983009808
      %v4046 = vunpack.c.0.s8 %v4045
      %v4047 = vlaneseq
      %v4048 = vshrl.u32 %v4047, 7
      %v4049 = vsub.s32 %v4046, %v4048
      %v4050 = vrot.slane %v4036, %v4049
      %v4051 = vcombine.low %v4043, %v4050
      %v4052 = vcombine.high %v4043, %v4050
      %v4053 = vcombine.low %v3998, %v4006
      %v4054 = vcombine.low %v4014, %v4022
      %v4056 = vunpack.c.l.s4 1983009808
      %v4057 = vunpack.c.0.s8 %v4056
      %v4058 = vlaneseq
      %v4059 = vshrl.u32 %v4058, 7
      %v4060 = vsub.s32 %v4057, %v4059
      %v4061 = vrot.slane %v4053, %v4060
      %v4063 = vunpack.c.l.s4 1983009808
      %v4064 = vunpack.c.0.s8 %v4063
      %v4065 = vlaneseq
      %v4066 = vshrl.u32 %v4065, 7
      %v4067 = vsub.s32 %v4064, %v4066
      %v4068 = vrot.slane %v4054, %v4067
      %v4069 = vcombine.low %v4061, %v4068
      %v4070 = vcombine.high %v4061, %v4068
      %v4072 = vunpack.c.l.s4 1983009808
      %v4073 = vunpack.c.0.s8 %v4072
      %v4074 = vlaneseq
      %v4075 = vshrl.u32 %v4074, 7
      %v4076 = vsub.s32 %v4073, %v4075
      %v4077 = vrot.slane %v4030, %v4076
      %v4078 = vcombine.high %v4077, %v4077
      %4085 = vst [vmem:[#allocation4] sm:$0xfc] %v4051
      %4086 = vst [vmem:[#allocation4 + $0x8] sm:$0xfc] %v4052
      %4087 = vst [vmem:[#allocation4 + $0x10] sm:$0xff] %v4069
      %4088 = vst [vmem:[#allocation4 + $0x18] sm:$0xff] %v4070
      %4089 = vst [vmem:[#allocation4 + $0x20] sm:$0x3] %v4077
      %4090 = vst [vmem:[#allocation4 + $0x28] sm:$0x3] %v4078
      %v4091 = vld [vmem:[#allocation4] sm:$0xff]
      %v4092 = vld [vmem:[#allocation4 + $0x8] sm:$0xff]
      %v4093 = vld [vmem:[#allocation4 + $0x10] sm:$0xff]
      %v4094 = vld [vmem:[#allocation4 + $0x18] sm:$0xff]
      %v4095 = vpack.c.bf16 %v4093, %v4091
      %v4096 = vpack.c.bf16 %v4094, %v4092
      %v4097 = vld [vmem:[%s9] sm:$0xff]
      %v4098 = vld [vmem:[%s9 + $0x8] sm:$0xff]
      %v4099 = vld [vmem:[%s9 + $0x10] sm:$0xff]
      %v4100 = vld [vmem:[%s9 + $0x18] sm:$0xff]
      %v4101 = vld [vmem:[%s9 + $0x20] sm:$0xff]
      %v4102 = vld [vmem:[%s9 + $0x28] sm:$0xff]
      %v4103 = vld [vmem:[%s9 + $0x30] sm:$0xff]
      %v4104 = vld [vmem:[%s9 + $0x38] sm:$0xff]
      %v4105 = vld [vmem:[%s9 + $0x40] sm:$0xff]
      %v4106 = vld [vmem:[%s9 + $0x48] sm:$0xff]
      %v4107 = vld [vmem:[%s9 + $0x50] sm:$0xff]
      %v4108 = vld [vmem:[%s9 + $0x58] sm:$0xff]
      %v4109 = vld [vmem:[%s9 + $0x60] sm:$0xff]
      %v4110 = vld [vmem:[%s9 + $0x68] sm:$0xff]
      %v4111 = vld [vmem:[%s9 + $0x70] sm:$0xff]
      %v4112 = vld [vmem:[%s9 + $0x78] sm:$0xff]
      %v4113 = vld [vmem:[%s9 + $0x80] sm:$0xff]
      %v4114 = vld [vmem:[%s9 + $0x88] sm:$0xff]
      %v4115 = vld [vmem:[%s9 + $0x90] sm:$0xff]
      %v4116 = vld [vmem:[%s9 + $0x98] sm:$0xff]
      %v4117 = vld [vmem:[%s9 + $0xa0] sm:$0xff]
      %v4118 = vld [vmem:[%s9 + $0xa8] sm:$0xff]
      %v4119 = vld [vmem:[%s9 + $0xb0] sm:$0xff]
      %v4120 = vld [vmem:[%s9 + $0xb8] sm:$0xff]
      %v4121 = vld [vmem:[%s9 + $0xc0] sm:$0xff]
      %v4122 = vld [vmem:[%s9 + $0xc8] sm:$0xff]
      %v4123 = vld [vmem:[%s9 + $0xd0] sm:$0xff]
      %v4124 = vld [vmem:[%s9 + $0xd8] sm:$0xff]
      %v4125 = vld [vmem:[%s9 + $0xe0] sm:$0xff]
      %v4126 = vld [vmem:[%s9 + $0xe8] sm:$0xff]
      %v4127 = vld [vmem:[%s9 + $0xf0] sm:$0xff]
      %v4128 = vld [vmem:[%s9 + $0xf8] sm:$0xff]
      %v4129 = vld [vmem:[#allocation4] sm:$0xfe]
      %v4130 = vld [vmem:[#allocation4 + $0x8] sm:$0xfe]
      %v4131 = vld [vmem:[#allocation4 + $0x20] sm:$0x1]
      %v4132 = vld [vmem:[#allocation4 + $0x28] sm:$0x1]
      %v4133 = vpack.c.bf16 %v4093, %v4129
      %v4134 = vpack.c.bf16 %v4094, %v4130
      %v4135 = vpack.c.bf16 %v4131, %v4131
      %v4136 = vpack.c.bf16 %v4132, %v4132
      %s4137 = scalar_lea.vmem %s9, 256
      %v4138 = vld [vmem:[%s4137] sm:$0xff]
      %v4139 = vld [vmem:[%s4137 + $0x8] sm:$0xff]
      %v4140 = vld [vmem:[%s4137 + $0x10] sm:$0xff]
      %v4141 = vld [vmem:[%s4137 + $0x18] sm:$0xff]
      %v4142 = vld [vmem:[%s4137 + $0x20] sm:$0xff]
      %v4143 = vld [vmem:[%s4137 + $0x28] sm:$0xff]
      %v4144 = vld [vmem:[%s4137 + $0x30] sm:$0xff]
      %v4145 = vld [vmem:[%s4137 + $0x38] sm:$0xff]
      %v4146 = vld [vmem:[%s4137 + $0x40] sm:$0xff]
      %v4147 = vld [vmem:[%s4137 + $0x48] sm:$0xff]
      %v4148 = vld [vmem:[%s4137 + $0x50] sm:$0xff]
      %v4149 = vld [vmem:[%s4137 + $0x58] sm:$0xff]
      %v4150 = vld [vmem:[%s4137 + $0x60] sm:$0xff]
      %v4151 = vld [vmem:[%s4137 + $0x68] sm:$0xff]
      %v4152 = vld [vmem:[%s4137 + $0x70] sm:$0xff]
      %v4153 = vld [vmem:[%s4137 + $0x78] sm:$0xff]
      %v4154 = vld [vmem:[%s4137 + $0x80] sm:$0xff]
      %v4155 = vld [vmem:[%s4137 + $0x88] sm:$0xff]
      %v4156 = vld [vmem:[%s4137 + $0x90] sm:$0xff]
      %v4157 = vld [vmem:[%s4137 + $0x98] sm:$0xff]
      %v4158 = vld [vmem:[%s4137 + $0xa0] sm:$0xff]
      %v4159 = vld [vmem:[%s4137 + $0xa8] sm:$0xff]
      %v4160 = vld [vmem:[%s4137 + $0xb0] sm:$0xff]
      %v4161 = vld [vmem:[%s4137 + $0xb8] sm:$0xff]
      %v4162 = vld [vmem:[%s4137 + $0xc0] sm:$0xff]
      %v4163 = vld [vmem:[%s4137 + $0xc8] sm:$0xff]
      %v4164 = vld [vmem:[%s4137 + $0xd0] sm:$0xff]
      %v4165 = vld [vmem:[%s4137 + $0xd8] sm:$0xff]
      %v4166 = vld [vmem:[%s4137 + $0xe0] sm:$0xff]
      %v4167 = vld [vmem:[%s4137 + $0xe8] sm:$0xff]
      %v4168 = vld [vmem:[%s4137 + $0xf0] sm:$0xff]
      %v4169 = vld [vmem:[%s4137 + $0xf8] sm:$0xff]
      %vm4170 = vsmask.f32 7424
      %v4172 = vshrl.u32 %v4133, 16
      %v4174 = vshll.u32 %v4133, 16
      %v4176 = vrot.slane %v4174, 1
      %v4177 = vor.u32 %v4172, %v4176
      %v4179 = vshll.u32 %v4135, 16
      %v4181 = vrot.slane %v4179, 1
      %v4182 = vsel %vm4170, %v4177, %v4181
      %v4184 = vshrl.u32 %v4134, 16
      %v4186 = vshll.u32 %v4134, 16
      %v4188 = vrot.slane %v4186, 1
      %v4189 = vor.u32 %v4184, %v4188
      %v4191 = vshll.u32 %v4136, 16
      %v4193 = vrot.slane %v4191, 1
      %v4194 = vsel %vm4170, %v4189, %v4193
      %v4229 = vunpack.c.l.b16 %v4138
      %v4230 = vunpack.c.h.b16 %v4138
      %v4231 = vunpack.c.l.b16 %v4139
      %v4232 = vunpack.c.h.b16 %v4139
      %v4233 = vunpack.c.l.b16 %v4140
      %v4234 = vunpack.c.h.b16 %v4140
      %v4235 = vunpack.c.l.b16 %v4141
      %v4236 = vunpack.c.h.b16 %v4141
      %v4237 = vunpack.c.l.b16 %v4142
      %v4238 = vunpack.c.h.b16 %v4142
      %v4239 = vunpack.c.l.b16 %v4143
      %v4240 = vunpack.c.h.b16 %v4143
      %v4241 = vunpack.c.l.b16 %v4144
      %v4242 = vunpack.c.h.b16 %v4144
      %v4243 = vunpack.c.l.b16 %v4145
      %v4244 = vunpack.c.h.b16 %v4145
      %v4245 = vunpack.c.l.b16 %v4146
      %v4246 = vunpack.c.h.b16 %v4146
      %v4247 = vunpack.c.l.b16 %v4147
      %v4248 = vunpack.c.h.b16 %v4147
      %v4249 = vunpack.c.l.b16 %v4148
      %v4250 = vunpack.c.h.b16 %v4148
      %v4251 = vunpack.c.l.b16 %v4149
      %v4252 = vunpack.c.h.b16 %v4149
      %v4253 = vunpack.c.l.b16 %v4150
      %v4254 = vunpack.c.h.b16 %v4150
      %v4255 = vunpack.c.l.b16 %v4151
      %v4256 = vunpack.c.h.b16 %v4151
      %v4257 = vunpack.c.l.b16 %v4152
      %v4258 = vunpack.c.h.b16 %v4152
      %v4259 = vunpack.c.l.b16 %v4153
      %v4260 = vunpack.c.h.b16 %v4153
      %v4261 = vunpack.c.l.b16 %v4154
      %v4262 = vunpack.c.h.b16 %v4154
      %v4263 = vunpack.c.l.b16 %v4155
      %v4264 = vunpack.c.h.b16 %v4155
      %v4265 = vunpack.c.l.b16 %v4156
      %v4266 = vunpack.c.h.b16 %v4156
      %v4267 = vunpack.c.l.b16 %v4157
      %v4268 = vunpack.c.h.b16 %v4157
      %v4269 = vunpack.c.l.b16 %v4158
      %v4270 = vunpack.c.h.b16 %v4158
      %v4271 = vunpack.c.l.b16 %v4159
      %v4272 = vunpack.c.h.b16 %v4159
      %v4273 = vunpack.c.l.b16 %v4160
      %v4274 = vunpack.c.h.b16 %v4160
      %v4275 = vunpack.c.l.b16 %v4161
      %v4276 = vunpack.c.h.b16 %v4161
      %v4277 = vunpack.c.l.b16 %v4162
      %v4278 = vunpack.c.h.b16 %v4162
      %v4279 = vunpack.c.l.b16 %v4163
      %v4280 = vunpack.c.h.b16 %v4163
      %v4281 = vunpack.c.l.b16 %v4164
      %v4282 = vunpack.c.h.b16 %v4164
      %v4283 = vunpack.c.l.b16 %v4165
      %v4284 = vunpack.c.h.b16 %v4165
      %v4285 = vunpack.c.l.b16 %v4166
      %v4286 = vunpack.c.h.b16 %v4166
      %v4287 = vunpack.c.l.b16 %v4167
      %v4288 = vunpack.c.h.b16 %v4167
      %v4289 = vunpack.c.l.b16 %v4168
      %v4290 = vunpack.c.h.b16 %v4168
      %v4291 = vunpack.c.l.b16 %v4169
      %v4292 = vunpack.c.h.b16 %v4169
      %v4293 = vpack.c.b16 %v4231, %v4229
      %v4294 = vpack.c.b16 %v4232, %v4230
      %v4295 = vpack.c.b16 %v4235, %v4233
      %v4296 = vpack.c.b16 %v4236, %v4234
      %v4297 = vpack.c.b16 %v4239, %v4237
      %v4298 = vpack.c.b16 %v4240, %v4238
      %v4299 = vpack.c.b16 %v4243, %v4241
      %v4300 = vpack.c.b16 %v4244, %v4242
      %v4301 = vpack.c.b16 %v4247, %v4245
      %v4302 = vpack.c.b16 %v4248, %v4246
      %v4303 = vpack.c.b16 %v4251, %v4249
      %v4304 = vpack.c.b16 %v4252, %v4250
      %v4305 = vpack.c.b16 %v4255, %v4253
      %v4306 = vpack.c.b16 %v4256, %v4254
      %v4307 = vpack.c.b16 %v4259, %v4257
      %v4308 = vpack.c.b16 %v4260, %v4258
      %v4309 = vpack.c.b16 %v4263, %v4261
      %v4310 = vpack.c.b16 %v4264, %v4262
      %v4311 = vpack.c.b16 %v4267, %v4265
      %v4312 = vpack.c.b16 %v4268, %v4266
      %v4313 = vpack.c.b16 %v4271, %v4269
      %v4314 = vpack.c.b16 %v4272, %v4270
      %v4315 = vpack.c.b16 %v4275, %v4273
      %v4316 = vpack.c.b16 %v4276, %v4274
      %v4317 = vpack.c.b16 %v4279, %v4277
      %v4318 = vpack.c.b16 %v4280, %v4278
      %v4319 = vpack.c.b16 %v4283, %v4281
      %v4320 = vpack.c.b16 %v4284, %v4282
      %v4321 = vpack.c.b16 %v4287, %v4285
      %v4322 = vpack.c.b16 %v4288, %v4286
      %v4323 = vpack.c.b16 %v4291, %v4289
      %v4324 = vpack.c.b16 %v4292, %v4290
      %4357 = vmatprep.subr.bf16.mxu0 %v4294
      %4358 = vmatpush1.bf16.msra.mxu0 %v4293
      %4359 = vmatprep.subr.bf16.mxu0 %v4296
      %4360 = vmatpush1.bf16.msra.mxu0 %v4295
      %4361 = vmatprep.subr.bf16.mxu0 %v4298
      %4362 = vmatpush1.bf16.msra.mxu0 %v4297
      %4363 = vmatprep.subr.bf16.mxu0 %v4300
      %4364 = vmatpush1.bf16.msra.mxu0 %v4299
      %4365 = vmatprep.subr.bf16.mxu0 %v4302
      %4366 = vmatpush1.bf16.msra.mxu0 %v4301
      %4367 = vmatprep.subr.bf16.mxu0 %v4304
      %4368 = vmatpush1.bf16.msra.mxu0 %v4303
      %4369 = vmatprep.subr.bf16.mxu0 %v4306
      %4370 = vmatpush1.bf16.msra.mxu0 %v4305
      %4371 = vmatprep.subr.bf16.mxu0 %v4308
      %4372 = vmatpush1.bf16.msra.mxu0 %v4307
      %4373 = vmatprep.subr.bf16.mxu0 %v4310
      %4374 = vmatpush1.bf16.msra.mxu0 %v4309
      %4375 = vmatprep.subr.bf16.mxu0 %v4312
      %4376 = vmatpush1.bf16.msra.mxu0 %v4311
      %4377 = vmatprep.subr.bf16.mxu0 %v4314
      %4378 = vmatpush1.bf16.msra.mxu0 %v4313
      %4379 = vmatprep.subr.bf16.mxu0 %v4316
      %4380 = vmatpush1.bf16.msra.mxu0 %v4315
      %4381 = vmatprep.subr.bf16.mxu0 %v4318
      %4382 = vmatpush1.bf16.msra.mxu0 %v4317
      %4383 = vmatprep.subr.bf16.mxu0 %v4320
      %4384 = vmatpush1.bf16.msra.mxu0 %v4319
      %4385 = vmatprep.subr.bf16.mxu0 %v4322
      %4386 = vmatpush1.bf16.msra.mxu0 %v4321
      %4387 = vmatprep.subr.bf16.mxu0 %v4324
      %4388 = vmatpush1.bf16.msra.mxu0 %v4323
      %4389 = vmatprep.mubr.bf16.mxu0 %v4194
      %4390 = vmatmul.mubr.bf16.gmra.mrb[0].mxu0 %v4182
      %v4391 = vpop.f32.mrb[0].mxu0
      %v4392 = vadd.f32 0.0, %v4391
      %v4393 = vpop.f32.mrb[0].mxu0
      %v4394 = vadd.f32 0.0, %v4393
      %v4395 = vpop.f32.mrb[0].mxu0
      %v4396 = vadd.f32 0.0, %v4395
      %v4397 = vpop.f32.mrb[0].mxu0
      %v4398 = vadd.f32 0.0, %v4397
      %4399 = vdwg.mxu0
      %v4432 = vunpack.c.l.b16 %v4097
      %v4433 = vunpack.c.h.b16 %v4097
      %v4434 = vunpack.c.l.b16 %v4098
      %v4435 = vunpack.c.h.b16 %v4098
      %v4436 = vunpack.c.l.b16 %v4099
      %v4437 = vunpack.c.h.b16 %v4099
      %v4438 = vunpack.c.l.b16 %v4100
      %v4439 = vunpack.c.h.b16 %v4100
      %v4440 = vunpack.c.l.b16 %v4101
      %v4441 = vunpack.c.h.b16 %v4101
      %v4442 = vunpack.c.l.b16 %v4102
      %v4443 = vunpack.c.h.b16 %v4102
      %v4444 = vunpack.c.l.b16 %v4103
      %v4445 = vunpack.c.h.b16 %v4103
      %v4446 = vunpack.c.l.b16 %v4104
      %v4447 = vunpack.c.h.b16 %v4104
      %v4448 = vunpack.c.l.b16 %v4105
      %v4449 = vunpack.c.h.b16 %v4105
      %v4450 = vunpack.c.l.b16 %v4106
      %v4451 = vunpack.c.h.b16 %v4106
      %v4452 = vunpack.c.l.b16 %v4107
      %v4453 = vunpack.c.h.b16 %v4107
      %v4454 = vunpack.c.l.b16 %v4108
      %v4455 = vunpack.c.h.b16 %v4108
      %v4456 = vunpack.c.l.b16 %v4109
      %v4457 = vunpack.c.h.b16 %v4109
      %v4458 = vunpack.c.l.b16 %v4110
      %v4459 = vunpack.c.h.b16 %v4110
      %v4460 = vunpack.c.l.b16 %v4111
      %v4461 = vunpack.c.h.b16 %v4111
      %v4462 = vunpack.c.l.b16 %v4112
      %v4463 = vunpack.c.h.b16 %v4112
      %v4464 = vunpack.c.l.b16 %v4113
      %v4465 = vunpack.c.h.b16 %v4113
      %v4466 = vunpack.c.l.b16 %v4114
      %v4467 = vunpack.c.h.b16 %v4114
      %v4468 = vunpack.c.l.b16 %v4115
      %v4469 = vunpack.c.h.b16 %v4115
      %v4470 = vunpack.c.l.b16 %v4116
      %v4471 = vunpack.c.h.b16 %v4116
      %v4472 = vunpack.c.l.b16 %v4117
      %v4473 = vunpack.c.h.b16 %v4117
      %v4474 = vunpack.c.l.b16 %v4118
      %v4475 = vunpack.c.h.b16 %v4118
      %v4476 = vunpack.c.l.b16 %v4119
      %v4477 = vunpack.c.h.b16 %v4119
      %v4478 = vunpack.c.l.b16 %v4120
      %v4479 = vunpack.c.h.b16 %v4120
      %v4480 = vunpack.c.l.b16 %v4121
      %v4481 = vunpack.c.h.b16 %v4121
      %v4482 = vunpack.c.l.b16 %v4122
      %v4483 = vunpack.c.h.b16 %v4122
      %v4484 = vunpack.c.l.b16 %v4123
      %v4485 = vunpack.c.h.b16 %v4123
      %v4486 = vunpack.c.l.b16 %v4124
      %v4487 = vunpack.c.h.b16 %v4124
      %v4488 = vunpack.c.l.b16 %v4125
      %v4489 = vunpack.c.h.b16 %v4125
      %v4490 = vunpack.c.l.b16 %v4126
      %v4491 = vunpack.c.h.b16 %v4126
      %v4492 = vunpack.c.l.b16 %v4127
      %v4493 = vunpack.c.h.b16 %v4127
      %v4494 = vunpack.c.l.b16 %v4128
      %v4495 = vunpack.c.h.b16 %v4128
      %v4496 = vpack.c.b16 %v4434, %v4432
      %v4497 = vpack.c.b16 %v4435, %v4433
      %v4498 = vpack.c.b16 %v4438, %v4436
      %v4499 = vpack.c.b16 %v4439, %v4437
      %v4500 = vpack.c.b16 %v4442, %v4440
      %v4501 = vpack.c.b16 %v4443, %v4441
      %v4502 = vpack.c.b16 %v4446, %v4444
      %v4503 = vpack.c.b16 %v4447, %v4445
      %v4504 = vpack.c.b16 %v4450, %v4448
      %v4505 = vpack.c.b16 %v4451, %v4449
      %v4506 = vpack.c.b16 %v4454, %v4452
      %v4507 = vpack.c.b16 %v4455, %v4453
      %v4508 = vpack.c.b16 %v4458, %v4456
      %v4509 = vpack.c.b16 %v4459, %v4457
      %v4510 = vpack.c.b16 %v4462, %v4460
      %v4511 = vpack.c.b16 %v4463, %v4461
      %v4512 = vpack.c.b16 %v4466, %v4464
      %v4513 = vpack.c.b16 %v4467, %v4465
      %v4514 = vpack.c.b16 %v4470, %v4468
      %v4515 = vpack.c.b16 %v4471, %v4469
      %v4516 = vpack.c.b16 %v4474, %v4472
      %v4517 = vpack.c.b16 %v4475, %v4473
      %v4518 = vpack.c.b16 %v4478, %v4476
      %v4519 = vpack.c.b16 %v4479, %v4477
      %v4520 = vpack.c.b16 %v4482, %v4480
      %v4521 = vpack.c.b16 %v4483, %v4481
      %v4522 = vpack.c.b16 %v4486, %v4484
      %v4523 = vpack.c.b16 %v4487, %v4485
      %v4524 = vpack.c.b16 %v4490, %v4488
      %v4525 = vpack.c.b16 %v4491, %v4489
      %v4526 = vpack.c.b16 %v4494, %v4492
      %v4527 = vpack.c.b16 %v4495, %v4493
      %4560 = vmatprep.subr.bf16.mxu0 %v4497
      %4561 = vmatpush1.bf16.msra.mxu0 %v4496
      %4562 = vmatprep.subr.bf16.mxu0 %v4499
      %4563 = vmatpush1.bf16.msra.mxu0 %v4498
      %4564 = vmatprep.subr.bf16.mxu0 %v4501
      %4565 = vmatpush1.bf16.msra.mxu0 %v4500
      %4566 = vmatprep.subr.bf16.mxu0 %v4503
      %4567 = vmatpush1.bf16.msra.mxu0 %v4502
      %4568 = vmatprep.subr.bf16.mxu0 %v4505
      %4569 = vmatpush1.bf16.msra.mxu0 %v4504
      %4570 = vmatprep.subr.bf16.mxu0 %v4507
      %4571 = vmatpush1.bf16.msra.mxu0 %v4506
      %4572 = vmatprep.subr.bf16.mxu0 %v4509
      %4573 = vmatpush1.bf16.msra.mxu0 %v4508
      %4574 = vmatprep.subr.bf16.mxu0 %v4511
      %4575 = vmatpush1.bf16.msra.mxu0 %v4510
      %4576 = vmatprep.subr.bf16.mxu0 %v4513
      %4577 = vmatpush1.bf16.msra.mxu0 %v4512
      %4578 = vmatprep.subr.bf16.mxu0 %v4515
      %4579 = vmatpush1.bf16.msra.mxu0 %v4514
      %4580 = vmatprep.subr.bf16.mxu0 %v4517
      %4581 = vmatpush1.bf16.msra.mxu0 %v4516
      %4582 = vmatprep.subr.bf16.mxu0 %v4519
      %4583 = vmatpush1.bf16.msra.mxu0 %v4518
      %4584 = vmatprep.subr.bf16.mxu0 %v4521
      %4585 = vmatpush1.bf16.msra.mxu0 %v4520
      %4586 = vmatprep.subr.bf16.mxu0 %v4523
      %4587 = vmatpush1.bf16.msra.mxu0 %v4522
      %4588 = vmatprep.subr.bf16.mxu0 %v4525
      %4589 = vmatpush1.bf16.msra.mxu0 %v4524
      %4590 = vmatprep.subr.bf16.mxu0 %v4527
      %4591 = vmatpush1.bf16.msra.mxu0 %v4526
      %4592 = vmatprep.mubr.bf16.mxu0 %v4096
      %4593 = vmatmul.mubr.bf16.gmra.mrb[0].mxu0 %v4095
      %v4594 = vpop.f32.mrb[0].mxu0
      %v4595 = vadd.f32 %v4392, %v4594
      %v4596 = vpop.f32.mrb[0].mxu0
      %v4597 = vadd.f32 %v4394, %v4596
      %v4598 = vpop.f32.mrb[0].mxu0
      %v4599 = vadd.f32 %v4396, %v4598
      %v4600 = vpop.f32.mrb[0].mxu0
      %v4601 = vadd.f32 %v4398, %v4600
      %4602 = vdwg.mxu0
      %v4603 = vld [vmem:[#allocation4] sm:$0xfc]
      %v4604 = vld [vmem:[#allocation4 + $0x8] sm:$0xfc]
      %v4605 = vld [vmem:[#allocation4 + $0x20] sm:$0x3]
      %v4606 = vld [vmem:[#allocation4 + $0x28] sm:$0x3]
      %v4607 = vpack.c.bf16 %v4093, %v4603
      %v4608 = vpack.c.bf16 %v4094, %v4604
      %v4609 = vpack.c.bf16 %v4605, %v4605
      %v4610 = vpack.c.bf16 %v4606, %v4606
      %s4611 = scalar_lea.vmem %s9, 512
      %v4612 = vld [vmem:[%s4611] sm:$0xff]
      %v4613 = vld [vmem:[%s4611 + $0x8] sm:$0xff]
      %v4614 = vld [vmem:[%s4611 + $0x10] sm:$0xff]
      %v4615 = vld [vmem:[%s4611 + $0x18] sm:$0xff]
      %v4616 = vld [vmem:[%s4611 + $0x20] sm:$0xff]
      %v4617 = vld [vmem:[%s4611 + $0x28] sm:$0xff]
      %v4618 = vld [vmem:[%s4611 + $0x30] sm:$0xff]
      %v4619 = vld [vmem:[%s4611 + $0x38] sm:$0xff]
      %v4620 = vld [vmem:[%s4611 + $0x40] sm:$0xff]
      %v4621 = vld [vmem:[%s4611 + $0x48] sm:$0xff]
      %v4622 = vld [vmem:[%s4611 + $0x50] sm:$0xff]
      %v4623 = vld [vmem:[%s4611 + $0x58] sm:$0xff]
      %v4624 = vld [vmem:[%s4611 + $0x60] sm:$0xff]
      %v4625 = vld [vmem:[%s4611 + $0x68] sm:$0xff]
      %v4626 = vld [vmem:[%s4611 + $0x70] sm:$0xff]
      %v4627 = vld [vmem:[%s4611 + $0x78] sm:$0xff]
      %v4628 = vld [vmem:[%s4611 + $0x80] sm:$0xff]
      %v4629 = vld [vmem:[%s4611 + $0x88] sm:$0xff]
      %v4630 = vld [vmem:[%s4611 + $0x90] sm:$0xff]
      %v4631 = vld [vmem:[%s4611 + $0x98] sm:$0xff]
      %v4632 = vld [vmem:[%s4611 + $0xa0] sm:$0xff]
      %v4633 = vld [vmem:[%s4611 + $0xa8] sm:$0xff]
      %v4634 = vld [vmem:[%s4611 + $0xb0] sm:$0xff]
      %v4635 = vld [vmem:[%s4611 + $0xb8] sm:$0xff]
      %v4636 = vld [vmem:[%s4611 + $0xc0] sm:$0xff]
      %v4637 = vld [vmem:[%s4611 + $0xc8] sm:$0xff]
      %v4638 = vld [vmem:[%s4611 + $0xd0] sm:$0xff]
      %v4639 = vld [vmem:[%s4611 + $0xd8] sm:$0xff]
      %v4640 = vld [vmem:[%s4611 + $0xe0] sm:$0xff]
      %v4641 = vld [vmem:[%s4611 + $0xe8] sm:$0xff]
      %v4642 = vld [vmem:[%s4611 + $0xf0] sm:$0xff]
      %v4643 = vld [vmem:[%s4611 + $0xf8] sm:$0xff]
      %vm4648 = vcmask 1046528
      %v4649 = vrot.slane %v4607, 1
      %v4650 = vrot.slane %v4609, 1
      %v4651 = vsel %vm4648, %v4649, %v4650
      %v4652 = vrot.slane %v4608, 1
      %v4653 = vrot.slane %v4610, 1
      %v4654 = vsel %vm4648, %v4652, %v4653
      %v4689 = vunpack.c.l.b16 %v4612
      %v4690 = vunpack.c.h.b16 %v4612
      %v4691 = vunpack.c.l.b16 %v4613
      %v4692 = vunpack.c.h.b16 %v4613
      %v4693 = vunpack.c.l.b16 %v4614
      %v4694 = vunpack.c.h.b16 %v4614
      %v4695 = vunpack.c.l.b16 %v4615
      %v4696 = vunpack.c.h.b16 %v4615
      %v4697 = vunpack.c.l.b16 %v4616
      %v4698 = vunpack.c.h.b16 %v4616
      %v4699 = vunpack.c.l.b16 %v4617
      %v4700 = vunpack.c.h.b16 %v4617
      %v4701 = vunpack.c.l.b16 %v4618
      %v4702 = vunpack.c.h.b16 %v4618
      %v4703 = vunpack.c.l.b16 %v4619
      %v4704 = vunpack.c.h.b16 %v4619
      %v4705 = vunpack.c.l.b16 %v4620
      %v4706 = vunpack.c.h.b16 %v4620
      %v4707 = vunpack.c.l.b16 %v4621
      %v4708 = vunpack.c.h.b16 %v4621
      %v4709 = vunpack.c.l.b16 %v4622
      %v4710 = vunpack.c.h.b16 %v4622
      %v4711 = vunpack.c.l.b16 %v4623
      %v4712 = vunpack.c.h.b16 %v4623
      %v4713 = vunpack.c.l.b16 %v4624
      %v4714 = vunpack.c.h.b16 %v4624
      %v4715 = vunpack.c.l.b16 %v4625
      %v4716 = vunpack.c.h.b16 %v4625
      %v4717 = vunpack.c.l.b16 %v4626
      %v4718 = vunpack.c.h.b16 %v4626
      %v4719 = vunpack.c.l.b16 %v4627
      %v4720 = vunpack.c.h.b16 %v4627
      %v4721 = vunpack.c.l.b16 %v4628
      %v4722 = vunpack.c.h.b16 %v4628
      %v4723 = vunpack.c.l.b16 %v4629
      %v4724 = vunpack.c.h.b16 %v4629
      %v4725 = vunpack.c.l.b16 %v4630
      %v4726 = vunpack.c.h.b16 %v4630
      %v4727 = vunpack.c.l.b16 %v4631
      %v4728 = vunpack.c.h.b16 %v4631
      %v4729 = vunpack.c.l.b16 %v4632
      %v4730 = vunpack.c.h.b16 %v4632
      %v4731 = vunpack.c.l.b16 %v4633
      %v4732 = vunpack.c.h.b16 %v4633
      %v4733 = vunpack.c.l.b16 %v4634
      %v4734 = vunpack.c.h.b16 %v4634
      %v4735 = vunpack.c.l.b16 %v4635
      %v4736 = vunpack.c.h.b16 %v4635
      %v4737 = vunpack.c.l.b16 %v4636
      %v4738 = vunpack.c.h.b16 %v4636
      %v4739 = vunpack.c.l.b16 %v4637
      %v4740 = vunpack.c.h.b16 %v4637
      %v4741 = vunpack.c.l.b16 %v4638
      %v4742 = vunpack.c.h.b16 %v4638
      %v4743 = vunpack.c.l.b16 %v4639
      %v4744 = vunpack.c.h.b16 %v4639
      %v4745 = vunpack.c.l.b16 %v4640
      %v4746 = vunpack.c.h.b16 %v4640
      %v4747 = vunpack.c.l.b16 %v4641
      %v4748 = vunpack.c.h.b16 %v4641
      %v4749 = vunpack.c.l.b16 %v4642
      %v4750 = vunpack.c.h.b16 %v4642
      %v4751 = vunpack.c.l.b16 %v4643
      %v4752 = vunpack.c.h.b16 %v4643
      %v4753 = vpack.c.b16 %v4691, %v4689
      %v4754 = vpack.c.b16 %v4692, %v4690
      %v4755 = vpack.c.b16 %v4695, %v4693
      %v4756 = vpack.c.b16 %v4696, %v4694
      %v4757 = vpack.c.b16 %v4699, %v4697
      %v4758 = vpack.c.b16 %v4700, %v4698
      %v4759 = vpack.c.b16 %v4703, %v4701
      %v4760 = vpack.c.b16 %v4704, %v4702
      %v4761 = vpack.c.b16 %v4707, %v4705
      %v4762 = vpack.c.b16 %v4708, %v4706
      %v4763 = vpack.c.b16 %v4711, %v4709
      %v4764 = vpack.c.b16 %v4712, %v4710
      %v4765 = vpack.c.b16 %v4715, %v4713
      %v4766 = vpack.c.b16 %v4716, %v4714
      %v4767 = vpack.c.b16 %v4719, %v4717
      %v4768 = vpack.c.b16 %v4720, %v4718
      %v4769 = vpack.c.b16 %v4723, %v4721
      %v4770 = vpack.c.b16 %v4724, %v4722
      %v4771 = vpack.c.b16 %v4727, %v4725
      %v4772 = vpack.c.b16 %v4728, %v4726
      %v4773 = vpack.c.b16 %v4731, %v4729
      %v4774 = vpack.c.b16 %v4732, %v4730
      %v4775 = vpack.c.b16 %v4735, %v4733
      %v4776 = vpack.c.b16 %v4736, %v4734
      %v4777 = vpack.c.b16 %v4739, %v4737
      %v4778 = vpack.c.b16 %v4740, %v4738
      %v4779 = vpack.c.b16 %v4743, %v4741
      %v4780 = vpack.c.b16 %v4744, %v4742
      %v4781 = vpack.c.b16 %v4747, %v4745
      %v4782 = vpack.c.b16 %v4748, %v4746
      %v4783 = vpack.c.b16 %v4751, %v4749
      %v4784 = vpack.c.b16 %v4752, %v4750
      %4817 = vmatprep.subr.bf16.mxu0 %v4754
      %4818 = vmatpush1.bf16.msra.mxu0 %v4753
      %4819 = vmatprep.subr.bf16.mxu0 %v4756
      %4820 = vmatpush1.bf16.msra.mxu0 %v4755
      %4821 = vmatprep.subr.bf16.mxu0 %v4758
      %4822 = vmatpush1.bf16.msra.mxu0 %v4757
      %4823 = vmatprep.subr.bf16.mxu0 %v4760
      %4824 = vmatpush1.bf16.msra.mxu0 %v4759
      %4825 = vmatprep.subr.bf16.mxu0 %v4762
      %4826 = vmatpush1.bf16.msra.mxu0 %v4761
      %4827 = vmatprep.subr.bf16.mxu0 %v4764
      %4828 = vmatpush1.bf16.msra.mxu0 %v4763
      %4829 = vmatprep.subr.bf16.mxu0 %v4766
      %4830 = vmatpush1.bf16.msra.mxu0 %v4765
      %4831 = vmatprep.subr.bf16.mxu0 %v4768
      %4832 = vmatpush1.bf16.msra.mxu0 %v4767
      %4833 = vmatprep.subr.bf16.mxu0 %v4770
      %4834 = vmatpush1.bf16.msra.mxu0 %v4769
      %4835 = vmatprep.subr.bf16.mxu0 %v4772
      %4836 = vmatpush1.bf16.msra.mxu0 %v4771
      %4837 = vmatprep.subr.bf16.mxu0 %v4774
      %4838 = vmatpush1.bf16.msra.mxu0 %v4773
      %4839 = vmatprep.subr.bf16.mxu0 %v4776
      %4840 = vmatpush1.bf16.msra.mxu0 %v4775
      %4841 = vmatprep.subr.bf16.mxu0 %v4778
      %4842 = vmatpush1.bf16.msra.mxu0 %v4777
      %4843 = vmatprep.subr.bf16.mxu0 %v4780
      %4844 = vmatpush1.bf16.msra.mxu0 %v4779
      %4845 = vmatprep.subr.bf16.mxu0 %v4782
      %4846 = vmatpush1.bf16.msra.mxu0 %v4781
      %4847 = vmatprep.subr.bf16.mxu0 %v4784
      %4848 = vmatpush1.bf16.msra.mxu0 %v4783
      %4849 = vmatprep.mubr.bf16.mxu0 %v4654
      %4850 = vmatmul.mubr.bf16.gmra.mrb[0].mxu0 %v4651
      %v4851 = vpop.f32.mrb[0].mxu0
      %v4852 = vadd.f32 0.0, %v4851
      %v4853 = vpop.f32.mrb[0].mxu0
      %v4854 = vadd.f32 0.0, %v4853
      %v4855 = vpop.f32.mrb[0].mxu0
      %v4856 = vadd.f32 0.0, %v4855
      %v4857 = vpop.f32.mrb[0].mxu0
      %v4858 = vadd.f32 0.0, %v4857
      %4859 = vdwg.mxu0
      %v4860 = vadd.f32 %v4595, %v4852
      %v4861 = vadd.f32 %v4597, %v4854
      %v4862 = vadd.f32 %v4599, %v4856
      %v4863 = vadd.f32 %v4601, %v4858
      %v4864 = vld [vmem:[#allocation4] sm:$0xf8]
      %v4865 = vld [vmem:[#allocation4 + $0x8] sm:$0xf8]
      %v4866 = vld [vmem:[#allocation4 + $0x20] sm:$0x7]
      %v4867 = vld [vmem:[#allocation4 + $0x28] sm:$0x7]
      %v4868 = vpack.c.bf16 %v4093, %v4864
      %v4869 = vpack.c.bf16 %v4094, %v4865
      %v4870 = vpack.c.bf16 %v4866, %v4866
      %v4871 = vpack.c.bf16 %v4867, %v4867
      %s4872 = scalar_lea.vmem %s9, 768
      %v4873 = vld [vmem:[%s4872] sm:$0xff]
      %v4874 = vld [vmem:[%s4872 + $0x8] sm:$0xff]
      %v4875 = vld [vmem:[%s4872 + $0x10] sm:$0xff]
      %v4876 = vld [vmem:[%s4872 + $0x18] sm:$0xff]
      %v4877 = vld [vmem:[%s4872 + $0x20] sm:$0xff]
      %v4878 = vld [vmem:[%s4872 + $0x28] sm:$0xff]
      %v4879 = vld [vmem:[%s4872 + $0x30] sm:$0xff]
      %v4880 = vld [vmem:[%s4872 + $0x38] sm:$0xff]
      %v4881 = vld [vmem:[%s4872 + $0x40] sm:$0xff]
      %v4882 = vld [vmem:[%s4872 + $0x48] sm:$0xff]
      %v4883 = vld [vmem:[%s4872 + $0x50] sm:$0xff]
      %v4884 = vld [vmem:[%s4872 + $0x58] sm:$0xff]
      %v4885 = vld [vmem:[%s4872 + $0x60] sm:$0xff]
      %v4886 = vld [vmem:[%s4872 + $0x68] sm:$0xff]
      %v4887 = vld [vmem:[%s4872 + $0x70] sm:$0xff]
      %v4888 = vld [vmem:[%s4872 + $0x78] sm:$0xff]
      %v4889 = vld [vmem:[%s4872 + $0x80] sm:$0xff]
      %v4890 = vld [vmem:[%s4872 + $0x88] sm:$0xff]
      %v4891 = vld [vmem:[%s4872 + $0x90] sm:$0xff]
      %v4892 = vld [vmem:[%s4872 + $0x98] sm:$0xff]
      %v4893 = vld [vmem:[%s4872 + $0xa0] sm:$0xff]
      %v4894 = vld [vmem:[%s4872 + $0xa8] sm:$0xff]
      %v4895 = vld [vmem:[%s4872 + $0xb0] sm:$0xff]
      %v4896 = vld [vmem:[%s4872 + $0xb8] sm:$0xff]
      %v4897 = vld [vmem:[%s4872 + $0xc0] sm:$0xff]
      %v4898 = vld [vmem:[%s4872 + $0xc8] sm:$0xff]
      %v4899 = vld [vmem:[%s4872 + $0xd0] sm:$0xff]
      %v4900 = vld [vmem:[%s4872 + $0xd8] sm:$0xff]
      %v4901 = vld [vmem:[%s4872 + $0xe0] sm:$0xff]
      %v4902 = vld [vmem:[%s4872 + $0xe8] sm:$0xff]
      %v4903 = vld [vmem:[%s4872 + $0xf0] sm:$0xff]
      %v4904 = vld [vmem:[%s4872 + $0xf8] sm:$0xff]
      %vm4905 = vsmask.f32 6400
      %v4907 = vshrl.u32 %v4868, 16
      %v4909 = vrot.slane %v4907, 1
      %v4910 = vshll.u32 %v4868, 16
      %v4912 = vrot.slane %v4910, 2
      %v4913 = vor.u32 %v4909, %v4912
      %v4915 = vshrl.u32 %v4870, 16
      %v4917 = vrot.slane %v4915, 1
      %v4918 = vshll.u32 %v4870, 16
      %v4920 = vrot.slane %v4918, 2
      %v4921 = vor.u32 %v4917, %v4920
      %v4922 = vsel %vm4905, %v4913, %v4921
      %v4924 = vshrl.u32 %v4869, 16
      %v4926 = vrot.slane %v4924, 1
      %v4927 = vshll.u32 %v4869, 16
      %v4929 = vrot.slane %v4927, 2
      %v4930 = vor.u32 %v4926, %v4929
      %v4932 = vshrl.u32 %v4871, 16
      %v4934 = vrot.slane %v4932, 1
      %v4935 = vshll.u32 %v4871, 16
      %v4937 = vrot.slane %v4935, 2
      %v4938 = vor.u32 %v4934, %v4937
      %v4939 = vsel %vm4905, %v4930, %v4938
      %v4974 = vunpack.c.l.b16 %v4873
      %v4975 = vunpack.c.h.b16 %v4873
      %v4976 = vunpack.c.l.b16 %v4874
      %v4977 = vunpack.c.h.b16 %v4874
      %v4978 = vunpack.c.l.b16 %v4875
      %v4979 = vunpack.c.h.b16 %v4875
      %v4980 = vunpack.c.l.b16 %v4876
      %v4981 = vunpack.c.h.b16 %v4876
      %v4982 = vunpack.c.l.b16 %v4877
      %v4983 = vunpack.c.h.b16 %v4877
      %v4984 = vunpack.c.l.b16 %v4878
      %v4985 = vunpack.c.h.b16 %v4878
      %v4986 = vunpack.c.l.b16 %v4879
      %v4987 = vunpack.c.h.b16 %v4879
      %v4988 = vunpack.c.l.b16 %v4880
      %v4989 = vunpack.c.h.b16 %v4880
      %v4990 = vunpack.c.l.b16 %v4881
      %v4991 = vunpack.c.h.b16 %v4881
      %v4992 = vunpack.c.l.b16 %v4882
      %v4993 = vunpack.c.h.b16 %v4882
      %v4994 = vunpack.c.l.b16 %v4883
      %v4995 = vunpack.c.h.b16 %v4883
      %v4996 = vunpack.c.l.b16 %v4884
      %v4997 = vunpack.c.h.b16 %v4884
      %v4998 = vunpack.c.l.b16 %v4885
      %v4999 = vunpack.c.h.b16 %v4885
      %v5000 = vunpack.c.l.b16 %v4886
      %v5001 = vunpack.c.h.b16 %v4886
      %v5002 = vunpack.c.l.b16 %v4887
      %v5003 = vunpack.c.h.b16 %v4887
      %v5004 = vunpack.c.l.b16 %v4888
      %v5005 = vunpack.c.h.b16 %v4888
      %v5006 = vunpack.c.l.b16 %v4889
      %v5007 = vunpack.c.h.b16 %v4889
      %v5008 = vunpack.c.l.b16 %v4890
      %v5009 = vunpack.c.h.b16 %v4890
      %v5010 = vunpack.c.l.b16 %v4891
      %v5011 = vunpack.c.h.b16 %v4891
      %v5012 = vunpack.c.l.b16 %v4892
      %v5013 = vunpack.c.h.b16 %v4892
      %v5014 = vunpack.c.l.b16 %v4893
      %v5015 = vunpack.c.h.b16 %v4893
      %v5016 = vunpack.c.l.b16 %v4894
      %v5017 = vunpack.c.h.b16 %v4894
      %v5018 = vunpack.c.l.b16 %v4895
      %v5019 = vunpack.c.h.b16 %v4895
      %v5020 = vunpack.c.l.b16 %v4896
      %v5021 = vunpack.c.h.b16 %v4896
      %v5022 = vunpack.c.l.b16 %v4897
      %v5023 = vunpack.c.h.b16 %v4897
      %v5024 = vunpack.c.l.b16 %v4898
      %v5025 = vunpack.c.h.b16 %v4898
      %v5026 = vunpack.c.l.b16 %v4899
      %v5027 = vunpack.c.h.b16 %v4899
      %v5028 = vunpack.c.l.b16 %v4900
      %v5029 = vunpack.c.h.b16 %v4900
      %v5030 = vunpack.c.l.b16 %v4901
      %v5031 = vunpack.c.h.b16 %v4901
      %v5032 = vunpack.c.l.b16 %v4902
      %v5033 = vunpack.c.h.b16 %v4902
      %v5034 = vunpack.c.l.b16 %v4903
      %v5035 = vunpack.c.h.b16 %v4903
      %v5036 = vunpack.c.l.b16 %v4904
      %v5037 = vunpack.c.h.b16 %v4904
      %v5038 = vpack.c.b16 %v4976, %v4974
      %v5039 = vpack.c.b16 %v4977, %v4975
      %v5040 = vpack.c.b16 %v4980, %v4978
      %v5041 = vpack.c.b16 %v4981, %v4979
      %v5042 = vpack.c.b16 %v4984, %v4982
      %v5043 = vpack.c.b16 %v4985, %v4983
      %v5044 = vpack.c.b16 %v4988, %v4986
      %v5045 = vpack.c.b16 %v4989, %v4987
      %v5046 = vpack.c.b16 %v4992, %v4990
      %v5047 = vpack.c.b16 %v4993, %v4991
      %v5048 = vpack.c.b16 %v4996, %v4994
      %v5049 = vpack.c.b16 %v4997, %v4995
      %v5050 = vpack.c.b16 %v5000, %v4998
      %v5051 = vpack.c.b16 %v5001, %v4999
      %v5052 = vpack.c.b16 %v5004, %v5002
      %v5053 = vpack.c.b16 %v5005, %v5003
      %v5054 = vpack.c.b16 %v5008, %v5006
      %v5055 = vpack.c.b16 %v5009, %v5007
      %v5056 = vpack.c.b16 %v5012, %v5010
      %v5057 = vpack.c.b16 %v5013, %v5011
      %v5058 = vpack.c.b16 %v5016, %v5014
      %v5059 = vpack.c.b16 %v5017, %v5015
      %v5060 = vpack.c.b16 %v5020, %v5018
      %v5061 = vpack.c.b16 %v5021, %v5019
      %v5062 = vpack.c.b16 %v5024, %v5022
      %v5063 = vpack.c.b16 %v5025, %v5023
      %v5064 = vpack.c.b16 %v5028, %v5026
      %v5065 = vpack.c.b16 %v5029, %v5027
      %v5066 = vpack.c.b16 %v5032, %v5030
      %v5067 = vpack.c.b16 %v5033, %v5031
      %v5068 = vpack.c.b16 %v5036, %v5034
      %v5069 = vpack.c.b16 %v5037, %v5035
      %5102 = vmatprep.subr.bf16.mxu0 %v5039
      %5103 = vmatpush1.bf16.msra.mxu0 %v5038
      %5104 = vmatprep.subr.bf16.mxu0 %v5041
      %5105 = vmatpush1.bf16.msra.mxu0 %v5040
      %5106 = vmatprep.subr.bf16.mxu0 %v5043
      %5107 = vmatpush1.bf16.msra.mxu0 %v5042
      %5108 = vmatprep.subr.bf16.mxu0 %v5045
      %5109 = vmatpush1.bf16.msra.mxu0 %v5044
      %5110 = vmatprep.subr.bf16.mxu0 %v5047
      %5111 = vmatpush1.bf16.msra.mxu0 %v5046
      %5112 = vmatprep.subr.bf16.mxu0 %v5049
      %5113 = vmatpush1.bf16.msra.mxu0 %v5048
      %5114 = vmatprep.subr.bf16.mxu0 %v5051
      %5115 = vmatpush1.bf16.msra.mxu0 %v5050
      %5116 = vmatprep.subr.bf16.mxu0 %v5053
      %5117 = vmatpush1.bf16.msra.mxu0 %v5052
      %5118 = vmatprep.subr.bf16.mxu0 %v5055
      %5119 = vmatpush1.bf16.msra.mxu0 %v5054
      %5120 = vmatprep.subr.bf16.mxu0 %v5057
      %5121 = vmatpush1.bf16.msra.mxu0 %v5056
      %5122 = vmatprep.subr.bf16.mxu0 %v5059
      %5123 = vmatpush1.bf16.msra.mxu0 %v5058
      %5124 = vmatprep.subr.bf16.mxu0 %v5061
      %5125 = vmatpush1.bf16.msra.mxu0 %v5060
      %5126 = vmatprep.subr.bf16.mxu0 %v5063
      %5127 = vmatpush1.bf16.msra.mxu0 %v5062
      %5128 = vmatprep.subr.bf16.mxu0 %v5065
      %5129 = vmatpush1.bf16.msra.mxu0 %v5064
      %5130 = vmatprep.subr.bf16.mxu0 %v5067
      %5131 = vmatpush1.bf16.msra.mxu0 %v5066
      %5132 = vmatprep.subr.bf16.mxu0 %v5069
      %5133 = vmatpush1.bf16.msra.mxu0 %v5068
      %5134 = vmatprep.mubr.bf16.mxu0 %v4939
      %5135 = vmatmul.mubr.bf16.gmra.mrb[0].mxu0 %v4922
      %v5136 = vpop.f32.mrb[0].mxu0
      %v5137 = vadd.f32 0.0, %v5136
      %v5138 = vpop.f32.mrb[0].mxu0
      %v5139 = vadd.f32 0.0, %v5138
      %v5140 = vpop.f32.mrb[0].mxu0
      %v5141 = vadd.f32 0.0, %v5140
      %v5142 = vpop.f32.mrb[0].mxu0
      %v5143 = vadd.f32 0.0, %v5142
      %5144 = vdwg.mxu0
      %v5145 = vadd.f32 %v4860, %v5137
      %v5146 = vadd.f32 %v4861, %v5139
      %v5147 = vadd.f32 %v4862, %v5141
      %v5148 = vadd.f32 %v4863, %v5143
      %s5149 = scalar_lea.vmem %s9, 1024
      %v5150 = vld [vmem:[%s5149] sm:$0xff]
      %v5151 = vld [vmem:[%s5149 + $0x8] sm:$0xff]
      %v5152 = vld [vmem:[%s5149 + $0x10] sm:$0xff]
      %v5153 = vld [vmem:[%s5149 + $0x18] sm:$0xff]
      %v5154 = vld [vmem:[%s5149 + $0x20] sm:$0xff]
      %v5155 = vld [vmem:[%s5149 + $0x28] sm:$0xff]
      %v5156 = vld [vmem:[%s5149 + $0x30] sm:$0xff]
      %v5157 = vld [vmem:[%s5149 + $0x38] sm:$0xff]
      %v5158 = vld [vmem:[%s5149 + $0x40] sm:$0xff]
      %v5159 = vld [vmem:[%s5149 + $0x48] sm:$0xff]
      %v5160 = vld [vmem:[%s5149 + $0x50] sm:$0xff]
      %v5161 = vld [vmem:[%s5149 + $0x58] sm:$0xff]
      %v5162 = vld [vmem:[%s5149 + $0x60] sm:$0xff]
      %v5163 = vld [vmem:[%s5149 + $0x68] sm:$0xff]
      %v5164 = vld [vmem:[%s5149 + $0x70] sm:$0xff]
      %v5165 = vld [vmem:[%s5149 + $0x78] sm:$0xff]
      %v5166 = vld [vmem:[%s5149 + $0x80] sm:$0xff]
      %v5167 = vld [vmem:[%s5149 + $0x88] sm:$0xff]
      %v5168 = vld [vmem:[%s5149 + $0x90] sm:$0xff]
      %v5169 = vld [vmem:[%s5149 + $0x98] sm:$0xff]
      %v5170 = vld [vmem:[%s5149 + $0xa0] sm:$0xff]
      %v5171 = vld [vmem:[%s5149 + $0xa8] sm:$0xff]
      %v5172 = vld [vmem:[%s5149 + $0xb0] sm:$0xff]
      %v5173 = vld [vmem:[%s5149 + $0xb8] sm:$0xff]
      %v5174 = vld [vmem:[%s5149 + $0xc0] sm:$0xff]
      %v5175 = vld [vmem:[%s5149 + $0xc8] sm:$0xff]
      %v5176 = vld [vmem:[%s5149 + $0xd0] sm:$0xff]
      %v5177 = vld [vmem:[%s5149 + $0xd8] sm:$0xff]
      %v5178 = vld [vmem:[%s5149 + $0xe0] sm:$0xff]
      %v5179 = vld [vmem:[%s5149 + $0xe8] sm:$0xff]
      %v5180 = vld [vmem:[%s5149 + $0xf0] sm:$0xff]
      %v5181 = vld [vmem:[%s5149 + $0xf8] sm:$0xff]
      %s5182 = scalar_lea.vmem %s9, 1280
      %v5183 = vld [vmem:[%s5182] sm:$0xff]
      %v5184 = vld [vmem:[%s5182 + $0x8] sm:$0xff]
      %v5185 = vld [vmem:[%s5182 + $0x10] sm:$0xff]
      %v5186 = vld [vmem:[%s5182 + $0x18] sm:$0xff]
      %v5187 = vld [vmem:[%s5182 + $0x20] sm:$0xff]
      %v5188 = vld [vmem:[%s5182 + $0x28] sm:$0xff]
      %v5189 = vld [vmem:[%s5182 + $0x30] sm:$0xff]
      %v5190 = vld [vmem:[%s5182 + $0x38] sm:$0xff]
      %v5191 = vld [vmem:[%s5182 + $0x40] sm:$0xff]
      %v5192 = vld [vmem:[%s5182 + $0x48] sm:$0xff]
      %v5193 = vld [vmem:[%s5182 + $0x50] sm:$0xff]
      %v5194 = vld [vmem:[%s5182 + $0x58] sm:$0xff]
      %v5195 = vld [vmem:[%s5182 + $0x60] sm:$0xff]
      %v5196 = vld [vmem:[%s5182 + $0x68] sm:$0xff]
      %v5197 = vld [vmem:[%s5182 + $0x70] sm:$0xff]
      %v5198 = vld [vmem:[%s5182 + $0x78] sm:$0xff]
      %v5199 = vld [vmem:[%s5182 + $0x80] sm:$0xff]
      %v5200 = vld [vmem:[%s5182 + $0x88] sm:$0xff]
      %v5201 = vld [vmem:[%s5182 + $0x90] sm:$0xff]
      %v5202 = vld [vmem:[%s5182 + $0x98] sm:$0xff]
      %v5203 = vld [vmem:[%s5182 + $0xa0] sm:$0xff]
      %v5204 = vld [vmem:[%s5182 + $0xa8] sm:$0xff]
      %v5205 = vld [vmem:[%s5182 + $0xb0] sm:$0xff]
      %v5206 = vld [vmem:[%s5182 + $0xb8] sm:$0xff]
      %v5207 = vld [vmem:[%s5182 + $0xc0] sm:$0xff]
      %v5208 = vld [vmem:[%s5182 + $0xc8] sm:$0xff]
      %v5209 = vld [vmem:[%s5182 + $0xd0] sm:$0xff]
      %v5210 = vld [vmem:[%s5182 + $0xd8] sm:$0xff]
      %v5211 = vld [vmem:[%s5182 + $0xe0] sm:$0xff]
      %v5212 = vld [vmem:[%s5182 + $0xe8] sm:$0xff]
      %v5213 = vld [vmem:[%s5182 + $0xf0] sm:$0xff]
      %v5214 = vld [vmem:[%s5182 + $0xf8] sm:$0xff]
      %v5247 = vunpack.c.l.b16 %v5183
      %v5248 = vunpack.c.h.b16 %v5183
      %v5249 = vunpack.c.l.b16 %v5184
      %v5250 = vunpack.c.h.b16 %v5184
      %v5251 = vunpack.c.l.b16 %v5185
      %v5252 = vunpack.c.h.b16 %v5185
      %v5253 = vunpack.c.l.b16 %v5186
      %v5254 = vunpack.c.h.b16 %v5186
      %v5255 = vunpack.c.l.b16 %v5187
      %v5256 = vunpack.c.h.b16 %v5187
      %v5257 = vunpack.c.l.b16 %v5188
      %v5258 = vunpack.c.h.b16 %v5188
      %v5259 = vunpack.c.l.b16 %v5189
      %v5260 = vunpack.c.h.b16 %v5189
      %v5261 = vunpack.c.l.b16 %v5190
      %v5262 = vunpack.c.h.b16 %v5190
      %v5263 = vunpack.c.l.b16 %v5191
      %v5264 = vunpack.c.h.b16 %v5191
      %v5265 = vunpack.c.l.b16 %v5192
      %v5266 = vunpack.c.h.b16 %v5192
      %v5267 = vunpack.c.l.b16 %v5193
      %v5268 = vunpack.c.h.b16 %v5193
      %v5269 = vunpack.c.l.b16 %v5194
      %v5270 = vunpack.c.h.b16 %v5194
      %v5271 = vunpack.c.l.b16 %v5195
      %v5272 = vunpack.c.h.b16 %v5195
      %v5273 = vunpack.c.l.b16 %v5196
      %v5274 = vunpack.c.h.b16 %v5196
      %v5275 = vunpack.c.l.b16 %v5197
      %v5276 = vunpack.c.h.b16 %v5197
      %v5277 = vunpack.c.l.b16 %v5198
      %v5278 = vunpack.c.h.b16 %v5198
      %v5279 = vunpack.c.l.b16 %v5199
      %v5280 = vunpack.c.h.b16 %v5199
      %v5281 = vunpack.c.l.b16 %v5200
      %v5282 = vunpack.c.h.b16 %v5200
      %v5283 = vunpack.c.l.b16 %v5201
      %v5284 = vunpack.c.h.b16 %v5201
      %v5285 = vunpack.c.l.b16 %v5202
      %v5286 = vunpack.c.h.b16 %v5202
      %v5287 = vunpack.c.l.b16 %v5203
      %v5288 = vunpack.c.h.b16 %v5203
      %v5289 = vunpack.c.l.b16 %v5204
      %v5290 = vunpack.c.h.b16 %v5204
      %v5291 = vunpack.c.l.b16 %v5205
      %v5292 = vunpack.c.h.b16 %v5205
      %v5293 = vunpack.c.l.b16 %v5206
      %v5294 = vunpack.c.h.b16 %v5206
      %v5295 = vunpack.c.l.b16 %v5207
      %v5296 = vunpack.c.h.b16 %v5207
      %v5297 = vunpack.c.l.b16 %v5208
      %v5298 = vunpack.c.h.b16 %v5208
      %v5299 = vunpack.c.l.b16 %v5209
      %v5300 = vunpack.c.h.b16 %v5209
      %v5301 = vunpack.c.l.b16 %v5210
      %v5302 = vunpack.c.h.b16 %v5210
      %v5303 = vunpack.c.l.b16 %v5211
      %v5304 = vunpack.c.h.b16 %v5211
      %v5305 = vunpack.c.l.b16 %v5212
      %v5306 = vunpack.c.h.b16 %v5212
      %v5307 = vunpack.c.l.b16 %v5213
      %v5308 = vunpack.c.h.b16 %v5213
      %v5309 = vunpack.c.l.b16 %v5214
      %v5310 = vunpack.c.h.b16 %v5214
      %v5311 = vpack.c.b16 %v5249, %v5247
      %v5312 = vpack.c.b16 %v5250, %v5248
      %v5313 = vpack.c.b16 %v5253, %v5251
      %v5314 = vpack.c.b16 %v5254, %v5252
      %v5315 = vpack.c.b16 %v5257, %v5255
      %v5316 = vpack.c.b16 %v5258, %v5256
      %v5317 = vpack.c.b16 %v5261, %v5259
      %v5318 = vpack.c.b16 %v5262, %v5260
      %v5319 = vpack.c.b16 %v5265, %v5263
      %v5320 = vpack.c.b16 %v5266, %v5264
      %v5321 = vpack.c.b16 %v5269, %v5267
      %v5322 = vpack.c.b16 %v5270, %v5268
      %v5323 = vpack.c.b16 %v5273, %v5271
      %v5324 = vpack.c.b16 %v5274, %v5272
      %v5325 = vpack.c.b16 %v5277, %v5275
      %v5326 = vpack.c.b16 %v5278, %v5276
      %v5327 = vpack.c.b16 %v5281, %v5279
      %v5328 = vpack.c.b16 %v5282, %v5280
      %v5329 = vpack.c.b16 %v5285, %v5283
      %v5330 = vpack.c.b16 %v5286, %v5284
      %v5331 = vpack.c.b16 %v5289, %v5287
      %v5332 = vpack.c.b16 %v5290, %v5288
      %v5333 = vpack.c.b16 %v5293, %v5291
      %v5334 = vpack.c.b16 %v5294, %v5292
      %v5335 = vpack.c.b16 %v5297, %v5295
      %v5336 = vpack.c.b16 %v5298, %v5296
      %v5337 = vpack.c.b16 %v5301, %v5299
      %v5338 = vpack.c.b16 %v5302, %v5300
      %v5339 = vpack.c.b16 %v5305, %v5303
      %v5340 = vpack.c.b16 %v5306, %v5304
      %v5341 = vpack.c.b16 %v5309, %v5307
      %v5342 = vpack.c.b16 %v5310, %v5308
      %5375 = vmatprep.subr.bf16.mxu0 %v5312
      %5376 = vmatpush1.bf16.msra.mxu0 %v5311
      %5377 = vmatprep.subr.bf16.mxu0 %v5314
      %5378 = vmatpush1.bf16.msra.mxu0 %v5313
      %5379 = vmatprep.subr.bf16.mxu0 %v5316
      %5380 = vmatpush1.bf16.msra.mxu0 %v5315
      %5381 = vmatprep.subr.bf16.mxu0 %v5318
      %5382 = vmatpush1.bf16.msra.mxu0 %v5317
      %5383 = vmatprep.subr.bf16.mxu0 %v5320
      %5384 = vmatpush1.bf16.msra.mxu0 %v5319
      %5385 = vmatprep.subr.bf16.mxu0 %v5322
      %5386 = vmatpush1.bf16.msra.mxu0 %v5321
      %5387 = vmatprep.subr.bf16.mxu0 %v5324
      %5388 = vmatpush1.bf16.msra.mxu0 %v5323
      %5389 = vmatprep.subr.bf16.mxu0 %v5326
      %5390 = vmatpush1.bf16.msra.mxu0 %v5325
      %5391 = vmatprep.subr.bf16.mxu0 %v5328
      %5392 = vmatpush1.bf16.msra.mxu0 %v5327
      %5393 = vmatprep.subr.bf16.mxu0 %v5330
      %5394 = vmatpush1.bf16.msra.mxu0 %v5329
      %5395 = vmatprep.subr.bf16.mxu0 %v5332
      %5396 = vmatpush1.bf16.msra.mxu0 %v5331
      %5397 = vmatprep.subr.bf16.mxu0 %v5334
      %5398 = vmatpush1.bf16.msra.mxu0 %v5333
      %5399 = vmatprep.subr.bf16.mxu0 %v5336
      %5400 = vmatpush1.bf16.msra.mxu0 %v5335
      %5401 = vmatprep.subr.bf16.mxu0 %v5338
      %5402 = vmatpush1.bf16.msra.mxu0 %v5337
      %5403 = vmatprep.subr.bf16.mxu0 %v5340
      %5404 = vmatpush1.bf16.msra.mxu0 %v5339
      %5405 = vmatprep.subr.bf16.mxu0 %v5342
      %5406 = vmatpush1.bf16.msra.mxu0 %v5341
      %5407 = vmatprep.mubr.bf16.mxu0 %v4654
      %5408 = vmatmul.mubr.bf16.gmra.mrb[0].mxu0 %v4651
      %v5409 = vpop.f32.mrb[0].mxu0
      %v5410 = vadd.f32 0.0, %v5409
      %v5411 = vpop.f32.mrb[0].mxu0
      %v5412 = vadd.f32 0.0, %v5411
      %v5413 = vpop.f32.mrb[0].mxu0
      %v5414 = vadd.f32 0.0, %v5413
      %v5415 = vpop.f32.mrb[0].mxu0
      %v5416 = vadd.f32 0.0, %v5415
      %5417 = vdwg.mxu0
      %v5450 = vunpack.c.l.b16 %v5150
      %v5451 = vunpack.c.h.b16 %v5150
      %v5452 = vunpack.c.l.b16 %v5151
      %v5453 = vunpack.c.h.b16 %v5151
      %v5454 = vunpack.c.l.b16 %v5152
      %v5455 = vunpack.c.h.b16 %v5152
      %v5456 = vunpack.c.l.b16 %v5153
      %v5457 = vunpack.c.h.b16 %v5153
      %v5458 = vunpack.c.l.b16 %v5154
      %v5459 = vunpack.c.h.b16 %v5154
      %v5460 = vunpack.c.l.b16 %v5155
      %v5461 = vunpack.c.h.b16 %v5155
      %v5462 = vunpack.c.l.b16 %v5156
      %v5463 = vunpack.c.h.b16 %v5156
      %v5464 = vunpack.c.l.b16 %v5157
      %v5465 = vunpack.c.h.b16 %v5157
      %v5466 = vunpack.c.l.b16 %v5158
      %v5467 = vunpack.c.h.b16 %v5158
      %v5468 = vunpack.c.l.b16 %v5159
      %v5469 = vunpack.c.h.b16 %v5159
      %v5470 = vunpack.c.l.b16 %v5160
      %v5471 = vunpack.c.h.b16 %v5160
      %v5472 = vunpack.c.l.b16 %v5161
      %v5473 = vunpack.c.h.b16 %v5161
      %v5474 = vunpack.c.l.b16 %v5162
      %v5475 = vunpack.c.h.b16 %v5162
      %v5476 = vunpack.c.l.b16 %v5163
      %v5477 = vunpack.c.h.b16 %v5163
      %v5478 = vunpack.c.l.b16 %v5164
      %v5479 = vunpack.c.h.b16 %v5164
      %v5480 = vunpack.c.l.b16 %v5165
      %v5481 = vunpack.c.h.b16 %v5165
      %v5482 = vunpack.c.l.b16 %v5166
      %v5483 = vunpack.c.h.b16 %v5166
      %v5484 = vunpack.c.l.b16 %v5167
      %v5485 = vunpack.c.h.b16 %v5167
      %v5486 = vunpack.c.l.b16 %v5168
      %v5487 = vunpack.c.h.b16 %v5168
      %v5488 = vunpack.c.l.b16 %v5169
      %v5489 = vunpack.c.h.b16 %v5169
      %v5490 = vunpack.c.l.b16 %v5170
      %v5491 = vunpack.c.h.b16 %v5170
      %v5492 = vunpack.c.l.b16 %v5171
      %v5493 = vunpack.c.h.b16 %v5171
      %v5494 = vunpack.c.l.b16 %v5172
      %v5495 = vunpack.c.h.b16 %v5172
      %v5496 = vunpack.c.l.b16 %v5173
      %v5497 = vunpack.c.h.b16 %v5173
      %v5498 = vunpack.c.l.b16 %v5174
      %v5499 = vunpack.c.h.b16 %v5174
      %v5500 = vunpack.c.l.b16 %v5175
      %v5501 = vunpack.c.h.b16 %v5175
      %v5502 = vunpack.c.l.b16 %v5176
      %v5503 = vunpack.c.h.b16 %v5176
      %v5504 = vunpack.c.l.b16 %v5177
      %v5505 = vunpack.c.h.b16 %v5177
      %v5506 = vunpack.c.l.b16 %v5178
      %v5507 = vunpack.c.h.b16 %v5178
      %v5508 = vunpack.c.l.b16 %v5179
      %v5509 = vunpack.c.h.b16 %v5179
      %v5510 = vunpack.c.l.b16 %v5180
      %v5511 = vunpack.c.h.b16 %v5180
      %v5512 = vunpack.c.l.b16 %v5181
      %v5513 = vunpack.c.h.b16 %v5181
      %v5514 = vpack.c.b16 %v5452, %v5450
      %v5515 = vpack.c.b16 %v5453, %v5451
      %v5516 = vpack.c.b16 %v5456, %v5454
      %v5517 = vpack.c.b16 %v5457, %v5455
      %v5518 = vpack.c.b16 %v5460, %v5458
      %v5519 = vpack.c.b16 %v5461, %v5459
      %v5520 = vpack.c.b16 %v5464, %v5462
      %v5521 = vpack.c.b16 %v5465, %v5463
      %v5522 = vpack.c.b16 %v5468, %v5466
      %v5523 = vpack.c.b16 %v5469, %v5467
      %v5524 = vpack.c.b16 %v5472, %v5470
      %v5525 = vpack.c.b16 %v5473, %v5471
      %v5526 = vpack.c.b16 %v5476, %v5474
      %v5527 = vpack.c.b16 %v5477, %v5475
      %v5528 = vpack.c.b16 %v5480, %v5478
      %v5529 = vpack.c.b16 %v5481, %v5479
      %v5530 = vpack.c.b16 %v5484, %v5482
      %v5531 = vpack.c.b16 %v5485, %v5483
      %v5532 = vpack.c.b16 %v5488, %v5486
      %v5533 = vpack.c.b16 %v5489, %v5487
      %v5534 = vpack.c.b16 %v5492, %v5490
      %v5535 = vpack.c.b16 %v5493, %v5491
      %v5536 = vpack.c.b16 %v5496, %v5494
      %v5537 = vpack.c.b16 %v5497, %v5495
      %v5538 = vpack.c.b16 %v5500, %v5498
      %v5539 = vpack.c.b16 %v5501, %v5499
      %v5540 = vpack.c.b16 %v5504, %v5502
      %v5541 = vpack.c.b16 %v5505, %v5503
      %v5542 = vpack.c.b16 %v5508, %v5506
      %v5543 = vpack.c.b16 %v5509, %v5507
      %v5544 = vpack.c.b16 %v5512, %v5510
      %v5545 = vpack.c.b16 %v5513, %v5511
      %5578 = vmatprep.subr.bf16.mxu0 %v5515
      %5579 = vmatpush1.bf16.msra.mxu0 %v5514
      %5580 = vmatprep.subr.bf16.mxu0 %v5517
      %5581 = vmatpush1.bf16.msra.mxu0 %v5516
      %5582 = vmatprep.subr.bf16.mxu0 %v5519
      %5583 = vmatpush1.bf16.msra.mxu0 %v5518
      %5584 = vmatprep.subr.bf16.mxu0 %v5521
      %5585 = vmatpush1.bf16.msra.mxu0 %v5520
      %5586 = vmatprep.subr.bf16.mxu0 %v5523
      %5587 = vmatpush1.bf16.msra.mxu0 %v5522
      %5588 = vmatprep.subr.bf16.mxu0 %v5525
      %5589 = vmatpush1.bf16.msra.mxu0 %v5524
      %5590 = vmatprep.subr.bf16.mxu0 %v5527
      %5591 = vmatpush1.bf16.msra.mxu0 %v5526
      %5592 = vmatprep.subr.bf16.mxu0 %v5529
      %5593 = vmatpush1.bf16.msra.mxu0 %v5528
      %5594 = vmatprep.subr.bf16.mxu0 %v5531
      %5595 = vmatpush1.bf16.msra.mxu0 %v5530
      %5596 = vmatprep.subr.bf16.mxu0 %v5533
      %5597 = vmatpush1.bf16.msra.mxu0 %v5532
      %5598 = vmatprep.subr.bf16.mxu0 %v5535
      %5599 = vmatpush1.bf16.msra.mxu0 %v5534
      %5600 = vmatprep.subr.bf16.mxu0 %v5537
      %5601 = vmatpush1.bf16.msra.mxu0 %v5536
      %5602 = vmatprep.subr.bf16.mxu0 %v5539
      %5603 = vmatpush1.bf16.msra.mxu0 %v5538
      %5604 = vmatprep.subr.bf16.mxu0 %v5541
      %5605 = vmatpush1.bf16.msra.mxu0 %v5540
      %5606 = vmatprep.subr.bf16.mxu0 %v5543
      %5607 = vmatpush1.bf16.msra.mxu0 %v5542
      %5608 = vmatprep.subr.bf16.mxu0 %v5545
      %5609 = vmatpush1.bf16.msra.mxu0 %v5544
      %5610 = vmatprep.mubr.bf16.mxu0 %v4194
      %5611 = vmatmul.mubr.bf16.gmra.mrb[0].mxu0 %v4182
      %v5612 = vpop.f32.mrb[0].mxu0
      %v5613 = vadd.f32 %v5410, %v5612
      %v5614 = vpop.f32.mrb[0].mxu0
      %v5615 = vadd.f32 %v5412, %v5614
      %v5616 = vpop.f32.mrb[0].mxu0
      %v5617 = vadd.f32 %v5414, %v5616
      %v5618 = vpop.f32.mrb[0].mxu0
      %v5619 = vadd.f32 %v5416, %v5618
      %5620 = vdwg.mxu0
      %s5621 = scalar_lea.vmem %s9, 1536
      %v5622 = vld [vmem:[%s5621] sm:$0xff]
      %v5623 = vld [vmem:[%s5621 + $0x8] sm:$0xff]
      %v5624 = vld [vmem:[%s5621 + $0x10] sm:$0xff]
      %v5625 = vld [vmem:[%s5621 + $0x18] sm:$0xff]
      %v5626 = vld [vmem:[%s5621 + $0x20] sm:$0xff]
      %v5627 = vld [vmem:[%s5621 + $0x28] sm:$0xff]
      %v5628 = vld [vmem:[%s5621 + $0x30] sm:$0xff]
      %v5629 = vld [vmem:[%s5621 + $0x38] sm:$0xff]
      %v5630 = vld [vmem:[%s5621 + $0x40] sm:$0xff]
      %v5631 = vld [vmem:[%s5621 + $0x48] sm:$0xff]
      %v5632 = vld [vmem:[%s5621 + $0x50] sm:$0xff]
      %v5633 = vld [vmem:[%s5621 + $0x58] sm:$0xff]
      %v5634 = vld [vmem:[%s5621 + $0x60] sm:$0xff]
      %v5635 = vld [vmem:[%s5621 + $0x68] sm:$0xff]
      %v5636 = vld [vmem:[%s5621 + $0x70] sm:$0xff]
      %v5637 = vld [vmem:[%s5621 + $0x78] sm:$0xff]
      %v5638 = vld [vmem:[%s5621 + $0x80] sm:$0xff]
      %v5639 = vld [vmem:[%s5621 + $0x88] sm:$0xff]
      %v5640 = vld [vmem:[%s5621 + $0x90] sm:$0xff]
      %v5641 = vld [vmem:[%s5621 + $0x98] sm:$0xff]
      %v5642 = vld [vmem:[%s5621 + $0xa0] sm:$0xff]
      %v5643 = vld [vmem:[%s5621 + $0xa8] sm:$0xff]
      %v5644 = vld [vmem:[%s5621 + $0xb0] sm:$0xff]
      %v5645 = vld [vmem:[%s5621 + $0xb8] sm:$0xff]
      %v5646 = vld [vmem:[%s5621 + $0xc0] sm:$0xff]
      %v5647 = vld [vmem:[%s5621 + $0xc8] sm:$0xff]
      %v5648 = vld [vmem:[%s5621 + $0xd0] sm:$0xff]
      %v5649 = vld [vmem:[%s5621 + $0xd8] sm:$0xff]
      %v5650 = vld [vmem:[%s5621 + $0xe0] sm:$0xff]
      %v5651 = vld [vmem:[%s5621 + $0xe8] sm:$0xff]
      %v5652 = vld [vmem:[%s5621 + $0xf0] sm:$0xff]
      %v5653 = vld [vmem:[%s5621 + $0xf8] sm:$0xff]
      %v5686 = vunpack.c.l.b16 %v5622
      %v5687 = vunpack.c.h.b16 %v5622
      %v5688 = vunpack.c.l.b16 %v5623
      %v5689 = vunpack.c.h.b16 %v5623
      %v5690 = vunpack.c.l.b16 %v5624
      %v5691 = vunpack.c.h.b16 %v5624
      %v5692 = vunpack.c.l.b16 %v5625
      %v5693 = vunpack.c.h.b16 %v5625
      %v5694 = vunpack.c.l.b16 %v5626
      %v5695 = vunpack.c.h.b16 %v5626
      %v5696 = vunpack.c.l.b16 %v5627
      %v5697 = vunpack.c.h.b16 %v5627
      %v5698 = vunpack.c.l.b16 %v5628
      %v5699 = vunpack.c.h.b16 %v5628
      %v5700 = vunpack.c.l.b16 %v5629
      %v5701 = vunpack.c.h.b16 %v5629
      %v5702 = vunpack.c.l.b16 %v5630
      %v5703 = vunpack.c.h.b16 %v5630
      %v5704 = vunpack.c.l.b16 %v5631
      %v5705 = vunpack.c.h.b16 %v5631
      %v5706 = vunpack.c.l.b16 %v5632
      %v5707 = vunpack.c.h.b16 %v5632
      %v5708 = vunpack.c.l.b16 %v5633
      %v5709 = vunpack.c.h.b16 %v5633
      %v5710 = vunpack.c.l.b16 %v5634
      %v5711 = vunpack.c.h.b16 %v5634
      %v5712 = vunpack.c.l.b16 %v5635
      %v5713 = vunpack.c.h.b16 %v5635
      %v5714 = vunpack.c.l.b16 %v5636
      %v5715 = vunpack.c.h.b16 %v5636
      %v5716 = vunpack.c.l.b16 %v5637
      %v5717 = vunpack.c.h.b16 %v5637
      %v5718 = vunpack.c.l.b16 %v5638
      %v5719 = vunpack.c.h.b16 %v5638
      %v5720 = vunpack.c.l.b16 %v5639
      %v5721 = vunpack.c.h.b16 %v5639
      %v5722 = vunpack.c.l.b16 %v5640
      %v5723 = vunpack.c.h.b16 %v5640
      %v5724 = vunpack.c.l.b16 %v5641
      %v5725 = vunpack.c.h.b16 %v5641
      %v5726 = vunpack.c.l.b16 %v5642
      %v5727 = vunpack.c.h.b16 %v5642
      %v5728 = vunpack.c.l.b16 %v5643
      %v5729 = vunpack.c.h.b16 %v5643
      %v5730 = vunpack.c.l.b16 %v5644
      %v5731 = vunpack.c.h.b16 %v5644
      %v5732 = vunpack.c.l.b16 %v5645
      %v5733 = vunpack.c.h.b16 %v5645
      %v5734 = vunpack.c.l.b16 %v5646
      %v5735 = vunpack.c.h.b16 %v5646
      %v5736 = vunpack.c.l.b16 %v5647
      %v5737 = vunpack.c.h.b16 %v5647
      %v5738 = vunpack.c.l.b16 %v5648
      %v5739 = vunpack.c.h.b16 %v5648
      %v5740 = vunpack.c.l.b16 %v5649
      %v5741 = vunpack.c.h.b16 %v5649
      %v5742 = vunpack.c.l.b16 %v5650
      %v5743 = vunpack.c.h.b16 %v5650
      %v5744 = vunpack.c.l.b16 %v5651
      %v5745 = vunpack.c.h.b16 %v5651
      %v5746 = vunpack.c.l.b16 %v5652
      %v5747 = vunpack.c.h.b16 %v5652
      %v5748 = vunpack.c.l.b16 %v5653
      %v5749 = vunpack.c.h.b16 %v5653
      %v5750 = vpack.c.b16 %v5688, %v5686
      %v5751 = vpack.c.b16 %v5689, %v5687
      %v5752 = vpack.c.b16 %v5692, %v5690
      %v5753 = vpack.c.b16 %v5693, %v5691
      %v5754 = vpack.c.b16 %v5696, %v5694
      %v5755 = vpack.c.b16 %v5697, %v5695
      %v5756 = vpack.c.b16 %v5700, %v5698
      %v5757 = vpack.c.b16 %v5701, %v5699
      %v5758 = vpack.c.b16 %v5704, %v5702
      %v5759 = vpack.c.b16 %v5705, %v5703
      %v5760 = vpack.c.b16 %v5708, %v5706
      %v5761 = vpack.c.b16 %v5709, %v5707
      %v5762 = vpack.c.b16 %v5712, %v5710
      %v5763 = vpack.c.b16 %v5713, %v5711
      %v5764 = vpack.c.b16 %v5716, %v5714
      %v5765 = vpack.c.b16 %v5717, %v5715
      %v5766 = vpack.c.b16 %v5720, %v5718
      %v5767 = vpack.c.b16 %v5721, %v5719
      %v5768 = vpack.c.b16 %v5724, %v5722
      %v5769 = vpack.c.b16 %v5725, %v5723
      %v5770 = vpack.c.b16 %v5728, %v5726
      %v5771 = vpack.c.b16 %v5729, %v5727
      %v5772 = vpack.c.b16 %v5732, %v5730
      %v5773 = vpack.c.b16 %v5733, %v5731
      %v5774 = vpack.c.b16 %v5736, %v5734
      %v5775 = vpack.c.b16 %v5737, %v5735
      %v5776 = vpack.c.b16 %v5740, %v5738
      %v5777 = vpack.c.b16 %v5741, %v5739
      %v5778 = vpack.c.b16 %v5744, %v5742
      %v5779 = vpack.c.b16 %v5745, %v5743
      %v5780 = vpack.c.b16 %v5748, %v5746
      %v5781 = vpack.c.b16 %v5749, %v5747
      %5814 = vmatprep.subr.bf16.mxu0 %v5751
      %5815 = vmatpush1.bf16.msra.mxu0 %v5750
      %5816 = vmatprep.subr.bf16.mxu0 %v5753
      %5817 = vmatpush1.bf16.msra.mxu0 %v5752
      %5818 = vmatprep.subr.bf16.mxu0 %v5755
      %5819 = vmatpush1.bf16.msra.mxu0 %v5754
      %5820 = vmatprep.subr.bf16.mxu0 %v5757
      %5821 = vmatpush1.bf16.msra.mxu0 %v5756
      %5822 = vmatprep.subr.bf16.mxu0 %v5759
      %5823 = vmatpush1.bf16.msra.mxu0 %v5758
      %5824 = vmatprep.subr.bf16.mxu0 %v5761
      %5825 = vmatpush1.bf16.msra.mxu0 %v5760
      %5826 = vmatprep.subr.bf16.mxu0 %v5763
      %5827 = vmatpush1.bf16.msra.mxu0 %v5762
      %5828 = vmatprep.subr.bf16.mxu0 %v5765
      %5829 = vmatpush1.bf16.msra.mxu0 %v5764
      %5830 = vmatprep.subr.bf16.mxu0 %v5767
      %5831 = vmatpush1.bf16.msra.mxu0 %v5766
      %5832 = vmatprep.subr.bf16.mxu0 %v5769
      %5833 = vmatpush1.bf16.msra.mxu0 %v5768
      %5834 = vmatprep.subr.bf16.mxu0 %v5771
      %5835 = vmatpush1.bf16.msra.mxu0 %v5770
      %5836 = vmatprep.subr.bf16.mxu0 %v5773
      %5837 = vmatpush1.bf16.msra.mxu0 %v5772
      %5838 = vmatprep.subr.bf16.mxu0 %v5775
      %5839 = vmatpush1.bf16.msra.mxu0 %v5774
      %5840 = vmatprep.subr.bf16.mxu0 %v5777
      %5841 = vmatpush1.bf16.msra.mxu0 %v5776
      %5842 = vmatprep.subr.bf16.mxu0 %v5779
      %5843 = vmatpush1.bf16.msra.mxu0 %v5778
      %5844 = vmatprep.subr.bf16.mxu0 %v5781
      %5845 = vmatpush1.bf16.msra.mxu0 %v5780
      %5846 = vmatprep.mubr.bf16.mxu0 %v4939
      %5847 = vmatmul.mubr.bf16.gmra.mrb[0].mxu0 %v4922
      %v5848 = vpop.f32.mrb[0].mxu0
      %v5849 = vadd.f32 0.0, %v5848
      %v5850 = vpop.f32.mrb[0].mxu0
      %v5851 = vadd.f32 0.0, %v5850
      %v5852 = vpop.f32.mrb[0].mxu0
      %v5853 = vadd.f32 0.0, %v5852
      %v5854 = vpop.f32.mrb[0].mxu0
      %v5855 = vadd.f32 0.0, %v5854
      %5856 = vdwg.mxu0
      %v5857 = vadd.f32 %v5613, %v5849
      %v5858 = vadd.f32 %v5615, %v5851
      %v5859 = vadd.f32 %v5617, %v5853
      %v5860 = vadd.f32 %v5619, %v5855
      %v5861 = vld [vmem:[#allocation4] sm:$0xf0]
      %v5862 = vld [vmem:[#allocation4 + $0x8] sm:$0xf0]
      %v5863 = vld [vmem:[#allocation4 + $0x20] sm:$0xf]
      %v5864 = vld [vmem:[#allocation4 + $0x28] sm:$0xf]
      %v5865 = vpack.c.bf16 %v4093, %v5861
      %v5866 = vpack.c.bf16 %v4094, %v5862
      %v5867 = vpack.c.bf16 %v5863, %v5863
      %v5868 = vpack.c.bf16 %v5864, %v5864
      %s5869 = scalar_lea.vmem %s9, 1792
      %v5870 = vld [vmem:[%s5869] sm:$0xff]
      %v5871 = vld [vmem:[%s5869 + $0x8] sm:$0xff]
      %v5872 = vld [vmem:[%s5869 + $0x10] sm:$0xff]
      %v5873 = vld [vmem:[%s5869 + $0x18] sm:$0xff]
      %v5874 = vld [vmem:[%s5869 + $0x20] sm:$0xff]
      %v5875 = vld [vmem:[%s5869 + $0x28] sm:$0xff]
      %v5876 = vld [vmem:[%s5869 + $0x30] sm:$0xff]
      %v5877 = vld [vmem:[%s5869 + $0x38] sm:$0xff]
      %v5878 = vld [vmem:[%s5869 + $0x40] sm:$0xff]
      %v5879 = vld [vmem:[%s5869 + $0x48] sm:$0xff]
      %v5880 = vld [vmem:[%s5869 + $0x50] sm:$0xff]
      %v5881 = vld [vmem:[%s5869 + $0x58] sm:$0xff]
      %v5882 = vld [vmem:[%s5869 + $0x60] sm:$0xff]
      %v5883 = vld [vmem:[%s5869 + $0x68] sm:$0xff]
      %v5884 = vld [vmem:[%s5869 + $0x70] sm:$0xff]
      %v5885 = vld [vmem:[%s5869 + $0x78] sm:$0xff]
      %v5886 = vld [vmem:[%s5869 + $0x80] sm:$0xff]
      %v5887 = vld [vmem:[%s5869 + $0x88] sm:$0xff]
      %v5888 = vld [vmem:[%s5869 + $0x90] sm:$0xff]
      %v5889 = vld [vmem:[%s5869 + $0x98] sm:$0xff]
      %v5890 = vld [vmem:[%s5869 + $0xa0] sm:$0xff]
      %v5891 = vld [vmem:[%s5869 + $0xa8] sm:$0xff]
      %v5892 = vld [vmem:[%s5869 + $0xb0] sm:$0xff]
      %v5893 = vld [vmem:[%s5869 + $0xb8] sm:$0xff]
      %v5894 = vld [vmem:[%s5869 + $0xc0] sm:$0xff]
      %v5895 = vld [vmem:[%s5869 + $0xc8] sm:$0xff]
      %v5896 = vld [vmem:[%s5869 + $0xd0] sm:$0xff]
      %v5897 = vld [vmem:[%s5869 + $0xd8] sm:$0xff]
      %v5898 = vld [vmem:[%s5869 + $0xe0] sm:$0xff]
      %v5899 = vld [vmem:[%s5869 + $0xe8] sm:$0xff]
      %v5900 = vld [vmem:[%s5869 + $0xf0] sm:$0xff]
      %v5901 = vld [vmem:[%s5869 + $0xf8] sm:$0xff]
      %vm5906 = vcmask 1045504
      %v5907 = vrot.slane %v5865, 2
      %v5908 = vrot.slane %v5867, 2
      %v5909 = vsel %vm5906, %v5907, %v5908
      %v5910 = vrot.slane %v5866, 2
      %v5911 = vrot.slane %v5868, 2
      %v5912 = vsel %vm5906, %v5910, %v5911
      %v5947 = vunpack.c.l.b16 %v5870
      %v5948 = vunpack.c.h.b16 %v5870
      %v5949 = vunpack.c.l.b16 %v5871
      %v5950 = vunpack.c.h.b16 %v5871
      %v5951 = vunpack.c.l.b16 %v5872
      %v5952 = vunpack.c.h.b16 %v5872
      %v5953 = vunpack.c.l.b16 %v5873
      %v5954 = vunpack.c.h.b16 %v5873
      %v5955 = vunpack.c.l.b16 %v5874
      %v5956 = vunpack.c.h.b16 %v5874
      %v5957 = vunpack.c.l.b16 %v5875
      %v5958 = vunpack.c.h.b16 %v5875
      %v5959 = vunpack.c.l.b16 %v5876
      %v5960 = vunpack.c.h.b16 %v5876
      %v5961 = vunpack.c.l.b16 %v5877
      %v5962 = vunpack.c.h.b16 %v5877
      %v5963 = vunpack.c.l.b16 %v5878
      %v5964 = vunpack.c.h.b16 %v5878
      %v5965 = vunpack.c.l.b16 %v5879
      %v5966 = vunpack.c.h.b16 %v5879
      %v5967 = vunpack.c.l.b16 %v5880
      %v5968 = vunpack.c.h.b16 %v5880
      %v5969 = vunpack.c.l.b16 %v5881
      %v5970 = vunpack.c.h.b16 %v5881
      %v5971 = vunpack.c.l.b16 %v5882
      %v5972 = vunpack.c.h.b16 %v5882
      %v5973 = vunpack.c.l.b16 %v5883
      %v5974 = vunpack.c.h.b16 %v5883
      %v5975 = vunpack.c.l.b16 %v5884
      %v5976 = vunpack.c.h.b16 %v5884
      %v5977 = vunpack.c.l.b16 %v5885
      %v5978 = vunpack.c.h.b16 %v5885
      %v5979 = vunpack.c.l.b16 %v5886
      %v5980 = vunpack.c.h.b16 %v5886
      %v5981 = vunpack.c.l.b16 %v5887
      %v5982 = vunpack.c.h.b16 %v5887
      %v5983 = vunpack.c.l.b16 %v5888
      %v5984 = vunpack.c.h.b16 %v5888
      %v5985 = vunpack.c.l.b16 %v5889
      %v5986 = vunpack.c.h.b16 %v5889
      %v5987 = vunpack.c.l.b16 %v5890
      %v5988 = vunpack.c.h.b16 %v5890
      %v5989 = vunpack.c.l.b16 %v5891
      %v5990 = vunpack.c.h.b16 %v5891
      %v5991 = vunpack.c.l.b16 %v5892
      %v5992 = vunpack.c.h.b16 %v5892
      %v5993 = vunpack.c.l.b16 %v5893
      %v5994 = vunpack.c.h.b16 %v5893
      %v5995 = vunpack.c.l.b16 %v5894
      %v5996 = vunpack.c.h.b16 %v5894
      %v5997 = vunpack.c.l.b16 %v5895
      %v5998 = vunpack.c.h.b16 %v5895
      %v5999 = vunpack.c.l.b16 %v5896
      %v6000 = vunpack.c.h.b16 %v5896
      %v6001 = vunpack.c.l.b16 %v5897
      %v6002 = vunpack.c.h.b16 %v5897
      %v6003 = vunpack.c.l.b16 %v5898
      %v6004 = vunpack.c.h.b16 %v5898
      %v6005 = vunpack.c.l.b16 %v5899
      %v6006 = vunpack.c.h.b16 %v5899
      %v6007 = vunpack.c.l.b16 %v5900
      %v6008 = vunpack.c.h.b16 %v5900
      %v6009 = vunpack.c.l.b16 %v5901
      %v6010 = vunpack.c.h.b16 %v5901
      %v6011 = vpack.c.b16 %v5949, %v5947
      %v6012 = vpack.c.b16 %v5950, %v5948
      %v6013 = vpack.c.b16 %v5953, %v5951
      %v6014 = vpack.c.b16 %v5954, %v5952
      %v6015 = vpack.c.b16 %v5957, %v5955
      %v6016 = vpack.c.b16 %v5958, %v5956
      %v6017 = vpack.c.b16 %v5961, %v5959
      %v6018 = vpack.c.b16 %v5962, %v5960
      %v6019 = vpack.c.b16 %v5965, %v5963
      %v6020 = vpack.c.b16 %v5966, %v5964
      %v6021 = vpack.c.b16 %v5969, %v5967
      %v6022 = vpack.c.b16 %v5970, %v5968
      %v6023 = vpack.c.b16 %v5973, %v5971
      %v6024 = vpack.c.b16 %v5974, %v5972
      %v6025 = vpack.c.b16 %v5977, %v5975
      %v6026 = vpack.c.b16 %v5978, %v5976
      %v6027 = vpack.c.b16 %v5981, %v5979
      %v6028 = vpack.c.b16 %v5982, %v5980
      %v6029 = vpack.c.b16 %v5985, %v5983
      %v6030 = vpack.c.b16 %v5986, %v5984
      %v6031 = vpack.c.b16 %v5989, %v5987
      %v6032 = vpack.c.b16 %v5990, %v5988
      %v6033 = vpack.c.b16 %v5993, %v5991
      %v6034 = vpack.c.b16 %v5994, %v5992
      %v6035 = vpack.c.b16 %v5997, %v5995
      %v6036 = vpack.c.b16 %v5998, %v5996
      %v6037 = vpack.c.b16 %v6001, %v5999
      %v6038 = vpack.c.b16 %v6002, %v6000
      %v6039 = vpack.c.b16 %v6005, %v6003
      %v6040 = vpack.c.b16 %v6006, %v6004
      %v6041 = vpack.c.b16 %v6009, %v6007
      %v6042 = vpack.c.b16 %v6010, %v6008
      %6075 = vmatprep.subr.bf16.mxu0 %v6012
      %6076 = vmatpush1.bf16.msra.mxu0 %v6011
      %6077 = vmatprep.subr.bf16.mxu0 %v6014
      %6078 = vmatpush1.bf16.msra.mxu0 %v6013
      %6079 = vmatprep.subr.bf16.mxu0 %v6016
      %6080 = vmatpush1.bf16.msra.mxu0 %v6015
      %6081 = vmatprep.subr.bf16.mxu0 %v6018
      %6082 = vmatpush1.bf16.msra.mxu0 %v6017
      %6083 = vmatprep.subr.bf16.mxu0 %v6020
      %6084 = vmatpush1.bf16.msra.mxu0 %v6019
      %6085 = vmatprep.subr.bf16.mxu0 %v6022
      %6086 = vmatpush1.bf16.msra.mxu0 %v6021
      %6087 = vmatprep.subr.bf16.mxu0 %v6024
      %6088 = vmatpush1.bf16.msra.mxu0 %v6023
      %6089 = vmatprep.subr.bf16.mxu0 %v6026
      %6090 = vmatpush1.bf16.msra.mxu0 %v6025
      %6091 = vmatprep.subr.bf16.mxu0 %v6028
      %6092 = vmatpush1.bf16.msra.mxu0 %v6027
      %6093 = vmatprep.subr.bf16.mxu0 %v6030
      %6094 = vmatpush1.bf16.msra.mxu0 %v6029
      %6095 = vmatprep.subr.bf16.mxu0 %v6032
      %6096 = vmatpush1.bf16.msra.mxu0 %v6031
      %6097 = vmatprep.subr.bf16.mxu0 %v6034
      %6098 = vmatpush1.bf16.msra.mxu0 %v6033
      %6099 = vmatprep.subr.bf16.mxu0 %v6036
      %6100 = vmatpush1.bf16.msra.mxu0 %v6035
      %6101 = vmatprep.subr.bf16.mxu0 %v6038
      %6102 = vmatpush1.bf16.msra.mxu0 %v6037
      %6103 = vmatprep.subr.bf16.mxu0 %v6040
      %6104 = vmatpush1.bf16.msra.mxu0 %v6039
      %6105 = vmatprep.subr.bf16.mxu0 %v6042
      %6106 = vmatpush1.bf16.msra.mxu0 %v6041
      %6107 = vmatprep.mubr.bf16.mxu0 %v5912
      %6108 = vmatmul.mubr.bf16.gmra.mrb[0].mxu0 %v5909
      %v6109 = vpop.f32.mrb[0].mxu0
      %v6110 = vadd.f32 0.0, %v6109
      %v6111 = vpop.f32.mrb[0].mxu0
      %v6112 = vadd.f32 0.0, %v6111
      %v6113 = vpop.f32.mrb[0].mxu0
      %v6114 = vadd.f32 0.0, %v6113
      %v6115 = vpop.f32.mrb[0].mxu0
      %v6116 = vadd.f32 0.0, %v6115
      %6117 = vdwg.mxu0
      %v6118 = vadd.f32 %v5857, %v6110
      %v6119 = vadd.f32 %v5858, %v6112
      %v6120 = vadd.f32 %v5859, %v6114
      %v6121 = vadd.f32 %v5860, %v6116
      %v6122 = vld [vmem:[%s10] sm:$0x3]
      %v6124 = vlaneseq
      %v6125 = vshrl.u32 %v6124, 7
      %v6126 = vsub.s32 0, %v6125
      %v6127 = vrot.slane %v6122, %v6126
      %v6128 = vlaneseq
      %v6129 = vshrl.u32 %v6128, 7
      %v6130 = vsub.s32 1, %v6129
      %v6131 = vrot.slane %v6122, %v6130
      %v6134 = vadd.f32 %v5145, %v6127
      %v6135 = vadd.f32 %v5146, %v6131
      %v6136 = vadd.f32 %v5147, %v6127
      %v6137 = vadd.f32 %v5148, %v6131
      %v6138 = vmax.f32 %v6134, 0.0
      %v6139 = vmax.f32 %v6135, 0.0
      %v6140 = vmax.f32 %v6136, 0.0
      %v6141 = vmax.f32 %v6137, 0.0
      %v6142 = vadd.f32 %v6118, %v6127
      %v6143 = vadd.f32 %v6119, %v6131
      %v6144 = vadd.f32 %v6120, %v6127
      %v6145 = vadd.f32 %v6121, %v6131
      %v6146 = vmax.f32 %v6142, 0.0
      %v6147 = vmax.f32 %v6143, 0.0
      %v6148 = vmax.f32 %v6144, 0.0
      %v6149 = vmax.f32 %v6145, 0.0
      %v6150 = vadd.f32 %v6138, %v6139
      %v6151 = vadd.f32 %v6150, %v6140
      %v6152 = vadd.f32 %v6151, %v6141
      %6153 = vadd.xlane.f32.xlu0 %v6152
      %v6154 = vpop.xlane.xlu0 %6153
      %v6155 = vrot.slane %v6154, 4
      %v6156 = vadd.f32 %v6154, %v6155
      %v6157 = vrot.slane %v6156, 2
      %v6158 = vadd.f32 %v6156, %v6157
      %v6159 = vrot.slane %v6158, 1
      %v6160 = vadd.f32 %v6158, %v6159
      %s6161 = vtos %v6160
      %v6162 = vadd.f32 %v6146, %v6147
      %v6163 = vadd.f32 %v6162, %v6148
      %v6164 = vadd.f32 %v6163, %v6149
      %6165 = vadd.xlane.f32.xlu0 %v6164
      %v6166 = vpop.xlane.xlu0 %6165
      %v6167 = vrot.slane %v6166, 4
      %v6168 = vadd.f32 %v6166, %v6167
      %v6169 = vrot.slane %v6168, 2
      %v6170 = vadd.f32 %v6168, %v6169
      %v6171 = vrot.slane %v6170, 1
      %v6172 = vadd.f32 %v6170, %v6171
      %s6173 = vtos %v6172
      %s6174 = sadd.f32 %s6161, %s6173
      %v6175 = vrcp.pop 8192.0
      %s6176 = vtos %v6175
      %s6177 = smul.f32 %s6174, %s6176
      %v6178 = vstv %s6177
      %v6179 = vsub.f32 %v6138, %v6178
      %v6180 = vsub.f32 %v6139, %v6178
      %v6181 = vsub.f32 %v6140, %v6178
      %v6182 = vsub.f32 %v6141, %v6178
      %v6183 = vsub.f32 %v6146, %v6178
      %v6184 = vsub.f32 %v6147, %v6178
      %v6185 = vsub.f32 %v6148, %v6178
      %v6186 = vsub.f32 %v6149, %v6178
      %v6187 = vmul.f32 %v6179, %v6179
      %v6188 = vmul.f32 %v6180, %v6180
      %v6189 = vmul.f32 %v6181, %v6181
      %v6190 = vmul.f32 %v6182, %v6182
      %v6191 = vadd.f32 %v6187, %v6188
      %v6192 = vadd.f32 %v6191, %v6189
      %v6193 = vadd.f32 %v6192, %v6190
      %6194 = vadd.xlane.f32.xlu0 %v6193
      %v6195 = vpop.xlane.xlu0 %6194
      %v6196 = vrot.slane %v6195, 4
      %v6197 = vadd.f32 %v6195, %v6196
      %v6198 = vrot.slane %v6197, 2
      %v6199 = vadd.f32 %v6197, %v6198
      %v6200 = vrot.slane %v6199, 1
      %v6201 = vadd.f32 %v6199, %v6200
      %s6202 = vtos %v6201
      %v6203 = vmul.f32 %v6183, %v6183
      %v6204 = vmul.f32 %v6184, %v6184
      %v6205 = vmul.f32 %v6185, %v6185
      %v6206 = vmul.f32 %v6186, %v6186
      %v6207 = vadd.f32 %v6203, %v6204
      %v6208 = vadd.f32 %v6207, %v6205
      %v6209 = vadd.f32 %v6208, %v6206
      %6210 = vadd.xlane.f32.xlu0 %v6209
      %v6211 = vpop.xlane.xlu0 %6210
      %v6212 = vrot.slane %v6211, 4
      %v6213 = vadd.f32 %v6211, %v6212
      %v6214 = vrot.slane %v6213, 2
      %v6215 = vadd.f32 %v6213, %v6214
      %v6216 = vrot.slane %v6215, 1
      %v6217 = vadd.f32 %v6215, %v6216
      %s6218 = vtos %v6217
      %s6219 = sadd.f32 %s6202, %s6218
      %v6220 = vrcp.pop 8192.0
      %s6221 = vtos %v6220
      %s6222 = smul.f32 %s6219, %s6221
      %s6223 = sadd.f32 %s6222, 1e-05
      %v6224 = vstv %s6223
      %v6225 = vrsqrt.pop %v6224
      %s6226 = vtos %v6225
      %v6227 = vstv %s6226
      %v6228 = vmul.f32 %v6179, %v6227
      %v6229 = vmul.f32 %v6180, %v6227
      %v6230 = vmul.f32 %v6181, %v6227
      %v6231 = vmul.f32 %v6182, %v6227
      %v6232 = vld [vmem:[%s11] sm:$0x3]
      %v6234 = vlaneseq
      %v6235 = vshrl.u32 %v6234, 7
      %v6236 = vsub.s32 0, %v6235
      %v6237 = vrot.slane %v6232, %v6236
      %v6238 = vlaneseq
      %v6239 = vshrl.u32 %v6238, 7
      %v6240 = vsub.s32 1, %v6239
      %v6241 = vrot.slane %v6232, %v6240
      %v6244 = vmul.f32 %v6228, %v6237
      %v6245 = vmul.f32 %v6229, %v6241
      %v6246 = vmul.f32 %v6230, %v6237
      %v6247 = vmul.f32 %v6231, %v6241
      %v6248 = vld [vmem:[%s12] sm:$0x3]
      %v6250 = vlaneseq
      %v6251 = vshrl.u32 %v6250, 7
      %v6252 = vsub.s32 0, %v6251
      %v6253 = vrot.slane %v6248, %v6252
      %v6254 = vlaneseq
      %v6255 = vshrl.u32 %v6254, 7
      %v6256 = vsub.s32 1, %v6255
      %v6257 = vrot.slane %v6248, %v6256
      %v6260 = vadd.f32 %v6244, %v6253
      %v6261 = vadd.f32 %v6245, %v6257
      %v6262 = vadd.f32 %v6246, %v6253
      %v6263 = vadd.f32 %v6247, %v6257
      %v6264 = vmul.f32 %v6183, %v6227
      %v6265 = vmul.f32 %v6184, %v6227
      %v6266 = vmul.f32 %v6185, %v6227
      %v6267 = vmul.f32 %v6186, %v6227
      %v6268 = vmul.f32 %v6264, %v6237
      %v6269 = vmul.f32 %v6265, %v6241
      %v6270 = vmul.f32 %v6266, %v6237
      %v6271 = vmul.f32 %v6267, %v6241
      %v6272 = vadd.f32 %v6268, %v6253
      %v6273 = vadd.f32 %v6269, %v6257
      %v6274 = vadd.f32 %v6270, %v6253
      %v6275 = vadd.f32 %v6271, %v6257
      %v6280 = vcombine.low %v6260, %v6261
      %v6281 = vcombine.high %v6260, %v6261
      %v6283 = vunpack.c.l.s4 1966171168
      %v6284 = vunpack.c.0.s8 %v6283
      %v6285 = vlaneseq
      %v6286 = vshrl.u32 %v6285, 7
      %v6287 = vsub.s32 %v6284, %v6286
      %v6288 = vrot.slane %v6280, %v6287
      %v6290 = vunpack.c.l.s4 1966171168
      %v6291 = vunpack.c.0.s8 %v6290
      %v6292 = vlaneseq
      %v6293 = vshrl.u32 %v6292, 7
      %v6294 = vsub.s32 %v6291, %v6293
      %v6295 = vrot.slane %v6281, %v6294
      %v6296 = vcombine.high %v6288, %v6288
      %v6297 = vcombine.high %v6295, %v6295
      %v6299 = vunpack.c.l.s4 1966171168
      %v6300 = vunpack.c.0.s8 %v6299
      %v6301 = vlaneseq
      %v6302 = vshrl.u32 %v6301, 7
      %v6303 = vsub.s32 %v6300, %v6302
      %v6304 = vrot.slane %v6288, %v6303
      %v6306 = vunpack.c.l.s4 1966171168
      %v6307 = vunpack.c.0.s8 %v6306
      %v6308 = vlaneseq
      %v6309 = vshrl.u32 %v6308, 7
      %v6310 = vsub.s32 %v6307, %v6309
      %v6311 = vrot.slane %v6295, %v6310
      %v6313 = vunpack.c.l.s4 1966171168
      %v6314 = vunpack.c.0.s8 %v6313
      %v6315 = vlaneseq
      %v6316 = vshrl.u32 %v6315, 7
      %v6317 = vsub.s32 %v6314, %v6316
      %v6318 = vrot.slane %v6296, %v6317
      %v6320 = vunpack.c.l.s4 1966171168
      %v6321 = vunpack.c.0.s8 %v6320
      %v6322 = vlaneseq
      %v6323 = vshrl.u32 %v6322, 7
      %v6324 = vsub.s32 %v6321, %v6323
      %v6325 = vrot.slane %v6297, %v6324
      %v6326 = vcombine.high %v6304, %v6304
      %v6327 = vcombine.high %v6311, %v6311
      %v6328 = vcombine.high %v6318, %v6318
      %v6329 = vcombine.high %v6325, %v6325
      %v6330 = vcombine.low %v6262, %v6263
      %v6331 = vcombine.high %v6262, %v6263
      %v6333 = vunpack.c.l.s4 1966171168
      %v6334 = vunpack.c.0.s8 %v6333
      %v6335 = vlaneseq
      %v6336 = vshrl.u32 %v6335, 7
      %v6337 = vsub.s32 %v6334, %v6336
      %v6338 = vrot.slane %v6330, %v6337
      %v6340 = vunpack.c.l.s4 1966171168
      %v6341 = vunpack.c.0.s8 %v6340
      %v6342 = vlaneseq
      %v6343 = vshrl.u32 %v6342, 7
      %v6344 = vsub.s32 %v6341, %v6343
      %v6345 = vrot.slane %v6331, %v6344
      %v6346 = vcombine.high %v6338, %v6338
      %v6347 = vcombine.high %v6345, %v6345
      %v6349 = vunpack.c.l.s4 1966171168
      %v6350 = vunpack.c.0.s8 %v6349
      %v6351 = vlaneseq
      %v6352 = vshrl.u32 %v6351, 7
      %v6353 = vsub.s32 %v6350, %v6352
      %v6354 = vrot.slane %v6338, %v6353
      %v6356 = vunpack.c.l.s4 1966171168
      %v6357 = vunpack.c.0.s8 %v6356
      %v6358 = vlaneseq
      %v6359 = vshrl.u32 %v6358, 7
      %v6360 = vsub.s32 %v6357, %v6359
      %v6361 = vrot.slane %v6345, %v6360
      %v6363 = vunpack.c.l.s4 1966171168
      %v6364 = vunpack.c.0.s8 %v6363
      %v6365 = vlaneseq
      %v6366 = vshrl.u32 %v6365, 7
      %v6367 = vsub.s32 %v6364, %v6366
      %v6368 = vrot.slane %v6346, %v6367
      %v6370 = vunpack.c.l.s4 1966171168
      %v6371 = vunpack.c.0.s8 %v6370
      %v6372 = vlaneseq
      %v6373 = vshrl.u32 %v6372, 7
      %v6374 = vsub.s32 %v6371, %v6373
      %v6375 = vrot.slane %v6347, %v6374
      %v6376 = vcombine.high %v6354, %v6354
      %v6377 = vcombine.high %v6361, %v6361
      %v6378 = vcombine.high %v6368, %v6368
      %v6379 = vcombine.high %v6375, %v6375
      %v6384 = vcombine.low %v6272, %v6273
      %v6385 = vcombine.high %v6272, %v6273
      %v6387 = vunpack.c.l.s4 1966171168
      %v6388 = vunpack.c.0.s8 %v6387
      %v6389 = vlaneseq
      %v6390 = vshrl.u32 %v6389, 7
      %v6391 = vsub.s32 %v6388, %v6390
      %v6392 = vrot.slane %v6384, %v6391
      %v6394 = vunpack.c.l.s4 1966171168
      %v6395 = vunpack.c.0.s8 %v6394
      %v6396 = vlaneseq
      %v6397 = vshrl.u32 %v6396, 7
      %v6398 = vsub.s32 %v6395, %v6397
      %v6399 = vrot.slane %v6385, %v6398
      %v6400 = vcombine.high %v6392, %v6392
      %v6401 = vcombine.high %v6399, %v6399
      %v6403 = vunpack.c.l.s4 1966171168
      %v6404 = vunpack.c.0.s8 %v6403
      %v6405 = vlaneseq
      %v6406 = vshrl.u32 %v6405, 7
      %v6407 = vsub.s32 %v6404, %v6406
      %v6408 = vrot.slane %v6392, %v6407
      %v6410 = vunpack.c.l.s4 1966171168
      %v6411 = vunpack.c.0.s8 %v6410
      %v6412 = vlaneseq
      %v6413 = vshrl.u32 %v6412, 7
      %v6414 = vsub.s32 %v6411, %v6413
      %v6415 = vrot.slane %v6399, %v6414
      %v6417 = vunpack.c.l.s4 1966171168
      %v6418 = vunpack.c.0.s8 %v6417
      %v6419 = vlaneseq
      %v6420 = vshrl.u32 %v6419, 7
      %v6421 = vsub.s32 %v6418, %v6420
      %v6422 = vrot.slane %v6400, %v6421
      %v6424 = vunpack.c.l.s4 1966171168
      %v6425 = vunpack.c.0.s8 %v6424
      %v6426 = vlaneseq
      %v6427 = vshrl.u32 %v6426, 7
      %v6428 = vsub.s32 %v6425, %v6427
      %v6429 = vrot.slane %v6401, %v6428
      %v6430 = vcombine.high %v6408, %v6408
      %v6431 = vcombine.high %v6415, %v6415
      %v6432 = vcombine.high %v6422, %v6422
      %v6433 = vcombine.high %v6429, %v6429
      %v6434 = vcombine.low %v6274, %v6275
      %v6435 = vcombine.high %v6274, %v6275
      %v6437 = vunpack.c.l.s4 1966171168
      %v6438 = vunpack.c.0.s8 %v6437
      %v6439 = vlaneseq
      %v6440 = vshrl.u32 %v6439, 7
      %v6441 = vsub.s32 %v6438, %v6440
      %v6442 = vrot.slane %v6434, %v6441
      %v6444 = vunpack.c.l.s4 1966171168
      %v6445 = vunpack.c.0.s8 %v6444
      %v6446 = vlaneseq
      %v6447 = vshrl.u32 %v6446, 7
      %v6448 = vsub.s32 %v6445, %v6447
      %v6449 = vrot.slane %v6435, %v6448
      %v6450 = vcombine.high %v6442, %v6442
      %v6451 = vcombine.high %v6449, %v6449
      %v6453 = vunpack.c.l.s4 1966171168
      %v6454 = vunpack.c.0.s8 %v6453
      %v6455 = vlaneseq
      %v6456 = vshrl.u32 %v6455, 7
      %v6457 = vsub.s32 %v6454, %v6456
      %v6458 = vrot.slane %v6442, %v6457
      %v6460 = vunpack.c.l.s4 1966171168
      %v6461 = vunpack.c.0.s8 %v6460
      %v6462 = vlaneseq
      %v6463 = vshrl.u32 %v6462, 7
      %v6464 = vsub.s32 %v6461, %v6463
      %v6465 = vrot.slane %v6449, %v6464
      %v6467 = vunpack.c.l.s4 1966171168
      %v6468 = vunpack.c.0.s8 %v6467
      %v6469 = vlaneseq
      %v6470 = vshrl.u32 %v6469, 7
      %v6471 = vsub.s32 %v6468, %v6470
      %v6472 = vrot.slane %v6450, %v6471
      %v6474 = vunpack.c.l.s4 1966171168
      %v6475 = vunpack.c.0.s8 %v6474
      %v6476 = vlaneseq
      %v6477 = vshrl.u32 %v6476, 7
      %v6478 = vsub.s32 %v6475, %v6477
      %v6479 = vrot.slane %v6451, %v6478
      %v6480 = vcombine.high %v6458, %v6458
      %v6481 = vcombine.high %v6465, %v6465
      %v6482 = vcombine.high %v6472, %v6472
      %v6483 = vcombine.high %v6479, %v6479
      %v6484 = vlaneseq
      %v6485 = vshrl.u32 %v6484, 7
      %v6486 = vsub.s32 0, %v6485
      %v6487 = vrot.slane %v6304, %v6486
      %v6488 = vlaneseq
      %v6489 = vshrl.u32 %v6488, 7
      %v6490 = vsub.s32 1, %v6489
      %v6491 = vrot.slane %v6304, %v6490
      %v6492 = vlaneseq
      %v6493 = vshrl.u32 %v6492, 7
      %v6494 = vsub.s32 0, %v6493
      %v6495 = vrot.slane %v6318, %v6494
      %v6496 = vlaneseq
      %v6497 = vshrl.u32 %v6496, 7
      %v6498 = vsub.s32 1, %v6497
      %v6499 = vrot.slane %v6318, %v6498
      %v6500 = vlaneseq
      %v6501 = vshrl.u32 %v6500, 7
      %v6502 = vsub.s32 0, %v6501
      %v6503 = vrot.slane %v6326, %v6502
      %v6504 = vlaneseq
      %v6505 = vshrl.u32 %v6504, 7
      %v6506 = vsub.s32 1, %v6505
      %v6507 = vrot.slane %v6326, %v6506
      %v6508 = vlaneseq
      %v6509 = vshrl.u32 %v6508, 7
      %v6510 = vsub.s32 0, %v6509
      %v6511 = vrot.slane %v6328, %v6510
      %v6512 = vlaneseq
      %v6513 = vshrl.u32 %v6512, 7
      %v6514 = vsub.s32 1, %v6513
      %v6515 = vrot.slane %v6328, %v6514
      %v6516 = vlaneseq
      %v6517 = vshrl.u32 %v6516, 7
      %v6518 = vsub.s32 0, %v6517
      %v6519 = vrot.slane %v6311, %v6518
      %v6520 = vlaneseq
      %v6521 = vshrl.u32 %v6520, 7
      %v6522 = vsub.s32 1, %v6521
      %v6523 = vrot.slane %v6311, %v6522
      %v6524 = vlaneseq
      %v6525 = vshrl.u32 %v6524, 7
      %v6526 = vsub.s32 0, %v6525
      %v6527 = vrot.slane %v6325, %v6526
      %v6528 = vlaneseq
      %v6529 = vshrl.u32 %v6528, 7
      %v6530 = vsub.s32 1, %v6529
      %v6531 = vrot.slane %v6325, %v6530
      %v6532 = vlaneseq
      %v6533 = vshrl.u32 %v6532, 7
      %v6534 = vsub.s32 0, %v6533
      %v6535 = vrot.slane %v6327, %v6534
      %v6536 = vlaneseq
      %v6537 = vshrl.u32 %v6536, 7
      %v6538 = vsub.s32 1, %v6537
      %v6539 = vrot.slane %v6327, %v6538
      %v6540 = vlaneseq
      %v6541 = vshrl.u32 %v6540, 7
      %v6542 = vsub.s32 0, %v6541
      %v6543 = vrot.slane %v6329, %v6542
      %v6544 = vlaneseq
      %v6545 = vshrl.u32 %v6544, 7
      %v6546 = vsub.s32 1, %v6545
      %v6547 = vrot.slane %v6329, %v6546
      %v6548 = vlaneseq
      %v6549 = vshrl.u32 %v6548, 7
      %v6550 = vsub.s32 0, %v6549
      %v6551 = vrot.slane %v6354, %v6550
      %v6552 = vlaneseq
      %v6553 = vshrl.u32 %v6552, 7
      %v6554 = vsub.s32 1, %v6553
      %v6555 = vrot.slane %v6354, %v6554
      %v6556 = vlaneseq
      %v6557 = vshrl.u32 %v6556, 7
      %v6558 = vsub.s32 0, %v6557
      %v6559 = vrot.slane %v6368, %v6558
      %v6560 = vlaneseq
      %v6561 = vshrl.u32 %v6560, 7
      %v6562 = vsub.s32 1, %v6561
      %v6563 = vrot.slane %v6368, %v6562
      %v6564 = vlaneseq
      %v6565 = vshrl.u32 %v6564, 7
      %v6566 = vsub.s32 0, %v6565
      %v6567 = vrot.slane %v6376, %v6566
      %v6568 = vlaneseq
      %v6569 = vshrl.u32 %v6568, 7
      %v6570 = vsub.s32 1, %v6569
      %v6571 = vrot.slane %v6376, %v6570
      %v6572 = vlaneseq
      %v6573 = vshrl.u32 %v6572, 7
      %v6574 = vsub.s32 0, %v6573
      %v6575 = vrot.slane %v6378, %v6574
      %v6576 = vlaneseq
      %v6577 = vshrl.u32 %v6576, 7
      %v6578 = vsub.s32 1, %v6577
      %v6579 = vrot.slane %v6378, %v6578
      %v6580 = vlaneseq
      %v6581 = vshrl.u32 %v6580, 7
      %v6582 = vsub.s32 0, %v6581
      %v6583 = vrot.slane %v6361, %v6582
      %v6584 = vlaneseq
      %v6585 = vshrl.u32 %v6584, 7
      %v6586 = vsub.s32 1, %v6585
      %v6587 = vrot.slane %v6361, %v6586
      %v6588 = vlaneseq
      %v6589 = vshrl.u32 %v6588, 7
      %v6590 = vsub.s32 0, %v6589
      %v6591 = vrot.slane %v6375, %v6590
      %v6592 = vlaneseq
      %v6593 = vshrl.u32 %v6592, 7
      %v6594 = vsub.s32 1, %v6593
      %v6595 = vrot.slane %v6375, %v6594
      %v6596 = vlaneseq
      %v6597 = vshrl.u32 %v6596, 7
      %v6598 = vsub.s32 0, %v6597
      %v6599 = vrot.slane %v6377, %v6598
      %v6600 = vlaneseq
      %v6601 = vshrl.u32 %v6600, 7
      %v6602 = vsub.s32 1, %v6601
      %v6603 = vrot.slane %v6377, %v6602
      %v6604 = vlaneseq
      %v6605 = vshrl.u32 %v6604, 7
      %v6606 = vsub.s32 0, %v6605
      %v6607 = vrot.slane %v6379, %v6606
      %v6608 = vlaneseq
      %v6609 = vshrl.u32 %v6608, 7
      %v6610 = vsub.s32 1, %v6609
      %v6611 = vrot.slane %v6379, %v6610
      %v6644 = vlaneseq
      %v6645 = vshrl.u32 %v6644, 7
      %v6646 = vsub.s32 0, %v6645
      %v6647 = vrot.slane %v6408, %v6646
      %v6648 = vlaneseq
      %v6649 = vshrl.u32 %v6648, 7
      %v6650 = vsub.s32 1, %v6649
      %v6651 = vrot.slane %v6408, %v6650
      %v6652 = vlaneseq
      %v6653 = vshrl.u32 %v6652, 7
      %v6654 = vsub.s32 0, %v6653
      %v6655 = vrot.slane %v6422, %v6654
      %v6656 = vlaneseq
      %v6657 = vshrl.u32 %v6656, 7
      %v6658 = vsub.s32 1, %v6657
      %v6659 = vrot.slane %v6422, %v6658
      %v6660 = vlaneseq
      %v6661 = vshrl.u32 %v6660, 7
      %v6662 = vsub.s32 0, %v6661
      %v6663 = vrot.slane %v6430, %v6662
      %v6664 = vlaneseq
      %v6665 = vshrl.u32 %v6664, 7
      %v6666 = vsub.s32 1, %v6665
      %v6667 = vrot.slane %v6430, %v6666
      %v6668 = vlaneseq
      %v6669 = vshrl.u32 %v6668, 7
      %v6670 = vsub.s32 0, %v6669
      %v6671 = vrot.slane %v6432, %v6670
      %v6672 = vlaneseq
      %v6673 = vshrl.u32 %v6672, 7
      %v6674 = vsub.s32 1, %v6673
      %v6675 = vrot.slane %v6432, %v6674
      %v6676 = vlaneseq
      %v6677 = vshrl.u32 %v6676, 7
      %v6678 = vsub.s32 0, %v6677
      %v6679 = vrot.slane %v6415, %v6678
      %v6680 = vlaneseq
      %v6681 = vshrl.u32 %v6680, 7
      %v6682 = vsub.s32 1, %v6681
      %v6683 = vrot.slane %v6415, %v6682
      %v6684 = vlaneseq
      %v6685 = vshrl.u32 %v6684, 7
      %v6686 = vsub.s32 0, %v6685
      %v6687 = vrot.slane %v6429, %v6686
      %v6688 = vlaneseq
      %v6689 = vshrl.u32 %v6688, 7
      %v6690 = vsub.s32 1, %v6689
      %v6691 = vrot.slane %v6429, %v6690
      %v6692 = vlaneseq
      %v6693 = vshrl.u32 %v6692, 7
      %v6694 = vsub.s32 0, %v6693
      %v6695 = vrot.slane %v6431, %v6694
      %v6696 = vlaneseq
      %v6697 = vshrl.u32 %v6696, 7
      %v6698 = vsub.s32 1, %v6697
      %v6699 = vrot.slane %v6431, %v6698
      %v6700 = vlaneseq
      %v6701 = vshrl.u32 %v6700, 7
      %v6702 = vsub.s32 0, %v6701
      %v6703 = vrot.slane %v6433, %v6702
      %v6704 = vlaneseq
      %v6705 = vshrl.u32 %v6704, 7
      %v6706 = vsub.s32 1, %v6705
      %v6707 = vrot.slane %v6433, %v6706
      %v6708 = vlaneseq
      %v6709 = vshrl.u32 %v6708, 7
      %v6710 = vsub.s32 0, %v6709
      %v6711 = vrot.slane %v6458, %v6710
      %v6712 = vlaneseq
      %v6713 = vshrl.u32 %v6712, 7
      %v6714 = vsub.s32 1, %v6713
      %v6715 = vrot.slane %v6458, %v6714
      %v6716 = vlaneseq
      %v6717 = vshrl.u32 %v6716, 7
      %v6718 = vsub.s32 0, %v6717
      %v6719 = vrot.slane %v6472, %v6718
      %v6720 = vlaneseq
      %v6721 = vshrl.u32 %v6720, 7
      %v6722 = vsub.s32 1, %v6721
      %v6723 = vrot.slane %v6472, %v6722
      %v6724 = vlaneseq
      %v6725 = vshrl.u32 %v6724, 7
      %v6726 = vsub.s32 0, %v6725
      %v6727 = vrot.slane %v6480, %v6726
      %v6728 = vlaneseq
      %v6729 = vshrl.u32 %v6728, 7
      %v6730 = vsub.s32 1, %v6729
      %v6731 = vrot.slane %v6480, %v6730
      %v6732 = vlaneseq
      %v6733 = vshrl.u32 %v6732, 7
      %v6734 = vsub.s32 0, %v6733
      %v6735 = vrot.slane %v6482, %v6734
      %v6736 = vlaneseq
      %v6737 = vshrl.u32 %v6736, 7
      %v6738 = vsub.s32 1, %v6737
      %v6739 = vrot.slane %v6482, %v6738
      %v6740 = vlaneseq
      %v6741 = vshrl.u32 %v6740, 7
      %v6742 = vsub.s32 0, %v6741
      %v6743 = vrot.slane %v6465, %v6742
      %v6744 = vlaneseq
      %v6745 = vshrl.u32 %v6744, 7
      %v6746 = vsub.s32 1, %v6745
      %v6747 = vrot.slane %v6465, %v6746
      %v6748 = vlaneseq
      %v6749 = vshrl.u32 %v6748, 7
      %v6750 = vsub.s32 0, %v6749
      %v6751 = vrot.slane %v6479, %v6750
      %v6752 = vlaneseq
      %v6753 = vshrl.u32 %v6752, 7
      %v6754 = vsub.s32 1, %v6753
      %v6755 = vrot.slane %v6479, %v6754
      %v6756 = vlaneseq
      %v6757 = vshrl.u32 %v6756, 7
      %v6758 = vsub.s32 0, %v6757
      %v6759 = vrot.slane %v6481, %v6758
      %v6760 = vlaneseq
      %v6761 = vshrl.u32 %v6760, 7
      %v6762 = vsub.s32 1, %v6761
      %v6763 = vrot.slane %v6481, %v6762
      %v6764 = vlaneseq
      %v6765 = vshrl.u32 %v6764, 7
      %v6766 = vsub.s32 0, %v6765
      %v6767 = vrot.slane %v6483, %v6766
      %v6768 = vlaneseq
      %v6769 = vshrl.u32 %v6768, 7
      %v6770 = vsub.s32 1, %v6769
      %v6771 = vrot.slane %v6483, %v6770
      %v6804 = vsel %vm1513, %v6487, %v6647
      %v6805 = vsel %vm1513, %v6491, %v6651
      %v6806 = vsel %vm1513, %v6495, %v6655
      %v6807 = vsel %vm1513, %v6499, %v6659
      %v6808 = vsel %vm1513, %v6503, %v6663
      %v6809 = vsel %vm1513, %v6507, %v6667
      %v6810 = vsel %vm1513, %v6511, %v6671
      %v6811 = vsel %vm1513, %v6515, %v6675
      %v6812 = vsel %vm1513, %v6519, %v6679
      %v6813 = vsel %vm1513, %v6523, %v6683
      %v6814 = vsel %vm1513, %v6527, %v6687
      %v6815 = vsel %vm1513, %v6531, %v6691
      %v6816 = vsel %vm1513, %v6535, %v6695
      %v6817 = vsel %vm1513, %v6539, %v6699
      %v6818 = vsel %vm1513, %v6543, %v6703
      %v6819 = vsel %vm1513, %v6547, %v6707
      %v6820 = vsel %vm1513, %v6551, %v6711
      %v6821 = vsel %vm1513, %v6555, %v6715
      %v6822 = vsel %vm1513, %v6559, %v6719
      %v6823 = vsel %vm1513, %v6563, %v6723
      %v6824 = vsel %vm1513, %v6567, %v6727
      %v6825 = vsel %vm1513, %v6571, %v6731
      %v6826 = vsel %vm1513, %v6575, %v6735
      %v6827 = vsel %vm1513, %v6579, %v6739
      %v6828 = vsel %vm1513, %v6583, %v6743
      %v6829 = vsel %vm1513, %v6587, %v6747
      %v6830 = vsel %vm1513, %v6591, %v6751
      %v6831 = vsel %vm1513, %v6595, %v6755
      %v6832 = vsel %vm1513, %v6599, %v6759
      %v6833 = vsel %vm1513, %v6603, %v6763
      %v6834 = vsel %vm1513, %v6607, %v6767
      %v6835 = vsel %vm1513, %v6611, %v6771
      %v6868 = vcombine.low %v6804, %v6805
      %v6870 = vunpack.c.l.s4 1983009808
      %v6871 = vunpack.c.0.s8 %v6870
      %v6872 = vlaneseq
      %v6873 = vshrl.u32 %v6872, 7
      %v6874 = vsub.s32 %v6871, %v6873
      %v6875 = vrot.slane %v6868, %v6874
      %v6876 = vcombine.low %v6806, %v6807
      %v6878 = vunpack.c.l.s4 1983009808
      %v6879 = vunpack.c.0.s8 %v6878
      %v6880 = vlaneseq
      %v6881 = vshrl.u32 %v6880, 7
      %v6882 = vsub.s32 %v6879, %v6881
      %v6883 = vrot.slane %v6876, %v6882
      %v6884 = vcombine.low %v6808, %v6809
      %v6886 = vunpack.c.l.s4 1983009808
      %v6887 = vunpack.c.0.s8 %v6886
      %v6888 = vlaneseq
      %v6889 = vshrl.u32 %v6888, 7
      %v6890 = vsub.s32 %v6887, %v6889
      %v6891 = vrot.slane %v6884, %v6890
      %v6892 = vcombine.low %v6810, %v6811
      %v6894 = vunpack.c.l.s4 1983009808
      %v6895 = vunpack.c.0.s8 %v6894
      %v6896 = vlaneseq
      %v6897 = vshrl.u32 %v6896, 7
      %v6898 = vsub.s32 %v6895, %v6897
      %v6899 = vrot.slane %v6892, %v6898
      %v6900 = vcombine.low %v6812, %v6813
      %v6902 = vunpack.c.l.s4 1983009808
      %v6903 = vunpack.c.0.s8 %v6902
      %v6904 = vlaneseq
      %v6905 = vshrl.u32 %v6904, 7
      %v6906 = vsub.s32 %v6903, %v6905
      %v6907 = vrot.slane %v6900, %v6906
      %v6908 = vcombine.low %v6814, %v6815
      %v6910 = vunpack.c.l.s4 1983009808
      %v6911 = vunpack.c.0.s8 %v6910
      %v6912 = vlaneseq
      %v6913 = vshrl.u32 %v6912, 7
      %v6914 = vsub.s32 %v6911, %v6913
      %v6915 = vrot.slane %v6908, %v6914
      %v6916 = vcombine.low %v6816, %v6817
      %v6918 = vunpack.c.l.s4 1983009808
      %v6919 = vunpack.c.0.s8 %v6918
      %v6920 = vlaneseq
      %v6921 = vshrl.u32 %v6920, 7
      %v6922 = vsub.s32 %v6919, %v6921
      %v6923 = vrot.slane %v6916, %v6922
      %v6924 = vcombine.low %v6818, %v6819
      %v6926 = vunpack.c.l.s4 1983009808
      %v6927 = vunpack.c.0.s8 %v6926
      %v6928 = vlaneseq
      %v6929 = vshrl.u32 %v6928, 7
      %v6930 = vsub.s32 %v6927, %v6929
      %v6931 = vrot.slane %v6924, %v6930
      %v6932 = vcombine.low %v6820, %v6821
      %v6934 = vunpack.c.l.s4 1983009808
      %v6935 = vunpack.c.0.s8 %v6934
      %v6936 = vlaneseq
      %v6937 = vshrl.u32 %v6936, 7
      %v6938 = vsub.s32 %v6935, %v6937
      %v6939 = vrot.slane %v6932, %v6938
      %v6940 = vcombine.low %v6822, %v6823
      %v6942 = vunpack.c.l.s4 1983009808
      %v6943 = vunpack.c.0.s8 %v6942
      %v6944 = vlaneseq
      %v6945 = vshrl.u32 %v6944, 7
      %v6946 = vsub.s32 %v6943, %v6945
      %v6947 = vrot.slane %v6940, %v6946
      %v6948 = vcombine.low %v6824, %v6825
      %v6950 = vunpack.c.l.s4 1983009808
      %v6951 = vunpack.c.0.s8 %v6950
      %v6952 = vlaneseq
      %v6953 = vshrl.u32 %v6952, 7
      %v6954 = vsub.s32 %v6951, %v6953
      %v6955 = vrot.slane %v6948, %v6954
      %v6956 = vcombine.low %v6826, %v6827
      %v6958 = vunpack.c.l.s4 1983009808
      %v6959 = vunpack.c.0.s8 %v6958
      %v6960 = vlaneseq
      %v6961 = vshrl.u32 %v6960, 7
      %v6962 = vsub.s32 %v6959, %v6961
      %v6963 = vrot.slane %v6956, %v6962
      %v6964 = vcombine.low %v6828, %v6829
      %v6966 = vunpack.c.l.s4 1983009808
      %v6967 = vunpack.c.0.s8 %v6966
      %v6968 = vlaneseq
      %v6969 = vshrl.u32 %v6968, 7
      %v6970 = vsub.s32 %v6967, %v6969
      %v6971 = vrot.slane %v6964, %v6970
      %v6972 = vcombine.low %v6830, %v6831
      %v6974 = vunpack.c.l.s4 1983009808
      %v6975 = vunpack.c.0.s8 %v6974
      %v6976 = vlaneseq
      %v6977 = vshrl.u32 %v6976, 7
      %v6978 = vsub.s32 %v6975, %v6977
      %v6979 = vrot.slane %v6972, %v6978
      %v6980 = vcombine.low %v6832, %v6833
      %v6982 = vunpack.c.l.s4 1983009808
      %v6983 = vunpack.c.0.s8 %v6982
      %v6984 = vlaneseq
      %v6985 = vshrl.u32 %v6984, 7
      %v6986 = vsub.s32 %v6983, %v6985
      %v6987 = vrot.slane %v6980, %v6986
      %v6988 = vcombine.low %v6834, %v6835
      %v6990 = vunpack.c.l.s4 1983009808
      %v6991 = vunpack.c.0.s8 %v6990
      %v6992 = vlaneseq
      %v6993 = vshrl.u32 %v6992, 7
      %v6994 = vsub.s32 %v6991, %v6993
      %v6995 = vrot.slane %v6988, %v6994
      %6996 = vst [vmem:[#allocation5] sm:$0x3] 0.0
      %6997 = vst [vmem:[#allocation5 + $0x8] sm:$0x3] 0.0
      %6998 = vst [vmem:[#allocation5 + $0x40] sm:$0xc] 0.0
      %6999 = vst [vmem:[#allocation5 + $0x48] sm:$0xc] 0.0
      %v7000 = vcombine.low %v6875, %v6875
      %v7001 = vcombine.low %v6883, %v6891
      %v7003 = vunpack.c.l.s4 1983009808
      %v7004 = vunpack.c.0.s8 %v7003
      %v7005 = vlaneseq
      %v7006 = vshrl.u32 %v7005, 7
      %v7007 = vsub.s32 %v7004, %v7006
      %v7008 = vrot.slane %v7000, %v7007
      %v7010 = vunpack.c.l.s4 1983009808
      %v7011 = vunpack.c.0.s8 %v7010
      %v7012 = vlaneseq
      %v7013 = vshrl.u32 %v7012, 7
      %v7014 = vsub.s32 %v7011, %v7013
      %v7015 = vrot.slane %v7001, %v7014
      %v7016 = vcombine.low %v7008, %v7015
      %v7017 = vcombine.high %v7008, %v7015
      %v7018 = vcombine.low %v6899, %v6907
      %v7019 = vcombine.low %v6915, %v6923
      %v7021 = vunpack.c.l.s4 1983009808
      %v7022 = vunpack.c.0.s8 %v7021
      %v7023 = vlaneseq
      %v7024 = vshrl.u32 %v7023, 7
      %v7025 = vsub.s32 %v7022, %v7024
      %v7026 = vrot.slane %v7018, %v7025
      %v7028 = vunpack.c.l.s4 1983009808
      %v7029 = vunpack.c.0.s8 %v7028
      %v7030 = vlaneseq
      %v7031 = vshrl.u32 %v7030, 7
      %v7032 = vsub.s32 %v7029, %v7031
      %v7033 = vrot.slane %v7019, %v7032
      %v7034 = vcombine.low %v7026, %v7033
      %v7035 = vcombine.high %v7026, %v7033
      %v7036 = vcombine.low %v6931, %v6939
      %v7037 = vcombine.low %v6947, %v6955
      %v7039 = vunpack.c.l.s4 1983009808
      %v7040 = vunpack.c.0.s8 %v7039
      %v7041 = vlaneseq
      %v7042 = vshrl.u32 %v7041, 7
      %v7043 = vsub.s32 %v7040, %v7042
      %v7044 = vrot.slane %v7036, %v7043
      %v7046 = vunpack.c.l.s4 1983009808
      %v7047 = vunpack.c.0.s8 %v7046
      %v7048 = vlaneseq
      %v7049 = vshrl.u32 %v7048, 7
      %v7050 = vsub.s32 %v7047, %v7049
      %v7051 = vrot.slane %v7037, %v7050
      %v7052 = vcombine.low %v7044, %v7051
      %v7053 = vcombine.high %v7044, %v7051
      %v7054 = vcombine.low %v6963, %v6971
      %v7055 = vcombine.low %v6979, %v6987
      %v7057 = vunpack.c.l.s4 1983009808
      %v7058 = vunpack.c.0.s8 %v7057
      %v7059 = vlaneseq
      %v7060 = vshrl.u32 %v7059, 7
      %v7061 = vsub.s32 %v7058, %v7060
      %v7062 = vrot.slane %v7054, %v7061
      %v7064 = vunpack.c.l.s4 1983009808
      %v7065 = vunpack.c.0.s8 %v7064
      %v7066 = vlaneseq
      %v7067 = vshrl.u32 %v7066, 7
      %v7068 = vsub.s32 %v7065, %v7067
      %v7069 = vrot.slane %v7055, %v7068
      %v7070 = vcombine.low %v7062, %v7069
      %v7071 = vcombine.high %v7062, %v7069
      %v7073 = vunpack.c.l.s4 1983009808
      %v7074 = vunpack.c.0.s8 %v7073
      %v7075 = vlaneseq
      %v7076 = vshrl.u32 %v7075, 7
      %v7077 = vsub.s32 %v7074, %v7076
      %v7078 = vrot.slane %v6995, %v7077
      %v7079 = vcombine.high %v7078, %v7078
      %7090 = vst [vmem:[#allocation5] sm:$0xfc] %v7016
      %7091 = vst [vmem:[#allocation5 + $0x8] sm:$0xfc] %v7017
      %7092 = vst [vmem:[#allocation5 + $0x10] sm:$0xff] %v7034
      %7093 = vst [vmem:[#allocation5 + $0x18] sm:$0xff] %v7035
      %7094 = vst [vmem:[#allocation5 + $0x20] sm:$0xff] %v7052
      %7095 = vst [vmem:[#allocation5 + $0x28] sm:$0xff] %v7053
      %7096 = vst [vmem:[#allocation5 + $0x30] sm:$0xff] %v7070
      %7097 = vst [vmem:[#allocation5 + $0x38] sm:$0xff] %v7071
      %7098 = vst [vmem:[#allocation5 + $0x40] sm:$0x3] %v7078
      %7099 = vst [vmem:[#allocation5 + $0x48] sm:$0x3] %v7079
      %v7100 = vld [vmem:[#allocation5] sm:$0xff]
      %v7101 = vld [vmem:[#allocation5 + $0x8] sm:$0xff]
      %v7102 = vld [vmem:[#allocation5 + $0x10] sm:$0xff]
      %v7103 = vld [vmem:[#allocation5 + $0x18] sm:$0xff]
      %v7104 = vld [vmem:[#allocation5 + $0x20] sm:$0xff]
      %v7105 = vld [vmem:[#allocation5 + $0x28] sm:$0xff]
      %v7106 = vld [vmem:[#allocation5 + $0x30] sm:$0xff]
      %v7107 = vld [vmem:[#allocation5 + $0x38] sm:$0xff]
      %v7108 = vpack.c.bf16 %v7102, %v7100
      %v7109 = vpack.c.bf16 %v7103, %v7101
      %v7110 = vpack.c.bf16 %v7106, %v7104
      %v7111 = vpack.c.bf16 %v7107, %v7105
      %v7112 = vld [vmem:[%s13] sm:$0xf]
      %v7113 = vld [vmem:[%s13 + $0x4] sm:$0xf]
      %v7114 = vld [vmem:[%s13 + $0x8] sm:$0xf]
      %v7115 = vld [vmem:[%s13 + $0xc] sm:$0xf]
      %v7116 = vld [vmem:[%s13 + $0x10] sm:$0xf]
      %v7117 = vld [vmem:[%s13 + $0x14] sm:$0xf]
      %v7118 = vld [vmem:[%s13 + $0x18] sm:$0xf]
      %v7119 = vld [vmem:[%s13 + $0x1c] sm:$0xf]
      %v7120 = vld [vmem:[%s13 + $0x20] sm:$0xf]
      %v7121 = vld [vmem:[%s13 + $0x24] sm:$0xf]
      %v7122 = vld [vmem:[%s13 + $0x28] sm:$0xf]
      %v7123 = vld [vmem:[%s13 + $0x2c] sm:$0xf]
      %v7124 = vld [vmem:[%s13 + $0x30] sm:$0xf]
      %v7125 = vld [vmem:[%s13 + $0x34] sm:$0xf]
      %v7126 = vld [vmem:[%s13 + $0x38] sm:$0xf]
      %v7127 = vld [vmem:[%s13 + $0x3c] sm:$0xf]
      %v7128 = vld [vmem:[%s13 + $0x40] sm:$0xf]
      %v7129 = vld [vmem:[%s13 + $0x44] sm:$0xf]
      %v7130 = vld [vmem:[%s13 + $0x48] sm:$0xf]
      %v7131 = vld [vmem:[%s13 + $0x4c] sm:$0xf]
      %v7132 = vld [vmem:[%s13 + $0x50] sm:$0xf]
      %v7133 = vld [vmem:[%s13 + $0x54] sm:$0xf]
      %v7134 = vld [vmem:[%s13 + $0x58] sm:$0xf]
      %v7135 = vld [vmem:[%s13 + $0x5c] sm:$0xf]
      %v7136 = vld [vmem:[%s13 + $0x60] sm:$0xf]
      %v7137 = vld [vmem:[%s13 + $0x64] sm:$0xf]
      %v7138 = vld [vmem:[%s13 + $0x68] sm:$0xf]
      %v7139 = vld [vmem:[%s13 + $0x6c] sm:$0xf]
      %v7140 = vld [vmem:[%s13 + $0x70] sm:$0xf]
      %v7141 = vld [vmem:[%s13 + $0x74] sm:$0xf]
      %v7142 = vld [vmem:[%s13 + $0x78] sm:$0xf]
      %v7143 = vld [vmem:[%s13 + $0x7c] sm:$0xf]
      %v7144 = vld [vmem:[#allocation5] sm:$0xfe]
      %v7145 = vld [vmem:[#allocation5 + $0x8] sm:$0xfe]
      %v7146 = vld [vmem:[#allocation5 + $0x40] sm:$0x1]
      %v7147 = vld [vmem:[#allocation5 + $0x48] sm:$0x1]
      %v7148 = vpack.c.bf16 %v7102, %v7144
      %v7149 = vpack.c.bf16 %v7103, %v7145
      %v7150 = vpack.c.bf16 %v7146, %v7146
      %v7151 = vpack.c.bf16 %v7147, %v7147
      %s7152 = scalar_lea.vmem %s13, 128
      %v7153 = vld [vmem:[%s7152] sm:$0xf]
      %v7154 = vld [vmem:[%s7152 + $0x4] sm:$0xf]
      %v7155 = vld [vmem:[%s7152 + $0x8] sm:$0xf]
      %v7156 = vld [vmem:[%s7152 + $0xc] sm:$0xf]
      %v7157 = vld [vmem:[%s7152 + $0x10] sm:$0xf]
      %v7158 = vld [vmem:[%s7152 + $0x14] sm:$0xf]
      %v7159 = vld [vmem:[%s7152 + $0x18] sm:$0xf]
      %v7160 = vld [vmem:[%s7152 + $0x1c] sm:$0xf]
      %v7161 = vld [vmem:[%s7152 + $0x20] sm:$0xf]
      %v7162 = vld [vmem:[%s7152 + $0x24] sm:$0xf]
      %v7163 = vld [vmem:[%s7152 + $0x28] sm:$0xf]
      %v7164 = vld [vmem:[%s7152 + $0x2c] sm:$0xf]
      %v7165 = vld [vmem:[%s7152 + $0x30] sm:$0xf]
      %v7166 = vld [vmem:[%s7152 + $0x34] sm:$0xf]
      %v7167 = vld [vmem:[%s7152 + $0x38] sm:$0xf]
      %v7168 = vld [vmem:[%s7152 + $0x3c] sm:$0xf]
      %v7169 = vld [vmem:[%s7152 + $0x40] sm:$0xf]
      %v7170 = vld [vmem:[%s7152 + $0x44] sm:$0xf]
      %v7171 = vld [vmem:[%s7152 + $0x48] sm:$0xf]
      %v7172 = vld [vmem:[%s7152 + $0x4c] sm:$0xf]
      %v7173 = vld [vmem:[%s7152 + $0x50] sm:$0xf]
      %v7174 = vld [vmem:[%s7152 + $0x54] sm:$0xf]
      %v7175 = vld [vmem:[%s7152 + $0x58] sm:$0xf]
      %v7176 = vld [vmem:[%s7152 + $0x5c] sm:$0xf]
      %v7177 = vld [vmem:[%s7152 + $0x60] sm:$0xf]
      %v7178 = vld [vmem:[%s7152 + $0x64] sm:$0xf]
      %v7179 = vld [vmem:[%s7152 + $0x68] sm:$0xf]
      %v7180 = vld [vmem:[%s7152 + $0x6c] sm:$0xf]
      %v7181 = vld [vmem:[%s7152 + $0x70] sm:$0xf]
      %v7182 = vld [vmem:[%s7152 + $0x74] sm:$0xf]
      %v7183 = vld [vmem:[%s7152 + $0x78] sm:$0xf]
      %v7184 = vld [vmem:[%s7152 + $0x7c] sm:$0xf]
      %v7186 = vshrl.u32 %v7148, 16
      %v7188 = vshll.u32 %v7148, 16
      %v7190 = vrot.slane %v7188, 1
      %v7191 = vor.u32 %v7186, %v7190
      %v7193 = vshll.u32 %v7110, 16
      %v7195 = vrot.slane %v7193, 1
      %v7196 = vsel %vm4170, %v7191, %v7195
      %v7198 = vshrl.u32 %v7149, 16
      %v7200 = vshll.u32 %v7149, 16
      %v7202 = vrot.slane %v7200, 1
      %v7203 = vor.u32 %v7198, %v7202
      %v7205 = vshll.u32 %v7111, 16
      %v7207 = vrot.slane %v7205, 1
      %v7208 = vsel %vm4170, %v7203, %v7207
      %v7209 = vshrl.u32 %v7110, 16
      %v7211 = vor.u32 %v7209, %v7195
      %v7213 = vshll.u32 %v7150, 16
      %v7215 = vrot.slane %v7213, 1
      %v7216 = vsel %vm4170, %v7211, %v7215
      %v7217 = vshrl.u32 %v7111, 16
      %v7219 = vor.u32 %v7217, %v7207
      %v7221 = vshll.u32 %v7151, 16
      %v7223 = vrot.slane %v7221, 1
      %v7224 = vsel %vm4170, %v7219, %v7223
      %v7261 = vunpack.c.l.b16 %v7153
      %v7262 = vunpack.c.l.b16 %v7154
      %v7263 = vunpack.c.l.b16 %v7155
      %v7264 = vunpack.c.l.b16 %v7156
      %v7265 = vunpack.c.l.b16 %v7157
      %v7266 = vunpack.c.l.b16 %v7158
      %v7267 = vunpack.c.l.b16 %v7159
      %v7268 = vunpack.c.l.b16 %v7160
      %v7269 = vunpack.c.l.b16 %v7161
      %v7270 = vunpack.c.l.b16 %v7162
      %v7271 = vunpack.c.l.b16 %v7163
      %v7272 = vunpack.c.l.b16 %v7164
      %v7273 = vunpack.c.l.b16 %v7165
      %v7274 = vunpack.c.l.b16 %v7166
      %v7275 = vunpack.c.l.b16 %v7167
      %v7276 = vunpack.c.l.b16 %v7168
      %v7277 = vunpack.c.l.b16 %v7169
      %v7278 = vunpack.c.l.b16 %v7170
      %v7279 = vunpack.c.l.b16 %v7171
      %v7280 = vunpack.c.l.b16 %v7172
      %v7281 = vunpack.c.l.b16 %v7173
      %v7282 = vunpack.c.l.b16 %v7174
      %v7283 = vunpack.c.l.b16 %v7175
      %v7284 = vunpack.c.l.b16 %v7176
      %v7285 = vunpack.c.l.b16 %v7177
      %v7286 = vunpack.c.l.b16 %v7178
      %v7287 = vunpack.c.l.b16 %v7179
      %v7288 = vunpack.c.l.b16 %v7180
      %v7289 = vunpack.c.l.b16 %v7181
      %v7290 = vunpack.c.l.b16 %v7182
      %v7291 = vunpack.c.l.b16 %v7183
      %v7292 = vunpack.c.l.b16 %v7184
      %v7293 = vpack.c.b16 %v7262, %v7261
      %v7294 = vpack.c.b16 %v7264, %v7263
      %v7295 = vpack.c.b16 %v7266, %v7265
      %v7296 = vpack.c.b16 %v7268, %v7267
      %v7297 = vpack.c.b16 %v7270, %v7269
      %v7298 = vpack.c.b16 %v7272, %v7271
      %v7299 = vpack.c.b16 %v7274, %v7273
      %v7300 = vpack.c.b16 %v7276, %v7275
      %v7301 = vpack.c.b16 %v7278, %v7277
      %v7302 = vpack.c.b16 %v7280, %v7279
      %v7303 = vpack.c.b16 %v7282, %v7281
      %v7304 = vpack.c.b16 %v7284, %v7283
      %v7305 = vpack.c.b16 %v7286, %v7285
      %v7306 = vpack.c.b16 %v7288, %v7287
      %v7307 = vpack.c.b16 %v7290, %v7289
      %v7308 = vpack.c.b16 %v7292, %v7291
      %7325 = vmatprep.subr.bf16.mxu0 0
      %7326 = vmatpush1.bf16.msra.mxu0 %v7293
      %7327 = vmatprep.subr.bf16.mxu0 0
      %7328 = vmatpush1.bf16.msra.mxu0 %v7294
      %7329 = vmatprep.subr.bf16.mxu0 0
      %7330 = vmatpush1.bf16.msra.mxu0 %v7295
      %7331 = vmatprep.subr.bf16.mxu0 0
      %7332 = vmatpush1.bf16.msra.mxu0 %v7296
      %7333 = vmatprep.subr.bf16.mxu0 0
      %7334 = vmatpush1.bf16.msra.mxu0 %v7297
      %7335 = vmatprep.subr.bf16.mxu0 0
      %7336 = vmatpush1.bf16.msra.mxu0 %v7298
      %7337 = vmatprep.subr.bf16.mxu0 0
      %7338 = vmatpush1.bf16.msra.mxu0 %v7299
      %7339 = vmatprep.subr.bf16.mxu0 0
      %7340 = vmatpush1.bf16.msra.mxu0 %v7300
      %7341 = vmatprep.subr.bf16.mxu0 0
      %7342 = vmatpush1.bf16.msra.mxu0 %v7301
      %7343 = vmatprep.subr.bf16.mxu0 0
      %7344 = vmatpush1.bf16.msra.mxu0 %v7302
      %7345 = vmatprep.subr.bf16.mxu0 0
      %7346 = vmatpush1.bf16.msra.mxu0 %v7303
      %7347 = vmatprep.subr.bf16.mxu0 0
      %7348 = vmatpush1.bf16.msra.mxu0 %v7304
      %7349 = vmatprep.subr.bf16.mxu0 0
      %7350 = vmatpush1.bf16.msra.mxu0 %v7305
      %7351 = vmatprep.subr.bf16.mxu0 0
      %7352 = vmatpush1.bf16.msra.mxu0 %v7306
      %7353 = vmatprep.subr.bf16.mxu0 0
      %7354 = vmatpush1.bf16.msra.mxu0 %v7307
      %7355 = vmatprep.subr.bf16.mxu0 0
      %7356 = vmatpush1.bf16.msra.mxu0 %v7308
      %7357 = vmatprep.mubr.bf16.mxu0 %v7208
      %7358 = vmatmul.mubr.bf16.gmra.mrb[0].mxu0 %v7196
      %v7359 = vpop.f32.mrb[0].mxu0
      %v7360 = vadd.f32 0.0, %v7359
      %v7361 = vpop.f32.mrb[0].mxu0
      %v7362 = vpop.f32.mrb[0].mxu0
      %v7363 = vadd.f32 0.0, %v7362
      %v7364 = vpop.f32.mrb[0].mxu0
      %7365 = vmatprep.mubr.bf16.mxu0 %v7224
      %7366 = vmatmul.mubr.bf16.gmra.mrb[0].mxu0 %v7216
      %v7367 = vpop.f32.mrb[0].mxu0
      %v7368 = vadd.f32 0.0, %v7367
      %v7369 = vpop.f32.mrb[0].mxu0
      %v7370 = vpop.f32.mrb[0].mxu0
      %v7371 = vadd.f32 0.0, %v7370
      %v7372 = vpop.f32.mrb[0].mxu0
      %7373 = vdwg.mxu0
      %v7406 = vunpack.c.l.b16 %v7112
      %v7407 = vunpack.c.l.b16 %v7113
      %v7408 = vunpack.c.l.b16 %v7114
      %v7409 = vunpack.c.l.b16 %v7115
      %v7410 = vunpack.c.l.b16 %v7116
      %v7411 = vunpack.c.l.b16 %v7117
      %v7412 = vunpack.c.l.b16 %v7118
      %v7413 = vunpack.c.l.b16 %v7119
      %v7414 = vunpack.c.l.b16 %v7120
      %v7415 = vunpack.c.l.b16 %v7121
      %v7416 = vunpack.c.l.b16 %v7122
      %v7417 = vunpack.c.l.b16 %v7123
      %v7418 = vunpack.c.l.b16 %v7124
      %v7419 = vunpack.c.l.b16 %v7125
      %v7420 = vunpack.c.l.b16 %v7126
      %v7421 = vunpack.c.l.b16 %v7127
      %v7422 = vunpack.c.l.b16 %v7128
      %v7423 = vunpack.c.l.b16 %v7129
      %v7424 = vunpack.c.l.b16 %v7130
      %v7425 = vunpack.c.l.b16 %v7131
      %v7426 = vunpack.c.l.b16 %v7132
      %v7427 = vunpack.c.l.b16 %v7133
      %v7428 = vunpack.c.l.b16 %v7134
      %v7429 = vunpack.c.l.b16 %v7135
      %v7430 = vunpack.c.l.b16 %v7136
      %v7431 = vunpack.c.l.b16 %v7137
      %v7432 = vunpack.c.l.b16 %v7138
      %v7433 = vunpack.c.l.b16 %v7139
      %v7434 = vunpack.c.l.b16 %v7140
      %v7435 = vunpack.c.l.b16 %v7141
      %v7436 = vunpack.c.l.b16 %v7142
      %v7437 = vunpack.c.l.b16 %v7143
      %v7438 = vpack.c.b16 %v7407, %v7406
      %v7439 = vpack.c.b16 %v7409, %v7408
      %v7440 = vpack.c.b16 %v7411, %v7410
      %v7441 = vpack.c.b16 %v7413, %v7412
      %v7442 = vpack.c.b16 %v7415, %v7414
      %v7443 = vpack.c.b16 %v7417, %v7416
      %v7444 = vpack.c.b16 %v7419, %v7418
      %v7445 = vpack.c.b16 %v7421, %v7420
      %v7446 = vpack.c.b16 %v7423, %v7422
      %v7447 = vpack.c.b16 %v7425, %v7424
      %v7448 = vpack.c.b16 %v7427, %v7426
      %v7449 = vpack.c.b16 %v7429, %v7428
      %v7450 = vpack.c.b16 %v7431, %v7430
      %v7451 = vpack.c.b16 %v7433, %v7432
      %v7452 = vpack.c.b16 %v7435, %v7434
      %v7453 = vpack.c.b16 %v7437, %v7436
      %7470 = vmatprep.subr.bf16.mxu0 0
      %7471 = vmatpush1.bf16.msra.mxu0 %v7438
      %7472 = vmatprep.subr.bf16.mxu0 0
      %7473 = vmatpush1.bf16.msra.mxu0 %v7439
      %7474 = vmatprep.subr.bf16.mxu0 0
      %7475 = vmatpush1.bf16.msra.mxu0 %v7440
      %7476 = vmatprep.subr.bf16.mxu0 0
      %7477 = vmatpush1.bf16.msra.mxu0 %v7441
      %7478 = vmatprep.subr.bf16.mxu0 0
      %7479 = vmatpush1.bf16.msra.mxu0 %v7442
      %7480 = vmatprep.subr.bf16.mxu0 0
      %7481 = vmatpush1.bf16.msra.mxu0 %v7443
      %7482 = vmatprep.subr.bf16.mxu0 0
      %7483 = vmatpush1.bf16.msra.mxu0 %v7444
      %7484 = vmatprep.subr.bf16.mxu0 0
      %7485 = vmatpush1.bf16.msra.mxu0 %v7445
      %7486 = vmatprep.subr.bf16.mxu0 0
      %7487 = vmatpush1.bf16.msra.mxu0 %v7446
      %7488 = vmatprep.subr.bf16.mxu0 0
      %7489 = vmatpush1.bf16.msra.mxu0 %v7447
      %7490 = vmatprep.subr.bf16.mxu0 0
      %7491 = vmatpush1.bf16.msra.mxu0 %v7448
      %7492 = vmatprep.subr.bf16.mxu0 0
      %7493 = vmatpush1.bf16.msra.mxu0 %v7449
      %7494 = vmatprep.subr.bf16.mxu0 0
      %7495 = vmatpush1.bf16.msra.mxu0 %v7450
      %7496 = vmatprep.subr.bf16.mxu0 0
      %7497 = vmatpush1.bf16.msra.mxu0 %v7451
      %7498 = vmatprep.subr.bf16.mxu0 0
      %7499 = vmatpush1.bf16.msra.mxu0 %v7452
      %7500 = vmatprep.subr.bf16.mxu0 0
      %7501 = vmatpush1.bf16.msra.mxu0 %v7453
      %7502 = vmatprep.mubr.bf16.mxu0 %v7109
      %7503 = vmatmul.mubr.bf16.gmra.mrb[0].mxu0 %v7108
      %v7504 = vpop.f32.mrb[0].mxu0
      %v7505 = vadd.f32 %v7360, %v7504
      %v7506 = vpop.f32.mrb[0].mxu0
      %v7507 = vpop.f32.mrb[0].mxu0
      %v7508 = vadd.f32 %v7363, %v7507
      %v7509 = vpop.f32.mrb[0].mxu0
      %7510 = vmatprep.mubr.bf16.mxu0 %v7111
      %7511 = vmatmul.mubr.bf16.gmra.mrb[0].mxu0 %v7110
      %v7512 = vpop.f32.mrb[0].mxu0
      %v7513 = vadd.f32 %v7368, %v7512
      %v7514 = vpop.f32.mrb[0].mxu0
      %v7515 = vpop.f32.mrb[0].mxu0
      %v7516 = vadd.f32 %v7371, %v7515
      %v7517 = vpop.f32.mrb[0].mxu0
      %7518 = vdwg.mxu0
      %v7519 = vld [vmem:[#allocation5] sm:$0xfc]
      %v7520 = vld [vmem:[#allocation5 + $0x8] sm:$0xfc]
      %v7521 = vld [vmem:[#allocation5 + $0x40] sm:$0x3]
      %v7522 = vld [vmem:[#allocation5 + $0x48] sm:$0x3]
      %v7523 = vpack.c.bf16 %v7102, %v7519
      %v7524 = vpack.c.bf16 %v7103, %v7520
      %v7525 = vpack.c.bf16 %v7521, %v7521
      %v7526 = vpack.c.bf16 %v7522, %v7522
      %s7527 = scalar_lea.vmem %s13, 256
      %v7528 = vld [vmem:[%s7527] sm:$0xf]
      %v7529 = vld [vmem:[%s7527 + $0x4] sm:$0xf]
      %v7530 = vld [vmem:[%s7527 + $0x8] sm:$0xf]
      %v7531 = vld [vmem:[%s7527 + $0xc] sm:$0xf]
      %v7532 = vld [vmem:[%s7527 + $0x10] sm:$0xf]
      %v7533 = vld [vmem:[%s7527 + $0x14] sm:$0xf]
      %v7534 = vld [vmem:[%s7527 + $0x18] sm:$0xf]
      %v7535 = vld [vmem:[%s7527 + $0x1c] sm:$0xf]
      %v7536 = vld [vmem:[%s7527 + $0x20] sm:$0xf]
      %v7537 = vld [vmem:[%s7527 + $0x24] sm:$0xf]
      %v7538 = vld [vmem:[%s7527 + $0x28] sm:$0xf]
      %v7539 = vld [vmem:[%s7527 + $0x2c] sm:$0xf]
      %v7540 = vld [vmem:[%s7527 + $0x30] sm:$0xf]
      %v7541 = vld [vmem:[%s7527 + $0x34] sm:$0xf]
      %v7542 = vld [vmem:[%s7527 + $0x38] sm:$0xf]
      %v7543 = vld [vmem:[%s7527 + $0x3c] sm:$0xf]
      %v7544 = vld [vmem:[%s7527 + $0x40] sm:$0xf]
      %v7545 = vld [vmem:[%s7527 + $0x44] sm:$0xf]
      %v7546 = vld [vmem:[%s7527 + $0x48] sm:$0xf]
      %v7547 = vld [vmem:[%s7527 + $0x4c] sm:$0xf]
      %v7548 = vld [vmem:[%s7527 + $0x50] sm:$0xf]
      %v7549 = vld [vmem:[%s7527 + $0x54] sm:$0xf]
      %v7550 = vld [vmem:[%s7527 + $0x58] sm:$0xf]
      %v7551 = vld [vmem:[%s7527 + $0x5c] sm:$0xf]
      %v7552 = vld [vmem:[%s7527 + $0x60] sm:$0xf]
      %v7553 = vld [vmem:[%s7527 + $0x64] sm:$0xf]
      %v7554 = vld [vmem:[%s7527 + $0x68] sm:$0xf]
      %v7555 = vld [vmem:[%s7527 + $0x6c] sm:$0xf]
      %v7556 = vld [vmem:[%s7527 + $0x70] sm:$0xf]
      %v7557 = vld [vmem:[%s7527 + $0x74] sm:$0xf]
      %v7558 = vld [vmem:[%s7527 + $0x78] sm:$0xf]
      %v7559 = vld [vmem:[%s7527 + $0x7c] sm:$0xf]
      %v7566 = vrot.slane %v7523, 1
      %v7567 = vrot.slane %v7110, 1
      %v7568 = vsel %vm4648, %v7566, %v7567
      %v7569 = vrot.slane %v7524, 1
      %v7570 = vrot.slane %v7111, 1
      %v7571 = vsel %vm4648, %v7569, %v7570
      %v7572 = vrot.slane %v7525, 1
      %v7573 = vsel %vm4648, %v7567, %v7572
      %v7574 = vrot.slane %v7526, 1
      %v7575 = vsel %vm4648, %v7570, %v7574
      %v7612 = vunpack.c.l.b16 %v7528
      %v7613 = vunpack.c.l.b16 %v7529
      %v7614 = vunpack.c.l.b16 %v7530
      %v7615 = vunpack.c.l.b16 %v7531
      %v7616 = vunpack.c.l.b16 %v7532
      %v7617 = vunpack.c.l.b16 %v7533
      %v7618 = vunpack.c.l.b16 %v7534
      %v7619 = vunpack.c.l.b16 %v7535
      %v7620 = vunpack.c.l.b16 %v7536
      %v7621 = vunpack.c.l.b16 %v7537
      %v7622 = vunpack.c.l.b16 %v7538
      %v7623 = vunpack.c.l.b16 %v7539
      %v7624 = vunpack.c.l.b16 %v7540
      %v7625 = vunpack.c.l.b16 %v7541
      %v7626 = vunpack.c.l.b16 %v7542
      %v7627 = vunpack.c.l.b16 %v7543
      %v7628 = vunpack.c.l.b16 %v7544
      %v7629 = vunpack.c.l.b16 %v7545
      %v7630 = vunpack.c.l.b16 %v7546
      %v7631 = vunpack.c.l.b16 %v7547
      %v7632 = vunpack.c.l.b16 %v7548
      %v7633 = vunpack.c.l.b16 %v7549
      %v7634 = vunpack.c.l.b16 %v7550
      %v7635 = vunpack.c.l.b16 %v7551
      %v7636 = vunpack.c.l.b16 %v7552
      %v7637 = vunpack.c.l.b16 %v7553
      %v7638 = vunpack.c.l.b16 %v7554
      %v7639 = vunpack.c.l.b16 %v7555
      %v7640 = vunpack.c.l.b16 %v7556
      %v7641 = vunpack.c.l.b16 %v7557
      %v7642 = vunpack.c.l.b16 %v7558
      %v7643 = vunpack.c.l.b16 %v7559
      %v7644 = vpack.c.b16 %v7613, %v7612
      %v7645 = vpack.c.b16 %v7615, %v7614
      %v7646 = vpack.c.b16 %v7617, %v7616
      %v7647 = vpack.c.b16 %v7619, %v7618
      %v7648 = vpack.c.b16 %v7621, %v7620
      %v7649 = vpack.c.b16 %v7623, %v7622
      %v7650 = vpack.c.b16 %v7625, %v7624
      %v7651 = vpack.c.b16 %v7627, %v7626
      %v7652 = vpack.c.b16 %v7629, %v7628
      %v7653 = vpack.c.b16 %v7631, %v7630
      %v7654 = vpack.c.b16 %v7633, %v7632
      %v7655 = vpack.c.b16 %v7635, %v7634
      %v7656 = vpack.c.b16 %v7637, %v7636
      %v7657 = vpack.c.b16 %v7639, %v7638
      %v7658 = vpack.c.b16 %v7641, %v7640
      %v7659 = vpack.c.b16 %v7643, %v7642
      %7676 = vmatprep.subr.bf16.mxu0 0
      %7677 = vmatpush1.bf16.msra.mxu0 %v7644
      %7678 = vmatprep.subr.bf16.mxu0 0
      %7679 = vmatpush1.bf16.msra.mxu0 %v7645
      %7680 = vmatprep.subr.bf16.mxu0 0
      %7681 = vmatpush1.bf16.msra.mxu0 %v7646
      %7682 = vmatprep.subr.bf16.mxu0 0
      %7683 = vmatpush1.bf16.msra.mxu0 %v7647
      %7684 = vmatprep.subr.bf16.mxu0 0
      %7685 = vmatpush1.bf16.msra.mxu0 %v7648
      %7686 = vmatprep.subr.bf16.mxu0 0
      %7687 = vmatpush1.bf16.msra.mxu0 %v7649
      %7688 = vmatprep.subr.bf16.mxu0 0
      %7689 = vmatpush1.bf16.msra.mxu0 %v7650
      %7690 = vmatprep.subr.bf16.mxu0 0
      %7691 = vmatpush1.bf16.msra.mxu0 %v7651
      %7692 = vmatprep.subr.bf16.mxu0 0
      %7693 = vmatpush1.bf16.msra.mxu0 %v7652
      %7694 = vmatprep.subr.bf16.mxu0 0
      %7695 = vmatpush1.bf16.msra.mxu0 %v7653
      %7696 = vmatprep.subr.bf16.mxu0 0
      %7697 = vmatpush1.bf16.msra.mxu0 %v7654
      %7698 = vmatprep.subr.bf16.mxu0 0
      %7699 = vmatpush1.bf16.msra.mxu0 %v7655
      %7700 = vmatprep.subr.bf16.mxu0 0
      %7701 = vmatpush1.bf16.msra.mxu0 %v7656
      %7702 = vmatprep.subr.bf16.mxu0 0
      %7703 = vmatpush1.bf16.msra.mxu0 %v7657
      %7704 = vmatprep.subr.bf16.mxu0 0
      %7705 = vmatpush1.bf16.msra.mxu0 %v7658
      %7706 = vmatprep.subr.bf16.mxu0 0
      %7707 = vmatpush1.bf16.msra.mxu0 %v7659
      %7708 = vmatprep.mubr.bf16.mxu0 %v7571
      %7709 = vmatmul.mubr.bf16.gmra.mrb[0].mxu0 %v7568
      %v7710 = vpop.f32.mrb[0].mxu0
      %v7711 = vadd.f32 0.0, %v7710
      %v7712 = vpop.f32.mrb[0].mxu0
      %v7713 = vpop.f32.mrb[0].mxu0
      %v7714 = vadd.f32 0.0, %v7713
      %v7715 = vpop.f32.mrb[0].mxu0
      %7716 = vmatprep.mubr.bf16.mxu0 %v7575
      %7717 = vmatmul.mubr.bf16.gmra.mrb[0].mxu0 %v7573
      %v7718 = vpop.f32.mrb[0].mxu0
      %v7719 = vadd.f32 0.0, %v7718
      %v7720 = vpop.f32.mrb[0].mxu0
      %v7721 = vpop.f32.mrb[0].mxu0
      %v7722 = vadd.f32 0.0, %v7721
      %v7723 = vpop.f32.mrb[0].mxu0
      %7724 = vdwg.mxu0
      %v7725 = vadd.f32 %v7505, %v7711
      %v7726 = vadd.f32 %v7508, %v7714
      %v7727 = vadd.f32 %v7513, %v7719
      %v7728 = vadd.f32 %v7516, %v7722
      %v7729 = vld [vmem:[#allocation5] sm:$0xf8]
      %v7730 = vld [vmem:[#allocation5 + $0x8] sm:$0xf8]
      %v7731 = vld [vmem:[#allocation5 + $0x40] sm:$0x7]
      %v7732 = vld [vmem:[#allocation5 + $0x48] sm:$0x7]
      %v7733 = vpack.c.bf16 %v7102, %v7729
      %v7734 = vpack.c.bf16 %v7103, %v7730
      %v7735 = vpack.c.bf16 %v7731, %v7731
      %v7736 = vpack.c.bf16 %v7732, %v7732
      %s7737 = scalar_lea.vmem %s13, 384
      %v7738 = vld [vmem:[%s7737] sm:$0xf]
      %v7739 = vld [vmem:[%s7737 + $0x4] sm:$0xf]
      %v7740 = vld [vmem:[%s7737 + $0x8] sm:$0xf]
      %v7741 = vld [vmem:[%s7737 + $0xc] sm:$0xf]
      %v7742 = vld [vmem:[%s7737 + $0x10] sm:$0xf]
      %v7743 = vld [vmem:[%s7737 + $0x14] sm:$0xf]
      %v7744 = vld [vmem:[%s7737 + $0x18] sm:$0xf]
      %v7745 = vld [vmem:[%s7737 + $0x1c] sm:$0xf]
      %v7746 = vld [vmem:[%s7737 + $0x20] sm:$0xf]
      %v7747 = vld [vmem:[%s7737 + $0x24] sm:$0xf]
      %v7748 = vld [vmem:[%s7737 + $0x28] sm:$0xf]
      %v7749 = vld [vmem:[%s7737 + $0x2c] sm:$0xf]
      %v7750 = vld [vmem:[%s7737 + $0x30] sm:$0xf]
      %v7751 = vld [vmem:[%s7737 + $0x34] sm:$0xf]
      %v7752 = vld [vmem:[%s7737 + $0x38] sm:$0xf]
      %v7753 = vld [vmem:[%s7737 + $0x3c] sm:$0xf]
      %v7754 = vld [vmem:[%s7737 + $0x40] sm:$0xf]
      %v7755 = vld [vmem:[%s7737 + $0x44] sm:$0xf]
      %v7756 = vld [vmem:[%s7737 + $0x48] sm:$0xf]
      %v7757 = vld [vmem:[%s7737 + $0x4c] sm:$0xf]
      %v7758 = vld [vmem:[%s7737 + $0x50] sm:$0xf]
      %v7759 = vld [vmem:[%s7737 + $0x54] sm:$0xf]
      %v7760 = vld [vmem:[%s7737 + $0x58] sm:$0xf]
      %v7761 = vld [vmem:[%s7737 + $0x5c] sm:$0xf]
      %v7762 = vld [vmem:[%s7737 + $0x60] sm:$0xf]
      %v7763 = vld [vmem:[%s7737 + $0x64] sm:$0xf]
      %v7764 = vld [vmem:[%s7737 + $0x68] sm:$0xf]
      %v7765 = vld [vmem:[%s7737 + $0x6c] sm:$0xf]
      %v7766 = vld [vmem:[%s7737 + $0x70] sm:$0xf]
      %v7767 = vld [vmem:[%s7737 + $0x74] sm:$0xf]
      %v7768 = vld [vmem:[%s7737 + $0x78] sm:$0xf]
      %v7769 = vld [vmem:[%s7737 + $0x7c] sm:$0xf]
      %v7771 = vshrl.u32 %v7733, 16
      %v7773 = vrot.slane %v7771, 1
      %v7774 = vshll.u32 %v7733, 16
      %v7776 = vrot.slane %v7774, 2
      %v7777 = vor.u32 %v7773, %v7776
      %v7778 = vrot.slane %v7209, 1
      %v7779 = vrot.slane %v7193, 2
      %v7780 = vor.u32 %v7778, %v7779
      %v7781 = vsel %vm4905, %v7777, %v7780
      %v7783 = vshrl.u32 %v7734, 16
      %v7785 = vrot.slane %v7783, 1
      %v7786 = vshll.u32 %v7734, 16
      %v7788 = vrot.slane %v7786, 2
      %v7789 = vor.u32 %v7785, %v7788
      %v7790 = vrot.slane %v7217, 1
      %v7791 = vrot.slane %v7205, 2
      %v7792 = vor.u32 %v7790, %v7791
      %v7793 = vsel %vm4905, %v7789, %v7792
      %v7795 = vshrl.u32 %v7735, 16
      %v7797 = vrot.slane %v7795, 1
      %v7798 = vshll.u32 %v7735, 16
      %v7800 = vrot.slane %v7798, 2
      %v7801 = vor.u32 %v7797, %v7800
      %v7802 = vsel %vm4905, %v7780, %v7801
      %v7804 = vshrl.u32 %v7736, 16
      %v7806 = vrot.slane %v7804, 1
      %v7807 = vshll.u32 %v7736, 16
      %v7809 = vrot.slane %v7807, 2
      %v7810 = vor.u32 %v7806, %v7809
      %v7811 = vsel %vm4905, %v7792, %v7810
      %v7848 = vunpack.c.l.b16 %v7738
      %v7849 = vunpack.c.l.b16 %v7739
      %v7850 = vunpack.c.l.b16 %v7740
      %v7851 = vunpack.c.l.b16 %v7741
      %v7852 = vunpack.c.l.b16 %v7742
      %v7853 = vunpack.c.l.b16 %v7743
      %v7854 = vunpack.c.l.b16 %v7744
      %v7855 = vunpack.c.l.b16 %v7745
      %v7856 = vunpack.c.l.b16 %v7746
      %v7857 = vunpack.c.l.b16 %v7747
      %v7858 = vunpack.c.l.b16 %v7748
      %v7859 = vunpack.c.l.b16 %v7749
      %v7860 = vunpack.c.l.b16 %v7750
      %v7861 = vunpack.c.l.b16 %v7751
      %v7862 = vunpack.c.l.b16 %v7752
      %v7863 = vunpack.c.l.b16 %v7753
      %v7864 = vunpack.c.l.b16 %v7754
      %v7865 = vunpack.c.l.b16 %v7755
      %v7866 = vunpack.c.l.b16 %v7756
      %v7867 = vunpack.c.l.b16 %v7757
      %v7868 = vunpack.c.l.b16 %v7758
      %v7869 = vunpack.c.l.b16 %v7759
      %v7870 = vunpack.c.l.b16 %v7760
      %v7871 = vunpack.c.l.b16 %v7761
      %v7872 = vunpack.c.l.b16 %v7762
      %v7873 = vunpack.c.l.b16 %v7763
      %v7874 = vunpack.c.l.b16 %v7764
      %v7875 = vunpack.c.l.b16 %v7765
      %v7876 = vunpack.c.l.b16 %v7766
      %v7877 = vunpack.c.l.b16 %v7767
      %v7878 = vunpack.c.l.b16 %v7768
      %v7879 = vunpack.c.l.b16 %v7769
      %v7880 = vpack.c.b16 %v7849, %v7848
      %v7881 = vpack.c.b16 %v7851, %v7850
      %v7882 = vpack.c.b16 %v7853, %v7852
      %v7883 = vpack.c.b16 %v7855, %v7854
      %v7884 = vpack.c.b16 %v7857, %v7856
      %v7885 = vpack.c.b16 %v7859, %v7858
      %v7886 = vpack.c.b16 %v7861, %v7860
      %v7887 = vpack.c.b16 %v7863, %v7862
      %v7888 = vpack.c.b16 %v7865, %v7864
      %v7889 = vpack.c.b16 %v7867, %v7866
      %v7890 = vpack.c.b16 %v7869, %v7868
      %v7891 = vpack.c.b16 %v7871, %v7870
      %v7892 = vpack.c.b16 %v7873, %v7872
      %v7893 = vpack.c.b16 %v7875, %v7874
      %v7894 = vpack.c.b16 %v7877, %v7876
      %v7895 = vpack.c.b16 %v7879, %v7878
      %7912 = vmatprep.subr.bf16.mxu0 0
      %7913 = vmatpush1.bf16.msra.mxu0 %v7880
      %7914 = vmatprep.subr.bf16.mxu0 0
      %7915 = vmatpush1.bf16.msra.mxu0 %v7881
      %7916 = vmatprep.subr.bf16.mxu0 0
      %7917 = vmatpush1.bf16.msra.mxu0 %v7882
      %7918 = vmatprep.subr.bf16.mxu0 0
      %7919 = vmatpush1.bf16.msra.mxu0 %v7883
      %7920 = vmatprep.subr.bf16.mxu0 0
      %7921 = vmatpush1.bf16.msra.mxu0 %v7884
      %7922 = vmatprep.subr.bf16.mxu0 0
      %7923 = vmatpush1.bf16.msra.mxu0 %v7885
      %7924 = vmatprep.subr.bf16.mxu0 0
      %7925 = vmatpush1.bf16.msra.mxu0 %v7886
      %7926 = vmatprep.subr.bf16.mxu0 0
      %7927 = vmatpush1.bf16.msra.mxu0 %v7887
      %7928 = vmatprep.subr.bf16.mxu0 0
      %7929 = vmatpush1.bf16.msra.mxu0 %v7888
      %7930 = vmatprep.subr.bf16.mxu0 0
      %7931 = vmatpush1.bf16.msra.mxu0 %v7889
      %7932 = vmatprep.subr.bf16.mxu0 0
      %7933 = vmatpush1.bf16.msra.mxu0 %v7890
      %7934 = vmatprep.subr.bf16.mxu0 0
      %7935 = vmatpush1.bf16.msra.mxu0 %v7891
      %7936 = vmatprep.subr.bf16.mxu0 0
      %7937 = vmatpush1.bf16.msra.mxu0 %v7892
      %7938 = vmatprep.subr.bf16.mxu0 0
      %7939 = vmatpush1.bf16.msra.mxu0 %v7893
      %7940 = vmatprep.subr.bf16.mxu0 0
      %7941 = vmatpush1.bf16.msra.mxu0 %v7894
      %7942 = vmatprep.subr.bf16.mxu0 0
      %7943 = vmatpush1.bf16.msra.mxu0 %v7895
      %7944 = vmatprep.mubr.bf16.mxu0 %v7793
      %7945 = vmatmul.mubr.bf16.gmra.mrb[0].mxu0 %v7781
      %v7946 = vpop.f32.mrb[0].mxu0
      %v7947 = vadd.f32 0.0, %v7946
      %v7948 = vpop.f32.mrb[0].mxu0
      %v7949 = vpop.f32.mrb[0].mxu0
      %v7950 = vadd.f32 0.0, %v7949
      %v7951 = vpop.f32.mrb[0].mxu0
      %7952 = vmatprep.mubr.bf16.mxu0 %v7811
      %7953 = vmatmul.mubr.bf16.gmra.mrb[0].mxu0 %v7802
      %v7954 = vpop.f32.mrb[0].mxu0
      %v7955 = vadd.f32 0.0, %v7954
      %v7956 = vpop.f32.mrb[0].mxu0
      %v7957 = vpop.f32.mrb[0].mxu0
      %v7958 = vadd.f32 0.0, %v7957
      %v7959 = vpop.f32.mrb[0].mxu0
      %7960 = vdwg.mxu0
      %v7961 = vadd.f32 %v7725, %v7947
      %v7962 = vadd.f32 %v7726, %v7950
      %v7963 = vadd.f32 %v7727, %v7955
      %v7964 = vadd.f32 %v7728, %v7958
      %s7965 = scalar_lea.vmem %s13, 512
      %v7966 = vld [vmem:[%s7965] sm:$0xf]
      %v7967 = vld [vmem:[%s7965 + $0x4] sm:$0xf]
      %v7968 = vld [vmem:[%s7965 + $0x8] sm:$0xf]
      %v7969 = vld [vmem:[%s7965 + $0xc] sm:$0xf]
      %v7970 = vld [vmem:[%s7965 + $0x10] sm:$0xf]
      %v7971 = vld [vmem:[%s7965 + $0x14] sm:$0xf]
      %v7972 = vld [vmem:[%s7965 + $0x18] sm:$0xf]
      %v7973 = vld [vmem:[%s7965 + $0x1c] sm:$0xf]
      %v7974 = vld [vmem:[%s7965 + $0x20] sm:$0xf]
      %v7975 = vld [vmem:[%s7965 + $0x24] sm:$0xf]
      %v7976 = vld [vmem:[%s7965 + $0x28] sm:$0xf]
      %v7977 = vld [vmem:[%s7965 + $0x2c] sm:$0xf]
      %v7978 = vld [vmem:[%s7965 + $0x30] sm:$0xf]
      %v7979 = vld [vmem:[%s7965 + $0x34] sm:$0xf]
      %v7980 = vld [vmem:[%s7965 + $0x38] sm:$0xf]
      %v7981 = vld [vmem:[%s7965 + $0x3c] sm:$0xf]
      %v7982 = vld [vmem:[%s7965 + $0x40] sm:$0xf]
      %v7983 = vld [vmem:[%s7965 + $0x44] sm:$0xf]
      %v7984 = vld [vmem:[%s7965 + $0x48] sm:$0xf]
      %v7985 = vld [vmem:[%s7965 + $0x4c] sm:$0xf]
      %v7986 = vld [vmem:[%s7965 + $0x50] sm:$0xf]
      %v7987 = vld [vmem:[%s7965 + $0x54] sm:$0xf]
      %v7988 = vld [vmem:[%s7965 + $0x58] sm:$0xf]
      %v7989 = vld [vmem:[%s7965 + $0x5c] sm:$0xf]
      %v7990 = vld [vmem:[%s7965 + $0x60] sm:$0xf]
      %v7991 = vld [vmem:[%s7965 + $0x64] sm:$0xf]
      %v7992 = vld [vmem:[%s7965 + $0x68] sm:$0xf]
      %v7993 = vld [vmem:[%s7965 + $0x6c] sm:$0xf]
      %v7994 = vld [vmem:[%s7965 + $0x70] sm:$0xf]
      %v7995 = vld [vmem:[%s7965 + $0x74] sm:$0xf]
      %v7996 = vld [vmem:[%s7965 + $0x78] sm:$0xf]
      %v7997 = vld [vmem:[%s7965 + $0x7c] sm:$0xf]
      %s7998 = scalar_lea.vmem %s13, 640
      %v7999 = vld [vmem:[%s7998] sm:$0xf]
      %v8000 = vld [vmem:[%s7998 + $0x4] sm:$0xf]
      %v8001 = vld [vmem:[%s7998 + $0x8] sm:$0xf]
      %v8002 = vld [vmem:[%s7998 + $0xc] sm:$0xf]
      %v8003 = vld [vmem:[%s7998 + $0x10] sm:$0xf]
      %v8004 = vld [vmem:[%s7998 + $0x14] sm:$0xf]
      %v8005 = vld [vmem:[%s7998 + $0x18] sm:$0xf]
      %v8006 = vld [vmem:[%s7998 + $0x1c] sm:$0xf]
      %v8007 = vld [vmem:[%s7998 + $0x20] sm:$0xf]
      %v8008 = vld [vmem:[%s7998 + $0x24] sm:$0xf]
      %v8009 = vld [vmem:[%s7998 + $0x28] sm:$0xf]
      %v8010 = vld [vmem:[%s7998 + $0x2c] sm:$0xf]
      %v8011 = vld [vmem:[%s7998 + $0x30] sm:$0xf]
      %v8012 = vld [vmem:[%s7998 + $0x34] sm:$0xf]
      %v8013 = vld [vmem:[%s7998 + $0x38] sm:$0xf]
      %v8014 = vld [vmem:[%s7998 + $0x3c] sm:$0xf]
      %v8015 = vld [vmem:[%s7998 + $0x40] sm:$0xf]
      %v8016 = vld [vmem:[%s7998 + $0x44] sm:$0xf]
      %v8017 = vld [vmem:[%s7998 + $0x48] sm:$0xf]
      %v8018 = vld [vmem:[%s7998 + $0x4c] sm:$0xf]
      %v8019 = vld [vmem:[%s7998 + $0x50] sm:$0xf]
      %v8020 = vld [vmem:[%s7998 + $0x54] sm:$0xf]
      %v8021 = vld [vmem:[%s7998 + $0x58] sm:$0xf]
      %v8022 = vld [vmem:[%s7998 + $0x5c] sm:$0xf]
      %v8023 = vld [vmem:[%s7998 + $0x60] sm:$0xf]
      %v8024 = vld [vmem:[%s7998 + $0x64] sm:$0xf]
      %v8025 = vld [vmem:[%s7998 + $0x68] sm:$0xf]
      %v8026 = vld [vmem:[%s7998 + $0x6c] sm:$0xf]
      %v8027 = vld [vmem:[%s7998 + $0x70] sm:$0xf]
      %v8028 = vld [vmem:[%s7998 + $0x74] sm:$0xf]
      %v8029 = vld [vmem:[%s7998 + $0x78] sm:$0xf]
      %v8030 = vld [vmem:[%s7998 + $0x7c] sm:$0xf]
      %v8063 = vunpack.c.l.b16 %v7999
      %v8064 = vunpack.c.l.b16 %v8000
      %v8065 = vunpack.c.l.b16 %v8001
      %v8066 = vunpack.c.l.b16 %v8002
      %v8067 = vunpack.c.l.b16 %v8003
      %v8068 = vunpack.c.l.b16 %v8004
      %v8069 = vunpack.c.l.b16 %v8005
      %v8070 = vunpack.c.l.b16 %v8006
      %v8071 = vunpack.c.l.b16 %v8007
      %v8072 = vunpack.c.l.b16 %v8008
      %v8073 = vunpack.c.l.b16 %v8009
      %v8074 = vunpack.c.l.b16 %v8010
      %v8075 = vunpack.c.l.b16 %v8011
      %v8076 = vunpack.c.l.b16 %v8012
      %v8077 = vunpack.c.l.b16 %v8013
      %v8078 = vunpack.c.l.b16 %v8014
      %v8079 = vunpack.c.l.b16 %v8015
      %v8080 = vunpack.c.l.b16 %v8016
      %v8081 = vunpack.c.l.b16 %v8017
      %v8082 = vunpack.c.l.b16 %v8018
      %v8083 = vunpack.c.l.b16 %v8019
      %v8084 = vunpack.c.l.b16 %v8020
      %v8085 = vunpack.c.l.b16 %v8021
      %v8086 = vunpack.c.l.b16 %v8022
      %v8087 = vunpack.c.l.b16 %v8023
      %v8088 = vunpack.c.l.b16 %v8024
      %v8089 = vunpack.c.l.b16 %v8025
      %v8090 = vunpack.c.l.b16 %v8026
      %v8091 = vunpack.c.l.b16 %v8027
      %v8092 = vunpack.c.l.b16 %v8028
      %v8093 = vunpack.c.l.b16 %v8029
      %v8094 = vunpack.c.l.b16 %v8030
      %v8095 = vpack.c.b16 %v8064, %v8063
      %v8096 = vpack.c.b16 %v8066, %v8065
      %v8097 = vpack.c.b16 %v8068, %v8067
      %v8098 = vpack.c.b16 %v8070, %v8069
      %v8099 = vpack.c.b16 %v8072, %v8071
      %v8100 = vpack.c.b16 %v8074, %v8073
      %v8101 = vpack.c.b16 %v8076, %v8075
      %v8102 = vpack.c.b16 %v8078, %v8077
      %v8103 = vpack.c.b16 %v8080, %v8079
      %v8104 = vpack.c.b16 %v8082, %v8081
      %v8105 = vpack.c.b16 %v8084, %v8083
      %v8106 = vpack.c.b16 %v8086, %v8085
      %v8107 = vpack.c.b16 %v8088, %v8087
      %v8108 = vpack.c.b16 %v8090, %v8089
      %v8109 = vpack.c.b16 %v8092, %v8091
      %v8110 = vpack.c.b16 %v8094, %v8093
      %8127 = vmatprep.subr.bf16.mxu0 0
      %8128 = vmatpush1.bf16.msra.mxu0 %v8095
      %8129 = vmatprep.subr.bf16.mxu0 0
      %8130 = vmatpush1.bf16.msra.mxu0 %v8096
      %8131 = vmatprep.subr.bf16.mxu0 0
      %8132 = vmatpush1.bf16.msra.mxu0 %v8097
      %8133 = vmatprep.subr.bf16.mxu0 0
      %8134 = vmatpush1.bf16.msra.mxu0 %v8098
      %8135 = vmatprep.subr.bf16.mxu0 0
      %8136 = vmatpush1.bf16.msra.mxu0 %v8099
      %8137 = vmatprep.subr.bf16.mxu0 0
      %8138 = vmatpush1.bf16.msra.mxu0 %v8100
      %8139 = vmatprep.subr.bf16.mxu0 0
      %8140 = vmatpush1.bf16.msra.mxu0 %v8101
      %8141 = vmatprep.subr.bf16.mxu0 0
      %8142 = vmatpush1.bf16.msra.mxu0 %v8102
      %8143 = vmatprep.subr.bf16.mxu0 0
      %8144 = vmatpush1.bf16.msra.mxu0 %v8103
      %8145 = vmatprep.subr.bf16.mxu0 0
      %8146 = vmatpush1.bf16.msra.mxu0 %v8104
      %8147 = vmatprep.subr.bf16.mxu0 0
      %8148 = vmatpush1.bf16.msra.mxu0 %v8105
      %8149 = vmatprep.subr.bf16.mxu0 0
      %8150 = vmatpush1.bf16.msra.mxu0 %v8106
      %8151 = vmatprep.subr.bf16.mxu0 0
      %8152 = vmatpush1.bf16.msra.mxu0 %v8107
      %8153 = vmatprep.subr.bf16.mxu0 0
      %8154 = vmatpush1.bf16.msra.mxu0 %v8108
      %8155 = vmatprep.subr.bf16.mxu0 0
      %8156 = vmatpush1.bf16.msra.mxu0 %v8109
      %8157 = vmatprep.subr.bf16.mxu0 0
      %8158 = vmatpush1.bf16.msra.mxu0 %v8110
      %8159 = vmatprep.mubr.bf16.mxu0 %v7571
      %8160 = vmatmul.mubr.bf16.gmra.mrb[0].mxu0 %v7568
      %v8161 = vpop.f32.mrb[0].mxu0
      %v8162 = vadd.f32 0.0, %v8161
      %v8163 = vpop.f32.mrb[0].mxu0
      %v8164 = vpop.f32.mrb[0].mxu0
      %v8165 = vadd.f32 0.0, %v8164
      %v8166 = vpop.f32.mrb[0].mxu0
      %8167 = vmatprep.mubr.bf16.mxu0 %v7575
      %8168 = vmatmul.mubr.bf16.gmra.mrb[0].mxu0 %v7573
      %v8169 = vpop.f32.mrb[0].mxu0
      %v8170 = vadd.f32 0.0, %v8169
      %v8171 = vpop.f32.mrb[0].mxu0
      %v8172 = vpop.f32.mrb[0].mxu0
      %v8173 = vadd.f32 0.0, %v8172
      %v8174 = vpop.f32.mrb[0].mxu0
      %8175 = vdwg.mxu0
      %v8208 = vunpack.c.l.b16 %v7966
      %v8209 = vunpack.c.l.b16 %v7967
      %v8210 = vunpack.c.l.b16 %v7968
      %v8211 = vunpack.c.l.b16 %v7969
      %v8212 = vunpack.c.l.b16 %v7970
      %v8213 = vunpack.c.l.b16 %v7971
      %v8214 = vunpack.c.l.b16 %v7972
      %v8215 = vunpack.c.l.b16 %v7973
      %v8216 = vunpack.c.l.b16 %v7974
      %v8217 = vunpack.c.l.b16 %v7975
      %v8218 = vunpack.c.l.b16 %v7976
      %v8219 = vunpack.c.l.b16 %v7977
      %v8220 = vunpack.c.l.b16 %v7978
      %v8221 = vunpack.c.l.b16 %v7979
      %v8222 = vunpack.c.l.b16 %v7980
      %v8223 = vunpack.c.l.b16 %v7981
      %v8224 = vunpack.c.l.b16 %v7982
      %v8225 = vunpack.c.l.b16 %v7983
      %v8226 = vunpack.c.l.b16 %v7984
      %v8227 = vunpack.c.l.b16 %v7985
      %v8228 = vunpack.c.l.b16 %v7986
      %v8229 = vunpack.c.l.b16 %v7987
      %v8230 = vunpack.c.l.b16 %v7988
      %v8231 = vunpack.c.l.b16 %v7989
      %v8232 = vunpack.c.l.b16 %v7990
      %v8233 = vunpack.c.l.b16 %v7991
      %v8234 = vunpack.c.l.b16 %v7992
      %v8235 = vunpack.c.l.b16 %v7993
      %v8236 = vunpack.c.l.b16 %v7994
      %v8237 = vunpack.c.l.b16 %v7995
      %v8238 = vunpack.c.l.b16 %v7996
      %v8239 = vunpack.c.l.b16 %v7997
      %v8240 = vpack.c.b16 %v8209, %v8208
      %v8241 = vpack.c.b16 %v8211, %v8210
      %v8242 = vpack.c.b16 %v8213, %v8212
      %v8243 = vpack.c.b16 %v8215, %v8214
      %v8244 = vpack.c.b16 %v8217, %v8216
      %v8245 = vpack.c.b16 %v8219, %v8218
      %v8246 = vpack.c.b16 %v8221, %v8220
      %v8247 = vpack.c.b16 %v8223, %v8222
      %v8248 = vpack.c.b16 %v8225, %v8224
      %v8249 = vpack.c.b16 %v8227, %v8226
      %v8250 = vpack.c.b16 %v8229, %v8228
      %v8251 = vpack.c.b16 %v8231, %v8230
      %v8252 = vpack.c.b16 %v8233, %v8232
      %v8253 = vpack.c.b16 %v8235, %v8234
      %v8254 = vpack.c.b16 %v8237, %v8236
      %v8255 = vpack.c.b16 %v8239, %v8238
      %8272 = vmatprep.subr.bf16.mxu0 0
      %8273 = vmatpush1.bf16.msra.mxu0 %v8240
      %8274 = vmatprep.subr.bf16.mxu0 0
      %8275 = vmatpush1.bf16.msra.mxu0 %v8241
      %8276 = vmatprep.subr.bf16.mxu0 0
      %8277 = vmatpush1.bf16.msra.mxu0 %v8242
      %8278 = vmatprep.subr.bf16.mxu0 0
      %8279 = vmatpush1.bf16.msra.mxu0 %v8243
      %8280 = vmatprep.subr.bf16.mxu0 0
      %8281 = vmatpush1.bf16.msra.mxu0 %v8244
      %8282 = vmatprep.subr.bf16.mxu0 0
      %8283 = vmatpush1.bf16.msra.mxu0 %v8245
      %8284 = vmatprep.subr.bf16.mxu0 0
      %8285 = vmatpush1.bf16.msra.mxu0 %v8246
      %8286 = vmatprep.subr.bf16.mxu0 0
      %8287 = vmatpush1.bf16.msra.mxu0 %v8247
      %8288 = vmatprep.subr.bf16.mxu0 0
      %8289 = vmatpush1.bf16.msra.mxu0 %v8248
      %8290 = vmatprep.subr.bf16.mxu0 0
      %8291 = vmatpush1.bf16.msra.mxu0 %v8249
      %8292 = vmatprep.subr.bf16.mxu0 0
      %8293 = vmatpush1.bf16.msra.mxu0 %v8250
      %8294 = vmatprep.subr.bf16.mxu0 0
      %8295 = vmatpush1.bf16.msra.mxu0 %v8251
      %8296 = vmatprep.subr.bf16.mxu0 0
      %8297 = vmatpush1.bf16.msra.mxu0 %v8252
      %8298 = vmatprep.subr.bf16.mxu0 0
      %8299 = vmatpush1.bf16.msra.mxu0 %v8253
      %8300 = vmatprep.subr.bf16.mxu0 0
      %8301 = vmatpush1.bf16.msra.mxu0 %v8254
      %8302 = vmatprep.subr.bf16.mxu0 0
      %8303 = vmatpush1.bf16.msra.mxu0 %v8255
      %8304 = vmatprep.mubr.bf16.mxu0 %v7208
      %8305 = vmatmul.mubr.bf16.gmra.mrb[0].mxu0 %v7196
      %v8306 = vpop.f32.mrb[0].mxu0
      %v8307 = vadd.f32 %v8162, %v8306
      %v8308 = vpop.f32.mrb[0].mxu0
      %v8309 = vpop.f32.mrb[0].mxu0
      %v8310 = vadd.f32 %v8165, %v8309
      %v8311 = vpop.f32.mrb[0].mxu0
      %8312 = vmatprep.mubr.bf16.mxu0 %v7224
      %8313 = vmatmul.mubr.bf16.gmra.mrb[0].mxu0 %v7216
      %v8314 = vpop.f32.mrb[0].mxu0
      %v8315 = vadd.f32 %v8170, %v8314
      %v8316 = vpop.f32.mrb[0].mxu0
      %v8317 = vpop.f32.mrb[0].mxu0
      %v8318 = vadd.f32 %v8173, %v8317
      %v8319 = vpop.f32.mrb[0].mxu0
      %8320 = vdwg.mxu0
      %s8321 = scalar_lea.vmem %s13, 768
      %v8322 = vld [vmem:[%s8321] sm:$0xf]
      %v8323 = vld [vmem:[%s8321 + $0x4] sm:$0xf]
      %v8324 = vld [vmem:[%s8321 + $0x8] sm:$0xf]
      %v8325 = vld [vmem:[%s8321 + $0xc] sm:$0xf]
      %v8326 = vld [vmem:[%s8321 + $0x10] sm:$0xf]
      %v8327 = vld [vmem:[%s8321 + $0x14] sm:$0xf]
      %v8328 = vld [vmem:[%s8321 + $0x18] sm:$0xf]
      %v8329 = vld [vmem:[%s8321 + $0x1c] sm:$0xf]
      %v8330 = vld [vmem:[%s8321 + $0x20] sm:$0xf]
      %v8331 = vld [vmem:[%s8321 + $0x24] sm:$0xf]
      %v8332 = vld [vmem:[%s8321 + $0x28] sm:$0xf]
      %v8333 = vld [vmem:[%s8321 + $0x2c] sm:$0xf]
      %v8334 = vld [vmem:[%s8321 + $0x30] sm:$0xf]
      %v8335 = vld [vmem:[%s8321 + $0x34] sm:$0xf]
      %v8336 = vld [vmem:[%s8321 + $0x38] sm:$0xf]
      %v8337 = vld [vmem:[%s8321 + $0x3c] sm:$0xf]
      %v8338 = vld [vmem:[%s8321 + $0x40] sm:$0xf]
      %v8339 = vld [vmem:[%s8321 + $0x44] sm:$0xf]
      %v8340 = vld [vmem:[%s8321 + $0x48] sm:$0xf]
      %v8341 = vld [vmem:[%s8321 + $0x4c] sm:$0xf]
      %v8342 = vld [vmem:[%s8321 + $0x50] sm:$0xf]
      %v8343 = vld [vmem:[%s8321 + $0x54] sm:$0xf]
      %v8344 = vld [vmem:[%s8321 + $0x58] sm:$0xf]
      %v8345 = vld [vmem:[%s8321 + $0x5c] sm:$0xf]
      %v8346 = vld [vmem:[%s8321 + $0x60] sm:$0xf]
      %v8347 = vld [vmem:[%s8321 + $0x64] sm:$0xf]
      %v8348 = vld [vmem:[%s8321 + $0x68] sm:$0xf]
      %v8349 = vld [vmem:[%s8321 + $0x6c] sm:$0xf]
      %v8350 = vld [vmem:[%s8321 + $0x70] sm:$0xf]
      %v8351 = vld [vmem:[%s8321 + $0x74] sm:$0xf]
      %v8352 = vld [vmem:[%s8321 + $0x78] sm:$0xf]
      %v8353 = vld [vmem:[%s8321 + $0x7c] sm:$0xf]
      %v8386 = vunpack.c.l.b16 %v8322
      %v8387 = vunpack.c.l.b16 %v8323
      %v8388 = vunpack.c.l.b16 %v8324
      %v8389 = vunpack.c.l.b16 %v8325
      %v8390 = vunpack.c.l.b16 %v8326
      %v8391 = vunpack.c.l.b16 %v8327
      %v8392 = vunpack.c.l.b16 %v8328
      %v8393 = vunpack.c.l.b16 %v8329
      %v8394 = vunpack.c.l.b16 %v8330
      %v8395 = vunpack.c.l.b16 %v8331
      %v8396 = vunpack.c.l.b16 %v8332
      %v8397 = vunpack.c.l.b16 %v8333
      %v8398 = vunpack.c.l.b16 %v8334
      %v8399 = vunpack.c.l.b16 %v8335
      %v8400 = vunpack.c.l.b16 %v8336
      %v8401 = vunpack.c.l.b16 %v8337
      %v8402 = vunpack.c.l.b16 %v8338
      %v8403 = vunpack.c.l.b16 %v8339
      %v8404 = vunpack.c.l.b16 %v8340
      %v8405 = vunpack.c.l.b16 %v8341
      %v8406 = vunpack.c.l.b16 %v8342
      %v8407 = vunpack.c.l.b16 %v8343
      %v8408 = vunpack.c.l.b16 %v8344
      %v8409 = vunpack.c.l.b16 %v8345
      %v8410 = vunpack.c.l.b16 %v8346
      %v8411 = vunpack.c.l.b16 %v8347
      %v8412 = vunpack.c.l.b16 %v8348
      %v8413 = vunpack.c.l.b16 %v8349
      %v8414 = vunpack.c.l.b16 %v8350
      %v8415 = vunpack.c.l.b16 %v8351
      %v8416 = vunpack.c.l.b16 %v8352
      %v8417 = vunpack.c.l.b16 %v8353
      %v8418 = vpack.c.b16 %v8387, %v8386
      %v8419 = vpack.c.b16 %v8389, %v8388
      %v8420 = vpack.c.b16 %v8391, %v8390
      %v8421 = vpack.c.b16 %v8393, %v8392
      %v8422 = vpack.c.b16 %v8395, %v8394
      %v8423 = vpack.c.b16 %v8397, %v8396
      %v8424 = vpack.c.b16 %v8399, %v8398
      %v8425 = vpack.c.b16 %v8401, %v8400
      %v8426 = vpack.c.b16 %v8403, %v8402
      %v8427 = vpack.c.b16 %v8405, %v8404
      %v8428 = vpack.c.b16 %v8407, %v8406
      %v8429 = vpack.c.b16 %v8409, %v8408
      %v8430 = vpack.c.b16 %v8411, %v8410
      %v8431 = vpack.c.b16 %v8413, %v8412
      %v8432 = vpack.c.b16 %v8415, %v8414
      %v8433 = vpack.c.b16 %v8417, %v8416
      %8450 = vmatprep.subr.bf16.mxu0 0
      %8451 = vmatpush1.bf16.msra.mxu0 %v8418
      %8452 = vmatprep.subr.bf16.mxu0 0
      %8453 = vmatpush1.bf16.msra.mxu0 %v8419
      %8454 = vmatprep.subr.bf16.mxu0 0
      %8455 = vmatpush1.bf16.msra.mxu0 %v8420
      %8456 = vmatprep.subr.bf16.mxu0 0
      %8457 = vmatpush1.bf16.msra.mxu0 %v8421
      %8458 = vmatprep.subr.bf16.mxu0 0
      %8459 = vmatpush1.bf16.msra.mxu0 %v8422
      %8460 = vmatprep.subr.bf16.mxu0 0
      %8461 = vmatpush1.bf16.msra.mxu0 %v8423
      %8462 = vmatprep.subr.bf16.mxu0 0
      %8463 = vmatpush1.bf16.msra.mxu0 %v8424
      %8464 = vmatprep.subr.bf16.mxu0 0
      %8465 = vmatpush1.bf16.msra.mxu0 %v8425
      %8466 = vmatprep.subr.bf16.mxu0 0
      %8467 = vmatpush1.bf16.msra.mxu0 %v8426
      %8468 = vmatprep.subr.bf16.mxu0 0
      %8469 = vmatpush1.bf16.msra.mxu0 %v8427
      %8470 = vmatprep.subr.bf16.mxu0 0
      %8471 = vmatpush1.bf16.msra.mxu0 %v8428
      %8472 = vmatprep.subr.bf16.mxu0 0
      %8473 = vmatpush1.bf16.msra.mxu0 %v8429
      %8474 = vmatprep.subr.bf16.mxu0 0
      %8475 = vmatpush1.bf16.msra.mxu0 %v8430
      %8476 = vmatprep.subr.bf16.mxu0 0
      %8477 = vmatpush1.bf16.msra.mxu0 %v8431
      %8478 = vmatprep.subr.bf16.mxu0 0
      %8479 = vmatpush1.bf16.msra.mxu0 %v8432
      %8480 = vmatprep.subr.bf16.mxu0 0
      %8481 = vmatpush1.bf16.msra.mxu0 %v8433
      %8482 = vmatprep.mubr.bf16.mxu0 %v7793
      %8483 = vmatmul.mubr.bf16.gmra.mrb[0].mxu0 %v7781
      %v8484 = vpop.f32.mrb[0].mxu0
      %v8485 = vadd.f32 0.0, %v8484
      %v8486 = vpop.f32.mrb[0].mxu0
      %v8487 = vpop.f32.mrb[0].mxu0
      %v8488 = vadd.f32 0.0, %v8487
      %v8489 = vpop.f32.mrb[0].mxu0
      %8490 = vmatprep.mubr.bf16.mxu0 %v7811
      %8491 = vmatmul.mubr.bf16.gmra.mrb[0].mxu0 %v7802
      %v8492 = vpop.f32.mrb[0].mxu0
      %v8493 = vadd.f32 0.0, %v8492
      %v8494 = vpop.f32.mrb[0].mxu0
      %v8495 = vpop.f32.mrb[0].mxu0
      %v8496 = vadd.f32 0.0, %v8495
      %v8497 = vpop.f32.mrb[0].mxu0
      %8498 = vdwg.mxu0
      %v8499 = vadd.f32 %v8307, %v8485
      %v8500 = vadd.f32 %v8310, %v8488
      %v8501 = vadd.f32 %v8315, %v8493
      %v8502 = vadd.f32 %v8318, %v8496
      %v8503 = vld [vmem:[#allocation5] sm:$0xf0]
      %v8504 = vld [vmem:[#allocation5 + $0x8] sm:$0xf0]
      %v8505 = vld [vmem:[#allocation5 + $0x40] sm:$0xf]
      %v8506 = vld [vmem:[#allocation5 + $0x48] sm:$0xf]
      %v8507 = vpack.c.bf16 %v7102, %v8503
      %v8508 = vpack.c.bf16 %v7103, %v8504
      %v8509 = vpack.c.bf16 %v8505, %v8505
      %v8510 = vpack.c.bf16 %v8506, %v8506
      %s8511 = scalar_lea.vmem %s13, 896
      %v8512 = vld [vmem:[%s8511] sm:$0xf]
      %v8513 = vld [vmem:[%s8511 + $0x4] sm:$0xf]
      %v8514 = vld [vmem:[%s8511 + $0x8] sm:$0xf]
      %v8515 = vld [vmem:[%s8511 + $0xc] sm:$0xf]
      %v8516 = vld [vmem:[%s8511 + $0x10] sm:$0xf]
      %v8517 = vld [vmem:[%s8511 + $0x14] sm:$0xf]
      %v8518 = vld [vmem:[%s8511 + $0x18] sm:$0xf]
      %v8519 = vld [vmem:[%s8511 + $0x1c] sm:$0xf]
      %v8520 = vld [vmem:[%s8511 + $0x20] sm:$0xf]
      %v8521 = vld [vmem:[%s8511 + $0x24] sm:$0xf]
      %v8522 = vld [vmem:[%s8511 + $0x28] sm:$0xf]
      %v8523 = vld [vmem:[%s8511 + $0x2c] sm:$0xf]
      %v8524 = vld [vmem:[%s8511 + $0x30] sm:$0xf]
      %v8525 = vld [vmem:[%s8511 + $0x34] sm:$0xf]
      %v8526 = vld [vmem:[%s8511 + $0x38] sm:$0xf]
      %v8527 = vld [vmem:[%s8511 + $0x3c] sm:$0xf]
      %v8528 = vld [vmem:[%s8511 + $0x40] sm:$0xf]
      %v8529 = vld [vmem:[%s8511 + $0x44] sm:$0xf]
      %v8530 = vld [vmem:[%s8511 + $0x48] sm:$0xf]
      %v8531 = vld [vmem:[%s8511 + $0x4c] sm:$0xf]
      %v8532 = vld [vmem:[%s8511 + $0x50] sm:$0xf]
      %v8533 = vld [vmem:[%s8511 + $0x54] sm:$0xf]
      %v8534 = vld [vmem:[%s8511 + $0x58] sm:$0xf]
      %v8535 = vld [vmem:[%s8511 + $0x5c] sm:$0xf]
      %v8536 = vld [vmem:[%s8511 + $0x60] sm:$0xf]
      %v8537 = vld [vmem:[%s8511 + $0x64] sm:$0xf]
      %v8538 = vld [vmem:[%s8511 + $0x68] sm:$0xf]
      %v8539 = vld [vmem:[%s8511 + $0x6c] sm:$0xf]
      %v8540 = vld [vmem:[%s8511 + $0x70] sm:$0xf]
      %v8541 = vld [vmem:[%s8511 + $0x74] sm:$0xf]
      %v8542 = vld [vmem:[%s8511 + $0x78] sm:$0xf]
      %v8543 = vld [vmem:[%s8511 + $0x7c] sm:$0xf]
      %v8548 = vrot.slane %v8507, 2
      %v8549 = vrot.slane %v7110, 2
      %v8550 = vsel %vm5906, %v8548, %v8549
      %v8551 = vrot.slane %v8508, 2
      %v8552 = vrot.slane %v7111, 2
      %v8553 = vsel %vm5906, %v8551, %v8552
      %v8554 = vrot.slane %v8509, 2
      %v8555 = vsel %vm5906, %v8549, %v8554
      %v8556 = vrot.slane %v8510, 2
      %v8557 = vsel %vm5906, %v8552, %v8556
      %v8594 = vunpack.c.l.b16 %v8512
      %v8595 = vunpack.c.l.b16 %v8513
      %v8596 = vunpack.c.l.b16 %v8514
      %v8597 = vunpack.c.l.b16 %v8515
      %v8598 = vunpack.c.l.b16 %v8516
      %v8599 = vunpack.c.l.b16 %v8517
      %v8600 = vunpack.c.l.b16 %v8518
      %v8601 = vunpack.c.l.b16 %v8519
      %v8602 = vunpack.c.l.b16 %v8520
      %v8603 = vunpack.c.l.b16 %v8521
      %v8604 = vunpack.c.l.b16 %v8522
      %v8605 = vunpack.c.l.b16 %v8523
      %v8606 = vunpack.c.l.b16 %v8524
      %v8607 = vunpack.c.l.b16 %v8525
      %v8608 = vunpack.c.l.b16 %v8526
      %v8609 = vunpack.c.l.b16 %v8527
      %v8610 = vunpack.c.l.b16 %v8528
      %v8611 = vunpack.c.l.b16 %v8529
      %v8612 = vunpack.c.l.b16 %v8530
      %v8613 = vunpack.c.l.b16 %v8531
      %v8614 = vunpack.c.l.b16 %v8532
      %v8615 = vunpack.c.l.b16 %v8533
      %v8616 = vunpack.c.l.b16 %v8534
      %v8617 = vunpack.c.l.b16 %v8535
      %v8618 = vunpack.c.l.b16 %v8536
      %v8619 = vunpack.c.l.b16 %v8537
      %v8620 = vunpack.c.l.b16 %v8538
      %v8621 = vunpack.c.l.b16 %v8539
      %v8622 = vunpack.c.l.b16 %v8540
      %v8623 = vunpack.c.l.b16 %v8541
      %v8624 = vunpack.c.l.b16 %v8542
      %v8625 = vunpack.c.l.b16 %v8543
      %v8626 = vpack.c.b16 %v8595, %v8594
      %v8627 = vpack.c.b16 %v8597, %v8596
      %v8628 = vpack.c.b16 %v8599, %v8598
      %v8629 = vpack.c.b16 %v8601, %v8600
      %v8630 = vpack.c.b16 %v8603, %v8602
      %v8631 = vpack.c.b16 %v8605, %v8604
      %v8632 = vpack.c.b16 %v8607, %v8606
      %v8633 = vpack.c.b16 %v8609, %v8608
      %v8634 = vpack.c.b16 %v8611, %v8610
      %v8635 = vpack.c.b16 %v8613, %v8612
      %v8636 = vpack.c.b16 %v8615, %v8614
      %v8637 = vpack.c.b16 %v8617, %v8616
      %v8638 = vpack.c.b16 %v8619, %v8618
      %v8639 = vpack.c.b16 %v8621, %v8620
      %v8640 = vpack.c.b16 %v8623, %v8622
      %v8641 = vpack.c.b16 %v8625, %v8624
      %8658 = vmatprep.subr.bf16.mxu0 0
      %8659 = vmatpush1.bf16.msra.mxu0 %v8626
      %8660 = vmatprep.subr.bf16.mxu0 0
      %8661 = vmatpush1.bf16.msra.mxu0 %v8627
      %8662 = vmatprep.subr.bf16.mxu0 0
      %8663 = vmatpush1.bf16.msra.mxu0 %v8628
      %8664 = vmatprep.subr.bf16.mxu0 0
      %8665 = vmatpush1.bf16.msra.mxu0 %v8629
      %8666 = vmatprep.subr.bf16.mxu0 0
      %8667 = vmatpush1.bf16.msra.mxu0 %v8630
      %8668 = vmatprep.subr.bf16.mxu0 0
      %8669 = vmatpush1.bf16.msra.mxu0 %v8631
      %8670 = vmatprep.subr.bf16.mxu0 0
      %8671 = vmatpush1.bf16.msra.mxu0 %v8632
      %8672 = vmatprep.subr.bf16.mxu0 0
      %8673 = vmatpush1.bf16.msra.mxu0 %v8633
      %8674 = vmatprep.subr.bf16.mxu0 0
      %8675 = vmatpush1.bf16.msra.mxu0 %v8634
      %8676 = vmatprep.subr.bf16.mxu0 0
      %8677 = vmatpush1.bf16.msra.mxu0 %v8635
      %8678 = vmatprep.subr.bf16.mxu0 0
      %8679 = vmatpush1.bf16.msra.mxu0 %v8636
      %8680 = vmatprep.subr.bf16.mxu0 0
      %8681 = vmatpush1.bf16.msra.mxu0 %v8637
      %8682 = vmatprep.subr.bf16.mxu0 0
      %8683 = vmatpush1.bf16.msra.mxu0 %v8638
      %8684 = vmatprep.subr.bf16.mxu0 0
      %8685 = vmatpush1.bf16.msra.mxu0 %v8639
      %8686 = vmatprep.subr.bf16.mxu0 0
      %8687 = vmatpush1.bf16.msra.mxu0 %v8640
      %8688 = vmatprep.subr.bf16.mxu0 0
      %8689 = vmatpush1.bf16.msra.mxu0 %v8641
      %8690 = vmatprep.mubr.bf16.mxu0 %v8553
      %8691 = vmatmul.mubr.bf16.gmra.mrb[0].mxu0 %v8550
      %v8692 = vpop.f32.mrb[0].mxu0
      %v8693 = vadd.f32 0.0, %v8692
      %v8694 = vpop.f32.mrb[0].mxu0
      %v8695 = vpop.f32.mrb[0].mxu0
      %v8696 = vadd.f32 0.0, %v8695
      %v8697 = vpop.f32.mrb[0].mxu0
      %8698 = vmatprep.mubr.bf16.mxu0 %v8557
      %8699 = vmatmul.mubr.bf16.gmra.mrb[0].mxu0 %v8555
      %v8700 = vpop.f32.mrb[0].mxu0
      %v8701 = vadd.f32 0.0, %v8700
      %v8702 = vpop.f32.mrb[0].mxu0
      %v8703 = vpop.f32.mrb[0].mxu0
      %v8704 = vadd.f32 0.0, %v8703
      %v8705 = vpop.f32.mrb[0].mxu0
      %8706 = vdwg.mxu0
      %v8707 = vadd.f32 %v8499, %v8693
      %v8708 = vadd.f32 %v8500, %v8696
      %v8709 = vadd.f32 %v8501, %v8701
      %v8710 = vadd.f32 %v8502, %v8704
      %v8711 = vld [vmem:[%s14] sm:$0x1]
      %v8713 = vlaneseq
      %v8714 = vshrl.u32 %v8713, 7
      %v8715 = vsub.s32 0, %v8714
      %v8716 = vrot.slane %v8711, %v8715
      %v8718 = vadd.f32 %v7961, %v8716
      %v8719 = vadd.f32 %v7962, %v8716
      %v8720 = vadd.f32 %v7963, %v8716
      %v8721 = vadd.f32 %v7964, %v8716
      %v8722 = vxor.u32 %v8718, 2147483648
      %v8723 = vxor.u32 %v8719, 2147483648
      %v8724 = vxor.u32 %v8720, 2147483648
      %v8725 = vxor.u32 %v8721, 2147483648
      %v8726 = vmul.f32 %v8722, 1.442695
      %v8727 = vpow.pop %v8726
      %v8728 = vmul.f32 %v8723, 1.442695
      %v8729 = vpow.pop %v8728
      %v8730 = vmul.f32 %v8724, 1.442695
      %v8731 = vpow.pop %v8730
      %v8732 = vmul.f32 %v8725, 1.442695
      %v8733 = vpow.pop %v8732
      %v8734 = vadd.f32 %v8727, 1.0
      %v8735 = vadd.f32 %v8729, 1.0
      %v8736 = vadd.f32 %v8731, 1.0
      %v8737 = vadd.f32 %v8733, 1.0
      %v8738 = vrcp.pop %v8734
      %v8739 = vmul.f32 1.0, %v8738
      %v8740 = vrcp.pop %v8735
      %v8741 = vmul.f32 1.0, %v8740
      %v8742 = vrcp.pop %v8736
      %v8743 = vmul.f32 1.0, %v8742
      %v8744 = vrcp.pop %v8737
      %v8745 = vmul.f32 1.0, %v8744
      %v8746 = vadd.f32 %v8707, %v8716
      %v8747 = vadd.f32 %v8708, %v8716
      %v8748 = vadd.f32 %v8709, %v8716
      %v8749 = vadd.f32 %v8710, %v8716
      %v8750 = vxor.u32 %v8746, 2147483648
      %v8751 = vxor.u32 %v8747, 2147483648
      %v8752 = vxor.u32 %v8748, 2147483648
      %v8753 = vxor.u32 %v8749, 2147483648
      %v8754 = vmul.f32 %v8750, 1.442695
      %v8755 = vpow.pop %v8754
      %v8756 = vmul.f32 %v8751, 1.442695
      %v8757 = vpow.pop %v8756
      %v8758 = vmul.f32 %v8752, 1.442695
      %v8759 = vpow.pop %v8758
      %v8760 = vmul.f32 %v8753, 1.442695
      %v8761 = vpow.pop %v8760
      %v8762 = vadd.f32 %v8755, 1.0
      %v8763 = vadd.f32 %v8757, 1.0
      %v8764 = vadd.f32 %v8759, 1.0
      %v8765 = vadd.f32 %v8761, 1.0
      %v8766 = vrcp.pop %v8762
      %v8767 = vmul.f32 1.0, %v8766
      %v8768 = vrcp.pop %v8763
      %v8769 = vmul.f32 1.0, %v8768
      %v8770 = vrcp.pop %v8764
      %v8771 = vmul.f32 1.0, %v8770
      %v8772 = vrcp.pop %v8765
      %v8773 = vmul.f32 1.0, %v8772
      %8778 = vrot.lane.b32.xlu0 %v8767, 64
      %v8779 = vpop.permute.xlu0 %8778
      %8780 = vrot.lane.b32.xlu0 %v8769, 64
      %v8781 = vpop.permute.xlu0 %8780
      %8782 = vrot.lane.b32.xlu0 %v8771, 64
      %v8783 = vpop.permute.xlu0 %8782
      %8784 = vrot.lane.b32.xlu0 %v8773, 64
      %v8785 = vpop.permute.xlu0 %8784
      %v8790 = vsel %vm560, %v8739, %v8779
      %v8791 = vsel %vm560, %v8741, %v8781
      %v8792 = vsel %vm560, %v8743, %v8783
      %v8793 = vsel %vm560, %v8745, %v8785
      %8794 = vst [vmem:[%s491] sm:$0xff] %v8790
      %8795 = vst [vmem:[%s491 + $0x8] sm:$0xff] %v8791
      %8796 = vst [vmem:[%s491 + $0x10] sm:$0xff] %v8792
      %8797 = vst [vmem:[%s491 + $0x18] sm:$0xff] %v8793
      %p8798 = scmp.lt.s32.totalorder %s26, 1
      %s8799 = scalar_select %p8798, %s26, 1
      %s8800 = smul.addr %s8799, 4
      %s8801 = smul.addr %s8800, 8
      %s8802 = scalar_lea.vmem %s15, %s8801
      // Predicated region
      $region81: #{texture_segmentation_forward.1} parent=79 // pred_check
        %p8803 = pneg %p364
      $region82: #{texture_segmentation_forward.1} parent=79 // pred_check_branch
        %8805 = sbr.rel (%p8803) target = $region84
      $region83: #{texture_segmentation_forward.1} parent=79 // pred_region
        _
      $region84: #{texture_segmentation_forward.1} parent=79 // pred_fallthru
        _
    $region80: #{texture_segmentation_forward.1} parent=5 // pred_fallthru
      _
    %p8806 = scmp.le.s32.totalorder 2, %s21
    // Predicated region
    $region85: #{texture_segmentation_forward.1} parent=5 // pred_check
      %p8807 = pneg %p8806
    $region86: #{texture_segmentation_forward.1} parent=5 // pred_check_branch
      %8809 = sbr.rel (%p8807) target = $region88
    $region87: #{texture_segmentation_forward.1} parent=5 // pred_region
      %s8810 = ssub.s32 %s21, 2
      // Predicated region
      $region89: #{texture_segmentation_forward.1} parent=87 // pred_check
        %p8811 = pneg %p370
      $region90: #{texture_segmentation_forward.1} parent=87 // pred_check_branch
        %8813 = sbr.rel (%p8811) target = $region92
      $region91: #{texture_segmentation_forward.1} parent=87 // pred_region
        %p8814 = scmp.lt.s32.totalorder %s27, 1
        %s8815 = scalar_select %p8814, %s27, 1
        %s8816 = smul.addr %s8815, 4
        %s8817 = smul.addr %s8816, 8
        %s8818 = scalar_lea.vmem %s15, %s8817
      $region92: #{texture_segmentation_forward.1} parent=87 // pred_fallthru
        _
    $region88: #{texture_segmentation_forward.1} parent=5 // pred_fallthru
      _
  $region6: #{texture_segmentation_forward.1} parent=0 // loop_footer
    %s25 = sadd.s32 1, %s21
  $region7: #{texture_segmentation_forward.1} parent=0 // loop_footer_branch
    %20 = sbr.rel target = $region3
  $region8: #{texture_segmentation_forward.1} parent=0 // loop_exit
    _

</llo_original>
